<compile_context>
chip_gen: v7x
topology: tpu7x:2x2x1
jax: 0.10.0
libtpu: 0.0.40
codegen_flags: <defaults>
</compile_context>

<pallas_src>
import functools

import jax
import jax.numpy as jnp
from jax import lax
from jax.experimental import pallas as pl
from jax.experimental.pallas import tpu as pltpu


def _round_up(x, m):
    return ((x + m - 1) // m) * m


# ----------------------------------------------------------------------------
# Fused kernel: one batch element per grid step.
# ----------------------------------------------------------------------------
def _fused_kernel(x_ref, mask_ref,
                  w0_ref, b0_ref, w1_ref, b1_ref, w2_ref, b2_ref,
                  w3_ref, b3_ref, ws_ref, bs_ref, we_ref, be_ref,
                  out_ref, edge_ref,
                  t1_ref, t2_ref, t3_ref, im_ref,
                  *, Wc, Npc_pad, S, ks, dil, share_x):
    f32 = jnp.float32
    mask = mask_ref[...]                       # (1, Npc_pad): 1 interior, 0 ring/pad
    Cin = x_ref.shape[0]

    def im2col(src_ref, K, d, p, rows_pad):
        """Gather K*K shifted canvas windows into the stacked im2col buffer."""
        Ci = src_ref.shape[0]
        tap = 0
        for kh in range(K):
            for kw in range(K):
                off = S + (kh * d - p) * Wc + (kw * d - p)        # static offset
                im_ref[tap * Ci:(tap + 1) * Ci, :] = src_ref[:, off:off + Npc_pad]
                tap += 1
        rows = K * K * Ci
        if rows_pad > rows:   # keep padded weight columns multiplying zeros
            im_ref[rows:rows_pad, :] = jnp.zeros((rows_pad - rows, Npc_pad),
                                                 im_ref.dtype)

    def matmul(w_ref, b_ref):
        rows_pad = w_ref.shape[1]
        return (jnp.dot(w_ref[...], im_ref[:rows_pad, :],
                        preferred_element_type=f32) + b_ref[...])

    # Zero ONLY the never-written halo extensions of the scratch canvases.
    # (Interior [S:S+Npc_pad] is fully overwritten each layer; unconditional so
    #  megacore/parallel grid sharding stays correct.)
    for t in (t1_ref, t2_ref, t3_ref):
        t[:, :S] = jnp.zeros((t.shape[0], S), t.dtype)
        t[:, S + Npc_pad:] = jnp.zeros((t.shape[0], S), t.dtype)

    # ---- one gather of the input feeds ed0 (+ spatial + 1x1 when shared) ----
    im2col(x_ref, 3, 1, 1, w0_ref.shape[1])
    a0 = matmul(w0_ref, b0_ref)                                  # (32, Npc_pad)

    center = (3 * (3 // 2) + (3 // 2)) * Cin                     # center-tap rows
    edge_feat = (jnp.dot(we_ref[...], im_ref[center:center + Cin, :],
                         preferred_element_type=f32) + be_ref[...])

    if share_x:                                                  # ks==3, dil==1
        spatial = matmul(ws_ref, bs_ref)                         # reuse im2col
    else:
        im2col(x_ref, ks, dil, dil * (ks // 2), ws_ref.shape[1])
        spatial = matmul(ws_ref, bs_ref)

    # ---- edge-detector cascade (intermediates VMEM-resident) ----
    t1_ref[:, S:S + Npc_pad] = (mask * jnp.maximum(a0, 0.0)).astype(t1_ref.dtype)
    im2col(t1_ref, 3, 1, 1, w1_ref.shape[1])
    a1 = matmul(w1_ref, b1_ref)
    t2_ref[:, S:S + Npc_pad] = (mask * jnp.maximum(a1, 0.0)).astype(t2_ref.dtype)
    im2col(t2_ref, 3, 1, 1, w2_ref.shape[1])
    a2 = matmul(w2_ref, b2_ref)
    t3_ref[:, S:S + Npc_pad] = (mask * jnp.maximum(a2, 0.0)).astype(t3_ref.dtype)
    im2col(t3_ref, 3, 1, 1, w3_ref.shape[1])
    a3 = matmul(w3_ref, b3_ref)                                  # (1, Npc_pad)
    edge_map = jax.nn.sigmoid(a3)

    # ---- blend:  em*ef + (1-em)*sp  ==  sp + em*(ef-sp)  (one fewer vmul) ----
    out = spatial + edge_map * (edge_feat - spatial)
    out_ref[...] = out.astype(out_ref.dtype)                     # (Cout, Npc_pad)
    edge_ref[...] = edge_map.astype(edge_ref.dtype)              # (1, Npc_pad)


# ----------------------------------------------------------------------------
# Host wrapper (accepts / returns NCHW like the PyTorch module)
# ----------------------------------------------------------------------------
def _pack_im2col(w, rows_pad):
    # (KH, KW, Cin, Cout) -> (Cout, rows_pad); column = (kh*KW + kw)*Cin + ci,
    # matching the kernel's im2col row layout.  Zero-padded to rows_pad.
    KH, KW, ci, co = w.shape
    rows = KH * KW * ci
    wp = jnp.transpose(w, (3, 0, 1, 2)).reshape(co, rows)
    if rows_pad > rows:
        wp = jnp.pad(wp, ((0, 0), (0, rows_pad - rows)))
    return wp


def edge_aware_conv_forward(params, x_nchw, *, use_bf16=False):
    N, Cin, H, W = x_nchw.shape
    ks = params["kernel_size"]
    dil = params["dilation"]
    Cout = params["conv_spatial"][0].shape[-1]

    P = max(1, dil * (ks // 2))          # canvas ring width (covers all convs)
    Hc, Wc = H + 2 * P, W + 2 * P
    Npc = Hc * Wc
    Npc_pad = _round_up(Npc, 128)        # lane-dense interior writes / output stores
    S = _round_up(P * (Wc + 1), 128)     # flat halo extension >= max |tap offset|
    Next = Npc_pad + 2 * S

    dot_dtype = jnp.bfloat16 if use_bf16 else jnp.float32

    # Pad the input ONCE: spatial zero ring + flat halo/lane-pad extension.
    xp = jnp.pad(x_nchw, ((0, 0), (0, 0), (P, P), (P, P)))          # (N,Cin,Hc,Wc)
    xcan = jnp.pad(xp.reshape(N, Cin, Npc),
                   ((0, 0), (0, 0), (S, S + Npc_pad - Npc))).astype(dot_dtype)

    # Interior mask over the padded canvas (1 = real pixel, 0 = ring / lane pad).
    mask = jnp.pad(jnp.ones((H, W), jnp.float32), ((P, P), (P, P))).reshape(1, Npc)
    mask = jnp.pad(mask, ((0, 0), (0, Npc_pad - Npc)))

    w0, b0 = params["ed0"]
    w1, b1 = params["ed1"]
    w2, b2 = params["ed2"]
    w3, b3 = params["ed3"]
    ws, bs = params["conv_spatial"]
    we, be = params["conv_edge"]

    share_x = (ks == 3 and dil == 1)
    r0 = _round_up(9 * Cin, 8)
    r1 = _round_up(9 * 32, 8)
    r2 = _round_up(9 * 64, 8)
    r3 = _round_up(9 * 32, 8)
    rs = r0 if share_x else _round_up(ks * ks * Cin, 8)
    max_rows = max(r0, r1, r2, r3, rs)

    operands = (
        xcan, mask,
        _pack_im2col(w0, r0).astype(dot_dtype), b0.reshape(-1, 1),
        _pack_im2col(w1, r1).astype(dot_dtype), b1.reshape(-1, 1),
        _pack_im2col(w2, r2).astype(dot_dtype), b2.reshape(-1, 1),
        _pack_im2col(w3, r3).astype(dot_dtype), b3.reshape(-1, 1),
        _pack_im2col(ws, rs).astype(dot_dtype), bs.reshape(-1, 1),
        we.reshape(Cin, Cout).T.astype(dot_dtype), be.reshape(-1, 1),
    )

    sq = pl.Squeezed()

    def cmap2(n):
        return (0, 0)

    in_specs = [
        pl.BlockSpec((sq, Cin, Next), lambda n: (n, 0, 0)),
        pl.BlockSpec((1, Npc_pad), cmap2),
        pl.BlockSpec((32, r0), cmap2), pl.BlockSpec((32, 1), cmap2),
        pl.BlockSpec((64, r1), cmap2), pl.BlockSpec((64, 1), cmap2),
        pl.BlockSpec((32, r2), cmap2), pl.BlockSpec((32, 1), cmap2),
        pl.BlockSpec((1, r3), cmap2), pl.BlockSpec((1, 1), cmap2),
        pl.BlockSpec((Cout, rs), cmap2), pl.BlockSpec((Cout, 1), cmap2),
        pl.BlockSpec((Cout, Cin), cmap2), pl.BlockSpec((Cout, 1), cmap2),
    ]
    out_specs = [pl.BlockSpec((sq, Cout, Npc_pad), lambda n: (n, 0, 0)),
                 pl.BlockSpec((sq, 1, Npc_pad), lambda n: (n, 0, 0))]

    scratch_shapes = [
        pltpu.VMEM((32, Next), dot_dtype),        # t1 canvas
        pltpu.VMEM((64, Next), dot_dtype),        # t2 canvas
        pltpu.VMEM((32, Next), dot_dtype),        # t3 canvas
        pltpu.VMEM((max_rows, Npc_pad), dot_dtype),  # shared im2col buffer
    ]

    # Advisory cost hint so XLA schedules around the fused custom call sensibly.
    macs = (9 * (Cin * 32 + 32 * 64 + 64 * 32 + 32 * 1)
            + ks * ks * Cin * Cout + Cin * Cout)
    cost = pl.CostEstimate(
        flops=2 * N * Npc * macs,
        transcendentals=N * Npc,
        bytes_accessed=4 * (xcan.size + mask.size + N * (Cout + 1) * Npc_pad))

    kernel = functools.partial(_fused_kernel, Wc=Wc, Npc_pad=Npc_pad, S=S,
                               ks=ks, dil=dil, share_x=share_x)

    out_flat, edge_flat = pl.pallas_call(
        kernel,
        out_shape=(jax.ShapeDtypeStruct((N, Cout, Npc_pad), x_nchw.dtype),
                   jax.ShapeDtypeStruct((N, 1, Npc_pad), x_nchw.dtype)),
        grid_spec=pltpu.PrefetchScalarGridSpec(
            num_scalar_prefetch=0,
            grid=(N,),
            in_specs=in_specs,
            out_specs=out_specs,
            scratch_shapes=scratch_shapes),
        compiler_params=pltpu.CompilerParams(
            dimension_semantics=("parallel",),
            vmem_limit_bytes=32 * 1024 * 1024),
        cost_estimate=cost,
    )(*operands)

    # Canvas -> NCHW: reshape and slice the interior (already channel-major).
    out = out_flat[:, :, :Npc].reshape(N, Cout, Hc, Wc)[:, :, P:P + H, P:P + W]
    edge = edge_flat[:, :, :Npc].reshape(N, 1, Hc, Wc)[:, :, P:P + H, P:P + W]
    return out, edge


# ----------------------------------------------------------------------------
# Parameter init (deterministic, PyTorch-Conv2d-style uniform init)
# ----------------------------------------------------------------------------
def _init_conv(key, kh, kw, cin, cout, dtype=jnp.float32):
    kw_key, kb_key = jax.random.split(key)
    fan_in = cin * kh * kw
    bound = 1.0 / (fan_in ** 0.5)
    w = jax.random.uniform(kw_key, (kh, kw, cin, cout), dtype, -bound, bound)
    b = jax.random.uniform(kb_key, (cout,), dtype, -bound, bound)
    return w, b


def init_edge_aware_conv(key, in_channels, out_channels, kernel_size=3,
                         dilation=1):
    keys = jax.random.split(key, 6)
    return {
        "conv_spatial": _init_conv(keys[0], kernel_size, kernel_size,
                                   in_channels, out_channels),
        "conv_edge": _init_conv(keys[1], 1, 1, in_channels, out_channels),
        "ed0": _init_conv(keys[2], 3, 3, in_channels, 32),
        "ed1": _init_conv(keys[3], 3, 3, 32, 64),
        "ed2": _init_conv(keys[4], 3, 3, 64, 32),
        "ed3": _init_conv(keys[5], 3, 3, 32, 1),
        "kernel_size": kernel_size,
        "dilation": dilation,
    }


# ----------------------------------------------------------------------------
# Pure-JAX reference (for correctness check)
# ----------------------------------------------------------------------------
def _conv_ref(x_nhwc, w_hwio, b, padding, dilation=1):
    y = lax.conv_general_dilated(
        x_nhwc, w_hwio, window_strides=(1, 1),
        padding=[(padding, padding), (padding, padding)],
        rhs_dilation=(dilation, dilation),
        dimension_numbers=("NHWC", "HWIO", "NHWC"))
    return y + b[None, None, None, :]


def edge_aware_conv_ref(params, x_nchw):
    x = jnp.transpose(x_nchw, (0, 2, 3, 1))
    ks = params["kernel_size"]
    dil = params["dilation"]
    h = jax.nn.relu(_conv_ref(x, *params["ed0"], 1))
    h = jax.nn.relu(_conv_ref(h, *params["ed1"], 1))
    h = jax.nn.relu(_conv_ref(h, *params["ed2"], 1))
    edge_map = jax.nn.sigmoid(_conv_ref(h, *params["ed3"], 1))
    spatial_feat = _conv_ref(x, *params["conv_spatial"], dil * (ks // 2), dil)
    edge_feat = _conv_ref(x, *params["conv_edge"], 0)
    out = edge_map * edge_feat + (1.0 - edge_map) * spatial_feat
    return (jnp.transpose(out, (0, 3, 1, 2)),
            jnp.transpose(edge_map, (0, 3, 1, 2)))


# ----------------------------------------------------------------------------
if __name__ == "__main__":
    key = jax.random.PRNGKey(0)
    k_param, k_x = jax.random.split(key)

    N, Cin, H, W = 2, 4, 16, 16
    Cout = 8

    params = init_edge_aware_conv(k_param, Cin, Cout, kernel_size=3, dilation=1)
    x = jax.random.normal(k_x, (N, Cin, H, W), jnp.float32)

    # use_bf16=True is the recommended setting on v6e/v7x (relax tolerances).
    out, edge_map = jax.block_until_ready(
        edge_aware_conv_forward(params, x, use_bf16=False))

    out_ref, edge_ref = edge_aware_conv_ref(params, x)
    assert out.shape == (N, Cout, H, W) and edge_map.shape == (N, 1, H, W)
    assert jnp.allclose(out, out_ref, atol=1e-3, rtol=1e-3)
    assert jnp.allclose(edge_map, edge_ref, atol=1e-3, rtol=1e-3)

    print("KERNEL_OK")
</pallas_src>

<mosaic_0001>
module attributes {stable_mosaic.version = 11 : i64} {
  func.func @_fused_kernel(%arg0: i32, %arg1: memref<1x4x640xf32, #tpu.memory_space<vmem>>, %arg2: memref<1x384xf32, #tpu.memory_space<vmem>>, %arg3: memref<32x40xf32, #tpu.memory_space<vmem>>, %arg4: memref<32x1xf32, #tpu.memory_space<vmem>>, %arg5: memref<64x288xf32, #tpu.memory_space<vmem>>, %arg6: memref<64x1xf32, #tpu.memory_space<vmem>>, %arg7: memref<32x576xf32, #tpu.memory_space<vmem>>, %arg8: memref<32x1xf32, #tpu.memory_space<vmem>>, %arg9: memref<1x288xf32, #tpu.memory_space<vmem>>, %arg10: memref<1x1xf32, #tpu.memory_space<vmem>>, %arg11: memref<8x40xf32, #tpu.memory_space<vmem>>, %arg12: memref<8x1xf32, #tpu.memory_space<vmem>>, %arg13: memref<8x4xf32, #tpu.memory_space<vmem>>, %arg14: memref<8x1xf32, #tpu.memory_space<vmem>>, %arg15: memref<1x8x384xf32, #tpu.memory_space<vmem>>, %arg16: memref<1x1x384xf32, #tpu.memory_space<vmem>>, %arg17: memref<32x640xf32, #tpu.memory_space<vmem>>, %arg18: memref<64x640xf32, #tpu.memory_space<vmem>>, %arg19: memref<32x640xf32, #tpu.memory_space<vmem>>, %arg20: memref<576x384xf32, #tpu.memory_space<vmem>>) attributes {dimension_semantics = [#tpu.dimension_semantics<parallel>], iteration_bounds = array<i64: 2>, scalar_prefetch = 0 : i64, scratch_operands = 4 : i64, tpu.core_type = #tpu.core_type<tc>, window_params = [{transform_indices = @transform_0, window_bounds = array<i64: 1, 4, 640>}, {pipeline_mode = #tpu.pipeline_mode<synchronous>, transform_indices = @transform_1, window_bounds = array<i64: 1, 384>}, {pipeline_mode = #tpu.pipeline_mode<synchronous>, transform_indices = @transform_2, window_bounds = array<i64: 32, 40>}, {pipeline_mode = #tpu.pipeline_mode<synchronous>, transform_indices = @transform_3, window_bounds = array<i64: 32, 1>}, {pipeline_mode = #tpu.pipeline_mode<synchronous>, transform_indices = @transform_4, window_bounds = array<i64: 64, 288>}, {pipeline_mode = #tpu.pipeline_mode<synchronous>, transform_indices = @transform_5, window_bounds = array<i64: 64, 1>}, {pipeline_mode = #tpu.pipeline_mode<synchronous>, transform_indices = @transform_6, window_bounds = array<i64: 32, 576>}, {pipeline_mode = #tpu.pipeline_mode<synchronous>, transform_indices = @transform_7, window_bounds = array<i64: 32, 1>}, {pipeline_mode = #tpu.pipeline_mode<synchronous>, transform_indices = @transform_8, window_bounds = array<i64: 1, 288>}, {pipeline_mode = #tpu.pipeline_mode<synchronous>, transform_indices = @transform_9, window_bounds = array<i64: 1, 1>}, {pipeline_mode = #tpu.pipeline_mode<synchronous>, transform_indices = @transform_10, window_bounds = array<i64: 8, 40>}, {pipeline_mode = #tpu.pipeline_mode<synchronous>, transform_indices = @transform_11, window_bounds = array<i64: 8, 1>}, {pipeline_mode = #tpu.pipeline_mode<synchronous>, transform_indices = @transform_12, window_bounds = array<i64: 8, 4>}, {pipeline_mode = #tpu.pipeline_mode<synchronous>, transform_indices = @transform_13, window_bounds = array<i64: 8, 1>}, {transform_indices = @transform_14, window_bounds = array<i64: 1, 8, 384>}, {transform_indices = @transform_15, window_bounds = array<i64: 1, 1, 384>}]} {
    %c0 = arith.constant 0 : index
    %c0_0 = arith.constant 0 : index
    %0 = vector.load %arg2[%c0, %c0_0] : memref<1x384xf32, #tpu.memory_space<vmem>>, vector<1x384xf32>
    %cst = arith.constant 0.000000e+00 : f32
    %1 = vector.broadcast %cst : f32 to vector<32x128xf32>
    %c0_1 = arith.constant 0 : index
    %c0_2 = arith.constant 0 : index
    %2 = vector.load %arg17[%c0_1, %c0_2] : memref<32x640xf32, #tpu.memory_space<vmem>>, vector<32x128xf32>
    tpu.vector_store %arg17[%c0_1, %c0_2], %1 {strides = array<i32>} : memref<32x640xf32, #tpu.memory_space<vmem>>, vector<32x128xf32>,
    %cst_3 = arith.constant 0.000000e+00 : f32
    %3 = vector.broadcast %cst_3 : f32 to vector<32x128xf32>
    %c0_4 = arith.constant 0 : index
    %c512 = arith.constant 512 : index
    %4 = vector.load %arg17[%c0_4, %c512] : memref<32x640xf32, #tpu.memory_space<vmem>>, vector<32x128xf32>
    tpu.vector_store %arg17[%c0_4, %c512], %3 {strides = array<i32>} : memref<32x640xf32, #tpu.memory_space<vmem>>, vector<32x128xf32>,
    %cst_5 = arith.constant 0.000000e+00 : f32
    %5 = vector.broadcast %cst_5 : f32 to vector<64x128xf32>
    %c0_6 = arith.constant 0 : index
    %c0_7 = arith.constant 0 : index
    %6 = vector.load %arg18[%c0_6, %c0_7] : memref<64x640xf32, #tpu.memory_space<vmem>>, vector<64x128xf32>
    tpu.vector_store %arg18[%c0_6, %c0_7], %5 {strides = array<i32>} : memref<64x640xf32, #tpu.memory_space<vmem>>, vector<64x128xf32>,
    %cst_8 = arith.constant 0.000000e+00 : f32
    %7 = vector.broadcast %cst_8 : f32 to vector<64x128xf32>
    %c0_9 = arith.constant 0 : index
    %c512_10 = arith.constant 512 : index
    %8 = vector.load %arg18[%c0_9, %c512_10] : memref<64x640xf32, #tpu.memory_space<vmem>>, vector<64x128xf32>
    tpu.vector_store %arg18[%c0_9, %c512_10], %7 {strides = array<i32>} : memref<64x640xf32, #tpu.memory_space<vmem>>, vector<64x128xf32>,
    %cst_11 = arith.constant 0.000000e+00 : f32
    %9 = vector.broadcast %cst_11 : f32 to vector<32x128xf32>
    %c0_12 = arith.constant 0 : index
    %c0_13 = arith.constant 0 : index
    %10 = vector.load %arg19[%c0_12, %c0_13] : memref<32x640xf32, #tpu.memory_space<vmem>>, vector<32x128xf32>
    tpu.vector_store %arg19[%c0_12, %c0_13], %9 {strides = array<i32>} : memref<32x640xf32, #tpu.memory_space<vmem>>, vector<32x128xf32>,
    %cst_14 = arith.constant 0.000000e+00 : f32
    %11 = vector.broadcast %cst_14 : f32 to vector<32x128xf32>
    %c0_15 = arith.constant 0 : index
    %c512_16 = arith.constant 512 : index
    %12 = vector.load %arg19[%c0_15, %c512_16] : memref<32x640xf32, #tpu.memory_space<vmem>>, vector<32x128xf32>
    tpu.vector_store %arg19[%c0_15, %c512_16], %11 {strides = array<i32>} : memref<32x640xf32, #tpu.memory_space<vmem>>, vector<32x128xf32>,
    %c0_17 = arith.constant 0 : index
    %c0_18 = arith.constant 0 : index
    %c109 = arith.constant 109 : index
    %13 = vector.load %arg1[%c0_17, %c0_18, %c109] : memref<1x4x640xf32, #tpu.memory_space<vmem>>, vector<1x4x384xf32>
    %14 = vector.shape_cast %13 : vector<1x4x384xf32> to vector<4x384xf32>
    %c0_19 = arith.constant 0 : index
    %c0_20 = arith.constant 0 : index
    %15 = vector.load %arg20[%c0_19, %c0_20] : memref<576x384xf32, #tpu.memory_space<vmem>>, vector<4x384xf32>
    tpu.vector_store %arg20[%c0_19, %c0_20], %14 {strides = array<i32>} : memref<576x384xf32, #tpu.memory_space<vmem>>, vector<4x384xf32>,
    %c0_21 = arith.constant 0 : index
    %c0_22 = arith.constant 0 : index
    %c110 = arith.constant 110 : index
    %16 = vector.load %arg1[%c0_21, %c0_22, %c110] : memref<1x4x640xf32, #tpu.memory_space<vmem>>, vector<1x4x384xf32>
    %17 = vector.shape_cast %16 : vector<1x4x384xf32> to vector<4x384xf32>
    %c4 = arith.constant 4 : index
    %c0_23 = arith.constant 0 : index
    %18 = vector.load %arg20[%c4, %c0_23] : memref<576x384xf32, #tpu.memory_space<vmem>>, vector<4x384xf32>
    tpu.vector_store %arg20[%c4, %c0_23], %17 {strides = array<i32>} : memref<576x384xf32, #tpu.memory_space<vmem>>, vector<4x384xf32>,
    %c0_24 = arith.constant 0 : index
    %c0_25 = arith.constant 0 : index
    %c111 = arith.constant 111 : index
    %19 = vector.load %arg1[%c0_24, %c0_25, %c111] : memref<1x4x640xf32, #tpu.memory_space<vmem>>, vector<1x4x384xf32>
    %20 = vector.shape_cast %19 : vector<1x4x384xf32> to vector<4x384xf32>
    %c8 = arith.constant 8 : index
    %c0_26 = arith.constant 0 : index
    %21 = vector.load %arg20[%c8, %c0_26] : memref<576x384xf32, #tpu.memory_space<vmem>>, vector<4x384xf32>
    tpu.vector_store %arg20[%c8, %c0_26], %20 {strides = array<i32>} : memref<576x384xf32, #tpu.memory_space<vmem>>, vector<4x384xf32>,
    %c0_27 = arith.constant 0 : index
    %c0_28 = arith.constant 0 : index
    %c127 = arith.constant 127 : index
    %22 = vector.load %arg1[%c0_27, %c0_28, %c127] : memref<1x4x640xf32, #tpu.memory_space<vmem>>, vector<1x4x384xf32>
    %23 = vector.shape_cast %22 : vector<1x4x384xf32> to vector<4x384xf32>
    %c12 = arith.constant 12 : index
    %c0_29 = arith.constant 0 : index
    %24 = vector.load %arg20[%c12, %c0_29] : memref<576x384xf32, #tpu.memory_space<vmem>>, vector<4x384xf32>
    tpu.vector_store %arg20[%c12, %c0_29], %23 {strides = array<i32>} : memref<576x384xf32, #tpu.memory_space<vmem>>, vector<4x384xf32>,
    %c0_30 = arith.constant 0 : index
    %c0_31 = arith.constant 0 : index
    %c128 = arith.constant 128 : index
    %25 = vector.load %arg1[%c0_30, %c0_31, %c128] : memref<1x4x640xf32, #tpu.memory_space<vmem>>, vector<1x4x384xf32>
    %26 = vector.shape_cast %25 : vector<1x4x384xf32> to vector<4x384xf32>
    %c16 = arith.constant 16 : index
    %c0_32 = arith.constant 0 : index
    %27 = vector.load %arg20[%c16, %c0_32] : memref<576x384xf32, #tpu.memory_space<vmem>>, vector<4x384xf32>
    tpu.vector_store %arg20[%c16, %c0_32], %26 {strides = array<i32>} : memref<576x384xf32, #tpu.memory_space<vmem>>, vector<4x384xf32>,
    %c0_33 = arith.constant 0 : index
    %c0_34 = arith.constant 0 : index
    %c129 = arith.constant 129 : index
    %28 = vector.load %arg1[%c0_33, %c0_34, %c129] : memref<1x4x640xf32, #tpu.memory_space<vmem>>, vector<1x4x384xf32>
    %29 = vector.shape_cast %28 : vector<1x4x384xf32> to vector<4x384xf32>
    %c20 = arith.constant 20 : index
    %c0_35 = arith.constant 0 : index
    %30 = vector.load %arg20[%c20, %c0_35] : memref<576x384xf32, #tpu.memory_space<vmem>>, vector<4x384xf32>
    tpu.vector_store %arg20[%c20, %c0_35], %29 {strides = array<i32>} : memref<576x384xf32, #tpu.memory_space<vmem>>, vector<4x384xf32>,
    %c0_36 = arith.constant 0 : index
    %c0_37 = arith.constant 0 : index
    %c145 = arith.constant 145 : index
    %31 = vector.load %arg1[%c0_36, %c0_37, %c145] : memref<1x4x640xf32, #tpu.memory_space<vmem>>, vector<1x4x384xf32>
    %32 = vector.shape_cast %31 : vector<1x4x384xf32> to vector<4x384xf32>
    %c24 = arith.constant 24 : index
    %c0_38 = arith.constant 0 : index
    %33 = vector.load %arg20[%c24, %c0_38] : memref<576x384xf32, #tpu.memory_space<vmem>>, vector<4x384xf32>
    tpu.vector_store %arg20[%c24, %c0_38], %32 {strides = array<i32>} : memref<576x384xf32, #tpu.memory_space<vmem>>, vector<4x384xf32>,
    %c0_39 = arith.constant 0 : index
    %c0_40 = arith.constant 0 : index
    %c146 = arith.constant 146 : index
    %34 = vector.load %arg1[%c0_39, %c0_40, %c146] : memref<1x4x640xf32, #tpu.memory_space<vmem>>, vector<1x4x384xf32>
    %35 = vector.shape_cast %34 : vector<1x4x384xf32> to vector<4x384xf32>
    %c28 = arith.constant 28 : index
    %c0_41 = arith.constant 0 : index
    %36 = vector.load %arg20[%c28, %c0_41] : memref<576x384xf32, #tpu.memory_space<vmem>>, vector<4x384xf32>
    tpu.vector_store %arg20[%c28, %c0_41], %35 {strides = array<i32>} : memref<576x384xf32, #tpu.memory_space<vmem>>, vector<4x384xf32>,
    %c0_42 = arith.constant 0 : index
    %c0_43 = arith.constant 0 : index
    %c147 = arith.constant 147 : index
    %37 = vector.load %arg1[%c0_42, %c0_43, %c147] : memref<1x4x640xf32, #tpu.memory_space<vmem>>, vector<1x4x384xf32>
    %38 = vector.shape_cast %37 : vector<1x4x384xf32> to vector<4x384xf32>
    %c32 = arith.constant 32 : index
    %c0_44 = arith.constant 0 : index
    %39 = vector.load %arg20[%c32, %c0_44] : memref<576x384xf32, #tpu.memory_space<vmem>>, vector<4x384xf32>
    tpu.vector_store %arg20[%c32, %c0_44], %38 {strides = array<i32>} : memref<576x384xf32, #tpu.memory_space<vmem>>, vector<4x384xf32>,
    %cst_45 = arith.constant 0.000000e+00 : f32
    %40 = vector.broadcast %cst_45 : f32 to vector<4x384xf32>
    %c36 = arith.constant 36 : index
    %c0_46 = arith.constant 0 : index
    %41 = vector.load %arg20[%c36, %c0_46] : memref<576x384xf32, #tpu.memory_space<vmem>>, vector<4x384xf32>
    tpu.vector_store %arg20[%c36, %c0_46], %40 {strides = array<i32>} : memref<576x384xf32, #tpu.memory_space<vmem>>, vector<4x384xf32>,
    %c0_47 = arith.constant 0 : index
    %c0_48 = arith.constant 0 : index
    %42 = vector.load %arg3[%c0_47, %c0_48] : memref<32x40xf32, #tpu.memory_space<vmem>>, vector<32x40xf32>
    %c0_49 = arith.constant 0 : index
    %c0_50 = arith.constant 0 : index
    %43 = vector.load %arg20[%c0_49, %c0_50] : memref<576x384xf32, #tpu.memory_space<vmem>>, vector<40x384xf32>
    %cst_51 = arith.constant dense<0.000000e+00> : vector<32x384xf32>
    %44 = tpu.matmul %42, %43, %cst_51 {dimension_numbers = #tpu.dot_dimension_numbers<[1], [0], [0], [1], [0, 0, 1, 1], [], []>} : vector<32x40xf32>, vector<40x384xf32>, vector<32x384xf32> -> vector<32x384xf32>
    %c0_52 = arith.constant 0 : index
    %c0_53 = arith.constant 0 : index
    %45 = vector.load %arg4[%c0_52, %c0_53] : memref<32x1xf32, #tpu.memory_space<vmem>>, vector<32x1xf32>
    %46 = vector.broadcast %45 : vector<32x1xf32> to vector<32x384xf32>
    %47 = arith.addf %44, %46 : vector<32x384xf32>
    %c0_54 = arith.constant 0 : index
    %c0_55 = arith.constant 0 : index
    %48 = vector.load %arg13[%c0_54, %c0_55] : memref<8x4xf32, #tpu.memory_space<vmem>>, vector<8x4xf32>
    %c16_56 = arith.constant 16 : index
    %c0_57 = arith.constant 0 : index
    %49 = vector.load %arg20[%c16_56, %c0_57] : memref<576x384xf32, #tpu.memory_space<vmem>>, vector<4x384xf32>
    %cst_58 = arith.constant dense<0.000000e+00> : vector<8x384xf32>
    %50 = tpu.matmul %48, %49, %cst_58 {dimension_numbers = #tpu.dot_dimension_numbers<[1], [0], [0], [1], [0, 0, 1, 1], [], []>} : vector<8x4xf32>, vector<4x384xf32>, vector<8x384xf32> -> vector<8x384xf32>
    %c0_59 = arith.constant 0 : index
    %c0_60 = arith.constant 0 : index
    %51 = vector.load %arg14[%c0_59, %c0_60] : memref<8x1xf32, #tpu.memory_space<vmem>>, vector<8x1xf32>
    %52 = vector.broadcast %51 : vector<8x1xf32> to vector<8x384xf32>
    %53 = arith.addf %50, %52 : vector<8x384xf32>
    %c0_61 = arith.constant 0 : index
    %c0_62 = arith.constant 0 : index
    %54 = vector.load %arg11[%c0_61, %c0_62] : memref<8x40xf32, #tpu.memory_space<vmem>>, vector<8x40xf32>
    %c0_63 = arith.constant 0 : index
    %c0_64 = arith.constant 0 : index
    %55 = vector.load %arg20[%c0_63, %c0_64] : memref<576x384xf32, #tpu.memory_space<vmem>>, vector<40x384xf32>
    %cst_65 = arith.constant dense<0.000000e+00> : vector<8x384xf32>
    %56 = tpu.matmul %54, %55, %cst_65 {dimension_numbers = #tpu.dot_dimension_numbers<[1], [0], [0], [1], [0, 0, 1, 1], [], []>} : vector<8x40xf32>, vector<40x384xf32>, vector<8x384xf32> -> vector<8x384xf32>
    %c0_66 = arith.constant 0 : index
    %c0_67 = arith.constant 0 : index
    %57 = vector.load %arg12[%c0_66, %c0_67] : memref<8x1xf32, #tpu.memory_space<vmem>>, vector<8x1xf32>
    %58 = vector.broadcast %57 : vector<8x1xf32> to vector<8x384xf32>
    %59 = arith.addf %56, %58 : vector<8x384xf32>
    %cst_68 = arith.constant 0.000000e+00 : f32
    %60 = vector.broadcast %cst_68 : f32 to vector<32x384xf32>
    %61 = arith.maximumf %47, %60 : vector<32x384xf32>
    %62 = vector.broadcast %0 : vector<1x384xf32> to vector<32x384xf32>
    %63 = arith.mulf %62, %61 : vector<32x384xf32>
    %c0_69 = arith.constant 0 : index
    %c128_70 = arith.constant 128 : index
    %64 = vector.load %arg17[%c0_69, %c128_70] : memref<32x640xf32, #tpu.memory_space<vmem>>, vector<32x384xf32>
    tpu.vector_store %arg17[%c0_69, %c128_70], %63 {strides = array<i32>} : memref<32x640xf32, #tpu.memory_space<vmem>>, vector<32x384xf32>,
    %c0_71 = arith.constant 0 : index
    %c109_72 = arith.constant 109 : index
    %65 = vector.load %arg17[%c0_71, %c109_72] : memref<32x640xf32, #tpu.memory_space<vmem>>, vector<32x384xf32>
    %c0_73 = arith.constant 0 : index
    %c0_74 = arith.constant 0 : index
    %66 = vector.load %arg20[%c0_73, %c0_74] : memref<576x384xf32, #tpu.memory_space<vmem>>, vector<32x384xf32>
    tpu.vector_store %arg20[%c0_73, %c0_74], %65 {strides = array<i32>} : memref<576x384xf32, #tpu.memory_space<vmem>>, vector<32x384xf32>,
    %c0_75 = arith.constant 0 : index
    %c110_76 = arith.constant 110 : index
    %67 = vector.load %arg17[%c0_75, %c110_76] : memref<32x640xf32, #tpu.memory_space<vmem>>, vector<32x384xf32>
    %c32_77 = arith.constant 32 : index
    %c0_78 = arith.constant 0 : index
    %68 = vector.load %arg20[%c32_77, %c0_78] : memref<576x384xf32, #tpu.memory_space<vmem>>, vector<32x384xf32>
    tpu.vector_store %arg20[%c32_77, %c0_78], %67 {strides = array<i32>} : memref<576x384xf32, #tpu.memory_space<vmem>>, vector<32x384xf32>,
    %c0_79 = arith.constant 0 : index
    %c111_80 = arith.constant 111 : index
    %69 = vector.load %arg17[%c0_79, %c111_80] : memref<32x640xf32, #tpu.memory_space<vmem>>, vector<32x384xf32>
    %c64 = arith.constant 64 : index
    %c0_81 = arith.constant 0 : index
    %70 = vector.load %arg20[%c64, %c0_81] : memref<576x384xf32, #tpu.memory_space<vmem>>, vector<32x384xf32>
    tpu.vector_store %arg20[%c64, %c0_81], %69 {strides = array<i32>} : memref<576x384xf32, #tpu.memory_space<vmem>>, vector<32x384xf32>,
    %c0_82 = arith.constant 0 : index
    %c127_83 = arith.constant 127 : index
    %71 = vector.load %arg17[%c0_82, %c127_83] : memref<32x640xf32, #tpu.memory_space<vmem>>, vector<32x384xf32>
    %c96 = arith.constant 96 : index
    %c0_84 = arith.constant 0 : index
    %72 = vector.load %arg20[%c96, %c0_84] : memref<576x384xf32, #tpu.memory_space<vmem>>, vector<32x384xf32>
    tpu.vector_store %arg20[%c96, %c0_84], %71 {strides = array<i32>} : memref<576x384xf32, #tpu.memory_space<vmem>>, vector<32x384xf32>,
    %c0_85 = arith.constant 0 : index
    %c128_86 = arith.constant 128 : index
    %73 = vector.load %arg17[%c0_85, %c128_86] : memref<32x640xf32, #tpu.memory_space<vmem>>, vector<32x384xf32>
    %c128_87 = arith.constant 128 : index
    %c0_88 = arith.constant 0 : index
    %74 = vector.load %arg20[%c128_87, %c0_88] : memref<576x384xf32, #tpu.memory_space<vmem>>, vector<32x384xf32>
    tpu.vector_store %arg20[%c128_87, %c0_88], %73 {strides = array<i32>} : memref<576x384xf32, #tpu.memory_space<vmem>>, vector<32x384xf32>,
    %c0_89 = arith.constant 0 : index
    %c129_90 = arith.constant 129 : index
    %75 = vector.load %arg17[%c0_89, %c129_90] : memref<32x640xf32, #tpu.memory_space<vmem>>, vector<32x384xf32>
    %c160 = arith.constant 160 : index
    %c0_91 = arith.constant 0 : index
    %76 = vector.load %arg20[%c160, %c0_91] : memref<576x384xf32, #tpu.memory_space<vmem>>, vector<32x384xf32>
    tpu.vector_store %arg20[%c160, %c0_91], %75 {strides = array<i32>} : memref<576x384xf32, #tpu.memory_space<vmem>>, vector<32x384xf32>,
    %c0_92 = arith.constant 0 : index
    %c145_93 = arith.constant 145 : index
    %77 = vector.load %arg17[%c0_92, %c145_93] : memref<32x640xf32, #tpu.memory_space<vmem>>, vector<32x384xf32>
    %c192 = arith.constant 192 : index
    %c0_94 = arith.constant 0 : index
    %78 = vector.load %arg20[%c192, %c0_94] : memref<576x384xf32, #tpu.memory_space<vmem>>, vector<32x384xf32>
    tpu.vector_store %arg20[%c192, %c0_94], %77 {strides = array<i32>} : memref<576x384xf32, #tpu.memory_space<vmem>>, vector<32x384xf32>,
    %c0_95 = arith.constant 0 : index
    %c146_96 = arith.constant 146 : index
    %79 = vector.load %arg17[%c0_95, %c146_96] : memref<32x640xf32, #tpu.memory_space<vmem>>, vector<32x384xf32>
    %c224 = arith.constant 224 : index
    %c0_97 = arith.constant 0 : index
    %80 = vector.load %arg20[%c224, %c0_97] : memref<576x384xf32, #tpu.memory_space<vmem>>, vector<32x384xf32>
    tpu.vector_store %arg20[%c224, %c0_97], %79 {strides = array<i32>} : memref<576x384xf32, #tpu.memory_space<vmem>>, vector<32x384xf32>,
    %c0_98 = arith.constant 0 : index
    %c147_99 = arith.constant 147 : index
    %81 = vector.load %arg17[%c0_98, %c147_99] : memref<32x640xf32, #tpu.memory_space<vmem>>, vector<32x384xf32>
    %c256 = arith.constant 256 : index
    %c0_100 = arith.constant 0 : index
    %82 = vector.load %arg20[%c256, %c0_100] : memref<576x384xf32, #tpu.memory_space<vmem>>, vector<32x384xf32>
    tpu.vector_store %arg20[%c256, %c0_100], %81 {strides = array<i32>} : memref<576x384xf32, #tpu.memory_space<vmem>>, vector<32x384xf32>,
    %c0_101 = arith.constant 0 : index
    %c0_102 = arith.constant 0 : index
    %83 = vector.load %arg5[%c0_101, %c0_102] : memref<64x288xf32, #tpu.memory_space<vmem>>, vector<64x288xf32>
    %c0_103 = arith.constant 0 : index
    %c0_104 = arith.constant 0 : index
    %84 = vector.load %arg20[%c0_103, %c0_104] : memref<576x384xf32, #tpu.memory_space<vmem>>, vector<288x384xf32>
    %cst_105 = arith.constant dense<0.000000e+00> : vector<64x384xf32>
    %85 = tpu.matmul %83, %84, %cst_105 {dimension_numbers = #tpu.dot_dimension_numbers<[1], [0], [0], [1], [0, 0, 1, 1], [], []>} : vector<64x288xf32>, vector<288x384xf32>, vector<64x384xf32> -> vector<64x384xf32>
    %c0_106 = arith.constant 0 : index
    %c0_107 = arith.constant 0 : index
    %86 = vector.load %arg6[%c0_106, %c0_107] : memref<64x1xf32, #tpu.memory_space<vmem>>, vector<64x1xf32>
    %87 = vector.broadcast %86 : vector<64x1xf32> to vector<64x384xf32>
    %88 = arith.addf %85, %87 : vector<64x384xf32>
    %cst_108 = arith.constant 0.000000e+00 : f32
    %89 = vector.broadcast %cst_108 : f32 to vector<64x384xf32>
    %90 = arith.maximumf %88, %89 : vector<64x384xf32>
    %91 = vector.broadcast %0 : vector<1x384xf32> to vector<64x384xf32>
    %92 = arith.mulf %91, %90 : vector<64x384xf32>
    %c0_109 = arith.constant 0 : index
    %c128_110 = arith.constant 128 : index
    %93 = vector.load %arg18[%c0_109, %c128_110] : memref<64x640xf32, #tpu.memory_space<vmem>>, vector<64x384xf32>
    tpu.vector_store %arg18[%c0_109, %c128_110], %92 {strides = array<i32>} : memref<64x640xf32, #tpu.memory_space<vmem>>, vector<64x384xf32>,
    %c0_111 = arith.constant 0 : index
    %c109_112 = arith.constant 109 : index
    %94 = vector.load %arg18[%c0_111, %c109_112] : memref<64x640xf32, #tpu.memory_space<vmem>>, vector<64x384xf32>
    %c0_113 = arith.constant 0 : index
    %c0_114 = arith.constant 0 : index
    %95 = vector.load %arg20[%c0_113, %c0_114] : memref<576x384xf32, #tpu.memory_space<vmem>>, vector<64x384xf32>
    tpu.vector_store %arg20[%c0_113, %c0_114], %94 {strides = array<i32>} : memref<576x384xf32, #tpu.memory_space<vmem>>, vector<64x384xf32>,
    %c0_115 = arith.constant 0 : index
    %c110_116 = arith.constant 110 : index
    %96 = vector.load %arg18[%c0_115, %c110_116] : memref<64x640xf32, #tpu.memory_space<vmem>>, vector<64x384xf32>
    %c64_117 = arith.constant 64 : index
    %c0_118 = arith.constant 0 : index
    %97 = vector.load %arg20[%c64_117, %c0_118] : memref<576x384xf32, #tpu.memory_space<vmem>>, vector<64x384xf32>
    tpu.vector_store %arg20[%c64_117, %c0_118], %96 {strides = array<i32>} : memref<576x384xf32, #tpu.memory_space<vmem>>, vector<64x384xf32>,
    %c0_119 = arith.constant 0 : index
    %c111_120 = arith.constant 111 : index
    %98 = vector.load %arg18[%c0_119, %c111_120] : memref<64x640xf32, #tpu.memory_space<vmem>>, vector<64x384xf32>
    %c128_121 = arith.constant 128 : index
    %c0_122 = arith.constant 0 : index
    %99 = vector.load %arg20[%c128_121, %c0_122] : memref<576x384xf32, #tpu.memory_space<vmem>>, vector<64x384xf32>
    tpu.vector_store %arg20[%c128_121, %c0_122], %98 {strides = array<i32>} : memref<576x384xf32, #tpu.memory_space<vmem>>, vector<64x384xf32>,
    %c0_123 = arith.constant 0 : index
    %c127_124 = arith.constant 127 : index
    %100 = vector.load %arg18[%c0_123, %c127_124] : memref<64x640xf32, #tpu.memory_space<vmem>>, vector<64x384xf32>
    %c192_125 = arith.constant 192 : index
    %c0_126 = arith.constant 0 : index
    %101 = vector.load %arg20[%c192_125, %c0_126] : memref<576x384xf32, #tpu.memory_space<vmem>>, vector<64x384xf32>
    tpu.vector_store %arg20[%c192_125, %c0_126], %100 {strides = array<i32>} : memref<576x384xf32, #tpu.memory_space<vmem>>, vector<64x384xf32>,
    %c0_127 = arith.constant 0 : index
    %c128_128 = arith.constant 128 : index
    %102 = vector.load %arg18[%c0_127, %c128_128] : memref<64x640xf32, #tpu.memory_space<vmem>>, vector<64x384xf32>
    %c256_129 = arith.constant 256 : index
    %c0_130 = arith.constant 0 : index
    %103 = vector.load %arg20[%c256_129, %c0_130] : memref<576x384xf32, #tpu.memory_space<vmem>>, vector<64x384xf32>
    tpu.vector_store %arg20[%c256_129, %c0_130], %102 {strides = array<i32>} : memref<576x384xf32, #tpu.memory_space<vmem>>, vector<64x384xf32>,
    %c0_131 = arith.constant 0 : index
    %c129_132 = arith.constant 129 : index
    %104 = vector.load %arg18[%c0_131, %c129_132] : memref<64x640xf32, #tpu.memory_space<vmem>>, vector<64x384xf32>
    %c320 = arith.constant 320 : index
    %c0_133 = arith.constant 0 : index
    %105 = vector.load %arg20[%c320, %c0_133] : memref<576x384xf32, #tpu.memory_space<vmem>>, vector<64x384xf32>
    tpu.vector_store %arg20[%c320, %c0_133], %104 {strides = array<i32>} : memref<576x384xf32, #tpu.memory_space<vmem>>, vector<64x384xf32>,
    %c0_134 = arith.constant 0 : index
    %c145_135 = arith.constant 145 : index
    %106 = vector.load %arg18[%c0_134, %c145_135] : memref<64x640xf32, #tpu.memory_space<vmem>>, vector<64x384xf32>
    %c384 = arith.constant 384 : index
    %c0_136 = arith.constant 0 : index
    %107 = vector.load %arg20[%c384, %c0_136] : memref<576x384xf32, #tpu.memory_space<vmem>>, vector<64x384xf32>
    tpu.vector_store %arg20[%c384, %c0_136], %106 {strides = array<i32>} : memref<576x384xf32, #tpu.memory_space<vmem>>, vector<64x384xf32>,
    %c0_137 = arith.constant 0 : index
    %c146_138 = arith.constant 146 : index
    %108 = vector.load %arg18[%c0_137, %c146_138] : memref<64x640xf32, #tpu.memory_space<vmem>>, vector<64x384xf32>
    %c448 = arith.constant 448 : index
    %c0_139 = arith.constant 0 : index
    %109 = vector.load %arg20[%c448, %c0_139] : memref<576x384xf32, #tpu.memory_space<vmem>>, vector<64x384xf32>
    tpu.vector_store %arg20[%c448, %c0_139], %108 {strides = array<i32>} : memref<576x384xf32, #tpu.memory_space<vmem>>, vector<64x384xf32>,
    %c0_140 = arith.constant 0 : index
    %c147_141 = arith.constant 147 : index
    %110 = vector.load %arg18[%c0_140, %c147_141] : memref<64x640xf32, #tpu.memory_space<vmem>>, vector<64x384xf32>
    %c512_142 = arith.constant 512 : index
    %c0_143 = arith.constant 0 : index
    %111 = vector.load %arg20[%c512_142, %c0_143] : memref<576x384xf32, #tpu.memory_space<vmem>>, vector<64x384xf32>
    tpu.vector_store %arg20[%c512_142, %c0_143], %110 {strides = array<i32>} : memref<576x384xf32, #tpu.memory_space<vmem>>, vector<64x384xf32>,
    %c0_144 = arith.constant 0 : index
    %c0_145 = arith.constant 0 : index
    %112 = vector.load %arg7[%c0_144, %c0_145] : memref<32x576xf32, #tpu.memory_space<vmem>>, vector<32x576xf32>
    %c0_146 = arith.constant 0 : index
    %c0_147 = arith.constant 0 : index
    %113 = vector.load %arg20[%c0_146, %c0_147] : memref<576x384xf32, #tpu.memory_space<vmem>>, vector<576x384xf32>
    %cst_148 = arith.constant dense<0.000000e+00> : vector<32x384xf32>
    %114 = tpu.matmul %112, %113, %cst_148 {dimension_numbers = #tpu.dot_dimension_numbers<[1], [0], [0], [1], [0, 0, 1, 1], [], []>} : vector<32x576xf32>, vector<576x384xf32>, vector<32x384xf32> -> vector<32x384xf32>
    %c0_149 = arith.constant 0 : index
    %c0_150 = arith.constant 0 : index
    %115 = vector.load %arg8[%c0_149, %c0_150] : memref<32x1xf32, #tpu.memory_space<vmem>>, vector<32x1xf32>
    %116 = vector.broadcast %115 : vector<32x1xf32> to vector<32x384xf32>
    %117 = arith.addf %114, %116 : vector<32x384xf32>
    %cst_151 = arith.constant 0.000000e+00 : f32
    %118 = vector.broadcast %cst_151 : f32 to vector<32x384xf32>
    %119 = arith.maximumf %117, %118 : vector<32x384xf32>
    %120 = vector.broadcast %0 : vector<1x384xf32> to vector<32x384xf32>
    %121 = arith.mulf %120, %119 : vector<32x384xf32>
    %c0_152 = arith.constant 0 : index
    %c128_153 = arith.constant 128 : index
    %122 = vector.load %arg19[%c0_152, %c128_153] : memref<32x640xf32, #tpu.memory_space<vmem>>, vector<32x384xf32>
    tpu.vector_store %arg19[%c0_152, %c128_153], %121 {strides = array<i32>} : memref<32x640xf32, #tpu.memory_space<vmem>>, vector<32x384xf32>,
    %c0_154 = arith.constant 0 : index
    %c109_155 = arith.constant 109 : index
    %123 = vector.load %arg19[%c0_154, %c109_155] : memref<32x640xf32, #tpu.memory_space<vmem>>, vector<32x384xf32>
    %c0_156 = arith.constant 0 : index
    %c0_157 = arith.constant 0 : index
    %124 = vector.load %arg20[%c0_156, %c0_157] : memref<576x384xf32, #tpu.memory_space<vmem>>, vector<32x384xf32>
    tpu.vector_store %arg20[%c0_156, %c0_157], %123 {strides = array<i32>} : memref<576x384xf32, #tpu.memory_space<vmem>>, vector<32x384xf32>,
    %c0_158 = arith.constant 0 : index
    %c110_159 = arith.constant 110 : index
    %125 = vector.load %arg19[%c0_158, %c110_159] : memref<32x640xf32, #tpu.memory_space<vmem>>, vector<32x384xf32>
    %c32_160 = arith.constant 32 : index
    %c0_161 = arith.constant 0 : index
    %126 = vector.load %arg20[%c32_160, %c0_161] : memref<576x384xf32, #tpu.memory_space<vmem>>, vector<32x384xf32>
    tpu.vector_store %arg20[%c32_160, %c0_161], %125 {strides = array<i32>} : memref<576x384xf32, #tpu.memory_space<vmem>>, vector<32x384xf32>,
    %c0_162 = arith.constant 0 : index
    %c111_163 = arith.constant 111 : index
    %127 = vector.load %arg19[%c0_162, %c111_163] : memref<32x640xf32, #tpu.memory_space<vmem>>, vector<32x384xf32>
    %c64_164 = arith.constant 64 : index
    %c0_165 = arith.constant 0 : index
    %128 = vector.load %arg20[%c64_164, %c0_165] : memref<576x384xf32, #tpu.memory_space<vmem>>, vector<32x384xf32>
    tpu.vector_store %arg20[%c64_164, %c0_165], %127 {strides = array<i32>} : memref<576x384xf32, #tpu.memory_space<vmem>>, vector<32x384xf32>,
    %c0_166 = arith.constant 0 : index
    %c127_167 = arith.constant 127 : index
    %129 = vector.load %arg19[%c0_166, %c127_167] : memref<32x640xf32, #tpu.memory_space<vmem>>, vector<32x384xf32>
    %c96_168 = arith.constant 96 : index
    %c0_169 = arith.constant 0 : index
    %130 = vector.load %arg20[%c96_168, %c0_169] : memref<576x384xf32, #tpu.memory_space<vmem>>, vector<32x384xf32>
    tpu.vector_store %arg20[%c96_168, %c0_169], %129 {strides = array<i32>} : memref<576x384xf32, #tpu.memory_space<vmem>>, vector<32x384xf32>,
    %c0_170 = arith.constant 0 : index
    %c128_171 = arith.constant 128 : index
    %131 = vector.load %arg19[%c0_170, %c128_171] : memref<32x640xf32, #tpu.memory_space<vmem>>, vector<32x384xf32>
    %c128_172 = arith.constant 128 : index
    %c0_173 = arith.constant 0 : index
    %132 = vector.load %arg20[%c128_172, %c0_173] : memref<576x384xf32, #tpu.memory_space<vmem>>, vector<32x384xf32>
    tpu.vector_store %arg20[%c128_172, %c0_173], %131 {strides = array<i32>} : memref<576x384xf32, #tpu.memory_space<vmem>>, vector<32x384xf32>,
    %c0_174 = arith.constant 0 : index
    %c129_175 = arith.constant 129 : index
    %133 = vector.load %arg19[%c0_174, %c129_175] : memref<32x640xf32, #tpu.memory_space<vmem>>, vector<32x384xf32>
    %c160_176 = arith.constant 160 : index
    %c0_177 = arith.constant 0 : index
    %134 = vector.load %arg20[%c160_176, %c0_177] : memref<576x384xf32, #tpu.memory_space<vmem>>, vector<32x384xf32>
    tpu.vector_store %arg20[%c160_176, %c0_177], %133 {strides = array<i32>} : memref<576x384xf32, #tpu.memory_space<vmem>>, vector<32x384xf32>,
    %c0_178 = arith.constant 0 : index
    %c145_179 = arith.constant 145 : index
    %135 = vector.load %arg19[%c0_178, %c145_179] : memref<32x640xf32, #tpu.memory_space<vmem>>, vector<32x384xf32>
    %c192_180 = arith.constant 192 : index
    %c0_181 = arith.constant 0 : index
    %136 = vector.load %arg20[%c192_180, %c0_181] : memref<576x384xf32, #tpu.memory_space<vmem>>, vector<32x384xf32>
    tpu.vector_store %arg20[%c192_180, %c0_181], %135 {strides = array<i32>} : memref<576x384xf32, #tpu.memory_space<vmem>>, vector<32x384xf32>,
    %c0_182 = arith.constant 0 : index
    %c146_183 = arith.constant 146 : index
    %137 = vector.load %arg19[%c0_182, %c146_183] : memref<32x640xf32, #tpu.memory_space<vmem>>, vector<32x384xf32>
    %c224_184 = arith.constant 224 : index
    %c0_185 = arith.constant 0 : index
    %138 = vector.load %arg20[%c224_184, %c0_185] : memref<576x384xf32, #tpu.memory_space<vmem>>, vector<32x384xf32>
    tpu.vector_store %arg20[%c224_184, %c0_185], %137 {strides = array<i32>} : memref<576x384xf32, #tpu.memory_space<vmem>>, vector<32x384xf32>,
    %c0_186 = arith.constant 0 : index
    %c147_187 = arith.constant 147 : index
    %139 = vector.load %arg19[%c0_186, %c147_187] : memref<32x640xf32, #tpu.memory_space<vmem>>, vector<32x384xf32>
    %c256_188 = arith.constant 256 : index
    %c0_189 = arith.constant 0 : index
    %140 = vector.load %arg20[%c256_188, %c0_189] : memref<576x384xf32, #tpu.memory_space<vmem>>, vector<32x384xf32>
    tpu.vector_store %arg20[%c256_188, %c0_189], %139 {strides = array<i32>} : memref<576x384xf32, #tpu.memory_space<vmem>>, vector<32x384xf32>,
    %c0_190 = arith.constant 0 : index
    %c0_191 = arith.constant 0 : index
    %141 = vector.load %arg9[%c0_190, %c0_191] : memref<1x288xf32, #tpu.memory_space<vmem>>, vector<1x288xf32>
    %c0_192 = arith.constant 0 : index
    %c0_193 = arith.constant 0 : index
    %142 = vector.load %arg20[%c0_192, %c0_193] : memref<576x384xf32, #tpu.memory_space<vmem>>, vector<288x384xf32>
    %cst_194 = arith.constant dense<0.000000e+00> : vector<1x384xf32>
    %143 = tpu.matmul %141, %142, %cst_194 {dimension_numbers = #tpu.dot_dimension_numbers<[1], [0], [0], [1], [0, 0, 1, 1], [], []>} : vector<1x288xf32>, vector<288x384xf32>, vector<1x384xf32> -> vector<1x384xf32>
    %c0_195 = arith.constant 0 : index
    %c0_196 = arith.constant 0 : index
    %144 = vector.load %arg10[%c0_195, %c0_196] : memref<1x1xf32, #tpu.memory_space<vmem>>, vector<1x1xf32>
    %145 = vector.broadcast %144 : vector<1x1xf32> to vector<1x384xf32>
    %146 = arith.addf %143, %145 : vector<1x384xf32>
    %147 = arith.negf %146 : vector<1x384xf32>
    %148 = math.exp %147 : vector<1x384xf32>
    %cst_197 = arith.constant 1.000000e+00 : f32
    %149 = vector.broadcast %cst_197 : f32 to vector<1x384xf32>
    %150 = arith.addf %149, %148 : vector<1x384xf32>
    %151 = arith.divf %149, %150 : vector<1x384xf32>
    %152 = arith.subf %53, %59 : vector<8x384xf32>
    %153 = vector.broadcast %151 : vector<1x384xf32> to vector<8x384xf32>
    %154 = arith.mulf %153, %152 : vector<8x384xf32>
    %155 = arith.addf %59, %154 : vector<8x384xf32>
    %c0_198 = arith.constant 0 : index
    %c0_199 = arith.constant 0 : index
    %c0_200 = arith.constant 0 : index
    %156 = vector.load %arg15[%c0_198, %c0_199, %c0_200] : memref<1x8x384xf32, #tpu.memory_space<vmem>>, vector<1x8x384xf32>
    %157 = vector.shape_cast %156 : vector<1x8x384xf32> to vector<8x384xf32>
    %158 = vector.shape_cast %155 : vector<8x384xf32> to vector<1x8x384xf32>
    tpu.vector_store %arg15[%c0_198, %c0_199, %c0_200], %158 {strides = array<i32>} : memref<1x8x384xf32, #tpu.memory_space<vmem>>, vector<1x8x384xf32>,
    %c0_201 = arith.constant 0 : index
    %c0_202 = arith.constant 0 : index
    %c0_203 = arith.constant 0 : index
    %159 = vector.load %arg16[%c0_201, %c0_202, %c0_203] : memref<1x1x384xf32, #tpu.memory_space<vmem>>, vector<1x1x384xf32>
    %160 = vector.shape_cast %159 : vector<1x1x384xf32> to vector<1x384xf32>
    %161 = vector.shape_cast %151 : vector<1x384xf32> to vector<1x1x384xf32>
    tpu.vector_store %arg16[%c0_201, %c0_202, %c0_203], %161 {strides = array<i32>} : memref<1x1x384xf32, #tpu.memory_space<vmem>>, vector<1x1x384xf32>,
    return
  }
  func.func @transform_0(%arg0: i32) -> (i32, i32, i32) {
    %c0_i32 = arith.constant 0 : i32
    %c0_i32_0 = arith.constant 0 : i32
    %c0_i32_1 = arith.constant 0 : i32
    return %arg0, %c0_i32, %c0_i32_0 : i32, i32, i32
  }
  func.func @transform_1(%arg0: i32) -> (i32, i32) {
    %c0_i32 = arith.constant 0 : i32
    %c0_i32_0 = arith.constant 0 : i32
    %c0_i32_1 = arith.constant 0 : i32
    return %c0_i32, %c0_i32_0 : i32, i32
  }
  func.func @transform_2(%arg0: i32) -> (i32, i32) {
    %c0_i32 = arith.constant 0 : i32
    %c0_i32_0 = arith.constant 0 : i32
    %c0_i32_1 = arith.constant 0 : i32
    return %c0_i32, %c0_i32_0 : i32, i32
  }
  func.func @transform_3(%arg0: i32) -> (i32, i32) {
    %c0_i32 = arith.constant 0 : i32
    %c0_i32_0 = arith.constant 0 : i32
    %c0_i32_1 = arith.constant 0 : i32
    return %c0_i32, %c0_i32_0 : i32, i32
  }
  func.func @transform_4(%arg0: i32) -> (i32, i32) {
    %c0_i32 = arith.constant 0 : i32
    %c0_i32_0 = arith.constant 0 : i32
    %c0_i32_1 = arith.constant 0 : i32
    return %c0_i32, %c0_i32_0 : i32, i32
  }
  func.func @transform_5(%arg0: i32) -> (i32, i32) {
    %c0_i32 = arith.constant 0 : i32
    %c0_i32_0 = arith.constant 0 : i32
    %c0_i32_1 = arith.constant 0 : i32
    return %c0_i32, %c0_i32_0 : i32, i32
  }
  func.func @transform_6(%arg0: i32) -> (i32, i32) {
    %c0_i32 = arith.constant 0 : i32
    %c0_i32_0 = arith.constant 0 : i32
    %c0_i32_1 = arith.constant 0 : i32
    return %c0_i32, %c0_i32_0 : i32, i32
  }
  func.func @transform_7(%arg0: i32) -> (i32, i32) {
    %c0_i32 = arith.constant 0 : i32
    %c0_i32_0 = arith.constant 0 : i32
    %c0_i32_1 = arith.constant 0 : i32
    return %c0_i32, %c0_i32_0 : i32, i32
  }
  func.func @transform_8(%arg0: i32) -> (i32, i32) {
    %c0_i32 = arith.constant 0 : i32
    %c0_i32_0 = arith.constant 0 : i32
    %c0_i32_1 = arith.constant 0 : i32
    return %c0_i32, %c0_i32_0 : i32, i32
  }
  func.func @transform_9(%arg0: i32) -> (i32, i32) {
    %c0_i32 = arith.constant 0 : i32
    %c0_i32_0 = arith.constant 0 : i32
    %c0_i32_1 = arith.constant 0 : i32
    return %c0_i32, %c0_i32_0 : i32, i32
  }
  func.func @transform_10(%arg0: i32) -> (i32, i32) {
    %c0_i32 = arith.constant 0 : i32
    %c0_i32_0 = arith.constant 0 : i32
    %c0_i32_1 = arith.constant 0 : i32
    return %c0_i32, %c0_i32_0 : i32, i32
  }
  func.func @transform_11(%arg0: i32) -> (i32, i32) {
    %c0_i32 = arith.constant 0 : i32
    %c0_i32_0 = arith.constant 0 : i32
    %c0_i32_1 = arith.constant 0 : i32
    return %c0_i32, %c0_i32_0 : i32, i32
  }
  func.func @transform_12(%arg0: i32) -> (i32, i32) {
    %c0_i32 = arith.constant 0 : i32
    %c0_i32_0 = arith.constant 0 : i32
    %c0_i32_1 = arith.constant 0 : i32
    return %c0_i32, %c0_i32_0 : i32, i32
  }
  func.func @transform_13(%arg0: i32) -> (i32, i32) {
    %c0_i32 = arith.constant 0 : i32
    %c0_i32_0 = arith.constant 0 : i32
    %c0_i32_1 = arith.constant 0 : i32
    return %c0_i32, %c0_i32_0 : i32, i32
  }
  func.func @transform_14(%arg0: i32) -> (i32, i32, i32) {
    %c0_i32 = arith.constant 0 : i32
    %c0_i32_0 = arith.constant 0 : i32
    %c0_i32_1 = arith.constant 0 : i32
    return %arg0, %c0_i32, %c0_i32_0 : i32, i32, i32
  }
  func.func @transform_15(%arg0: i32) -> (i32, i32, i32) {
    %c0_i32 = arith.constant 0 : i32
    %c0_i32_0 = arith.constant 0 : i32
    %c0_i32_1 = arith.constant 0 : i32
    return %arg0, %c0_i32, %c0_i32_0 : i32, i32, i32
  }
}

</mosaic_0001>

<llo_original>
// kernel: tpu_custom_call.1
$region0: #{tpu_custom_call.1}
  #allocation0 [shape = 'u32[]', space=smem, size = 0x4, offset = 0x4, fixed_abs, tag = 'smem constant byte address 0x4 - core index']
  #allocation1 [shape = 'u32[144,128]{1,0:T(1,128)}', space=vmem, size = 0x12000, scoped, tag = 'internal scratch']
  #allocation2 [shape = 'f32[32,640]{1,0:T(8,128)}', space=vmem, size = 0x14000, scoped, tag = 'scratch operand']
  #allocation3 [shape = 'f32[64,640]{1,0:T(8,128)}', space=vmem, size = 0x28000, scoped, tag = 'scratch operand']
  #allocation4 [shape = 'f32[32,640]{1,0:T(8,128)}', space=vmem, size = 0x14000, scoped, tag = 'scratch operand']
  #allocation5 [shape = 'f32[576,384]{1,0:T(8,128)}', space=vmem, size = 0xd8000, scoped, tag = 'scratch operand']
  #allocation6 [shape = 'f32[1,1]{1,0:T(1,128)S(1)}', space=vmem, size = 0x200, scoped, tag = 'scoped memory for tpu_custom_call.1']
  %s0 = inlined_call_operand.hbm [shape: f32[2,4,640], index: 0, kind: input, shape index: {}]
  %s1 = inlined_call_operand.vmem [shape: f32[1,384], index: 1, kind: input, shape index: {}]
  %s2 = inlined_call_operand.hbm [shape: f32[32,40], index: 2, kind: input, shape index: {}]
  %s3 = inlined_call_operand.vmem [shape: f32[32,1], index: 3, kind: input, shape index: {}]
  %s4 = inlined_call_operand.hbm [shape: f32[64,288], index: 4, kind: input, shape index: {}]
  %s5 = inlined_call_operand.vmem [shape: f32[64,1], index: 5, kind: input, shape index: {}]
  %s6 = inlined_call_operand.vmem [shape: f32[32,576], index: 6, kind: input, shape index: {}]
  %s7 = inlined_call_operand.vmem [shape: f32[32,1], index: 7, kind: input, shape index: {}]
  %s8 = inlined_call_operand.vmem [shape: f32[1,288], index: 8, kind: input, shape index: {}]
  %s9 = inlined_call_operand.<no memory space> [shape: f32[1,1], index: 9, kind: input, shape index: {}]
  %s10 = inlined_call_operand.vmem [shape: f32[8,40], index: 10, kind: input, shape index: {}]
  %s11 = inlined_call_operand.vmem [shape: f32[8,1], index: 11, kind: input, shape index: {}]
  %s12 = inlined_call_operand.vmem [shape: f32[8,4], index: 12, kind: input, shape index: {}]
  %s13 = inlined_call_operand.vmem [shape: f32[8,1], index: 13, kind: input, shape index: {}]
  %s14 = inlined_call_operand.hbm [shape: f32[2,8,384], index: 14, kind: output, shape index: {0}]
  %s15 = inlined_call_operand.hbm [shape: f32[2,1,384], index: 15, kind: output, shape index: {1}]
  %16 = xla_tuple %s14, %s15
  %s17 = sld [smem:[#allocation0]]
  $region109: #{tpu_custom_call.1} parent=0
    _
  %s19 = ssub.s32 1, %s17
  %s20 = scalar_select 0, %s19, %s17
  %v21 = vstv %s9
  %22 = vst [vmem:[#allocation6] sm:$0x1] %v21
  $region1: #{tpu_custom_call.1} parent=0
    #allocation7 [shape = 'u8[20480]{0}', space=vmem, size = 0x5000, scoped, tag = 'input window, operand 0']
    #allocation8 [shape = 's32[2]{0}', space=sflag, size = 0x8, scoped, tag = 'scoped memory for tpu_custom_call.1']
    #allocation9 [shape = 's32[2]{0}', space=sflag, size = 0x8, scoped, tag = 'scoped memory for tpu_custom_call.1']
    #allocation10 [shape = 'u8[16384]{0}', space=vmem, size = 0x4000, scoped, tag = 'input window, operand 2, single buffered']
    #allocation11 [shape = 's32[1]{0}', space=sflag, size = 0x4, scoped, tag = 'scoped memory for tpu_custom_call.1']
    #allocation12 [shape = 'u8[98304]{0}', space=vmem, size = 0x18000, scoped, tag = 'input window, operand 4, single buffered']
    #allocation13 [shape = 'u8[24576]{0}', space=vmem, size = 0x6000, scoped, tag = 'output window, operand 0']
    #allocation14 [shape = 'u8[3072]{0}', space=vmem, size = 0xc00, scoped, tag = 'output window, operand 1']
    #allocation15 [shape = 's32[2]{0}', space=sflag, size = 0x8, scoped, tag = 'scoped memory for tpu_custom_call.1']
    %23 = vsyncpa [#allocation8], 0
    %s24 = scalar_lea.sflag [#allocation8], 1
    %25 = vsyncpa %s24, 0
    %26 = vsyncpa [#allocation11], 0
    %27 = vsyncpa [#allocation9], 0
    %s28 = scalar_lea.sflag [#allocation9], 1
    %29 = vsyncpa %s28, 0
    %30 = vsyncpa [#allocation15], 0
    %s31 = scalar_lea.sflag [#allocation15], 1
    %32 = vsyncpa %s31, 0
    loop: start=0, step=1, limit=4
    $region2: #{tpu_custom_call.1} parent=1 // loop_pre_header
      _
    $region3: #{tpu_custom_call.1} parent=1 // loop_header
      %s34 = sphi 0, %s38
      %p35 = scmp.ge.s32.totalorder %s34, 4
      %s44 = sphi 0, %s46
      %s47 = sphi 0, %s44
      %s48 = sphi 0, %s47
      %s64 = sphi 0, %s48
      %s68 = sphi 0, %s68
      %s70 = sphi 0, %s68
      %s71 = sphi 0, %s70
      %s85 = sphi 0, %s71
      %s89 = sphi 0, %s89
      %s91 = sphi 0, %s89
      %s92 = sphi 0, %s91
      %s106 = sphi 0, %s92
      %s110 = sphi 0, %s110
      %s112 = sphi 0, %s110
      %s113 = sphi 0, %s112
      %s127 = sphi 0, %s113
      %s131 = sphi 0, %s131
      %s133 = sphi 0, %s131
      %s134 = sphi 0, %s133
      %s148 = sphi 0, %s134
      %s152 = sphi 0, %s152
      %s154 = sphi 0, %s152
      %s155 = sphi 0, %s154
      %s169 = sphi 0, %s155
      %s173 = sphi 0, %s173
      %s175 = sphi 0, %s173
      %s176 = sphi 0, %s175
      %s190 = sphi 0, %s176
      %s194 = sphi 0, %s194
      %s196 = sphi 0, %s194
      %s197 = sphi 0, %s196
      %s211 = sphi 0, %s197
      %s215 = sphi 0, %s215
      %s217 = sphi 0, %s215
      %s218 = sphi 0, %s217
      %s232 = sphi 0, %s218
      %s236 = sphi 0, %s236
      %s238 = sphi 0, %s236
      %s239 = sphi 0, %s238
      %s253 = sphi 0, %s239
      %s257 = sphi 0, %s257
      %s259 = sphi 0, %s257
      %s260 = sphi 0, %s259
      %s274 = sphi 0, %s260
      %s278 = sphi 0, %s278
      %s280 = sphi 0, %s278
      %s281 = sphi 0, %s280
      %s295 = sphi 0, %s281
      %s299 = sphi 0, %s299
      %s301 = sphi 0, %s299
      %s302 = sphi 0, %s301
      %s316 = sphi 0, %s302
      %s320 = sphi 0, %s320
      %s322 = sphi 0, %s320
      %s323 = sphi 0, %s322
      %s337 = sphi 0, %s323
      %s343 = sphi 0, %s345
      %s346 = sphi 0, %s343
      %s347 = sphi 0, %s346
      %s363 = sphi 0, %s347
      %s369 = sphi 0, %s371
      %s372 = sphi 0, %s369
      %s373 = sphi 0, %s372
      %s389 = sphi 0, %s373
    $region4: #{tpu_custom_call.1} parent=1 // loop_header_branch
      %37 = sbr.rel (%p35) target = $region8
    $region5: #{tpu_custom_call.1} parent=1 // loop_body
      %s39 = ssub.s32 %s34, 1
      %s40 = ssub.s32 %s34, 2
      %s41 = sadd.s32 %s34, 1
      %s42 = ssub.s32 %s34, %s41
      %p43 = scmp.eq.s32.totalorder %s42, 0
      %s45 = sadd.s32 %s44, 1
      %s46 = scalar_select %p43, %s44, %s45
      %p49 = pneg %p43
      %p50 = scmp.eq.s32.totalorder %s34, 1
      %p51 = por %p49, %p50
      %p52 = scmp.ne.s32.totalorder %s44, %s47
      %p53 = scmp.eq.s32.totalorder %s34, 0
      %p54 = por %p52, %p53
      %p55 = scmp.ne.s32.totalorder %s44, %s47
      %p56 = scmp.eq.s32.totalorder %s39, 1
      %p57 = por %p55, %p56
      %p58 = scmp.ne.s32.totalorder %s47, %s48
      %p59 = scmp.eq.s32.totalorder %s39, 0
      %p60 = por %p58, %p59
      %p61 = scmp.ne.s32.totalorder %s47, %s48
      %p62 = scmp.eq.s32.totalorder %s40, 1
      %p63 = por %p61, %p62
      %p65 = scmp.ne.s32.totalorder %s48, %s64
      %p66 = scmp.eq.s32.totalorder %s40, 0
      %p67 = por %p65, %p66
      %s69 = sadd.s32 %s68, 1
      %p72 = scmp.eq.s32.totalorder %s34, 1
      %p73 = scmp.ne.s32.totalorder %s68, %s70
      %p74 = scmp.eq.s32.totalorder %s34, 0
      %p75 = por %p73, %p74
      %p76 = scmp.ne.s32.totalorder %s68, %s70
      %p77 = scmp.eq.s32.totalorder %s39, 1
      %p78 = por %p76, %p77
      %p79 = scmp.ne.s32.totalorder %s70, %s71
      %p80 = scmp.eq.s32.totalorder %s39, 0
      %p81 = por %p79, %p80
      %p82 = scmp.ne.s32.totalorder %s70, %s71
      %p83 = scmp.eq.s32.totalorder %s40, 1
      %p84 = por %p82, %p83
      %p86 = scmp.ne.s32.totalorder %s71, %s85
      %p87 = scmp.eq.s32.totalorder %s40, 0
      %p88 = por %p86, %p87
      %s90 = sadd.s32 %s89, 1
      %p93 = scmp.eq.s32.totalorder %s34, 1
      %p94 = scmp.ne.s32.totalorder %s89, %s91
      %p95 = scmp.eq.s32.totalorder %s34, 0
      %p96 = por %p94, %p95
      %p97 = scmp.ne.s32.totalorder %s89, %s91
      %p98 = scmp.eq.s32.totalorder %s39, 1
      %p99 = por %p97, %p98
      %p100 = scmp.ne.s32.totalorder %s91, %s92
      %p101 = scmp.eq.s32.totalorder %s39, 0
      %p102 = por %p100, %p101
      %p103 = scmp.ne.s32.totalorder %s91, %s92
      %p104 = scmp.eq.s32.totalorder %s40, 1
      %p105 = por %p103, %p104
      %p107 = scmp.ne.s32.totalorder %s92, %s106
      %p108 = scmp.eq.s32.totalorder %s40, 0
      %p109 = por %p107, %p108
      %s111 = sadd.s32 %s110, 1
      %p114 = scmp.eq.s32.totalorder %s34, 1
      %p115 = scmp.ne.s32.totalorder %s110, %s112
      %p116 = scmp.eq.s32.totalorder %s34, 0
      %p117 = por %p115, %p116
      %p118 = scmp.ne.s32.totalorder %s110, %s112
      %p119 = scmp.eq.s32.totalorder %s39, 1
      %p120 = por %p118, %p119
      %p121 = scmp.ne.s32.totalorder %s112, %s113
      %p122 = scmp.eq.s32.totalorder %s39, 0
      %p123 = por %p121, %p122
      %p124 = scmp.ne.s32.totalorder %s112, %s113
      %p125 = scmp.eq.s32.totalorder %s40, 1
      %p126 = por %p124, %p125
      %p128 = scmp.ne.s32.totalorder %s113, %s127
      %p129 = scmp.eq.s32.totalorder %s40, 0
      %p130 = por %p128, %p129
      %s132 = sadd.s32 %s131, 1
      %p135 = scmp.eq.s32.totalorder %s34, 1
      %p136 = scmp.ne.s32.totalorder %s131, %s133
      %p137 = scmp.eq.s32.totalorder %s34, 0
      %p138 = por %p136, %p137
      %p139 = scmp.ne.s32.totalorder %s131, %s133
      %p140 = scmp.eq.s32.totalorder %s39, 1
      %p141 = por %p139, %p140
      %p142 = scmp.ne.s32.totalorder %s133, %s134
      %p143 = scmp.eq.s32.totalorder %s39, 0
      %p144 = por %p142, %p143
      %p145 = scmp.ne.s32.totalorder %s133, %s134
      %p146 = scmp.eq.s32.totalorder %s40, 1
      %p147 = por %p145, %p146
      %p149 = scmp.ne.s32.totalorder %s134, %s148
      %p150 = scmp.eq.s32.totalorder %s40, 0
      %p151 = por %p149, %p150
      %s153 = sadd.s32 %s152, 1
      %p156 = scmp.eq.s32.totalorder %s34, 1
      %p157 = scmp.ne.s32.totalorder %s152, %s154
      %p158 = scmp.eq.s32.totalorder %s34, 0
      %p159 = por %p157, %p158
      %p160 = scmp.ne.s32.totalorder %s152, %s154
      %p161 = scmp.eq.s32.totalorder %s39, 1
      %p162 = por %p160, %p161
      %p163 = scmp.ne.s32.totalorder %s154, %s155
      %p164 = scmp.eq.s32.totalorder %s39, 0
      %p165 = por %p163, %p164
      %p166 = scmp.ne.s32.totalorder %s154, %s155
      %p167 = scmp.eq.s32.totalorder %s40, 1
      %p168 = por %p166, %p167
      %p170 = scmp.ne.s32.totalorder %s155, %s169
      %p171 = scmp.eq.s32.totalorder %s40, 0
      %p172 = por %p170, %p171
      %s174 = sadd.s32 %s173, 1
      %p177 = scmp.eq.s32.totalorder %s34, 1
      %p178 = scmp.ne.s32.totalorder %s173, %s175
      %p179 = scmp.eq.s32.totalorder %s34, 0
      %p180 = por %p178, %p179
      %p181 = scmp.ne.s32.totalorder %s173, %s175
      %p182 = scmp.eq.s32.totalorder %s39, 1
      %p183 = por %p181, %p182
      %p184 = scmp.ne.s32.totalorder %s175, %s176
      %p185 = scmp.eq.s32.totalorder %s39, 0
      %p186 = por %p184, %p185
      %p187 = scmp.ne.s32.totalorder %s175, %s176
      %p188 = scmp.eq.s32.totalorder %s40, 1
      %p189 = por %p187, %p188
      %p191 = scmp.ne.s32.totalorder %s176, %s190
      %p192 = scmp.eq.s32.totalorder %s40, 0
      %p193 = por %p191, %p192
      %s195 = sadd.s32 %s194, 1
      %p198 = scmp.eq.s32.totalorder %s34, 1
      %p199 = scmp.ne.s32.totalorder %s194, %s196
      %p200 = scmp.eq.s32.totalorder %s34, 0
      %p201 = por %p199, %p200
      %p202 = scmp.ne.s32.totalorder %s194, %s196
      %p203 = scmp.eq.s32.totalorder %s39, 1
      %p204 = por %p202, %p203
      %p205 = scmp.ne.s32.totalorder %s196, %s197
      %p206 = scmp.eq.s32.totalorder %s39, 0
      %p207 = por %p205, %p206
      %p208 = scmp.ne.s32.totalorder %s196, %s197
      %p209 = scmp.eq.s32.totalorder %s40, 1
      %p210 = por %p208, %p209
      %p212 = scmp.ne.s32.totalorder %s197, %s211
      %p213 = scmp.eq.s32.totalorder %s40, 0
      %p214 = por %p212, %p213
      %s216 = sadd.s32 %s215, 1
      %p219 = scmp.eq.s32.totalorder %s34, 1
      %p220 = scmp.ne.s32.totalorder %s215, %s217
      %p221 = scmp.eq.s32.totalorder %s34, 0
      %p222 = por %p220, %p221
      %p223 = scmp.ne.s32.totalorder %s215, %s217
      %p224 = scmp.eq.s32.totalorder %s39, 1
      %p225 = por %p223, %p224
      %p226 = scmp.ne.s32.totalorder %s217, %s218
      %p227 = scmp.eq.s32.totalorder %s39, 0
      %p228 = por %p226, %p227
      %p229 = scmp.ne.s32.totalorder %s217, %s218
      %p230 = scmp.eq.s32.totalorder %s40, 1
      %p231 = por %p229, %p230
      %p233 = scmp.ne.s32.totalorder %s218, %s232
      %p234 = scmp.eq.s32.totalorder %s40, 0
      %p235 = por %p233, %p234
      %s237 = sadd.s32 %s236, 1
      %p240 = scmp.eq.s32.totalorder %s34, 1
      %p241 = scmp.ne.s32.totalorder %s236, %s238
      %p242 = scmp.eq.s32.totalorder %s34, 0
      %p243 = por %p241, %p242
      %p244 = scmp.ne.s32.totalorder %s236, %s238
      %p245 = scmp.eq.s32.totalorder %s39, 1
      %p246 = por %p244, %p245
      %p247 = scmp.ne.s32.totalorder %s238, %s239
      %p248 = scmp.eq.s32.totalorder %s39, 0
      %p249 = por %p247, %p248
      %p250 = scmp.ne.s32.totalorder %s238, %s239
      %p251 = scmp.eq.s32.totalorder %s40, 1
      %p252 = por %p250, %p251
      %p254 = scmp.ne.s32.totalorder %s239, %s253
      %p255 = scmp.eq.s32.totalorder %s40, 0
      %p256 = por %p254, %p255
      %s258 = sadd.s32 %s257, 1
      %p261 = scmp.eq.s32.totalorder %s34, 1
      %p262 = scmp.ne.s32.totalorder %s257, %s259
      %p263 = scmp.eq.s32.totalorder %s34, 0
      %p264 = por %p262, %p263
      %p265 = scmp.ne.s32.totalorder %s257, %s259
      %p266 = scmp.eq.s32.totalorder %s39, 1
      %p267 = por %p265, %p266
      %p268 = scmp.ne.s32.totalorder %s259, %s260
      %p269 = scmp.eq.s32.totalorder %s39, 0
      %p270 = por %p268, %p269
      %p271 = scmp.ne.s32.totalorder %s259, %s260
      %p272 = scmp.eq.s32.totalorder %s40, 1
      %p273 = por %p271, %p272
      %p275 = scmp.ne.s32.totalorder %s260, %s274
      %p276 = scmp.eq.s32.totalorder %s40, 0
      %p277 = por %p275, %p276
      %s279 = sadd.s32 %s278, 1
      %p282 = scmp.eq.s32.totalorder %s34, 1
      %p283 = scmp.ne.s32.totalorder %s278, %s280
      %p284 = scmp.eq.s32.totalorder %s34, 0
      %p285 = por %p283, %p284
      %p286 = scmp.ne.s32.totalorder %s278, %s280
      %p287 = scmp.eq.s32.totalorder %s39, 1
      %p288 = por %p286, %p287
      %p289 = scmp.ne.s32.totalorder %s280, %s281
      %p290 = scmp.eq.s32.totalorder %s39, 0
      %p291 = por %p289, %p290
      %p292 = scmp.ne.s32.totalorder %s280, %s281
      %p293 = scmp.eq.s32.totalorder %s40, 1
      %p294 = por %p292, %p293
      %p296 = scmp.ne.s32.totalorder %s281, %s295
      %p297 = scmp.eq.s32.totalorder %s40, 0
      %p298 = por %p296, %p297
      %s300 = sadd.s32 %s299, 1
      %p303 = scmp.eq.s32.totalorder %s34, 1
      %p304 = scmp.ne.s32.totalorder %s299, %s301
      %p305 = scmp.eq.s32.totalorder %s34, 0
      %p306 = por %p304, %p305
      %p307 = scmp.ne.s32.totalorder %s299, %s301
      %p308 = scmp.eq.s32.totalorder %s39, 1
      %p309 = por %p307, %p308
      %p310 = scmp.ne.s32.totalorder %s301, %s302
      %p311 = scmp.eq.s32.totalorder %s39, 0
      %p312 = por %p310, %p311
      %p313 = scmp.ne.s32.totalorder %s301, %s302
      %p314 = scmp.eq.s32.totalorder %s40, 1
      %p315 = por %p313, %p314
      %p317 = scmp.ne.s32.totalorder %s302, %s316
      %p318 = scmp.eq.s32.totalorder %s40, 0
      %p319 = por %p317, %p318
      %s321 = sadd.s32 %s320, 1
      %p324 = scmp.eq.s32.totalorder %s34, 1
      %p325 = scmp.ne.s32.totalorder %s320, %s322
      %p326 = scmp.eq.s32.totalorder %s34, 0
      %p327 = por %p325, %p326
      %p328 = scmp.ne.s32.totalorder %s320, %s322
      %p329 = scmp.eq.s32.totalorder %s39, 1
      %p330 = por %p328, %p329
      %p331 = scmp.ne.s32.totalorder %s322, %s323
      %p332 = scmp.eq.s32.totalorder %s39, 0
      %p333 = por %p331, %p332
      %p334 = scmp.ne.s32.totalorder %s322, %s323
      %p335 = scmp.eq.s32.totalorder %s40, 1
      %p336 = por %p334, %p335
      %p338 = scmp.ne.s32.totalorder %s323, %s337
      %p339 = scmp.eq.s32.totalorder %s40, 0
      %p340 = por %p338, %p339
      %s341 = ssub.s32 %s34, %s41
      %p342 = scmp.eq.s32.totalorder %s341, 0
      %s344 = sadd.s32 %s343, 1
      %s345 = scalar_select %p342, %s343, %s344
      %p348 = pneg %p342
      %p349 = scmp.eq.s32.totalorder %s34, 1
      %p350 = por %p348, %p349
      %p351 = scmp.ne.s32.totalorder %s343, %s346
      %p352 = scmp.eq.s32.totalorder %s34, 0
      %p353 = por %p351, %p352
      %p354 = scmp.ne.s32.totalorder %s343, %s346
      %p355 = scmp.eq.s32.totalorder %s39, 1
      %p356 = por %p354, %p355
      %p357 = scmp.ne.s32.totalorder %s346, %s347
      %p358 = scmp.eq.s32.totalorder %s39, 0
      %p359 = por %p357, %p358
      %p360 = scmp.ne.s32.totalorder %s346, %s347
      %p361 = scmp.eq.s32.totalorder %s40, 1
      %p362 = por %p360, %p361
      %p364 = scmp.ne.s32.totalorder %s347, %s363
      %p365 = scmp.eq.s32.totalorder %s40, 0
      %p366 = por %p364, %p365
      %s367 = ssub.s32 %s34, %s41
      %p368 = scmp.eq.s32.totalorder %s367, 0
      %s370 = sadd.s32 %s369, 1
      %s371 = scalar_select %p368, %s369, %s370
      %p374 = pneg %p368
      %p375 = scmp.eq.s32.totalorder %s34, 1
      %p376 = por %p374, %p375
      %p377 = scmp.ne.s32.totalorder %s369, %s372
      %p378 = scmp.eq.s32.totalorder %s34, 0
      %p379 = por %p377, %p378
      %p380 = scmp.ne.s32.totalorder %s369, %s372
      %p381 = scmp.eq.s32.totalorder %s39, 1
      %p382 = por %p380, %p381
      %p383 = scmp.ne.s32.totalorder %s372, %s373
      %p384 = scmp.eq.s32.totalorder %s39, 0
      %p385 = por %p383, %p384
      %p386 = scmp.ne.s32.totalorder %s372, %s373
      %p387 = scmp.eq.s32.totalorder %s40, 1
      %p388 = por %p386, %p387
      %p390 = scmp.ne.s32.totalorder %s373, %s389
      %p391 = scmp.eq.s32.totalorder %s40, 0
      %p392 = por %p390, %p391
      %p393 = scmp.le.s32.totalorder 1, %s34
      %p394 = scmp.lt.s32.totalorder %s34, 3
      %p395 = pnand %p393, %p394
      %p396 = pneg %p395
      // Predicated region
      $region9: #{tpu_custom_call.1} parent=5 // pred_check
        _
      $region10: #{tpu_custom_call.1} parent=5 // pred_check_branch
        %398 = sbr.rel (%p395) target = $region12
      $region11: #{tpu_custom_call.1} parent=5 // pred_region
        %s399 = ssub.s32 %s34, 1
        // Predicated region
        $region13: #{tpu_custom_call.1} parent=11 // pred_check
          %p400 = pneg %p81
        $region14: #{tpu_custom_call.1} parent=11 // pred_check_branch
          %402 = sbr.rel (%p400) target = $region16
        $region15: #{tpu_custom_call.1} parent=11 // pred_region
          _
        $region16: #{tpu_custom_call.1} parent=11 // pred_fallthru
          _
        // Predicated region
        $region17: #{tpu_custom_call.1} parent=11 // pred_check
          %p403 = pneg %p102
        $region18: #{tpu_custom_call.1} parent=11 // pred_check_branch
          %405 = sbr.rel (%p403) target = $region20
        $region19: #{tpu_custom_call.1} parent=11 // pred_region
          %s407 = ssub.s32 512, 512
          %408 = vsyncadd [#allocation11], %s407
          %s409 = sshll.u32 [#allocation10], 4
          %s410 = int_to_ptr.vmem [resolvable:$true] %s409
          %415 = dma.hbm_to_vmem [thread:$0]  %s2, 512, %s410, [#allocation11], 128, 128, 8
        $region20: #{tpu_custom_call.1} parent=11 // pred_fallthru
          _
        // Predicated region
        $region21: #{tpu_custom_call.1} parent=11 // pred_check
          %p416 = pneg %p123
        $region22: #{tpu_custom_call.1} parent=11 // pred_check_branch
          %418 = sbr.rel (%p416) target = $region24
        $region23: #{tpu_custom_call.1} parent=11 // pred_region
          _
        $region24: #{tpu_custom_call.1} parent=11 // pred_fallthru
          _
        // Predicated region
        $region25: #{tpu_custom_call.1} parent=11 // pred_check
          %p419 = pneg %p144
        $region26: #{tpu_custom_call.1} parent=11 // pred_check_branch
          %421 = sbr.rel (%p419) target = $region28
        $region27: #{tpu_custom_call.1} parent=11 // pred_region
          %s423 = ssub.s32 3072, 3072
          %424 = vsyncadd [#allocation11], %s423
          %s425 = sshll.u32 [#allocation12], 4
          %s426 = int_to_ptr.vmem [resolvable:$true] %s425
          %431 = dma.hbm_to_vmem [thread:$0]  %s4, 3072, %s426, [#allocation11], 384, 384, 24
        $region28: #{tpu_custom_call.1} parent=11 // pred_fallthru
          _
        // Predicated region
        $region29: #{tpu_custom_call.1} parent=11 // pred_check
          %p432 = pneg %p165
        $region30: #{tpu_custom_call.1} parent=11 // pred_check_branch
          %434 = sbr.rel (%p432) target = $region32
        $region31: #{tpu_custom_call.1} parent=11 // pred_region
          _
        $region32: #{tpu_custom_call.1} parent=11 // pred_fallthru
          _
        // Predicated region
        $region33: #{tpu_custom_call.1} parent=11 // pred_check
          %p435 = pneg %p186
        $region34: #{tpu_custom_call.1} parent=11 // pred_check_branch
          %437 = sbr.rel (%p435) target = $region36
        $region35: #{tpu_custom_call.1} parent=11 // pred_region
          _
        $region36: #{tpu_custom_call.1} parent=11 // pred_fallthru
          _
        // Predicated region
        $region37: #{tpu_custom_call.1} parent=11 // pred_check
          %p438 = pneg %p207
        $region38: #{tpu_custom_call.1} parent=11 // pred_check_branch
          %440 = sbr.rel (%p438) target = $region40
        $region39: #{tpu_custom_call.1} parent=11 // pred_region
          _
        $region40: #{tpu_custom_call.1} parent=11 // pred_fallthru
          _
        // Predicated region
        $region41: #{tpu_custom_call.1} parent=11 // pred_check
          %p441 = pneg %p228
        $region42: #{tpu_custom_call.1} parent=11 // pred_check_branch
          %443 = sbr.rel (%p441) target = $region44
        $region43: #{tpu_custom_call.1} parent=11 // pred_region
          _
        $region44: #{tpu_custom_call.1} parent=11 // pred_fallthru
          _
        // Predicated region
        $region45: #{tpu_custom_call.1} parent=11 // pred_check
          %p444 = pneg %p249
        $region46: #{tpu_custom_call.1} parent=11 // pred_check_branch
          %446 = sbr.rel (%p444) target = $region48
        $region47: #{tpu_custom_call.1} parent=11 // pred_region
          _
        $region48: #{tpu_custom_call.1} parent=11 // pred_fallthru
          _
        // Predicated region
        $region49: #{tpu_custom_call.1} parent=11 // pred_check
          %p447 = pneg %p270
        $region50: #{tpu_custom_call.1} parent=11 // pred_check_branch
          %449 = sbr.rel (%p447) target = $region52
        $region51: #{tpu_custom_call.1} parent=11 // pred_region
          _
        $region52: #{tpu_custom_call.1} parent=11 // pred_fallthru
          _
        // Predicated region
        $region53: #{tpu_custom_call.1} parent=11 // pred_check
          %p450 = pneg %p291
        $region54: #{tpu_custom_call.1} parent=11 // pred_check_branch
          %452 = sbr.rel (%p450) target = $region56
        $region55: #{tpu_custom_call.1} parent=11 // pred_region
          _
        $region56: #{tpu_custom_call.1} parent=11 // pred_fallthru
          _
        // Predicated region
        $region57: #{tpu_custom_call.1} parent=11 // pred_check
          %p453 = pneg %p312
        $region58: #{tpu_custom_call.1} parent=11 // pred_check_branch
          %455 = sbr.rel (%p453) target = $region60
        $region59: #{tpu_custom_call.1} parent=11 // pred_region
          _
        $region60: #{tpu_custom_call.1} parent=11 // pred_fallthru
          _
        // Predicated region
        $region61: #{tpu_custom_call.1} parent=11 // pred_check
          %p456 = pneg %p333
        $region62: #{tpu_custom_call.1} parent=11 // pred_check_branch
          %458 = sbr.rel (%p456) target = $region64
        $region63: #{tpu_custom_call.1} parent=11 // pred_region
          _
        $region64: #{tpu_custom_call.1} parent=11 // pred_fallthru
          _
      $region12: #{tpu_custom_call.1} parent=5 // pred_fallthru
        _
      %p459 = scmp.lt.s32.totalorder %s34, 2
      // Predicated region
      $region65: #{tpu_custom_call.1} parent=5 // pred_check
        %p460 = pneg %p459
      $region66: #{tpu_custom_call.1} parent=5 // pred_check_branch
        %462 = sbr.rel (%p460) target = $region68
      $region67: #{tpu_custom_call.1} parent=5 // pred_region
        // Predicated region
        $region69: #{tpu_custom_call.1} parent=67 // pred_check
          %p463 = pneg %p54
        $region70: #{tpu_custom_call.1} parent=67 // pred_check_branch
          %465 = sbr.rel (%p463) target = $region72
        $region71: #{tpu_custom_call.1} parent=67 // pred_region
          %s466 = sand.u32 %s44, 1
          %s467 = scalar_lea.sflag [#allocation8], %s466
          %s468 = sand.u32 %s44, 1
          %s469 = smul.addr %s468, 20
          %s470 = scalar_lea.vmem [#allocation7], %s469
          %s472 = ssub.s32 320, 320
          %473 = vsyncadd %s467, %s472
          %s474 = smul.addr %s34, 5
          %s475 = smul.addr %s474, 64
          %s476 = scalar_lea.hbm %s0, %s475
          %s478 = sshll.u32 %s470, 4
          %s479 = int_to_ptr.vmem [resolvable:$true] %s478
          %481 = dma.hbm_to_vmem [thread:$0]  %s476, 320, %s479, %s467
        $region72: #{tpu_custom_call.1} parent=67 // pred_fallthru
          _
      $region68: #{tpu_custom_call.1} parent=5 // pred_fallthru
        _
      %p482 = scmp.le.s32.totalorder 1, %s34
      %p483 = scmp.lt.s32.totalorder %s34, 3
      %p484 = pnand %p482, %p483
      %p485 = pneg %p484
      // Predicated region
      $region73: #{tpu_custom_call.1} parent=5 // pred_check
        _
      $region74: #{tpu_custom_call.1} parent=5 // pred_check_branch
        %487 = sbr.rel (%p484) target = $region76
      $region75: #{tpu_custom_call.1} parent=5 // pred_region
        %s488 = ssub.s32 %s34, 1
        %s489 = sand.u32 %s47, 1
        %s490 = scalar_lea.sflag [#allocation8], %s489
        %s491 = sand.u32 %s47, 1
        %s492 = smul.addr %s491, 20
        %s493 = scalar_lea.vmem [#allocation7], %s492
        // Predicated region
        $region77: #{tpu_custom_call.1} parent=75 // pred_check
          %p494 = pneg %p60
        $region78: #{tpu_custom_call.1} parent=75 // pred_check_branch
          %496 = sbr.rel (%p494) target = $region80
        $region79: #{tpu_custom_call.1} parent=75 // pred_region
          %497 = dma.done %s490, 320
        $region80: #{tpu_custom_call.1} parent=75 // pred_fallthru
          _
        // Predicated region
        $region81: #{tpu_custom_call.1} parent=75 // pred_check
          %p498 = pneg %p102
        $region82: #{tpu_custom_call.1} parent=75 // pred_check_branch
          %500 = sbr.rel (%p498) target = $region84
        $region83: #{tpu_custom_call.1} parent=75 // pred_region
          %501 = dma.done [#allocation11], 512
        $region84: #{tpu_custom_call.1} parent=75 // pred_fallthru
          _
        // Predicated region
        $region85: #{tpu_custom_call.1} parent=75 // pred_check
          %p502 = pneg %p144
        $region86: #{tpu_custom_call.1} parent=75 // pred_check_branch
          %504 = sbr.rel (%p502) target = $region88
        $region87: #{tpu_custom_call.1} parent=75 // pred_region
          %505 = dma.done [#allocation11], 3072
        $region88: #{tpu_custom_call.1} parent=75 // pred_fallthru
          _
        %s506 = sand.u32 %s47, 1
        %s507 = scalar_lea.sflag [#allocation8], %s506
        %s508 = sand.u32 %s47, 1
        %s509 = smul.addr %s508, 20
        %s510 = scalar_lea.vmem [#allocation7], %s509
        %p511 = pneg %p60
        %p512 = pneg %p57
        %p513 = pneg %p81
        %p514 = pneg %p78
        %p515 = pneg %p102
        %p516 = pneg %p99
        %p517 = pneg %p123
        %p518 = pneg %p120
        %p519 = pneg %p144
        %p520 = pneg %p141
        %p521 = pneg %p165
        %p522 = pneg %p162
        %p523 = pneg %p186
        %p524 = pneg %p183
        %p525 = pneg %p207
        %p526 = pneg %p204
        %p527 = pneg %p228
        %p528 = pneg %p225
        %p529 = pneg %p249
        %p530 = pneg %p246
        %p531 = pneg %p270
        %p532 = pneg %p267
        %p533 = pneg %p291
        %p534 = pneg %p288
        %p535 = pneg %p312
        %p536 = pneg %p309
        %p537 = pneg %p333
        %p538 = pneg %p330
        %p539 = pneg %p359
        %p540 = pneg %p356
        %s541 = sand.u32 %s346, 1
        %s542 = scalar_lea.sflag [#allocation9], %s541
        %s543 = sand.u32 %s346, 1
        %s544 = smul.addr %s543, 24
        %s545 = scalar_lea.vmem [#allocation13], %s544
        %p546 = pneg %p385
        %p547 = pneg %p382
        %s548 = sand.u32 %s372, 1
        %s549 = scalar_lea.sflag [#allocation15], %s548
        %s550 = sand.u32 %s372, 1
        %s551 = smul.addr %s550, 3
        %s552 = scalar_lea.vmem [#allocation14], %s551
        %v553 = vld [vmem:[%s1] sm:$0x7]
        %554 = vst [vmem:[#allocation2] sm:$0xff] 0.0
        %555 = vst [vmem:[#allocation2 + $0x28] sm:$0xff] 0.0
        %556 = vst [vmem:[#allocation2 + $0x50] sm:$0xff] 0.0
        %557 = vst [vmem:[#allocation2 + $0x78] sm:$0xff] 0.0
        %558 = vst [vmem:[#allocation2 + $0x20] sm:$0xff] 0.0
        %559 = vst [vmem:[#allocation2 + $0x48] sm:$0xff] 0.0
        %560 = vst [vmem:[#allocation2 + $0x70] sm:$0xff] 0.0
        %561 = vst [vmem:[#allocation2 + $0x98] sm:$0xff] 0.0
        %562 = vst [vmem:[#allocation3] sm:$0xff] 0.0
        %563 = vst [vmem:[#allocation3 + $0x28] sm:$0xff] 0.0
        %564 = vst [vmem:[#allocation3 + $0x50] sm:$0xff] 0.0
        %565 = vst [vmem:[#allocation3 + $0x78] sm:$0xff] 0.0
        %566 = vst [vmem:[#allocation3 + $0xa0] sm:$0xff] 0.0
        %567 = vst [vmem:[#allocation3 + $0xc8] sm:$0xff] 0.0
        %568 = vst [vmem:[#allocation3 + $0xf0] sm:$0xff] 0.0
        %569 = vst [vmem:[#allocation3 + $0x118] sm:$0xff] 0.0
        %570 = vst [vmem:[#allocation3 + $0x20] sm:$0xff] 0.0
        %571 = vst [vmem:[#allocation3 + $0x48] sm:$0xff] 0.0
        %572 = vst [vmem:[#allocation3 + $0x70] sm:$0xff] 0.0
        %573 = vst [vmem:[#allocation3 + $0x98] sm:$0xff] 0.0
        %574 = vst [vmem:[#allocation3 + $0xc0] sm:$0xff] 0.0
        %575 = vst [vmem:[#allocation3 + $0xe8] sm:$0xff] 0.0
        %576 = vst [vmem:[#allocation3 + $0x110] sm:$0xff] 0.0
        %577 = vst [vmem:[#allocation3 + $0x138] sm:$0xff] 0.0
        %578 = vst [vmem:[#allocation4] sm:$0xff] 0.0
        %579 = vst [vmem:[#allocation4 + $0x28] sm:$0xff] 0.0
        %580 = vst [vmem:[#allocation4 + $0x50] sm:$0xff] 0.0
        %581 = vst [vmem:[#allocation4 + $0x78] sm:$0xff] 0.0
        %582 = vst [vmem:[#allocation4 + $0x20] sm:$0xff] 0.0
        %583 = vst [vmem:[#allocation4 + $0x48] sm:$0xff] 0.0
        %584 = vst [vmem:[#allocation4 + $0x70] sm:$0xff] 0.0
        %585 = vst [vmem:[#allocation4 + $0x98] sm:$0xff] 0.0
        %v586 = vld [vmem:[%s493] sm:$0xff]
        %v587 = vld [vmem:[%s493 + $0x8] sm:$0xff]
        %v590 = vcombine.high %v586, %v586
        %v591 = vcombine.high %v587, %v587
        %592 = vrot.lane.b32.xlu0 %v586, 19
        %v593 = vpop.permute.xlu0 %592
        %594 = vrot.lane.b32.xlu0 %v590, 19
        %v595 = vpop.permute.xlu0 %594
        %596 = vrot.lane.b32.xlu0 %v587, 19
        %v597 = vpop.permute.xlu0 %596
        %598 = vrot.lane.b32.xlu0 %v591, 19
        %v599 = vpop.permute.xlu0 %598
        %vm600 = vcmask 154624
        %v601 = vsel %vm600, %v593, %v595
        %v602 = vsel %vm600, %v595, %v597
        %v603 = vsel %vm600, %v597, %v599
        %607 = vst [vmem:[#allocation5] sm:$0xf] %v601
        %608 = vst [vmem:[#allocation5 + $0x8] sm:$0xf] %v602
        %609 = vst [vmem:[#allocation5 + $0x10] sm:$0xf] %v603
        %v610 = vld [vmem:[%s493] sm:$0xff]
        %v611 = vld [vmem:[%s493 + $0x8] sm:$0xff]
        %v614 = vcombine.low %v610, %v610
        %v615 = vcombine.low %v611, %v611
        %616 = vrot.lane.b32.xlu0 %v614, 18
        %v617 = vpop.permute.xlu0 %616
        %618 = vrot.lane.b32.xlu0 %v610, 18
        %v619 = vpop.permute.xlu0 %618
        %620 = vrot.lane.b32.xlu0 %v615, 18
        %v621 = vpop.permute.xlu0 %620
        %622 = vrot.lane.b32.xlu0 %v611, 18
        %v623 = vpop.permute.xlu0 %622
        %vm624 = vcmask 146432
        %v625 = vsel %vm624, %v617, %v619
        %v626 = vsel %vm624, %v619, %v621
        %v627 = vsel %vm624, %v621, %v623
        %631 = vst [vmem:[#allocation5] sm:$0xf0] %v625
        %632 = vst [vmem:[#allocation5 + $0x8] sm:$0xf0] %v626
        %633 = vst [vmem:[#allocation5 + $0x10] sm:$0xf0] %v627
        %v634 = vld [vmem:[%s493] sm:$0xff]
        %v635 = vld [vmem:[%s493 + $0x8] sm:$0xff]
        %v638 = vcombine.high %v634, %v634
        %v639 = vcombine.high %v635, %v635
        %640 = vrot.lane.b32.xlu0 %v634, 17
        %v641 = vpop.permute.xlu0 %640
        %642 = vrot.lane.b32.xlu0 %v638, 17
        %v643 = vpop.permute.xlu0 %642
        %644 = vrot.lane.b32.xlu0 %v635, 17
        %v645 = vpop.permute.xlu0 %644
        %646 = vrot.lane.b32.xlu0 %v639, 17
        %v647 = vpop.permute.xlu0 %646
        %vm648 = vcmask 138240
        %v649 = vsel %vm648, %v641, %v643
        %v650 = vsel %vm648, %v643, %v645
        %v651 = vsel %vm648, %v645, %v647
        %655 = vst [vmem:[#allocation5 + $0x18] sm:$0xf] %v649
        %656 = vst [vmem:[#allocation5 + $0x20] sm:$0xf] %v650
        %657 = vst [vmem:[#allocation5 + $0x28] sm:$0xf] %v651
        %v658 = vld [vmem:[%s493] sm:$0xff]
        %v659 = vld [vmem:[%s493 + $0x8] sm:$0xff]
        %v662 = vcombine.low %v658, %v658
        %v663 = vcombine.low %v659, %v659
        %664 = vrot.lane.b32.xlu0 %v662, 1
        %v665 = vpop.permute.xlu0 %664
        %666 = vrot.lane.b32.xlu0 %v658, 1
        %v667 = vpop.permute.xlu0 %666
        %668 = vrot.lane.b32.xlu0 %v663, 1
        %v669 = vpop.permute.xlu0 %668
        %670 = vrot.lane.b32.xlu0 %v659, 1
        %v671 = vpop.permute.xlu0 %670
        %vm672 = vcmask 7168
        %v673 = vsel %vm672, %v665, %v667
        %v674 = vsel %vm672, %v667, %v669
        %v675 = vsel %vm672, %v669, %v671
        %679 = vst [vmem:[#allocation5 + $0x18] sm:$0xf0] %v673
        %680 = vst [vmem:[#allocation5 + $0x20] sm:$0xf0] %v674
        %681 = vst [vmem:[#allocation5 + $0x28] sm:$0xf0] %v675
        %v682 = vld [vmem:[%s493 + $0x4] sm:$0xff]
        %v683 = vld [vmem:[%s493 + $0xc] sm:$0xf]
        %v685 = vcombine.high %v682, %v682
        %687 = vst [vmem:[#allocation5 + $0x30] sm:$0xf] %v682
        %688 = vst [vmem:[#allocation5 + $0x38] sm:$0xf] %v685
        %689 = vst [vmem:[#allocation5 + $0x40] sm:$0xf] %v683
        %v690 = vld [vmem:[%s493 + $0x4] sm:$0xff]
        %v691 = vld [vmem:[%s493 + $0xc] sm:$0xff]
        %v694 = vcombine.low %v690, %v690
        %v695 = vcombine.low %v691, %v691
        %696 = vrot.lane.b32.xlu0 %v694, 127
        %v697 = vpop.permute.xlu0 %696
        %698 = vrot.lane.b32.xlu0 %v690, 127
        %v699 = vpop.permute.xlu0 %698
        %700 = vrot.lane.b32.xlu0 %v695, 127
        %v701 = vpop.permute.xlu0 %700
        %702 = vrot.lane.b32.xlu0 %v691, 127
        %v703 = vpop.permute.xlu0 %702
        %vm704 = vcmask 1039360
        %v705 = vsel %vm704, %v697, %v699
        %v706 = vsel %vm704, %v699, %v701
        %v707 = vsel %vm704, %v701, %v703
        %711 = vst [vmem:[#allocation5 + $0x30] sm:$0xf0] %v705
        %712 = vst [vmem:[#allocation5 + $0x38] sm:$0xf0] %v706
        %713 = vst [vmem:[#allocation5 + $0x40] sm:$0xf0] %v707
        %v714 = vld [vmem:[%s493 + $0x4] sm:$0xff]
        %v715 = vld [vmem:[%s493 + $0xc] sm:$0xff]
        %v718 = vcombine.high %v714, %v714
        %v719 = vcombine.high %v715, %v715
        %720 = vrot.lane.b32.xlu0 %v714, 111
        %v721 = vpop.permute.xlu0 %720
        %722 = vrot.lane.b32.xlu0 %v718, 111
        %v723 = vpop.permute.xlu0 %722
        %724 = vrot.lane.b32.xlu0 %v715, 111
        %v725 = vpop.permute.xlu0 %724
        %726 = vrot.lane.b32.xlu0 %v719, 111
        %v727 = vpop.permute.xlu0 %726
        %vm728 = vcmask 908288
        %v729 = vsel %vm728, %v721, %v723
        %v730 = vsel %vm728, %v723, %v725
        %v731 = vsel %vm728, %v725, %v727
        %735 = vst [vmem:[#allocation5 + $0x48] sm:$0xf] %v729
        %736 = vst [vmem:[#allocation5 + $0x50] sm:$0xf] %v730
        %737 = vst [vmem:[#allocation5 + $0x58] sm:$0xf] %v731
        %v738 = vld [vmem:[%s493 + $0x4] sm:$0xff]
        %v739 = vld [vmem:[%s493 + $0xc] sm:$0xff]
        %v742 = vcombine.low %v738, %v738
        %v743 = vcombine.low %v739, %v739
        %744 = vrot.lane.b32.xlu0 %v742, 110
        %v745 = vpop.permute.xlu0 %744
        %746 = vrot.lane.b32.xlu0 %v738, 110
        %v747 = vpop.permute.xlu0 %746
        %748 = vrot.lane.b32.xlu0 %v743, 110
        %v749 = vpop.permute.xlu0 %748
        %750 = vrot.lane.b32.xlu0 %v739, 110
        %v751 = vpop.permute.xlu0 %750
        %vm752 = vcmask 900096
        %v753 = vsel %vm752, %v745, %v747
        %v754 = vsel %vm752, %v747, %v749
        %v755 = vsel %vm752, %v749, %v751
        %759 = vst [vmem:[#allocation5 + $0x48] sm:$0xf0] %v753
        %760 = vst [vmem:[#allocation5 + $0x50] sm:$0xf0] %v754
        %761 = vst [vmem:[#allocation5 + $0x58] sm:$0xf0] %v755
        %v762 = vld [vmem:[%s493 + $0x4] sm:$0xff]
        %v763 = vld [vmem:[%s493 + $0xc] sm:$0xff]
        %v766 = vcombine.high %v762, %v762
        %v767 = vcombine.high %v763, %v763
        %768 = vrot.lane.b32.xlu0 %v762, 109
        %v769 = vpop.permute.xlu0 %768
        %770 = vrot.lane.b32.xlu0 %v766, 109
        %v771 = vpop.permute.xlu0 %770
        %772 = vrot.lane.b32.xlu0 %v763, 109
        %v773 = vpop.permute.xlu0 %772
        %774 = vrot.lane.b32.xlu0 %v767, 109
        %v775 = vpop.permute.xlu0 %774
        %vm776 = vcmask 891904
        %v777 = vsel %vm776, %v769, %v771
        %v778 = vsel %vm776, %v771, %v773
        %v779 = vsel %vm776, %v773, %v775
        %783 = vst [vmem:[#allocation5 + $0x60] sm:$0xf] %v777
        %784 = vst [vmem:[#allocation5 + $0x68] sm:$0xf] %v778
        %785 = vst [vmem:[#allocation5 + $0x70] sm:$0xf] %v779
        %786 = vst [vmem:[#allocation5 + $0x60] sm:$0xf0] 0.0
        %787 = vst [vmem:[#allocation5 + $0x68] sm:$0xf0] 0.0
        %788 = vst [vmem:[#allocation5 + $0x70] sm:$0xf0] 0.0
        %v789 = vld [vmem:[#allocation10] sm:$0xff]
        %v790 = vld [vmem:[#allocation10 + $0x8] sm:$0xff]
        %v791 = vld [vmem:[#allocation10 + $0x10] sm:$0xff]
        %v792 = vld [vmem:[#allocation10 + $0x18] sm:$0xff]
        %v793 = vld [vmem:[#allocation5] sm:$0xff]
        %v794 = vld [vmem:[#allocation5 + $0x8] sm:$0xff]
        %v795 = vld [vmem:[#allocation5 + $0x10] sm:$0xff]
        %v796 = vld [vmem:[#allocation5 + $0x18] sm:$0xff]
        %v797 = vld [vmem:[#allocation5 + $0x20] sm:$0xff]
        %v798 = vld [vmem:[#allocation5 + $0x28] sm:$0xff]
        %v799 = vld [vmem:[#allocation5 + $0x30] sm:$0xff]
        %v800 = vld [vmem:[#allocation5 + $0x38] sm:$0xff]
        %v801 = vld [vmem:[#allocation5 + $0x40] sm:$0xff]
        %v802 = vld [vmem:[#allocation5 + $0x48] sm:$0xff]
        %v803 = vld [vmem:[#allocation5 + $0x50] sm:$0xff]
        %v804 = vld [vmem:[#allocation5 + $0x58] sm:$0xff]
        %v805 = vld [vmem:[#allocation5 + $0x60] sm:$0xff]
        %v806 = vld [vmem:[#allocation5 + $0x68] sm:$0xff]
        %v807 = vld [vmem:[#allocation5 + $0x70] sm:$0xff]
        %v808 = vld [vmem:[%s3] sm:$0xff]
        %v809 = vld [vmem:[%s3 + $0x8] sm:$0xff]
        %v810 = vld [vmem:[%s3 + $0x10] sm:$0xff]
        %v811 = vld [vmem:[%s3 + $0x18] sm:$0xff]
        %813 = vset.pattern.permute.xlu0 0
        %814 = vperm.xlu0 %813, %v808
        %v815 = vpop.permute.xlu0 %814
        %818 = vset.pattern.permute.xlu0 0
        %819 = vperm.xlu0 %818, %v809
        %v820 = vpop.permute.xlu0 %819
        %823 = vset.pattern.permute.xlu0 0
        %824 = vperm.xlu0 %823, %v810
        %v825 = vpop.permute.xlu0 %824
        %828 = vset.pattern.permute.xlu0 0
        %829 = vperm.xlu0 %828, %v811
        %v830 = vpop.permute.xlu0 %829
        %vm832 = vcmask 326656
        %v834 = vsel %vm832, %v789, 0
        %v837 = vsel %vm832, %v790, 0
        %v840 = vsel %vm832, %v791, 0
        %v843 = vsel %vm832, %v792, 0
        %845 = vmatprep.subr.mxu0 %v794
        %846 = vmatpush1.msra.mxu0 %v793
        %847 = vmatprep.subr.mxu0 %v797
        %848 = vmatpush1.msra.mxu0 %v796
        %849 = vmatprep.subr.mxu0 %v800
        %850 = vmatpush1.msra.mxu0 %v799
        %851 = vmatprep.subr.mxu0 %v803
        %852 = vmatpush1.msra.mxu0 %v802
        %853 = vmatprep.subr.mxu0 %v806
        %854 = vmatpush1.msra.mxu0 %v805
        %855 = vmatprep.subr.mxu0 0.0
        %856 = vmatpush1.msra.mxu0 0.0
        %857 = vmatprep.subr.mxu0 0.0
        %858 = vmatpush1.msra.mxu0 0.0
        %859 = vmatprep.subr.mxu0 0.0
        %860 = vmatpush1.msra.mxu0 0.0
        %861 = vmatprep.subr.mxu0 0.0
        %862 = vmatpush1.msra.mxu0 0.0
        %863 = vmatprep.subr.mxu0 0.0
        %864 = vmatpush1.msra.mxu0 0.0
        %865 = vmatprep.subr.mxu0 0.0
        %866 = vmatpush1.msra.mxu0 0.0
        %867 = vmatprep.subr.mxu0 0.0
        %868 = vmatpush1.msra.mxu0 0.0
        %869 = vmatprep.subr.mxu0 0.0
        %870 = vmatpush1.msra.mxu0 0.0
        %871 = vmatprep.subr.mxu0 0.0
        %872 = vmatpush1.msra.mxu0 0.0
        %873 = vmatprep.subr.mxu0 0.0
        %874 = vmatpush1.msra.mxu0 0.0
        %875 = vmatprep.subr.mxu0 0.0
        %876 = vmatpush1.msra.mxu0 0.0
        %877 = vmatprep.subr.mxu0 0.0
        %878 = vmatpush1.msra.mxu0 0.0
        %879 = vmatprep.subr.mxu0 0.0
        %880 = vmatpush1.msra.mxu0 0.0
        %881 = vmatprep.subr.mxu0 0.0
        %882 = vmatpush1.msra.mxu0 0.0
        %883 = vmatprep.subr.mxu0 0.0
        %884 = vmatpush1.msra.mxu0 0.0
        %885 = vmatprep.subr.mxu0 0.0
        %886 = vmatpush1.msra.mxu0 0.0
        %887 = vmatprep.subr.mxu0 0.0
        %888 = vmatpush1.msra.mxu0 0.0
        %889 = vmatprep.subr.mxu0 0.0
        %890 = vmatpush1.msra.mxu0 0.0
        %891 = vmatprep.subr.mxu0 0.0
        %892 = vmatpush1.msra.mxu0 0.0
        %893 = vmatprep.subr.mxu0 0.0
        %894 = vmatpush1.msra.mxu0 0.0
        %895 = vmatprep.subr.mxu0 0.0
        %896 = vmatpush1.msra.mxu0 0.0
        %897 = vmatprep.subr.mxu0 0.0
        %898 = vmatpush1.msra.mxu0 0.0
        %899 = vmatprep.subr.mxu0 0.0
        %900 = vmatpush1.msra.mxu0 0.0
        %901 = vmatprep.subr.mxu0 0.0
        %902 = vmatpush1.msra.mxu0 0.0
        %903 = vmatprep.subr.mxu0 0.0
        %904 = vmatpush1.msra.mxu0 0.0
        %905 = vmatprep.subr.mxu0 0.0
        %906 = vmatpush1.msra.mxu0 0.0
        %907 = vmatprep.subr.mxu0 0.0
        %908 = vmatpush1.msra.mxu0 0.0
        %909 = vmatprep.mubr.f32.mxu0 0.0
        %910 = vmatmul.mubr.f32.gmra.mrb[0].mxu0 %v834
        %v911 = vpop.f32.mrb[0].mxu0
        %v912 = vadd.f32 %v815, %v911
        %v913 = vpop.f32.mrb[0].mxu0
        %v914 = vadd.f32 %v815, %v913
        %915 = vmatprep.mubr.f32.mxu0 0.0
        %916 = vmatmul.mubr.f32.gmra.mrb[0].mxu0 %v837
        %v917 = vpop.f32.mrb[0].mxu0
        %v918 = vadd.f32 %v820, %v917
        %v919 = vpop.f32.mrb[0].mxu0
        %v920 = vadd.f32 %v820, %v919
        %921 = vmatprep.mubr.f32.mxu0 0.0
        %922 = vmatmul.mubr.f32.gmra.mrb[0].mxu0 %v840
        %v923 = vpop.f32.mrb[0].mxu0
        %v924 = vadd.f32 %v825, %v923
        %v925 = vpop.f32.mrb[0].mxu0
        %v926 = vadd.f32 %v825, %v925
        %927 = vmatprep.mubr.f32.mxu0 0.0
        %928 = vmatmul.mubr.f32.gmra.mrb[0].mxu0 %v843
        %v929 = vpop.f32.mrb[0].mxu0
        %v930 = vadd.f32 %v830, %v929
        %v931 = vpop.f32.mrb[0].mxu0
        %v932 = vadd.f32 %v830, %v931
        %933 = vdwg.mxu0
        %934 = vmatprep.subr.mxu0 0.0
        %935 = vmatpush1.msra.mxu0 %v795
        %936 = vmatprep.subr.mxu0 0.0
        %937 = vmatpush1.msra.mxu0 %v798
        %938 = vmatprep.subr.mxu0 0.0
        %939 = vmatpush1.msra.mxu0 %v801
        %940 = vmatprep.subr.mxu0 0.0
        %941 = vmatpush1.msra.mxu0 %v804
        %942 = vmatprep.subr.mxu0 0.0
        %943 = vmatpush1.msra.mxu0 %v807
        %944 = vmatprep.subr.mxu0 0.0
        %945 = vmatpush1.msra.mxu0 0.0
        %946 = vmatprep.subr.mxu0 0.0
        %947 = vmatpush1.msra.mxu0 0.0
        %948 = vmatprep.subr.mxu0 0.0
        %949 = vmatpush1.msra.mxu0 0.0
        %950 = vmatprep.subr.mxu0 0.0
        %951 = vmatpush1.msra.mxu0 0.0
        %952 = vmatprep.subr.mxu0 0.0
        %953 = vmatpush1.msra.mxu0 0.0
        %954 = vmatprep.subr.mxu0 0.0
        %955 = vmatpush1.msra.mxu0 0.0
        %956 = vmatprep.subr.mxu0 0.0
        %957 = vmatpush1.msra.mxu0 0.0
        %958 = vmatprep.subr.mxu0 0.0
        %959 = vmatpush1.msra.mxu0 0.0
        %960 = vmatprep.subr.mxu0 0.0
        %961 = vmatpush1.msra.mxu0 0.0
        %962 = vmatprep.subr.mxu0 0.0
        %963 = vmatpush1.msra.mxu0 0.0
        %964 = vmatprep.subr.mxu0 0.0
        %965 = vmatpush1.msra.mxu0 0.0
        %966 = vmatprep.subr.mxu0 0.0
        %967 = vmatpush1.msra.mxu0 0.0
        %968 = vmatprep.subr.mxu0 0.0
        %969 = vmatpush1.msra.mxu0 0.0
        %970 = vmatprep.subr.mxu0 0.0
        %971 = vmatpush1.msra.mxu0 0.0
        %972 = vmatprep.subr.mxu0 0.0
        %973 = vmatpush1.msra.mxu0 0.0
        %974 = vmatprep.subr.mxu0 0.0
        %975 = vmatpush1.msra.mxu0 0.0
        %976 = vmatprep.subr.mxu0 0.0
        %977 = vmatpush1.msra.mxu0 0.0
        %978 = vmatprep.subr.mxu0 0.0
        %979 = vmatpush1.msra.mxu0 0.0
        %980 = vmatprep.subr.mxu0 0.0
        %981 = vmatpush1.msra.mxu0 0.0
        %982 = vmatprep.subr.mxu0 0.0
        %983 = vmatpush1.msra.mxu0 0.0
        %984 = vmatprep.subr.mxu0 0.0
        %985 = vmatpush1.msra.mxu0 0.0
        %986 = vmatprep.subr.mxu0 0.0
        %987 = vmatpush1.msra.mxu0 0.0
        %988 = vmatprep.subr.mxu0 0.0
        %989 = vmatpush1.msra.mxu0 0.0
        %990 = vmatprep.subr.mxu0 0.0
        %991 = vmatpush1.msra.mxu0 0.0
        %992 = vmatprep.subr.mxu0 0.0
        %993 = vmatpush1.msra.mxu0 0.0
        %994 = vmatprep.subr.mxu0 0.0
        %995 = vmatpush1.msra.mxu0 0.0
        %996 = vmatprep.subr.mxu0 0.0
        %997 = vmatpush1.msra.mxu0 0.0
        %998 = vmatprep.mubr.f32.mxu0 0.0
        %999 = vmatmul.mubr.f32.gmra.mrb[0].mxu0 %v834
        %v1000 = vpop.f32.mrb[0].mxu0
        %v1001 = vadd.f32 %v815, %v1000
        %v1002 = vpop.f32.mrb[0].mxu0
        %1003 = vmatprep.mubr.f32.mxu0 0.0
        %1004 = vmatmul.mubr.f32.gmra.mrb[0].mxu0 %v837
        %v1005 = vpop.f32.mrb[0].mxu0
        %v1006 = vadd.f32 %v820, %v1005
        %v1007 = vpop.f32.mrb[0].mxu0
        %1008 = vmatprep.mubr.f32.mxu0 0.0
        %1009 = vmatmul.mubr.f32.gmra.mrb[0].mxu0 %v840
        %v1010 = vpop.f32.mrb[0].mxu0
        %v1011 = vadd.f32 %v825, %v1010
        %v1012 = vpop.f32.mrb[0].mxu0
        %1013 = vmatprep.mubr.f32.mxu0 0.0
        %1014 = vmatmul.mubr.f32.gmra.mrb[0].mxu0 %v843
        %v1015 = vpop.f32.mrb[0].mxu0
        %v1016 = vadd.f32 %v830, %v1015
        %v1017 = vpop.f32.mrb[0].mxu0
        %1018 = vdwg.mxu0
        %v1019 = vld [vmem:[%s12] sm:$0xff]
        %v1020 = vld [vmem:[#allocation5 + $0x30] sm:$0xf]
        %v1021 = vld [vmem:[#allocation5 + $0x38] sm:$0xf]
        %v1022 = vld [vmem:[#allocation5 + $0x40] sm:$0xf]
        %v1023 = vld [vmem:[%s13] sm:$0xff]
        %1025 = vset.pattern.permute.xlu0 0
        %1026 = vperm.xlu0 %1025, %v1023
        %v1027 = vpop.permute.xlu0 %1026
        %vm1029 = vcmask 31744
        %v1031 = vsel %vm1029, %v1019, 0
        %vm1033 = vcmask 1043456
        %v1035 = vsel %vm1033, %v1020, 0
        %v1038 = vsel %vm1033, %v1021, 0
        %v1041 = vsel %vm1033, %v1022, 0
        %1043 = vmatprep.subr.mxu0 %v1038
        %1044 = vmatpush1.msra.mxu0 %v1035
        %1045 = vmatprep.subr.mxu0 0.0
        %1046 = vmatpush1.msra.mxu0 0.0
        %1047 = vmatprep.subr.mxu0 0.0
        %1048 = vmatpush1.msra.mxu0 0.0
        %1049 = vmatprep.subr.mxu0 0.0
        %1050 = vmatpush1.msra.mxu0 0.0
        %1051 = vmatprep.subr.mxu0 0.0
        %1052 = vmatpush1.msra.mxu0 0.0
        %1053 = vmatprep.subr.mxu0 0.0
        %1054 = vmatpush1.msra.mxu0 0.0
        %1055 = vmatprep.subr.mxu0 0.0
        %1056 = vmatpush1.msra.mxu0 0.0
        %1057 = vmatprep.subr.mxu0 0.0
        %1058 = vmatpush1.msra.mxu0 0.0
        %1059 = vmatprep.subr.mxu0 0.0
        %1060 = vmatpush1.msra.mxu0 0.0
        %1061 = vmatprep.subr.mxu0 0.0
        %1062 = vmatpush1.msra.mxu0 0.0
        %1063 = vmatprep.subr.mxu0 0.0
        %1064 = vmatpush1.msra.mxu0 0.0
        %1065 = vmatprep.subr.mxu0 0.0
        %1066 = vmatpush1.msra.mxu0 0.0
        %1067 = vmatprep.subr.mxu0 0.0
        %1068 = vmatpush1.msra.mxu0 0.0
        %1069 = vmatprep.subr.mxu0 0.0
        %1070 = vmatpush1.msra.mxu0 0.0
        %1071 = vmatprep.subr.mxu0 0.0
        %1072 = vmatpush1.msra.mxu0 0.0
        %1073 = vmatprep.subr.mxu0 0.0
        %1074 = vmatpush1.msra.mxu0 0.0
        %1075 = vmatprep.subr.mxu0 0.0
        %1076 = vmatpush1.msra.mxu0 0.0
        %1077 = vmatprep.subr.mxu0 0.0
        %1078 = vmatpush1.msra.mxu0 0.0
        %1079 = vmatprep.subr.mxu0 0.0
        %1080 = vmatpush1.msra.mxu0 0.0
        %1081 = vmatprep.subr.mxu0 0.0
        %1082 = vmatpush1.msra.mxu0 0.0
        %1083 = vmatprep.subr.mxu0 0.0
        %1084 = vmatpush1.msra.mxu0 0.0
        %1085 = vmatprep.subr.mxu0 0.0
        %1086 = vmatpush1.msra.mxu0 0.0
        %1087 = vmatprep.subr.mxu0 0.0
        %1088 = vmatpush1.msra.mxu0 0.0
        %1089 = vmatprep.subr.mxu0 0.0
        %1090 = vmatpush1.msra.mxu0 0.0
        %1091 = vmatprep.subr.mxu0 0.0
        %1092 = vmatpush1.msra.mxu0 0.0
        %1093 = vmatprep.subr.mxu0 0.0
        %1094 = vmatpush1.msra.mxu0 0.0
        %1095 = vmatprep.subr.mxu0 0.0
        %1096 = vmatpush1.msra.mxu0 0.0
        %1097 = vmatprep.subr.mxu0 0.0
        %1098 = vmatpush1.msra.mxu0 0.0
        %1099 = vmatprep.subr.mxu0 0.0
        %1100 = vmatpush1.msra.mxu0 0.0
        %1101 = vmatprep.subr.mxu0 0.0
        %1102 = vmatpush1.msra.mxu0 0.0
        %1103 = vmatprep.subr.mxu0 0.0
        %1104 = vmatpush1.msra.mxu0 0.0
        %1105 = vmatprep.subr.mxu0 0.0
        %1106 = vmatpush1.msra.mxu0 0.0
        %1107 = vmatprep.mubr.f32.mxu0 0.0
        %1108 = vmatmul.mubr.f32.gmra.mrb[0].mxu0 %v1031
        %v1109 = vpop.f32.mrb[0].mxu0
        %v1110 = vadd.f32 %v1027, %v1109
        %v1111 = vpop.f32.mrb[0].mxu0
        %v1112 = vadd.f32 %v1027, %v1111
        %1113 = vdwg.mxu0
        %1114 = vmatprep.subr.mxu0 0.0
        %1115 = vmatpush1.msra.mxu0 %v1041
        %1116 = vmatprep.subr.mxu0 0.0
        %1117 = vmatpush1.msra.mxu0 0.0
        %1118 = vmatprep.subr.mxu0 0.0
        %1119 = vmatpush1.msra.mxu0 0.0
        %1120 = vmatprep.subr.mxu0 0.0
        %1121 = vmatpush1.msra.mxu0 0.0
        %1122 = vmatprep.subr.mxu0 0.0
        %1123 = vmatpush1.msra.mxu0 0.0
        %1124 = vmatprep.subr.mxu0 0.0
        %1125 = vmatpush1.msra.mxu0 0.0
        %1126 = vmatprep.subr.mxu0 0.0
        %1127 = vmatpush1.msra.mxu0 0.0
        %1128 = vmatprep.subr.mxu0 0.0
        %1129 = vmatpush1.msra.mxu0 0.0
        %1130 = vmatprep.subr.mxu0 0.0
        %1131 = vmatpush1.msra.mxu0 0.0
        %1132 = vmatprep.subr.mxu0 0.0
        %1133 = vmatpush1.msra.mxu0 0.0
        %1134 = vmatprep.subr.mxu0 0.0
        %1135 = vmatpush1.msra.mxu0 0.0
        %1136 = vmatprep.subr.mxu0 0.0
        %1137 = vmatpush1.msra.mxu0 0.0
        %1138 = vmatprep.subr.mxu0 0.0
        %1139 = vmatpush1.msra.mxu0 0.0
        %1140 = vmatprep.subr.mxu0 0.0
        %1141 = vmatpush1.msra.mxu0 0.0
        %1142 = vmatprep.subr.mxu0 0.0
        %1143 = vmatpush1.msra.mxu0 0.0
        %1144 = vmatprep.subr.mxu0 0.0
        %1145 = vmatpush1.msra.mxu0 0.0
        %1146 = vmatprep.subr.mxu0 0.0
        %1147 = vmatpush1.msra.mxu0 0.0
        %1148 = vmatprep.subr.mxu0 0.0
        %1149 = vmatpush1.msra.mxu0 0.0
        %1150 = vmatprep.subr.mxu0 0.0
        %1151 = vmatpush1.msra.mxu0 0.0
        %1152 = vmatprep.subr.mxu0 0.0
        %1153 = vmatpush1.msra.mxu0 0.0
        %1154 = vmatprep.subr.mxu0 0.0
        %1155 = vmatpush1.msra.mxu0 0.0
        %1156 = vmatprep.subr.mxu0 0.0
        %1157 = vmatpush1.msra.mxu0 0.0
        %1158 = vmatprep.subr.mxu0 0.0
        %1159 = vmatpush1.msra.mxu0 0.0
        %1160 = vmatprep.subr.mxu0 0.0
        %1161 = vmatpush1.msra.mxu0 0.0
        %1162 = vmatprep.subr.mxu0 0.0
        %1163 = vmatpush1.msra.mxu0 0.0
        %1164 = vmatprep.subr.mxu0 0.0
        %1165 = vmatpush1.msra.mxu0 0.0
        %1166 = vmatprep.subr.mxu0 0.0
        %1167 = vmatpush1.msra.mxu0 0.0
        %1168 = vmatprep.subr.mxu0 0.0
        %1169 = vmatpush1.msra.mxu0 0.0
        %1170 = vmatprep.subr.mxu0 0.0
        %1171 = vmatpush1.msra.mxu0 0.0
        %1172 = vmatprep.subr.mxu0 0.0
        %1173 = vmatpush1.msra.mxu0 0.0
        %1174 = vmatprep.subr.mxu0 0.0
        %1175 = vmatpush1.msra.mxu0 0.0
        %1176 = vmatprep.subr.mxu0 0.0
        %1177 = vmatpush1.msra.mxu0 0.0
        %1178 = vmatprep.mubr.f32.mxu0 0.0
        %1179 = vmatmul.mubr.f32.gmra.mrb[0].mxu0 %v1031
        %v1180 = vpop.f32.mrb[0].mxu0
        %v1181 = vadd.f32 %v1027, %v1180
        %v1182 = vpop.f32.mrb[0].mxu0
        %1183 = vdwg.mxu0
        %v1184 = vld [vmem:[%s10] sm:$0xff]
        %v1185 = vld [vmem:[%s11] sm:$0xff]
        %1187 = vset.pattern.permute.xlu0 0
        %1188 = vperm.xlu0 %1187, %v1185
        %v1189 = vpop.permute.xlu0 %1188
        %v1192 = vsel %vm832, %v1184, 0
        %1194 = vmatprep.subr.mxu0 %v794
        %1195 = vmatpush1.msra.mxu0 %v793
        %1196 = vmatprep.subr.mxu0 %v797
        %1197 = vmatpush1.msra.mxu0 %v796
        %1198 = vmatprep.subr.mxu0 %v800
        %1199 = vmatpush1.msra.mxu0 %v799
        %1200 = vmatprep.subr.mxu0 %v803
        %1201 = vmatpush1.msra.mxu0 %v802
        %1202 = vmatprep.subr.mxu0 %v806
        %1203 = vmatpush1.msra.mxu0 %v805
        %1204 = vmatprep.subr.mxu0 0.0
        %1205 = vmatpush1.msra.mxu0 0.0
        %1206 = vmatprep.subr.mxu0 0.0
        %1207 = vmatpush1.msra.mxu0 0.0
        %1208 = vmatprep.subr.mxu0 0.0
        %1209 = vmatpush1.msra.mxu0 0.0
        %1210 = vmatprep.subr.mxu0 0.0
        %1211 = vmatpush1.msra.mxu0 0.0
        %1212 = vmatprep.subr.mxu0 0.0
        %1213 = vmatpush1.msra.mxu0 0.0
        %1214 = vmatprep.subr.mxu0 0.0
        %1215 = vmatpush1.msra.mxu0 0.0
        %1216 = vmatprep.subr.mxu0 0.0
        %1217 = vmatpush1.msra.mxu0 0.0
        %1218 = vmatprep.subr.mxu0 0.0
        %1219 = vmatpush1.msra.mxu0 0.0
        %1220 = vmatprep.subr.mxu0 0.0
        %1221 = vmatpush1.msra.mxu0 0.0
        %1222 = vmatprep.subr.mxu0 0.0
        %1223 = vmatpush1.msra.mxu0 0.0
        %1224 = vmatprep.subr.mxu0 0.0
        %1225 = vmatpush1.msra.mxu0 0.0
        %1226 = vmatprep.subr.mxu0 0.0
        %1227 = vmatpush1.msra.mxu0 0.0
        %1228 = vmatprep.subr.mxu0 0.0
        %1229 = vmatpush1.msra.mxu0 0.0
        %1230 = vmatprep.subr.mxu0 0.0
        %1231 = vmatpush1.msra.mxu0 0.0
        %1232 = vmatprep.subr.mxu0 0.0
        %1233 = vmatpush1.msra.mxu0 0.0
        %1234 = vmatprep.subr.mxu0 0.0
        %1235 = vmatpush1.msra.mxu0 0.0
        %1236 = vmatprep.subr.mxu0 0.0
        %1237 = vmatpush1.msra.mxu0 0.0
        %1238 = vmatprep.subr.mxu0 0.0
        %1239 = vmatpush1.msra.mxu0 0.0
        %1240 = vmatprep.subr.mxu0 0.0
        %1241 = vmatpush1.msra.mxu0 0.0
        %1242 = vmatprep.subr.mxu0 0.0
        %1243 = vmatpush1.msra.mxu0 0.0
        %1244 = vmatprep.subr.mxu0 0.0
        %1245 = vmatpush1.msra.mxu0 0.0
        %1246 = vmatprep.subr.mxu0 0.0
        %1247 = vmatpush1.msra.mxu0 0.0
        %1248 = vmatprep.subr.mxu0 0.0
        %1249 = vmatpush1.msra.mxu0 0.0
        %1250 = vmatprep.subr.mxu0 0.0
        %1251 = vmatpush1.msra.mxu0 0.0
        %1252 = vmatprep.subr.mxu0 0.0
        %1253 = vmatpush1.msra.mxu0 0.0
        %1254 = vmatprep.subr.mxu0 0.0
        %1255 = vmatpush1.msra.mxu0 0.0
        %1256 = vmatprep.subr.mxu0 0.0
        %1257 = vmatpush1.msra.mxu0 0.0
        %1258 = vmatprep.mubr.f32.mxu0 0.0
        %1259 = vmatmul.mubr.f32.gmra.mrb[0].mxu0 %v1192
        %v1260 = vpop.f32.mrb[0].mxu0
        %v1261 = vadd.f32 %v1189, %v1260
        %v1262 = vpop.f32.mrb[0].mxu0
        %v1263 = vadd.f32 %v1189, %v1262
        %1264 = vdwg.mxu0
        %1265 = vmatprep.subr.mxu0 0.0
        %1266 = vmatpush1.msra.mxu0 %v795
        %1267 = vmatprep.subr.mxu0 0.0
        %1268 = vmatpush1.msra.mxu0 %v798
        %1269 = vmatprep.subr.mxu0 0.0
        %1270 = vmatpush1.msra.mxu0 %v801
        %1271 = vmatprep.subr.mxu0 0.0
        %1272 = vmatpush1.msra.mxu0 %v804
        %1273 = vmatprep.subr.mxu0 0.0
        %1274 = vmatpush1.msra.mxu0 %v807
        %1275 = vmatprep.subr.mxu0 0.0
        %1276 = vmatpush1.msra.mxu0 0.0
        %1277 = vmatprep.subr.mxu0 0.0
        %1278 = vmatpush1.msra.mxu0 0.0
        %1279 = vmatprep.subr.mxu0 0.0
        %1280 = vmatpush1.msra.mxu0 0.0
        %1281 = vmatprep.subr.mxu0 0.0
        %1282 = vmatpush1.msra.mxu0 0.0
        %1283 = vmatprep.subr.mxu0 0.0
        %1284 = vmatpush1.msra.mxu0 0.0
        %1285 = vmatprep.subr.mxu0 0.0
        %1286 = vmatpush1.msra.mxu0 0.0
        %1287 = vmatprep.subr.mxu0 0.0
        %1288 = vmatpush1.msra.mxu0 0.0
        %1289 = vmatprep.subr.mxu0 0.0
        %1290 = vmatpush1.msra.mxu0 0.0
        %1291 = vmatprep.subr.mxu0 0.0
        %1292 = vmatpush1.msra.mxu0 0.0
        %1293 = vmatprep.subr.mxu0 0.0
        %1294 = vmatpush1.msra.mxu0 0.0
        %1295 = vmatprep.subr.mxu0 0.0
        %1296 = vmatpush1.msra.mxu0 0.0
        %1297 = vmatprep.subr.mxu0 0.0
        %1298 = vmatpush1.msra.mxu0 0.0
        %1299 = vmatprep.subr.mxu0 0.0
        %1300 = vmatpush1.msra.mxu0 0.0
        %1301 = vmatprep.subr.mxu0 0.0
        %1302 = vmatpush1.msra.mxu0 0.0
        %1303 = vmatprep.subr.mxu0 0.0
        %1304 = vmatpush1.msra.mxu0 0.0
        %1305 = vmatprep.subr.mxu0 0.0
        %1306 = vmatpush1.msra.mxu0 0.0
        %1307 = vmatprep.subr.mxu0 0.0
        %1308 = vmatpush1.msra.mxu0 0.0
        %1309 = vmatprep.subr.mxu0 0.0
        %1310 = vmatpush1.msra.mxu0 0.0
        %1311 = vmatprep.subr.mxu0 0.0
        %1312 = vmatpush1.msra.mxu0 0.0
        %1313 = vmatprep.subr.mxu0 0.0
        %1314 = vmatpush1.msra.mxu0 0.0
        %1315 = vmatprep.subr.mxu0 0.0
        %1316 = vmatpush1.msra.mxu0 0.0
        %1317 = vmatprep.subr.mxu0 0.0
        %1318 = vmatpush1.msra.mxu0 0.0
        %1319 = vmatprep.subr.mxu0 0.0
        %1320 = vmatpush1.msra.mxu0 0.0
        %1321 = vmatprep.subr.mxu0 0.0
        %1322 = vmatpush1.msra.mxu0 0.0
        %1323 = vmatprep.subr.mxu0 0.0
        %1324 = vmatpush1.msra.mxu0 0.0
        %1325 = vmatprep.subr.mxu0 0.0
        %1326 = vmatpush1.msra.mxu0 0.0
        %1327 = vmatprep.subr.mxu0 0.0
        %1328 = vmatpush1.msra.mxu0 0.0
        %1329 = vmatprep.mubr.f32.mxu0 0.0
        %1330 = vmatmul.mubr.f32.gmra.mrb[0].mxu0 %v1192
        %v1331 = vpop.f32.mrb[0].mxu0
        %v1332 = vadd.f32 %v1189, %v1331
        %v1333 = vpop.f32.mrb[0].mxu0
        %1334 = vdwg.mxu0
        %v1335 = vmax.f32 %v912, 0.0
        %v1336 = vmax.f32 %v914, 0.0
        %v1337 = vmax.f32 %v1001, 0.0
        %v1338 = vmax.f32 %v918, 0.0
        %v1339 = vmax.f32 %v920, 0.0
        %v1340 = vmax.f32 %v1006, 0.0
        %v1341 = vmax.f32 %v924, 0.0
        %v1342 = vmax.f32 %v926, 0.0
        %v1343 = vmax.f32 %v1011, 0.0
        %v1344 = vmax.f32 %v930, 0.0
        %v1345 = vmax.f32 %v932, 0.0
        %v1346 = vmax.f32 %v1016, 0.0
        %v1348 = vlaneseq
        %v1349 = vshrl.u32 %v1348, 7
        %v1350 = vsub.s32 0, %v1349
        %v1351 = vrot.slane %v553, %v1350
        %v1352 = vlaneseq
        %v1353 = vshrl.u32 %v1352, 7
        %v1354 = vsub.s32 1, %v1353
        %v1355 = vrot.slane %v553, %v1354
        %v1356 = vlaneseq
        %v1357 = vshrl.u32 %v1356, 7
        %v1358 = vsub.s32 2, %v1357
        %v1359 = vrot.slane %v553, %v1358
        %v1363 = vmul.f32 %v1351, %v1335
        %v1364 = vmul.f32 %v1355, %v1336
        %v1365 = vmul.f32 %v1359, %v1337
        %v1366 = vmul.f32 %v1351, %v1338
        %v1367 = vmul.f32 %v1355, %v1339
        %v1368 = vmul.f32 %v1359, %v1340
        %v1369 = vmul.f32 %v1351, %v1341
        %v1370 = vmul.f32 %v1355, %v1342
        %v1371 = vmul.f32 %v1359, %v1343
        %v1372 = vmul.f32 %v1351, %v1344
        %v1373 = vmul.f32 %v1355, %v1345
        %v1374 = vmul.f32 %v1359, %v1346
        %1375 = vst [vmem:[#allocation2 + $0x8] sm:$0xff] %v1363
        %1376 = vst [vmem:[#allocation2 + $0x10] sm:$0xff] %v1364
        %1377 = vst [vmem:[#allocation2 + $0x18] sm:$0xff] %v1365
        %1378 = vst [vmem:[#allocation2 + $0x30] sm:$0xff] %v1366
        %1379 = vst [vmem:[#allocation2 + $0x38] sm:$0xff] %v1367
        %1380 = vst [vmem:[#allocation2 + $0x40] sm:$0xff] %v1368
        %1381 = vst [vmem:[#allocation2 + $0x58] sm:$0xff] %v1369
        %1382 = vst [vmem:[#allocation2 + $0x60] sm:$0xff] %v1370
        %1383 = vst [vmem:[#allocation2 + $0x68] sm:$0xff] %v1371
        %1384 = vst [vmem:[#allocation2 + $0x80] sm:$0xff] %v1372
        %1385 = vst [vmem:[#allocation2 + $0x88] sm:$0xff] %v1373
        %1386 = vst [vmem:[#allocation2 + $0x90] sm:$0xff] %v1374
        %v1387 = vld [vmem:[#allocation2] sm:$0xff]
        %v1388 = vld [vmem:[#allocation2 + $0x8] sm:$0xff]
        %v1389 = vld [vmem:[#allocation2 + $0x10] sm:$0xff]
        %v1390 = vld [vmem:[#allocation2 + $0x18] sm:$0xff]
        %v1391 = vld [vmem:[#allocation2 + $0x28] sm:$0xff]
        %v1392 = vld [vmem:[#allocation2 + $0x30] sm:$0xff]
        %v1393 = vld [vmem:[#allocation2 + $0x38] sm:$0xff]
        %v1394 = vld [vmem:[#allocation2 + $0x40] sm:$0xff]
        %v1395 = vld [vmem:[#allocation2 + $0x50] sm:$0xff]
        %v1396 = vld [vmem:[#allocation2 + $0x58] sm:$0xff]
        %v1397 = vld [vmem:[#allocation2 + $0x60] sm:$0xff]
        %v1398 = vld [vmem:[#allocation2 + $0x68] sm:$0xff]
        %v1399 = vld [vmem:[#allocation2 + $0x78] sm:$0xff]
        %v1400 = vld [vmem:[#allocation2 + $0x80] sm:$0xff]
        %v1401 = vld [vmem:[#allocation2 + $0x88] sm:$0xff]
        %v1402 = vld [vmem:[#allocation2 + $0x90] sm:$0xff]
        %1419 = vrot.lane.b32.xlu0 %v1387, 19
        %v1420 = vpop.permute.xlu0 %1419
        %1421 = vrot.lane.b32.xlu0 %v1388, 19
        %v1422 = vpop.permute.xlu0 %1421
        %1423 = vrot.lane.b32.xlu0 %v1389, 19
        %v1424 = vpop.permute.xlu0 %1423
        %1425 = vrot.lane.b32.xlu0 %v1390, 19
        %v1426 = vpop.permute.xlu0 %1425
        %1427 = vrot.lane.b32.xlu0 %v1391, 19
        %v1428 = vpop.permute.xlu0 %1427
        %1429 = vrot.lane.b32.xlu0 %v1392, 19
        %v1430 = vpop.permute.xlu0 %1429
        %1431 = vrot.lane.b32.xlu0 %v1393, 19
        %v1432 = vpop.permute.xlu0 %1431
        %1433 = vrot.lane.b32.xlu0 %v1394, 19
        %v1434 = vpop.permute.xlu0 %1433
        %1435 = vrot.lane.b32.xlu0 %v1395, 19
        %v1436 = vpop.permute.xlu0 %1435
        %1437 = vrot.lane.b32.xlu0 %v1396, 19
        %v1438 = vpop.permute.xlu0 %1437
        %1439 = vrot.lane.b32.xlu0 %v1397, 19
        %v1440 = vpop.permute.xlu0 %1439
        %1441 = vrot.lane.b32.xlu0 %v1398, 19
        %v1442 = vpop.permute.xlu0 %1441
        %1443 = vrot.lane.b32.xlu0 %v1399, 19
        %v1444 = vpop.permute.xlu0 %1443
        %1445 = vrot.lane.b32.xlu0 %v1400, 19
        %v1446 = vpop.permute.xlu0 %1445
        %1447 = vrot.lane.b32.xlu0 %v1401, 19
        %v1448 = vpop.permute.xlu0 %1447
        %1449 = vrot.lane.b32.xlu0 %v1402, 19
        %v1450 = vpop.permute.xlu0 %1449
        %v1451 = vsel %vm600, %v1420, %v1422
        %v1452 = vsel %vm600, %v1422, %v1424
        %v1453 = vsel %vm600, %v1424, %v1426
        %v1454 = vsel %vm600, %v1428, %v1430
        %v1455 = vsel %vm600, %v1430, %v1432
        %v1456 = vsel %vm600, %v1432, %v1434
        %v1457 = vsel %vm600, %v1436, %v1438
        %v1458 = vsel %vm600, %v1438, %v1440
        %v1459 = vsel %vm600, %v1440, %v1442
        %v1460 = vsel %vm600, %v1444, %v1446
        %v1461 = vsel %vm600, %v1446, %v1448
        %v1462 = vsel %vm600, %v1448, %v1450
        %1475 = vst [vmem:[#allocation5] sm:$0xff] %v1451
        %1476 = vst [vmem:[#allocation5 + $0x8] sm:$0xff] %v1452
        %1477 = vst [vmem:[#allocation5 + $0x10] sm:$0xff] %v1453
        %1478 = vst [vmem:[#allocation5 + $0x18] sm:$0xff] %v1454
        %1479 = vst [vmem:[#allocation5 + $0x20] sm:$0xff] %v1455
        %1480 = vst [vmem:[#allocation5 + $0x28] sm:$0xff] %v1456
        %1481 = vst [vmem:[#allocation5 + $0x30] sm:$0xff] %v1457
        %1482 = vst [vmem:[#allocation5 + $0x38] sm:$0xff] %v1458
        %1483 = vst [vmem:[#allocation5 + $0x40] sm:$0xff] %v1459
        %1484 = vst [vmem:[#allocation5 + $0x48] sm:$0xff] %v1460
        %1485 = vst [vmem:[#allocation5 + $0x50] sm:$0xff] %v1461
        %1486 = vst [vmem:[#allocation5 + $0x58] sm:$0xff] %v1462
        %v1487 = vld [vmem:[#allocation2] sm:$0xff]
        %v1488 = vld [vmem:[#allocation2 + $0x8] sm:$0xff]
        %v1489 = vld [vmem:[#allocation2 + $0x10] sm:$0xff]
        %v1490 = vld [vmem:[#allocation2 + $0x18] sm:$0xff]
        %v1491 = vld [vmem:[#allocation2 + $0x28] sm:$0xff]
        %v1492 = vld [vmem:[#allocation2 + $0x30] sm:$0xff]
        %v1493 = vld [vmem:[#allocation2 + $0x38] sm:$0xff]
        %v1494 = vld [vmem:[#allocation2 + $0x40] sm:$0xff]
        %v1495 = vld [vmem:[#allocation2 + $0x50] sm:$0xff]
        %v1496 = vld [vmem:[#allocation2 + $0x58] sm:$0xff]
        %v1497 = vld [vmem:[#allocation2 + $0x60] sm:$0xff]
        %v1498 = vld [vmem:[#allocation2 + $0x68] sm:$0xff]
        %v1499 = vld [vmem:[#allocation2 + $0x78] sm:$0xff]
        %v1500 = vld [vmem:[#allocation2 + $0x80] sm:$0xff]
        %v1501 = vld [vmem:[#allocation2 + $0x88] sm:$0xff]
        %v1502 = vld [vmem:[#allocation2 + $0x90] sm:$0xff]
        %1519 = vrot.lane.b32.xlu0 %v1487, 18
        %v1520 = vpop.permute.xlu0 %1519
        %1521 = vrot.lane.b32.xlu0 %v1488, 18
        %v1522 = vpop.permute.xlu0 %1521
        %1523 = vrot.lane.b32.xlu0 %v1489, 18
        %v1524 = vpop.permute.xlu0 %1523
        %1525 = vrot.lane.b32.xlu0 %v1490, 18
        %v1526 = vpop.permute.xlu0 %1525
        %1527 = vrot.lane.b32.xlu0 %v1491, 18
        %v1528 = vpop.permute.xlu0 %1527
        %1529 = vrot.lane.b32.xlu0 %v1492, 18
        %v1530 = vpop.permute.xlu0 %1529
        %1531 = vrot.lane.b32.xlu0 %v1493, 18
        %v1532 = vpop.permute.xlu0 %1531
        %1533 = vrot.lane.b32.xlu0 %v1494, 18
        %v1534 = vpop.permute.xlu0 %1533
        %1535 = vrot.lane.b32.xlu0 %v1495, 18
        %v1536 = vpop.permute.xlu0 %1535
        %1537 = vrot.lane.b32.xlu0 %v1496, 18
        %v1538 = vpop.permute.xlu0 %1537
        %1539 = vrot.lane.b32.xlu0 %v1497, 18
        %v1540 = vpop.permute.xlu0 %1539
        %1541 = vrot.lane.b32.xlu0 %v1498, 18
        %v1542 = vpop.permute.xlu0 %1541
        %1543 = vrot.lane.b32.xlu0 %v1499, 18
        %v1544 = vpop.permute.xlu0 %1543
        %1545 = vrot.lane.b32.xlu0 %v1500, 18
        %v1546 = vpop.permute.xlu0 %1545
        %1547 = vrot.lane.b32.xlu0 %v1501, 18
        %v1548 = vpop.permute.xlu0 %1547
        %1549 = vrot.lane.b32.xlu0 %v1502, 18
        %v1550 = vpop.permute.xlu0 %1549
        %v1551 = vsel %vm624, %v1520, %v1522
        %v1552 = vsel %vm624, %v1522, %v1524
        %v1553 = vsel %vm624, %v1524, %v1526
        %v1554 = vsel %vm624, %v1528, %v1530
        %v1555 = vsel %vm624, %v1530, %v1532
        %v1556 = vsel %vm624, %v1532, %v1534
        %v1557 = vsel %vm624, %v1536, %v1538
        %v1558 = vsel %vm624, %v1538, %v1540
        %v1559 = vsel %vm624, %v1540, %v1542
        %v1560 = vsel %vm624, %v1544, %v1546
        %v1561 = vsel %vm624, %v1546, %v1548
        %v1562 = vsel %vm624, %v1548, %v1550
        %1575 = vst [vmem:[#allocation5 + $0x60] sm:$0xff] %v1551
        %1576 = vst [vmem:[#allocation5 + $0x68] sm:$0xff] %v1552
        %1577 = vst [vmem:[#allocation5 + $0x70] sm:$0xff] %v1553
        %1578 = vst [vmem:[#allocation5 + $0x78] sm:$0xff] %v1554
        %1579 = vst [vmem:[#allocation5 + $0x80] sm:$0xff] %v1555
        %1580 = vst [vmem:[#allocation5 + $0x88] sm:$0xff] %v1556
        %1581 = vst [vmem:[#allocation5 + $0x90] sm:$0xff] %v1557
        %1582 = vst [vmem:[#allocation5 + $0x98] sm:$0xff] %v1558
        %1583 = vst [vmem:[#allocation5 + $0xa0] sm:$0xff] %v1559
        %1584 = vst [vmem:[#allocation5 + $0xa8] sm:$0xff] %v1560
        %1585 = vst [vmem:[#allocation5 + $0xb0] sm:$0xff] %v1561
        %1586 = vst [vmem:[#allocation5 + $0xb8] sm:$0xff] %v1562
        %v1587 = vld [vmem:[#allocation2] sm:$0xff]
        %v1588 = vld [vmem:[#allocation2 + $0x8] sm:$0xff]
        %v1589 = vld [vmem:[#allocation2 + $0x10] sm:$0xff]
        %v1590 = vld [vmem:[#allocation2 + $0x18] sm:$0xff]
        %v1591 = vld [vmem:[#allocation2 + $0x28] sm:$0xff]
        %v1592 = vld [vmem:[#allocation2 + $0x30] sm:$0xff]
        %v1593 = vld [vmem:[#allocation2 + $0x38] sm:$0xff]
        %v1594 = vld [vmem:[#allocation2 + $0x40] sm:$0xff]
        %v1595 = vld [vmem:[#allocation2 + $0x50] sm:$0xff]
        %v1596 = vld [vmem:[#allocation2 + $0x58] sm:$0xff]
        %v1597 = vld [vmem:[#allocation2 + $0x60] sm:$0xff]
        %v1598 = vld [vmem:[#allocation2 + $0x68] sm:$0xff]
        %v1599 = vld [vmem:[#allocation2 + $0x78] sm:$0xff]
        %v1600 = vld [vmem:[#allocation2 + $0x80] sm:$0xff]
        %v1601 = vld [vmem:[#allocation2 + $0x88] sm:$0xff]
        %v1602 = vld [vmem:[#allocation2 + $0x90] sm:$0xff]
        %1619 = vrot.lane.b32.xlu0 %v1587, 17
        %v1620 = vpop.permute.xlu0 %1619
        %1621 = vrot.lane.b32.xlu0 %v1588, 17
        %v1622 = vpop.permute.xlu0 %1621
        %1623 = vrot.lane.b32.xlu0 %v1589, 17
        %v1624 = vpop.permute.xlu0 %1623
        %1625 = vrot.lane.b32.xlu0 %v1590, 17
        %v1626 = vpop.permute.xlu0 %1625
        %1627 = vrot.lane.b32.xlu0 %v1591, 17
        %v1628 = vpop.permute.xlu0 %1627
        %1629 = vrot.lane.b32.xlu0 %v1592, 17
        %v1630 = vpop.permute.xlu0 %1629
        %1631 = vrot.lane.b32.xlu0 %v1593, 17
        %v1632 = vpop.permute.xlu0 %1631
        %1633 = vrot.lane.b32.xlu0 %v1594, 17
        %v1634 = vpop.permute.xlu0 %1633
        %1635 = vrot.lane.b32.xlu0 %v1595, 17
        %v1636 = vpop.permute.xlu0 %1635
        %1637 = vrot.lane.b32.xlu0 %v1596, 17
        %v1638 = vpop.permute.xlu0 %1637
        %1639 = vrot.lane.b32.xlu0 %v1597, 17
        %v1640 = vpop.permute.xlu0 %1639
        %1641 = vrot.lane.b32.xlu0 %v1598, 17
        %v1642 = vpop.permute.xlu0 %1641
        %1643 = vrot.lane.b32.xlu0 %v1599, 17
        %v1644 = vpop.permute.xlu0 %1643
        %1645 = vrot.lane.b32.xlu0 %v1600, 17
        %v1646 = vpop.permute.xlu0 %1645
        %1647 = vrot.lane.b32.xlu0 %v1601, 17
        %v1648 = vpop.permute.xlu0 %1647
        %1649 = vrot.lane.b32.xlu0 %v1602, 17
        %v1650 = vpop.permute.xlu0 %1649
        %v1651 = vsel %vm648, %v1620, %v1622
        %v1652 = vsel %vm648, %v1622, %v1624
        %v1653 = vsel %vm648, %v1624, %v1626
        %v1654 = vsel %vm648, %v1628, %v1630
        %v1655 = vsel %vm648, %v1630, %v1632
        %v1656 = vsel %vm648, %v1632, %v1634
        %v1657 = vsel %vm648, %v1636, %v1638
        %v1658 = vsel %vm648, %v1638, %v1640
        %v1659 = vsel %vm648, %v1640, %v1642
        %v1660 = vsel %vm648, %v1644, %v1646
        %v1661 = vsel %vm648, %v1646, %v1648
        %v1662 = vsel %vm648, %v1648, %v1650
        %1675 = vst [vmem:[#allocation5 + $0xc0] sm:$0xff] %v1651
        %1676 = vst [vmem:[#allocation5 + $0xc8] sm:$0xff] %v1652
        %1677 = vst [vmem:[#allocation5 + $0xd0] sm:$0xff] %v1653
        %1678 = vst [vmem:[#allocation5 + $0xd8] sm:$0xff] %v1654
        %1679 = vst [vmem:[#allocation5 + $0xe0] sm:$0xff] %v1655
        %1680 = vst [vmem:[#allocation5 + $0xe8] sm:$0xff] %v1656
        %1681 = vst [vmem:[#allocation5 + $0xf0] sm:$0xff] %v1657
        %1682 = vst [vmem:[#allocation5 + $0xf8] sm:$0xff] %v1658
        %1683 = vst [vmem:[#allocation5 + $0x100] sm:$0xff] %v1659
        %1684 = vst [vmem:[#allocation5 + $0x108] sm:$0xff] %v1660
        %1685 = vst [vmem:[#allocation5 + $0x110] sm:$0xff] %v1661
        %1686 = vst [vmem:[#allocation5 + $0x118] sm:$0xff] %v1662
        %v1687 = vld [vmem:[#allocation2] sm:$0xff]
        %v1688 = vld [vmem:[#allocation2 + $0x8] sm:$0xff]
        %v1689 = vld [vmem:[#allocation2 + $0x10] sm:$0xff]
        %v1690 = vld [vmem:[#allocation2 + $0x18] sm:$0xff]
        %v1691 = vld [vmem:[#allocation2 + $0x28] sm:$0xff]
        %v1692 = vld [vmem:[#allocation2 + $0x30] sm:$0xff]
        %v1693 = vld [vmem:[#allocation2 + $0x38] sm:$0xff]
        %v1694 = vld [vmem:[#allocation2 + $0x40] sm:$0xff]
        %v1695 = vld [vmem:[#allocation2 + $0x50] sm:$0xff]
        %v1696 = vld [vmem:[#allocation2 + $0x58] sm:$0xff]
        %v1697 = vld [vmem:[#allocation2 + $0x60] sm:$0xff]
        %v1698 = vld [vmem:[#allocation2 + $0x68] sm:$0xff]
        %v1699 = vld [vmem:[#allocation2 + $0x78] sm:$0xff]
        %v1700 = vld [vmem:[#allocation2 + $0x80] sm:$0xff]
        %v1701 = vld [vmem:[#allocation2 + $0x88] sm:$0xff]
        %v1702 = vld [vmem:[#allocation2 + $0x90] sm:$0xff]
        %1719 = vrot.lane.b32.xlu0 %v1687, 1
        %v1720 = vpop.permute.xlu0 %1719
        %1721 = vrot.lane.b32.xlu0 %v1688, 1
        %v1722 = vpop.permute.xlu0 %1721
        %1723 = vrot.lane.b32.xlu0 %v1689, 1
        %v1724 = vpop.permute.xlu0 %1723
        %1725 = vrot.lane.b32.xlu0 %v1690, 1
        %v1726 = vpop.permute.xlu0 %1725
        %1727 = vrot.lane.b32.xlu0 %v1691, 1
        %v1728 = vpop.permute.xlu0 %1727
        %1729 = vrot.lane.b32.xlu0 %v1692, 1
        %v1730 = vpop.permute.xlu0 %1729
        %1731 = vrot.lane.b32.xlu0 %v1693, 1
        %v1732 = vpop.permute.xlu0 %1731
        %1733 = vrot.lane.b32.xlu0 %v1694, 1
        %v1734 = vpop.permute.xlu0 %1733
        %1735 = vrot.lane.b32.xlu0 %v1695, 1
        %v1736 = vpop.permute.xlu0 %1735
        %1737 = vrot.lane.b32.xlu0 %v1696, 1
        %v1738 = vpop.permute.xlu0 %1737
        %1739 = vrot.lane.b32.xlu0 %v1697, 1
        %v1740 = vpop.permute.xlu0 %1739
        %1741 = vrot.lane.b32.xlu0 %v1698, 1
        %v1742 = vpop.permute.xlu0 %1741
        %1743 = vrot.lane.b32.xlu0 %v1699, 1
        %v1744 = vpop.permute.xlu0 %1743
        %1745 = vrot.lane.b32.xlu0 %v1700, 1
        %v1746 = vpop.permute.xlu0 %1745
        %1747 = vrot.lane.b32.xlu0 %v1701, 1
        %v1748 = vpop.permute.xlu0 %1747
        %1749 = vrot.lane.b32.xlu0 %v1702, 1
        %v1750 = vpop.permute.xlu0 %1749
        %v1751 = vsel %vm672, %v1720, %v1722
        %v1752 = vsel %vm672, %v1722, %v1724
        %v1753 = vsel %vm672, %v1724, %v1726
        %v1754 = vsel %vm672, %v1728, %v1730
        %v1755 = vsel %vm672, %v1730, %v1732
        %v1756 = vsel %vm672, %v1732, %v1734
        %v1757 = vsel %vm672, %v1736, %v1738
        %v1758 = vsel %vm672, %v1738, %v1740
        %v1759 = vsel %vm672, %v1740, %v1742
        %v1760 = vsel %vm672, %v1744, %v1746
        %v1761 = vsel %vm672, %v1746, %v1748
        %v1762 = vsel %vm672, %v1748, %v1750
        %1775 = vst [vmem:[#allocation5 + $0x120] sm:$0xff] %v1751
        %1776 = vst [vmem:[#allocation5 + $0x128] sm:$0xff] %v1752
        %1777 = vst [vmem:[#allocation5 + $0x130] sm:$0xff] %v1753
        %1778 = vst [vmem:[#allocation5 + $0x138] sm:$0xff] %v1754
        %1779 = vst [vmem:[#allocation5 + $0x140] sm:$0xff] %v1755
        %1780 = vst [vmem:[#allocation5 + $0x148] sm:$0xff] %v1756
        %1781 = vst [vmem:[#allocation5 + $0x150] sm:$0xff] %v1757
        %1782 = vst [vmem:[#allocation5 + $0x158] sm:$0xff] %v1758
        %1783 = vst [vmem:[#allocation5 + $0x160] sm:$0xff] %v1759
        %1784 = vst [vmem:[#allocation5 + $0x168] sm:$0xff] %v1760
        %1785 = vst [vmem:[#allocation5 + $0x170] sm:$0xff] %v1761
        %1786 = vst [vmem:[#allocation5 + $0x178] sm:$0xff] %v1762
        %v1787 = vld [vmem:[#allocation2 + $0x8] sm:$0xff]
        %v1788 = vld [vmem:[#allocation2 + $0x10] sm:$0xff]
        %v1789 = vld [vmem:[#allocation2 + $0x18] sm:$0xff]
        %v1790 = vld [vmem:[#allocation2 + $0x30] sm:$0xff]
        %v1791 = vld [vmem:[#allocation2 + $0x38] sm:$0xff]
        %v1792 = vld [vmem:[#allocation2 + $0x40] sm:$0xff]
        %v1793 = vld [vmem:[#allocation2 + $0x58] sm:$0xff]
        %v1794 = vld [vmem:[#allocation2 + $0x60] sm:$0xff]
        %v1795 = vld [vmem:[#allocation2 + $0x68] sm:$0xff]
        %v1796 = vld [vmem:[#allocation2 + $0x80] sm:$0xff]
        %v1797 = vld [vmem:[#allocation2 + $0x88] sm:$0xff]
        %v1798 = vld [vmem:[#allocation2 + $0x90] sm:$0xff]
        %1799 = vst [vmem:[#allocation5 + $0x180] sm:$0xff] %v1787
        %1800 = vst [vmem:[#allocation5 + $0x188] sm:$0xff] %v1788
        %1801 = vst [vmem:[#allocation5 + $0x190] sm:$0xff] %v1789
        %1802 = vst [vmem:[#allocation5 + $0x198] sm:$0xff] %v1790
        %1803 = vst [vmem:[#allocation5 + $0x1a0] sm:$0xff] %v1791
        %1804 = vst [vmem:[#allocation5 + $0x1a8] sm:$0xff] %v1792
        %1805 = vst [vmem:[#allocation5 + $0x1b0] sm:$0xff] %v1793
        %1806 = vst [vmem:[#allocation5 + $0x1b8] sm:$0xff] %v1794
        %1807 = vst [vmem:[#allocation5 + $0x1c0] sm:$0xff] %v1795
        %1808 = vst [vmem:[#allocation5 + $0x1c8] sm:$0xff] %v1796
        %1809 = vst [vmem:[#allocation5 + $0x1d0] sm:$0xff] %v1797
        %1810 = vst [vmem:[#allocation5 + $0x1d8] sm:$0xff] %v1798
        %v1811 = vld [vmem:[#allocation2 + $0x8] sm:$0xff]
        %v1812 = vld [vmem:[#allocation2 + $0x10] sm:$0xff]
        %v1813 = vld [vmem:[#allocation2 + $0x18] sm:$0xff]
        %v1814 = vld [vmem:[#allocation2 + $0x20] sm:$0xff]
        %v1815 = vld [vmem:[#allocation2 + $0x30] sm:$0xff]
        %v1816 = vld [vmem:[#allocation2 + $0x38] sm:$0xff]
        %v1817 = vld [vmem:[#allocation2 + $0x40] sm:$0xff]
        %v1818 = vld [vmem:[#allocation2 + $0x48] sm:$0xff]
        %v1819 = vld [vmem:[#allocation2 + $0x58] sm:$0xff]
        %v1820 = vld [vmem:[#allocation2 + $0x60] sm:$0xff]
        %v1821 = vld [vmem:[#allocation2 + $0x68] sm:$0xff]
        %v1822 = vld [vmem:[#allocation2 + $0x70] sm:$0xff]
        %v1823 = vld [vmem:[#allocation2 + $0x80] sm:$0xff]
        %v1824 = vld [vmem:[#allocation2 + $0x88] sm:$0xff]
        %v1825 = vld [vmem:[#allocation2 + $0x90] sm:$0xff]
        %v1826 = vld [vmem:[#allocation2 + $0x98] sm:$0xff]
        %1843 = vrot.lane.b32.xlu0 %v1811, 127
        %v1844 = vpop.permute.xlu0 %1843
        %1845 = vrot.lane.b32.xlu0 %v1812, 127
        %v1846 = vpop.permute.xlu0 %1845
        %1847 = vrot.lane.b32.xlu0 %v1813, 127
        %v1848 = vpop.permute.xlu0 %1847
        %1849 = vrot.lane.b32.xlu0 %v1814, 127
        %v1850 = vpop.permute.xlu0 %1849
        %1851 = vrot.lane.b32.xlu0 %v1815, 127
        %v1852 = vpop.permute.xlu0 %1851
        %1853 = vrot.lane.b32.xlu0 %v1816, 127
        %v1854 = vpop.permute.xlu0 %1853
        %1855 = vrot.lane.b32.xlu0 %v1817, 127
        %v1856 = vpop.permute.xlu0 %1855
        %1857 = vrot.lane.b32.xlu0 %v1818, 127
        %v1858 = vpop.permute.xlu0 %1857
        %1859 = vrot.lane.b32.xlu0 %v1819, 127
        %v1860 = vpop.permute.xlu0 %1859
        %1861 = vrot.lane.b32.xlu0 %v1820, 127
        %v1862 = vpop.permute.xlu0 %1861
        %1863 = vrot.lane.b32.xlu0 %v1821, 127
        %v1864 = vpop.permute.xlu0 %1863
        %1865 = vrot.lane.b32.xlu0 %v1822, 127
        %v1866 = vpop.permute.xlu0 %1865
        %1867 = vrot.lane.b32.xlu0 %v1823, 127
        %v1868 = vpop.permute.xlu0 %1867
        %1869 = vrot.lane.b32.xlu0 %v1824, 127
        %v1870 = vpop.permute.xlu0 %1869
        %1871 = vrot.lane.b32.xlu0 %v1825, 127
        %v1872 = vpop.permute.xlu0 %1871
        %1873 = vrot.lane.b32.xlu0 %v1826, 127
        %v1874 = vpop.permute.xlu0 %1873
        %v1875 = vsel %vm704, %v1844, %v1846
        %v1876 = vsel %vm704, %v1846, %v1848
        %v1877 = vsel %vm704, %v1848, %v1850
        %v1878 = vsel %vm704, %v1852, %v1854
        %v1879 = vsel %vm704, %v1854, %v1856
        %v1880 = vsel %vm704, %v1856, %v1858
        %v1881 = vsel %vm704, %v1860, %v1862
        %v1882 = vsel %vm704, %v1862, %v1864
        %v1883 = vsel %vm704, %v1864, %v1866
        %v1884 = vsel %vm704, %v1868, %v1870
        %v1885 = vsel %vm704, %v1870, %v1872
        %v1886 = vsel %vm704, %v1872, %v1874
        %1899 = vst [vmem:[#allocation5 + $0x1e0] sm:$0xff] %v1875
        %1900 = vst [vmem:[#allocation5 + $0x1e8] sm:$0xff] %v1876
        %1901 = vst [vmem:[#allocation5 + $0x1f0] sm:$0xff] %v1877
        %1902 = vst [vmem:[#allocation5 + $0x1f8] sm:$0xff] %v1878
        %1903 = vst [vmem:[#allocation5 + $0x200] sm:$0xff] %v1879
        %1904 = vst [vmem:[#allocation5 + $0x208] sm:$0xff] %v1880
        %1905 = vst [vmem:[#allocation5 + $0x210] sm:$0xff] %v1881
        %1906 = vst [vmem:[#allocation5 + $0x218] sm:$0xff] %v1882
        %1907 = vst [vmem:[#allocation5 + $0x220] sm:$0xff] %v1883
        %1908 = vst [vmem:[#allocation5 + $0x228] sm:$0xff] %v1884
        %1909 = vst [vmem:[#allocation5 + $0x230] sm:$0xff] %v1885
        %1910 = vst [vmem:[#allocation5 + $0x238] sm:$0xff] %v1886
        %v1911 = vld [vmem:[#allocation2 + $0x8] sm:$0xff]
        %v1912 = vld [vmem:[#allocation2 + $0x10] sm:$0xff]
        %v1913 = vld [vmem:[#allocation2 + $0x18] sm:$0xff]
        %v1914 = vld [vmem:[#allocation2 + $0x20] sm:$0xff]
        %v1915 = vld [vmem:[#allocation2 + $0x30] sm:$0xff]
        %v1916 = vld [vmem:[#allocation2 + $0x38] sm:$0xff]
        %v1917 = vld [vmem:[#allocation2 + $0x40] sm:$0xff]
        %v1918 = vld [vmem:[#allocation2 + $0x48] sm:$0xff]
        %v1919 = vld [vmem:[#allocation2 + $0x58] sm:$0xff]
        %v1920 = vld [vmem:[#allocation2 + $0x60] sm:$0xff]
        %v1921 = vld [vmem:[#allocation2 + $0x68] sm:$0xff]
        %v1922 = vld [vmem:[#allocation2 + $0x70] sm:$0xff]
        %v1923 = vld [vmem:[#allocation2 + $0x80] sm:$0xff]
        %v1924 = vld [vmem:[#allocation2 + $0x88] sm:$0xff]
        %v1925 = vld [vmem:[#allocation2 + $0x90] sm:$0xff]
        %v1926 = vld [vmem:[#allocation2 + $0x98] sm:$0xff]
        %1943 = vrot.lane.b32.xlu0 %v1911, 111
        %v1944 = vpop.permute.xlu0 %1943
        %1945 = vrot.lane.b32.xlu0 %v1912, 111
        %v1946 = vpop.permute.xlu0 %1945
        %1947 = vrot.lane.b32.xlu0 %v1913, 111
        %v1948 = vpop.permute.xlu0 %1947
        %1949 = vrot.lane.b32.xlu0 %v1914, 111
        %v1950 = vpop.permute.xlu0 %1949
        %1951 = vrot.lane.b32.xlu0 %v1915, 111
        %v1952 = vpop.permute.xlu0 %1951
        %1953 = vrot.lane.b32.xlu0 %v1916, 111
        %v1954 = vpop.permute.xlu0 %1953
        %1955 = vrot.lane.b32.xlu0 %v1917, 111
        %v1956 = vpop.permute.xlu0 %1955
        %1957 = vrot.lane.b32.xlu0 %v1918, 111
        %v1958 = vpop.permute.xlu0 %1957
        %1959 = vrot.lane.b32.xlu0 %v1919, 111
        %v1960 = vpop.permute.xlu0 %1959
        %1961 = vrot.lane.b32.xlu0 %v1920, 111
        %v1962 = vpop.permute.xlu0 %1961
        %1963 = vrot.lane.b32.xlu0 %v1921, 111
        %v1964 = vpop.permute.xlu0 %1963
        %1965 = vrot.lane.b32.xlu0 %v1922, 111
        %v1966 = vpop.permute.xlu0 %1965
        %1967 = vrot.lane.b32.xlu0 %v1923, 111
        %v1968 = vpop.permute.xlu0 %1967
        %1969 = vrot.lane.b32.xlu0 %v1924, 111
        %v1970 = vpop.permute.xlu0 %1969
        %1971 = vrot.lane.b32.xlu0 %v1925, 111
        %v1972 = vpop.permute.xlu0 %1971
        %1973 = vrot.lane.b32.xlu0 %v1926, 111
        %v1974 = vpop.permute.xlu0 %1973
        %v1975 = vsel %vm728, %v1944, %v1946
        %v1976 = vsel %vm728, %v1946, %v1948
        %v1977 = vsel %vm728, %v1948, %v1950
        %v1978 = vsel %vm728, %v1952, %v1954
        %v1979 = vsel %vm728, %v1954, %v1956
        %v1980 = vsel %vm728, %v1956, %v1958
        %v1981 = vsel %vm728, %v1960, %v1962
        %v1982 = vsel %vm728, %v1962, %v1964
        %v1983 = vsel %vm728, %v1964, %v1966
        %v1984 = vsel %vm728, %v1968, %v1970
        %v1985 = vsel %vm728, %v1970, %v1972
        %v1986 = vsel %vm728, %v1972, %v1974
        %1999 = vst [vmem:[#allocation5 + $0x240] sm:$0xff] %v1975
        %2000 = vst [vmem:[#allocation5 + $0x248] sm:$0xff] %v1976
        %2001 = vst [vmem:[#allocation5 + $0x250] sm:$0xff] %v1977
        %2002 = vst [vmem:[#allocation5 + $0x258] sm:$0xff] %v1978
        %2003 = vst [vmem:[#allocation5 + $0x260] sm:$0xff] %v1979
        %2004 = vst [vmem:[#allocation5 + $0x268] sm:$0xff] %v1980
        %2005 = vst [vmem:[#allocation5 + $0x270] sm:$0xff] %v1981
        %2006 = vst [vmem:[#allocation5 + $0x278] sm:$0xff] %v1982
        %2007 = vst [vmem:[#allocation5 + $0x280] sm:$0xff] %v1983
        %2008 = vst [vmem:[#allocation5 + $0x288] sm:$0xff] %v1984
        %2009 = vst [vmem:[#allocation5 + $0x290] sm:$0xff] %v1985
        %2010 = vst [vmem:[#allocation5 + $0x298] sm:$0xff] %v1986
        %v2011 = vld [vmem:[#allocation2 + $0x8] sm:$0xff]
        %v2012 = vld [vmem:[#allocation2 + $0x10] sm:$0xff]
        %v2013 = vld [vmem:[#allocation2 + $0x18] sm:$0xff]
        %v2014 = vld [vmem:[#allocation2 + $0x20] sm:$0xff]
        %v2015 = vld [vmem:[#allocation2 + $0x30] sm:$0xff]
        %v2016 = vld [vmem:[#allocation2 + $0x38] sm:$0xff]
        %v2017 = vld [vmem:[#allocation2 + $0x40] sm:$0xff]
        %v2018 = vld [vmem:[#allocation2 + $0x48] sm:$0xff]
        %v2019 = vld [vmem:[#allocation2 + $0x58] sm:$0xff]
        %v2020 = vld [vmem:[#allocation2 + $0x60] sm:$0xff]
        %v2021 = vld [vmem:[#allocation2 + $0x68] sm:$0xff]
        %v2022 = vld [vmem:[#allocation2 + $0x70] sm:$0xff]
        %v2023 = vld [vmem:[#allocation2 + $0x80] sm:$0xff]
        %v2024 = vld [vmem:[#allocation2 + $0x88] sm:$0xff]
        %v2025 = vld [vmem:[#allocation2 + $0x90] sm:$0xff]
        %v2026 = vld [vmem:[#allocation2 + $0x98] sm:$0xff]
        %2043 = vrot.lane.b32.xlu0 %v2011, 110
        %v2044 = vpop.permute.xlu0 %2043
        %2045 = vrot.lane.b32.xlu0 %v2012, 110
        %v2046 = vpop.permute.xlu0 %2045
        %2047 = vrot.lane.b32.xlu0 %v2013, 110
        %v2048 = vpop.permute.xlu0 %2047
        %2049 = vrot.lane.b32.xlu0 %v2014, 110
        %v2050 = vpop.permute.xlu0 %2049
        %2051 = vrot.lane.b32.xlu0 %v2015, 110
        %v2052 = vpop.permute.xlu0 %2051
        %2053 = vrot.lane.b32.xlu0 %v2016, 110
        %v2054 = vpop.permute.xlu0 %2053
        %2055 = vrot.lane.b32.xlu0 %v2017, 110
        %v2056 = vpop.permute.xlu0 %2055
        %2057 = vrot.lane.b32.xlu0 %v2018, 110
        %v2058 = vpop.permute.xlu0 %2057
        %2059 = vrot.lane.b32.xlu0 %v2019, 110
        %v2060 = vpop.permute.xlu0 %2059
        %2061 = vrot.lane.b32.xlu0 %v2020, 110
        %v2062 = vpop.permute.xlu0 %2061
        %2063 = vrot.lane.b32.xlu0 %v2021, 110
        %v2064 = vpop.permute.xlu0 %2063
        %2065 = vrot.lane.b32.xlu0 %v2022, 110
        %v2066 = vpop.permute.xlu0 %2065
        %2067 = vrot.lane.b32.xlu0 %v2023, 110
        %v2068 = vpop.permute.xlu0 %2067
        %2069 = vrot.lane.b32.xlu0 %v2024, 110
        %v2070 = vpop.permute.xlu0 %2069
        %2071 = vrot.lane.b32.xlu0 %v2025, 110
        %v2072 = vpop.permute.xlu0 %2071
        %2073 = vrot.lane.b32.xlu0 %v2026, 110
        %v2074 = vpop.permute.xlu0 %2073
        %v2075 = vsel %vm752, %v2044, %v2046
        %v2076 = vsel %vm752, %v2046, %v2048
        %v2077 = vsel %vm752, %v2048, %v2050
        %v2078 = vsel %vm752, %v2052, %v2054
        %v2079 = vsel %vm752, %v2054, %v2056
        %v2080 = vsel %vm752, %v2056, %v2058
        %v2081 = vsel %vm752, %v2060, %v2062
        %v2082 = vsel %vm752, %v2062, %v2064
        %v2083 = vsel %vm752, %v2064, %v2066
        %v2084 = vsel %vm752, %v2068, %v2070
        %v2085 = vsel %vm752, %v2070, %v2072
        %v2086 = vsel %vm752, %v2072, %v2074
        %2099 = vst [vmem:[#allocation5 + $0x2a0] sm:$0xff] %v2075
        %2100 = vst [vmem:[#allocation5 + $0x2a8] sm:$0xff] %v2076
        %2101 = vst [vmem:[#allocation5 + $0x2b0] sm:$0xff] %v2077
        %2102 = vst [vmem:[#allocation5 + $0x2b8] sm:$0xff] %v2078
        %2103 = vst [vmem:[#allocation5 + $0x2c0] sm:$0xff] %v2079
        %2104 = vst [vmem:[#allocation5 + $0x2c8] sm:$0xff] %v2080
        %2105 = vst [vmem:[#allocation5 + $0x2d0] sm:$0xff] %v2081
        %2106 = vst [vmem:[#allocation5 + $0x2d8] sm:$0xff] %v2082
        %2107 = vst [vmem:[#allocation5 + $0x2e0] sm:$0xff] %v2083
        %2108 = vst [vmem:[#allocation5 + $0x2e8] sm:$0xff] %v2084
        %2109 = vst [vmem:[#allocation5 + $0x2f0] sm:$0xff] %v2085
        %2110 = vst [vmem:[#allocation5 + $0x2f8] sm:$0xff] %v2086
        %v2111 = vld [vmem:[#allocation2 + $0x8] sm:$0xff]
        %v2112 = vld [vmem:[#allocation2 + $0x10] sm:$0xff]
        %v2113 = vld [vmem:[#allocation2 + $0x18] sm:$0xff]
        %v2114 = vld [vmem:[#allocation2 + $0x20] sm:$0xff]
        %v2115 = vld [vmem:[#allocation2 + $0x30] sm:$0xff]
        %v2116 = vld [vmem:[#allocation2 + $0x38] sm:$0xff]
        %v2117 = vld [vmem:[#allocation2 + $0x40] sm:$0xff]
        %v2118 = vld [vmem:[#allocation2 + $0x48] sm:$0xff]
        %v2119 = vld [vmem:[#allocation2 + $0x58] sm:$0xff]
        %v2120 = vld [vmem:[#allocation2 + $0x60] sm:$0xff]
        %v2121 = vld [vmem:[#allocation2 + $0x68] sm:$0xff]
        %v2122 = vld [vmem:[#allocation2 + $0x70] sm:$0xff]
        %v2123 = vld [vmem:[#allocation2 + $0x80] sm:$0xff]
        %v2124 = vld [vmem:[#allocation2 + $0x88] sm:$0xff]
        %v2125 = vld [vmem:[#allocation2 + $0x90] sm:$0xff]
        %v2126 = vld [vmem:[#allocation2 + $0x98] sm:$0xff]
        %2143 = vrot.lane.b32.xlu0 %v2111, 109
        %v2144 = vpop.permute.xlu0 %2143
        %2145 = vrot.lane.b32.xlu0 %v2112, 109
        %v2146 = vpop.permute.xlu0 %2145
        %2147 = vrot.lane.b32.xlu0 %v2113, 109
        %v2148 = vpop.permute.xlu0 %2147
        %2149 = vrot.lane.b32.xlu0 %v2114, 109
        %v2150 = vpop.permute.xlu0 %2149
        %2151 = vrot.lane.b32.xlu0 %v2115, 109
        %v2152 = vpop.permute.xlu0 %2151
        %2153 = vrot.lane.b32.xlu0 %v2116, 109
        %v2154 = vpop.permute.xlu0 %2153
        %2155 = vrot.lane.b32.xlu0 %v2117, 109
        %v2156 = vpop.permute.xlu0 %2155
        %2157 = vrot.lane.b32.xlu0 %v2118, 109
        %v2158 = vpop.permute.xlu0 %2157
        %2159 = vrot.lane.b32.xlu0 %v2119, 109
        %v2160 = vpop.permute.xlu0 %2159
        %2161 = vrot.lane.b32.xlu0 %v2120, 109
        %v2162 = vpop.permute.xlu0 %2161
        %2163 = vrot.lane.b32.xlu0 %v2121, 109
        %v2164 = vpop.permute.xlu0 %2163
        %2165 = vrot.lane.b32.xlu0 %v2122, 109
        %v2166 = vpop.permute.xlu0 %2165
        %2167 = vrot.lane.b32.xlu0 %v2123, 109
        %v2168 = vpop.permute.xlu0 %2167
        %2169 = vrot.lane.b32.xlu0 %v2124, 109
        %v2170 = vpop.permute.xlu0 %2169
        %2171 = vrot.lane.b32.xlu0 %v2125, 109
        %v2172 = vpop.permute.xlu0 %2171
        %2173 = vrot.lane.b32.xlu0 %v2126, 109
        %v2174 = vpop.permute.xlu0 %2173
        %v2175 = vsel %vm776, %v2144, %v2146
        %v2176 = vsel %vm776, %v2146, %v2148
        %v2177 = vsel %vm776, %v2148, %v2150
        %v2178 = vsel %vm776, %v2152, %v2154
        %v2179 = vsel %vm776, %v2154, %v2156
        %v2180 = vsel %vm776, %v2156, %v2158
        %v2181 = vsel %vm776, %v2160, %v2162
        %v2182 = vsel %vm776, %v2162, %v2164
        %v2183 = vsel %vm776, %v2164, %v2166
        %v2184 = vsel %vm776, %v2168, %v2170
        %v2185 = vsel %vm776, %v2170, %v2172
        %v2186 = vsel %vm776, %v2172, %v2174
        %2199 = vst [vmem:[#allocation5 + $0x300] sm:$0xff] %v2175
        %2200 = vst [vmem:[#allocation5 + $0x308] sm:$0xff] %v2176
        %2201 = vst [vmem:[#allocation5 + $0x310] sm:$0xff] %v2177
        %2202 = vst [vmem:[#allocation5 + $0x318] sm:$0xff] %v2178
        %2203 = vst [vmem:[#allocation5 + $0x320] sm:$0xff] %v2179
        %2204 = vst [vmem:[#allocation5 + $0x328] sm:$0xff] %v2180
        %2205 = vst [vmem:[#allocation5 + $0x330] sm:$0xff] %v2181
        %2206 = vst [vmem:[#allocation5 + $0x338] sm:$0xff] %v2182
        %2207 = vst [vmem:[#allocation5 + $0x340] sm:$0xff] %v2183
        %2208 = vst [vmem:[#allocation5 + $0x348] sm:$0xff] %v2184
        %2209 = vst [vmem:[#allocation5 + $0x350] sm:$0xff] %v2185
        %2210 = vst [vmem:[#allocation5 + $0x358] sm:$0xff] %v2186
        %v2211 = vld [vmem:[#allocation12] sm:$0xff]
        %v2212 = vld [vmem:[#allocation12 + $0x8] sm:$0xff]
        %v2213 = vld [vmem:[#allocation12 + $0x10] sm:$0xff]
        %v2214 = vld [vmem:[#allocation12 + $0x18] sm:$0xff]
        %v2215 = vld [vmem:[#allocation12 + $0x20] sm:$0xff]
        %v2216 = vld [vmem:[#allocation12 + $0x28] sm:$0xff]
        %v2217 = vld [vmem:[#allocation12 + $0x30] sm:$0xff]
        %v2218 = vld [vmem:[#allocation12 + $0x38] sm:$0xff]
        %v2219 = vld [vmem:[#allocation12 + $0x40] sm:$0xff]
        %v2220 = vld [vmem:[#allocation12 + $0x48] sm:$0xff]
        %v2221 = vld [vmem:[#allocation12 + $0x50] sm:$0xff]
        %v2222 = vld [vmem:[#allocation12 + $0x58] sm:$0xff]
        %v2223 = vld [vmem:[#allocation12 + $0x60] sm:$0xff]
        %v2224 = vld [vmem:[#allocation12 + $0x68] sm:$0xff]
        %v2225 = vld [vmem:[#allocation12 + $0x70] sm:$0xff]
        %v2226 = vld [vmem:[#allocation12 + $0x78] sm:$0xff]
        %v2227 = vld [vmem:[#allocation12 + $0x80] sm:$0xff]
        %v2228 = vld [vmem:[#allocation12 + $0x88] sm:$0xff]
        %v2229 = vld [vmem:[#allocation12 + $0x90] sm:$0xff]
        %v2230 = vld [vmem:[#allocation12 + $0x98] sm:$0xff]
        %v2231 = vld [vmem:[#allocation12 + $0xa0] sm:$0xff]
        %v2232 = vld [vmem:[#allocation12 + $0xa8] sm:$0xff]
        %v2233 = vld [vmem:[#allocation12 + $0xb0] sm:$0xff]
        %v2234 = vld [vmem:[#allocation12 + $0xb8] sm:$0xff]
        %v2235 = vld [vmem:[#allocation5] sm:$0xff]
        %v2236 = vld [vmem:[#allocation5 + $0x8] sm:$0xff]
        %v2237 = vld [vmem:[#allocation5 + $0x10] sm:$0xff]
        %v2238 = vld [vmem:[#allocation5 + $0x18] sm:$0xff]
        %v2239 = vld [vmem:[#allocation5 + $0x20] sm:$0xff]
        %v2240 = vld [vmem:[#allocation5 + $0x28] sm:$0xff]
        %v2241 = vld [vmem:[#allocation5 + $0x30] sm:$0xff]
        %v2242 = vld [vmem:[#allocation5 + $0x38] sm:$0xff]
        %v2243 = vld [vmem:[#allocation5 + $0x40] sm:$0xff]
        %v2244 = vld [vmem:[#allocation5 + $0x48] sm:$0xff]
        %v2245 = vld [vmem:[#allocation5 + $0x50] sm:$0xff]
        %v2246 = vld [vmem:[#allocation5 + $0x58] sm:$0xff]
        %v2247 = vld [vmem:[#allocation5 + $0x60] sm:$0xff]
        %v2248 = vld [vmem:[#allocation5 + $0x68] sm:$0xff]
        %v2249 = vld [vmem:[#allocation5 + $0x70] sm:$0xff]
        %v2250 = vld [vmem:[#allocation5 + $0x78] sm:$0xff]
        %v2251 = vld [vmem:[#allocation5 + $0x80] sm:$0xff]
        %v2252 = vld [vmem:[#allocation5 + $0x88] sm:$0xff]
        %v2253 = vld [vmem:[#allocation5 + $0x90] sm:$0xff]
        %v2254 = vld [vmem:[#allocation5 + $0x98] sm:$0xff]
        %v2255 = vld [vmem:[#allocation5 + $0xa0] sm:$0xff]
        %v2256 = vld [vmem:[#allocation5 + $0xa8] sm:$0xff]
        %v2257 = vld [vmem:[#allocation5 + $0xb0] sm:$0xff]
        %v2258 = vld [vmem:[#allocation5 + $0xb8] sm:$0xff]
        %v2259 = vld [vmem:[#allocation5 + $0xc0] sm:$0xff]
        %v2260 = vld [vmem:[#allocation5 + $0xc8] sm:$0xff]
        %v2261 = vld [vmem:[#allocation5 + $0xd0] sm:$0xff]
        %v2262 = vld [vmem:[#allocation5 + $0xd8] sm:$0xff]
        %v2263 = vld [vmem:[#allocation5 + $0xe0] sm:$0xff]
        %v2264 = vld [vmem:[#allocation5 + $0xe8] sm:$0xff]
        %v2265 = vld [vmem:[#allocation5 + $0xf0] sm:$0xff]
        %v2266 = vld [vmem:[#allocation5 + $0xf8] sm:$0xff]
        %v2267 = vld [vmem:[#allocation5 + $0x100] sm:$0xff]
        %v2268 = vld [vmem:[#allocation5 + $0x108] sm:$0xff]
        %v2269 = vld [vmem:[#allocation5 + $0x110] sm:$0xff]
        %v2270 = vld [vmem:[#allocation5 + $0x118] sm:$0xff]
        %v2271 = vld [vmem:[#allocation5 + $0x120] sm:$0xff]
        %v2272 = vld [vmem:[#allocation5 + $0x128] sm:$0xff]
        %v2273 = vld [vmem:[#allocation5 + $0x130] sm:$0xff]
        %v2274 = vld [vmem:[#allocation5 + $0x138] sm:$0xff]
        %v2275 = vld [vmem:[#allocation5 + $0x140] sm:$0xff]
        %v2276 = vld [vmem:[#allocation5 + $0x148] sm:$0xff]
        %v2277 = vld [vmem:[#allocation5 + $0x150] sm:$0xff]
        %v2278 = vld [vmem:[#allocation5 + $0x158] sm:$0xff]
        %v2279 = vld [vmem:[#allocation5 + $0x160] sm:$0xff]
        %v2280 = vld [vmem:[#allocation5 + $0x168] sm:$0xff]
        %v2281 = vld [vmem:[#allocation5 + $0x170] sm:$0xff]
        %v2282 = vld [vmem:[#allocation5 + $0x178] sm:$0xff]
        %v2283 = vld [vmem:[#allocation5 + $0x180] sm:$0xff]
        %v2284 = vld [vmem:[#allocation5 + $0x188] sm:$0xff]
        %v2285 = vld [vmem:[#allocation5 + $0x190] sm:$0xff]
        %v2286 = vld [vmem:[#allocation5 + $0x198] sm:$0xff]
        %v2287 = vld [vmem:[#allocation5 + $0x1a0] sm:$0xff]
        %v2288 = vld [vmem:[#allocation5 + $0x1a8] sm:$0xff]
        %v2289 = vld [vmem:[#allocation5 + $0x1b0] sm:$0xff]
        %v2290 = vld [vmem:[#allocation5 + $0x1b8] sm:$0xff]
        %v2291 = vld [vmem:[#allocation5 + $0x1c0] sm:$0xff]
        %v2292 = vld [vmem:[#allocation5 + $0x1c8] sm:$0xff]
        %v2293 = vld [vmem:[#allocation5 + $0x1d0] sm:$0xff]
        %v2294 = vld [vmem:[#allocation5 + $0x1d8] sm:$0xff]
        %v2295 = vld [vmem:[#allocation5 + $0x1e0] sm:$0xff]
        %v2296 = vld [vmem:[#allocation5 + $0x1e8] sm:$0xff]
        %v2297 = vld [vmem:[#allocation5 + $0x1f0] sm:$0xff]
        %v2298 = vld [vmem:[#allocation5 + $0x1f8] sm:$0xff]
        %v2299 = vld [vmem:[#allocation5 + $0x200] sm:$0xff]
        %v2300 = vld [vmem:[#allocation5 + $0x208] sm:$0xff]
        %v2301 = vld [vmem:[#allocation5 + $0x210] sm:$0xff]
        %v2302 = vld [vmem:[#allocation5 + $0x218] sm:$0xff]
        %v2303 = vld [vmem:[#allocation5 + $0x220] sm:$0xff]
        %v2304 = vld [vmem:[#allocation5 + $0x228] sm:$0xff]
        %v2305 = vld [vmem:[#allocation5 + $0x230] sm:$0xff]
        %v2306 = vld [vmem:[#allocation5 + $0x238] sm:$0xff]
        %v2307 = vld [vmem:[#allocation5 + $0x240] sm:$0xff]
        %v2308 = vld [vmem:[#allocation5 + $0x248] sm:$0xff]
        %v2309 = vld [vmem:[#allocation5 + $0x250] sm:$0xff]
        %v2310 = vld [vmem:[#allocation5 + $0x258] sm:$0xff]
        %v2311 = vld [vmem:[#allocation5 + $0x260] sm:$0xff]
        %v2312 = vld [vmem:[#allocation5 + $0x268] sm:$0xff]
        %v2313 = vld [vmem:[#allocation5 + $0x270] sm:$0xff]
        %v2314 = vld [vmem:[#allocation5 + $0x278] sm:$0xff]
        %v2315 = vld [vmem:[#allocation5 + $0x280] sm:$0xff]
        %v2316 = vld [vmem:[#allocation5 + $0x288] sm:$0xff]
        %v2317 = vld [vmem:[#allocation5 + $0x290] sm:$0xff]
        %v2318 = vld [vmem:[#allocation5 + $0x298] sm:$0xff]
        %v2319 = vld [vmem:[#allocation5 + $0x2a0] sm:$0xff]
        %v2320 = vld [vmem:[#allocation5 + $0x2a8] sm:$0xff]
        %v2321 = vld [vmem:[#allocation5 + $0x2b0] sm:$0xff]
        %v2322 = vld [vmem:[#allocation5 + $0x2b8] sm:$0xff]
        %v2323 = vld [vmem:[#allocation5 + $0x2c0] sm:$0xff]
        %v2324 = vld [vmem:[#allocation5 + $0x2c8] sm:$0xff]
        %v2325 = vld [vmem:[#allocation5 + $0x2d0] sm:$0xff]
        %v2326 = vld [vmem:[#allocation5 + $0x2d8] sm:$0xff]
        %v2327 = vld [vmem:[#allocation5 + $0x2e0] sm:$0xff]
        %v2328 = vld [vmem:[#allocation5 + $0x2e8] sm:$0xff]
        %v2329 = vld [vmem:[#allocation5 + $0x2f0] sm:$0xff]
        %v2330 = vld [vmem:[#allocation5 + $0x2f8] sm:$0xff]
        %v2331 = vld [vmem:[#allocation5 + $0x300] sm:$0xff]
        %v2332 = vld [vmem:[#allocation5 + $0x308] sm:$0xff]
        %v2333 = vld [vmem:[#allocation5 + $0x310] sm:$0xff]
        %v2334 = vld [vmem:[#allocation5 + $0x318] sm:$0xff]
        %v2335 = vld [vmem:[#allocation5 + $0x320] sm:$0xff]
        %v2336 = vld [vmem:[#allocation5 + $0x328] sm:$0xff]
        %v2337 = vld [vmem:[#allocation5 + $0x330] sm:$0xff]
        %v2338 = vld [vmem:[#allocation5 + $0x338] sm:$0xff]
        %v2339 = vld [vmem:[#allocation5 + $0x340] sm:$0xff]
        %v2340 = vld [vmem:[#allocation5 + $0x348] sm:$0xff]
        %v2341 = vld [vmem:[#allocation5 + $0x350] sm:$0xff]
        %v2342 = vld [vmem:[#allocation5 + $0x358] sm:$0xff]
        %v2343 = vld [vmem:[%s5] sm:$0xff]
        %v2344 = vld [vmem:[%s5 + $0x8] sm:$0xff]
        %v2345 = vld [vmem:[%s5 + $0x10] sm:$0xff]
        %v2346 = vld [vmem:[%s5 + $0x18] sm:$0xff]
        %v2347 = vld [vmem:[%s5 + $0x20] sm:$0xff]
        %v2348 = vld [vmem:[%s5 + $0x28] sm:$0xff]
        %v2349 = vld [vmem:[%s5 + $0x30] sm:$0xff]
        %v2350 = vld [vmem:[%s5 + $0x38] sm:$0xff]
        %2352 = vset.pattern.permute.xlu0 0
        %2353 = vperm.xlu0 %2352, %v2343
        %v2354 = vpop.permute.xlu0 %2353
        %2357 = vset.pattern.permute.xlu0 0
        %2358 = vperm.xlu0 %2357, %v2344
        %v2359 = vpop.permute.xlu0 %2358
        %2362 = vset.pattern.permute.xlu0 0
        %2363 = vperm.xlu0 %2362, %v2345
        %v2364 = vpop.permute.xlu0 %2363
        %2367 = vset.pattern.permute.xlu0 0
        %2368 = vperm.xlu0 %2367, %v2346
        %v2369 = vpop.permute.xlu0 %2368
        %2372 = vset.pattern.permute.xlu0 0
        %2373 = vperm.xlu0 %2372, %v2347
        %v2374 = vpop.permute.xlu0 %2373
        %2377 = vset.pattern.permute.xlu0 0
        %2378 = vperm.xlu0 %2377, %v2348
        %v2379 = vpop.permute.xlu0 %2378
        %2382 = vset.pattern.permute.xlu0 0
        %2383 = vperm.xlu0 %2382, %v2349
        %v2384 = vpop.permute.xlu0 %2383
        %2387 = vset.pattern.permute.xlu0 0
        %2388 = vperm.xlu0 %2387, %v2350
        %v2389 = vpop.permute.xlu0 %2388
        %vm2391 = vcmask 261120
        %v2393 = vsel %vm2391, %v2213, 0
        %v2396 = vsel %vm2391, %v2216, 0
        %v2399 = vsel %vm2391, %v2219, 0
        %v2402 = vsel %vm2391, %v2222, 0
        %v2405 = vsel %vm2391, %v2225, 0
        %v2408 = vsel %vm2391, %v2228, 0
        %v2411 = vsel %vm2391, %v2231, 0
        %v2414 = vsel %vm2391, %v2234, 0
        %2416 = vmatprep.subr.mxu0 %v2236
        %2417 = vmatpush1.msra.mxu0 %v2235
        %2418 = vmatprep.subr.mxu0 %v2239
        %2419 = vmatpush1.msra.mxu0 %v2238
        %2420 = vmatprep.subr.mxu0 %v2242
        %2421 = vmatpush1.msra.mxu0 %v2241
        %2422 = vmatprep.subr.mxu0 %v2245
        %2423 = vmatpush1.msra.mxu0 %v2244
        %2424 = vmatprep.subr.mxu0 %v2248
        %2425 = vmatpush1.msra.mxu0 %v2247
        %2426 = vmatprep.subr.mxu0 %v2251
        %2427 = vmatpush1.msra.mxu0 %v2250
        %2428 = vmatprep.subr.mxu0 %v2254
        %2429 = vmatpush1.msra.mxu0 %v2253
        %2430 = vmatprep.subr.mxu0 %v2257
        %2431 = vmatpush1.msra.mxu0 %v2256
        %2432 = vmatprep.subr.mxu0 %v2260
        %2433 = vmatpush1.msra.mxu0 %v2259
        %2434 = vmatprep.subr.mxu0 %v2263
        %2435 = vmatpush1.msra.mxu0 %v2262
        %2436 = vmatprep.subr.mxu0 %v2266
        %2437 = vmatpush1.msra.mxu0 %v2265
        %2438 = vmatprep.subr.mxu0 %v2269
        %2439 = vmatpush1.msra.mxu0 %v2268
        %2440 = vmatprep.subr.mxu0 %v2272
        %2441 = vmatpush1.msra.mxu0 %v2271
        %2442 = vmatprep.subr.mxu0 %v2275
        %2443 = vmatpush1.msra.mxu0 %v2274
        %2444 = vmatprep.subr.mxu0 %v2278
        %2445 = vmatpush1.msra.mxu0 %v2277
        %2446 = vmatprep.subr.mxu0 %v2281
        %2447 = vmatpush1.msra.mxu0 %v2280
        %2448 = vmatprep.subr.mxu0 %v2284
        %2449 = vmatpush1.msra.mxu0 %v2283
        %2450 = vmatprep.subr.mxu0 %v2287
        %2451 = vmatpush1.msra.mxu0 %v2286
        %2452 = vmatprep.subr.mxu0 %v2290
        %2453 = vmatpush1.msra.mxu0 %v2289
        %2454 = vmatprep.subr.mxu0 %v2293
        %2455 = vmatpush1.msra.mxu0 %v2292
        %2456 = vmatprep.subr.mxu0 %v2296
        %2457 = vmatpush1.msra.mxu0 %v2295
        %2458 = vmatprep.subr.mxu0 %v2299
        %2459 = vmatpush1.msra.mxu0 %v2298
        %2460 = vmatprep.subr.mxu0 %v2302
        %2461 = vmatpush1.msra.mxu0 %v2301
        %2462 = vmatprep.subr.mxu0 %v2305
        %2463 = vmatpush1.msra.mxu0 %v2304
        %2464 = vmatprep.subr.mxu0 %v2308
        %2465 = vmatpush1.msra.mxu0 %v2307
        %2466 = vmatprep.subr.mxu0 %v2311
        %2467 = vmatpush1.msra.mxu0 %v2310
        %2468 = vmatprep.subr.mxu0 %v2314
        %2469 = vmatpush1.msra.mxu0 %v2313
        %2470 = vmatprep.subr.mxu0 %v2317
        %2471 = vmatpush1.msra.mxu0 %v2316
        %2472 = vmatprep.subr.mxu0 %v2320
        %2473 = vmatpush1.msra.mxu0 %v2319
        %2474 = vmatprep.subr.mxu0 %v2323
        %2475 = vmatpush1.msra.mxu0 %v2322
        %2476 = vmatprep.subr.mxu0 %v2326
        %2477 = vmatpush1.msra.mxu0 %v2325
        %2478 = vmatprep.subr.mxu0 %v2329
        %2479 = vmatpush1.msra.mxu0 %v2328
        %2480 = vmatprep.mubr.f32.mxu0 %v2212
        %2481 = vmatmul.mubr.f32.gmra.mrb[0].mxu0 %v2211
        %v2482 = vpop.f32.mrb[0].mxu0
        %v2483 = vadd.f32 %v2354, %v2482
        %v2484 = vpop.f32.mrb[0].mxu0
        %v2485 = vadd.f32 %v2354, %v2484
        %2486 = vmatprep.mubr.f32.mxu0 %v2215
        %2487 = vmatmul.mubr.f32.gmra.mrb[0].mxu0 %v2214
        %v2488 = vpop.f32.mrb[0].mxu0
        %v2489 = vadd.f32 %v2359, %v2488
        %v2490 = vpop.f32.mrb[0].mxu0
        %v2491 = vadd.f32 %v2359, %v2490
        %2492 = vmatprep.mubr.f32.mxu0 %v2218
        %2493 = vmatmul.mubr.f32.gmra.mrb[0].mxu0 %v2217
        %v2494 = vpop.f32.mrb[0].mxu0
        %v2495 = vadd.f32 %v2364, %v2494
        %v2496 = vpop.f32.mrb[0].mxu0
        %v2497 = vadd.f32 %v2364, %v2496
        %2498 = vmatprep.mubr.f32.mxu0 %v2221
        %2499 = vmatmul.mubr.f32.gmra.mrb[0].mxu0 %v2220
        %v2500 = vpop.f32.mrb[0].mxu0
        %v2501 = vadd.f32 %v2369, %v2500
        %v2502 = vpop.f32.mrb[0].mxu0
        %v2503 = vadd.f32 %v2369, %v2502
        %2504 = vmatprep.mubr.f32.mxu0 %v2224
        %2505 = vmatmul.mubr.f32.gmra.mrb[0].mxu0 %v2223
        %v2506 = vpop.f32.mrb[0].mxu0
        %v2507 = vadd.f32 %v2374, %v2506
        %v2508 = vpop.f32.mrb[0].mxu0
        %v2509 = vadd.f32 %v2374, %v2508
        %2510 = vmatprep.mubr.f32.mxu0 %v2227
        %2511 = vmatmul.mubr.f32.gmra.mrb[0].mxu0 %v2226
        %v2512 = vpop.f32.mrb[0].mxu0
        %v2513 = vadd.f32 %v2379, %v2512
        %v2514 = vpop.f32.mrb[0].mxu0
        %v2515 = vadd.f32 %v2379, %v2514
        %2516 = vmatprep.mubr.f32.mxu0 %v2230
        %2517 = vmatmul.mubr.f32.gmra.mrb[0].mxu0 %v2229
        %v2518 = vpop.f32.mrb[0].mxu0
        %v2519 = vadd.f32 %v2384, %v2518
        %v2520 = vpop.f32.mrb[0].mxu0
        %v2521 = vadd.f32 %v2384, %v2520
        %2522 = vmatprep.mubr.f32.mxu0 %v2233
        %2523 = vmatmul.mubr.f32.gmra.mrb[0].mxu0 %v2232
        %v2524 = vpop.f32.mrb[0].mxu0
        %v2525 = vadd.f32 %v2389, %v2524
        %v2526 = vpop.f32.mrb[0].mxu0
        %v2527 = vadd.f32 %v2389, %v2526
        %2528 = vdwg.mxu0
        %2529 = vmatprep.subr.mxu0 %v2332
        %2530 = vmatpush1.msra.mxu0 %v2331
        %2531 = vmatprep.subr.mxu0 %v2335
        %2532 = vmatpush1.msra.mxu0 %v2334
        %2533 = vmatprep.subr.mxu0 %v2338
        %2534 = vmatpush1.msra.mxu0 %v2337
        %2535 = vmatprep.subr.mxu0 %v2341
        %2536 = vmatpush1.msra.mxu0 %v2340
        %2537 = vmatprep.subr.mxu0 0.0
        %2538 = vmatpush1.msra.mxu0 0.0
        %2539 = vmatprep.subr.mxu0 0.0
        %2540 = vmatpush1.msra.mxu0 0.0
        %2541 = vmatprep.subr.mxu0 0.0
        %2542 = vmatpush1.msra.mxu0 0.0
        %2543 = vmatprep.subr.mxu0 0.0
        %2544 = vmatpush1.msra.mxu0 0.0
        %2545 = vmatprep.subr.mxu0 0.0
        %2546 = vmatpush1.msra.mxu0 0.0
        %2547 = vmatprep.subr.mxu0 0.0
        %2548 = vmatpush1.msra.mxu0 0.0
        %2549 = vmatprep.subr.mxu0 0.0
        %2550 = vmatpush1.msra.mxu0 0.0
        %2551 = vmatprep.subr.mxu0 0.0
        %2552 = vmatpush1.msra.mxu0 0.0
        %2553 = vmatprep.subr.mxu0 0.0
        %2554 = vmatpush1.msra.mxu0 0.0
        %2555 = vmatprep.subr.mxu0 0.0
        %2556 = vmatpush1.msra.mxu0 0.0
        %2557 = vmatprep.subr.mxu0 0.0
        %2558 = vmatpush1.msra.mxu0 0.0
        %2559 = vmatprep.subr.mxu0 0.0
        %2560 = vmatpush1.msra.mxu0 0.0
        %2561 = vmatprep.subr.mxu0 0.0
        %2562 = vmatpush1.msra.mxu0 0.0
        %2563 = vmatprep.subr.mxu0 0.0
        %2564 = vmatpush1.msra.mxu0 0.0
        %2565 = vmatprep.subr.mxu0 0.0
        %2566 = vmatpush1.msra.mxu0 0.0
        %2567 = vmatprep.subr.mxu0 0.0
        %2568 = vmatpush1.msra.mxu0 0.0
        %2569 = vmatprep.subr.mxu0 0.0
        %2570 = vmatpush1.msra.mxu0 0.0
        %2571 = vmatprep.subr.mxu0 0.0
        %2572 = vmatpush1.msra.mxu0 0.0
        %2573 = vmatprep.subr.mxu0 0.0
        %2574 = vmatpush1.msra.mxu0 0.0
        %2575 = vmatprep.subr.mxu0 0.0
        %2576 = vmatpush1.msra.mxu0 0.0
        %2577 = vmatprep.subr.mxu0 0.0
        %2578 = vmatpush1.msra.mxu0 0.0
        %2579 = vmatprep.subr.mxu0 0.0
        %2580 = vmatpush1.msra.mxu0 0.0
        %2581 = vmatprep.subr.mxu0 0.0
        %2582 = vmatpush1.msra.mxu0 0.0
        %2583 = vmatprep.subr.mxu0 0.0
        %2584 = vmatpush1.msra.mxu0 0.0
        %2585 = vmatprep.subr.mxu0 0.0
        %2586 = vmatpush1.msra.mxu0 0.0
        %2587 = vmatprep.subr.mxu0 0.0
        %2588 = vmatpush1.msra.mxu0 0.0
        %2589 = vmatprep.subr.mxu0 0.0
        %2590 = vmatpush1.msra.mxu0 0.0
        %2591 = vmatprep.subr.mxu0 0.0
        %2592 = vmatpush1.msra.mxu0 0.0
        %2593 = vmatprep.mubr.f32.mxu0 0.0
        %2594 = vmatmul.mubr.f32.gmra.mrb[0].mxu0 %v2393
        %v2595 = vpop.f32.mrb[0].mxu0
        %v2596 = vadd.f32 %v2483, %v2595
        %v2597 = vpop.f32.mrb[0].mxu0
        %v2598 = vadd.f32 %v2485, %v2597
        %2599 = vmatprep.mubr.f32.mxu0 0.0
        %2600 = vmatmul.mubr.f32.gmra.mrb[0].mxu0 %v2396
        %v2601 = vpop.f32.mrb[0].mxu0
        %v2602 = vadd.f32 %v2489, %v2601
        %v2603 = vpop.f32.mrb[0].mxu0
        %v2604 = vadd.f32 %v2491, %v2603
        %2605 = vmatprep.mubr.f32.mxu0 0.0
        %2606 = vmatmul.mubr.f32.gmra.mrb[0].mxu0 %v2399
        %v2607 = vpop.f32.mrb[0].mxu0
        %v2608 = vadd.f32 %v2495, %v2607
        %v2609 = vpop.f32.mrb[0].mxu0
        %v2610 = vadd.f32 %v2497, %v2609
        %2611 = vmatprep.mubr.f32.mxu0 0.0
        %2612 = vmatmul.mubr.f32.gmra.mrb[0].mxu0 %v2402
        %v2613 = vpop.f32.mrb[0].mxu0
        %v2614 = vadd.f32 %v2501, %v2613
        %v2615 = vpop.f32.mrb[0].mxu0
        %v2616 = vadd.f32 %v2503, %v2615
        %2617 = vmatprep.mubr.f32.mxu0 0.0
        %2618 = vmatmul.mubr.f32.gmra.mrb[0].mxu0 %v2405
        %v2619 = vpop.f32.mrb[0].mxu0
        %v2620 = vadd.f32 %v2507, %v2619
        %v2621 = vpop.f32.mrb[0].mxu0
        %v2622 = vadd.f32 %v2509, %v2621
        %2623 = vmatprep.mubr.f32.mxu0 0.0
        %2624 = vmatmul.mubr.f32.gmra.mrb[0].mxu0 %v2408
        %v2625 = vpop.f32.mrb[0].mxu0
        %v2626 = vadd.f32 %v2513, %v2625
        %v2627 = vpop.f32.mrb[0].mxu0
        %v2628 = vadd.f32 %v2515, %v2627
        %2629 = vmatprep.mubr.f32.mxu0 0.0
        %2630 = vmatmul.mubr.f32.gmra.mrb[0].mxu0 %v2411
        %v2631 = vpop.f32.mrb[0].mxu0
        %v2632 = vadd.f32 %v2519, %v2631
        %v2633 = vpop.f32.mrb[0].mxu0
        %v2634 = vadd.f32 %v2521, %v2633
        %2635 = vmatprep.mubr.f32.mxu0 0.0
        %2636 = vmatmul.mubr.f32.gmra.mrb[0].mxu0 %v2414
        %v2637 = vpop.f32.mrb[0].mxu0
        %v2638 = vadd.f32 %v2525, %v2637
        %v2639 = vpop.f32.mrb[0].mxu0
        %v2640 = vadd.f32 %v2527, %v2639
        %2641 = vdwg.mxu0
        %2642 = vmatprep.subr.mxu0 0.0
        %2643 = vmatpush1.msra.mxu0 %v2237
        %2644 = vmatprep.subr.mxu0 0.0
        %2645 = vmatpush1.msra.mxu0 %v2240
        %2646 = vmatprep.subr.mxu0 0.0
        %2647 = vmatpush1.msra.mxu0 %v2243
        %2648 = vmatprep.subr.mxu0 0.0
        %2649 = vmatpush1.msra.mxu0 %v2246
        %2650 = vmatprep.subr.mxu0 0.0
        %2651 = vmatpush1.msra.mxu0 %v2249
        %2652 = vmatprep.subr.mxu0 0.0
        %2653 = vmatpush1.msra.mxu0 %v2252
        %2654 = vmatprep.subr.mxu0 0.0
        %2655 = vmatpush1.msra.mxu0 %v2255
        %2656 = vmatprep.subr.mxu0 0.0
        %2657 = vmatpush1.msra.mxu0 %v2258
        %2658 = vmatprep.subr.mxu0 0.0
        %2659 = vmatpush1.msra.mxu0 %v2261
        %2660 = vmatprep.subr.mxu0 0.0
        %2661 = vmatpush1.msra.mxu0 %v2264
        %2662 = vmatprep.subr.mxu0 0.0
        %2663 = vmatpush1.msra.mxu0 %v2267
        %2664 = vmatprep.subr.mxu0 0.0
        %2665 = vmatpush1.msra.mxu0 %v2270
        %2666 = vmatprep.subr.mxu0 0.0
        %2667 = vmatpush1.msra.mxu0 %v2273
        %2668 = vmatprep.subr.mxu0 0.0
        %2669 = vmatpush1.msra.mxu0 %v2276
        %2670 = vmatprep.subr.mxu0 0.0
        %2671 = vmatpush1.msra.mxu0 %v2279
        %2672 = vmatprep.subr.mxu0 0.0
        %2673 = vmatpush1.msra.mxu0 %v2282
        %2674 = vmatprep.subr.mxu0 0.0
        %2675 = vmatpush1.msra.mxu0 %v2285
        %2676 = vmatprep.subr.mxu0 0.0
        %2677 = vmatpush1.msra.mxu0 %v2288
        %2678 = vmatprep.subr.mxu0 0.0
        %2679 = vmatpush1.msra.mxu0 %v2291
        %2680 = vmatprep.subr.mxu0 0.0
        %2681 = vmatpush1.msra.mxu0 %v2294
        %2682 = vmatprep.subr.mxu0 0.0
        %2683 = vmatpush1.msra.mxu0 %v2297
        %2684 = vmatprep.subr.mxu0 0.0
        %2685 = vmatpush1.msra.mxu0 %v2300
        %2686 = vmatprep.subr.mxu0 0.0
        %2687 = vmatpush1.msra.mxu0 %v2303
        %2688 = vmatprep.subr.mxu0 0.0
        %2689 = vmatpush1.msra.mxu0 %v2306
        %2690 = vmatprep.subr.mxu0 0.0
        %2691 = vmatpush1.msra.mxu0 %v2309
        %2692 = vmatprep.subr.mxu0 0.0
        %2693 = vmatpush1.msra.mxu0 %v2312
        %2694 = vmatprep.subr.mxu0 0.0
        %2695 = vmatpush1.msra.mxu0 %v2315
        %2696 = vmatprep.subr.mxu0 0.0
        %2697 = vmatpush1.msra.mxu0 %v2318
        %2698 = vmatprep.subr.mxu0 0.0
        %2699 = vmatpush1.msra.mxu0 %v2321
        %2700 = vmatprep.subr.mxu0 0.0
        %2701 = vmatpush1.msra.mxu0 %v2324
        %2702 = vmatprep.subr.mxu0 0.0
        %2703 = vmatpush1.msra.mxu0 %v2327
        %2704 = vmatprep.subr.mxu0 0.0
        %2705 = vmatpush1.msra.mxu0 %v2330
        %2706 = vmatprep.mubr.f32.mxu0 %v2212
        %2707 = vmatmul.mubr.f32.gmra.mrb[0].mxu0 %v2211
        %v2708 = vpop.f32.mrb[0].mxu0
        %v2709 = vadd.f32 %v2354, %v2708
        %v2710 = vpop.f32.mrb[0].mxu0
        %2711 = vmatprep.mubr.f32.mxu0 %v2215
        %2712 = vmatmul.mubr.f32.gmra.mrb[0].mxu0 %v2214
        %v2713 = vpop.f32.mrb[0].mxu0
        %v2714 = vadd.f32 %v2359, %v2713
        %v2715 = vpop.f32.mrb[0].mxu0
        %2716 = vmatprep.mubr.f32.mxu0 %v2218
        %2717 = vmatmul.mubr.f32.gmra.mrb[0].mxu0 %v2217
        %v2718 = vpop.f32.mrb[0].mxu0
        %v2719 = vadd.f32 %v2364, %v2718
        %v2720 = vpop.f32.mrb[0].mxu0
        %2721 = vmatprep.mubr.f32.mxu0 %v2221
        %2722 = vmatmul.mubr.f32.gmra.mrb[0].mxu0 %v2220
        %v2723 = vpop.f32.mrb[0].mxu0
        %v2724 = vadd.f32 %v2369, %v2723
        %v2725 = vpop.f32.mrb[0].mxu0
        %2726 = vmatprep.mubr.f32.mxu0 %v2224
        %2727 = vmatmul.mubr.f32.gmra.mrb[0].mxu0 %v2223
        %v2728 = vpop.f32.mrb[0].mxu0
        %v2729 = vadd.f32 %v2374, %v2728
        %v2730 = vpop.f32.mrb[0].mxu0
        %2731 = vmatprep.mubr.f32.mxu0 %v2227
        %2732 = vmatmul.mubr.f32.gmra.mrb[0].mxu0 %v2226
        %v2733 = vpop.f32.mrb[0].mxu0
        %v2734 = vadd.f32 %v2379, %v2733
        %v2735 = vpop.f32.mrb[0].mxu0
        %2736 = vmatprep.mubr.f32.mxu0 %v2230
        %2737 = vmatmul.mubr.f32.gmra.mrb[0].mxu0 %v2229
        %v2738 = vpop.f32.mrb[0].mxu0
        %v2739 = vadd.f32 %v2384, %v2738
        %v2740 = vpop.f32.mrb[0].mxu0
        %2741 = vmatprep.mubr.f32.mxu0 %v2233
        %2742 = vmatmul.mubr.f32.gmra.mrb[0].mxu0 %v2232
        %v2743 = vpop.f32.mrb[0].mxu0
        %v2744 = vadd.f32 %v2389, %v2743
        %v2745 = vpop.f32.mrb[0].mxu0
        %2746 = vdwg.mxu0
        %2747 = vmatprep.subr.mxu0 0.0
        %2748 = vmatpush1.msra.mxu0 %v2333
        %2749 = vmatprep.subr.mxu0 0.0
        %2750 = vmatpush1.msra.mxu0 %v2336
        %2751 = vmatprep.subr.mxu0 0.0
        %2752 = vmatpush1.msra.mxu0 %v2339
        %2753 = vmatprep.subr.mxu0 0.0
        %2754 = vmatpush1.msra.mxu0 %v2342
        %2755 = vmatprep.subr.mxu0 0.0
        %2756 = vmatpush1.msra.mxu0 0.0
        %2757 = vmatprep.subr.mxu0 0.0
        %2758 = vmatpush1.msra.mxu0 0.0
        %2759 = vmatprep.subr.mxu0 0.0
        %2760 = vmatpush1.msra.mxu0 0.0
        %2761 = vmatprep.subr.mxu0 0.0
        %2762 = vmatpush1.msra.mxu0 0.0
        %2763 = vmatprep.subr.mxu0 0.0
        %2764 = vmatpush1.msra.mxu0 0.0
        %2765 = vmatprep.subr.mxu0 0.0
        %2766 = vmatpush1.msra.mxu0 0.0
        %2767 = vmatprep.subr.mxu0 0.0
        %2768 = vmatpush1.msra.mxu0 0.0
        %2769 = vmatprep.subr.mxu0 0.0
        %2770 = vmatpush1.msra.mxu0 0.0
        %2771 = vmatprep.subr.mxu0 0.0
        %2772 = vmatpush1.msra.mxu0 0.0
        %2773 = vmatprep.subr.mxu0 0.0
        %2774 = vmatpush1.msra.mxu0 0.0
        %2775 = vmatprep.subr.mxu0 0.0
        %2776 = vmatpush1.msra.mxu0 0.0
        %2777 = vmatprep.subr.mxu0 0.0
        %2778 = vmatpush1.msra.mxu0 0.0
        %2779 = vmatprep.subr.mxu0 0.0
        %2780 = vmatpush1.msra.mxu0 0.0
        %2781 = vmatprep.subr.mxu0 0.0
        %2782 = vmatpush1.msra.mxu0 0.0
        %2783 = vmatprep.subr.mxu0 0.0
        %2784 = vmatpush1.msra.mxu0 0.0
        %2785 = vmatprep.subr.mxu0 0.0
        %2786 = vmatpush1.msra.mxu0 0.0
        %2787 = vmatprep.subr.mxu0 0.0
        %2788 = vmatpush1.msra.mxu0 0.0
        %2789 = vmatprep.subr.mxu0 0.0
        %2790 = vmatpush1.msra.mxu0 0.0
        %2791 = vmatprep.subr.mxu0 0.0
        %2792 = vmatpush1.msra.mxu0 0.0
        %2793 = vmatprep.subr.mxu0 0.0
        %2794 = vmatpush1.msra.mxu0 0.0
        %2795 = vmatprep.subr.mxu0 0.0
        %2796 = vmatpush1.msra.mxu0 0.0
        %2797 = vmatprep.subr.mxu0 0.0
        %2798 = vmatpush1.msra.mxu0 0.0
        %2799 = vmatprep.subr.mxu0 0.0
        %2800 = vmatpush1.msra.mxu0 0.0
        %2801 = vmatprep.subr.mxu0 0.0
        %2802 = vmatpush1.msra.mxu0 0.0
        %2803 = vmatprep.subr.mxu0 0.0
        %2804 = vmatpush1.msra.mxu0 0.0
        %2805 = vmatprep.subr.mxu0 0.0
        %2806 = vmatpush1.msra.mxu0 0.0
        %2807 = vmatprep.subr.mxu0 0.0
        %2808 = vmatpush1.msra.mxu0 0.0
        %2809 = vmatprep.subr.mxu0 0.0
        %2810 = vmatpush1.msra.mxu0 0.0
        %2811 = vmatprep.mubr.f32.mxu0 0.0
        %2812 = vmatmul.mubr.f32.gmra.mrb[0].mxu0 %v2393
        %v2813 = vpop.f32.mrb[0].mxu0
        %v2814 = vadd.f32 %v2709, %v2813
        %v2815 = vpop.f32.mrb[0].mxu0
        %2816 = vmatprep.mubr.f32.mxu0 0.0
        %2817 = vmatmul.mubr.f32.gmra.mrb[0].mxu0 %v2396
        %v2818 = vpop.f32.mrb[0].mxu0
        %v2819 = vadd.f32 %v2714, %v2818
        %v2820 = vpop.f32.mrb[0].mxu0
        %2821 = vmatprep.mubr.f32.mxu0 0.0
        %2822 = vmatmul.mubr.f32.gmra.mrb[0].mxu0 %v2399
        %v2823 = vpop.f32.mrb[0].mxu0
        %v2824 = vadd.f32 %v2719, %v2823
        %v2825 = vpop.f32.mrb[0].mxu0
        %2826 = vmatprep.mubr.f32.mxu0 0.0
        %2827 = vmatmul.mubr.f32.gmra.mrb[0].mxu0 %v2402
        %v2828 = vpop.f32.mrb[0].mxu0
        %v2829 = vadd.f32 %v2724, %v2828
        %v2830 = vpop.f32.mrb[0].mxu0
        %2831 = vmatprep.mubr.f32.mxu0 0.0
        %2832 = vmatmul.mubr.f32.gmra.mrb[0].mxu0 %v2405
        %v2833 = vpop.f32.mrb[0].mxu0
        %v2834 = vadd.f32 %v2729, %v2833
        %v2835 = vpop.f32.mrb[0].mxu0
        %2836 = vmatprep.mubr.f32.mxu0 0.0
        %2837 = vmatmul.mubr.f32.gmra.mrb[0].mxu0 %v2408
        %v2838 = vpop.f32.mrb[0].mxu0
        %v2839 = vadd.f32 %v2734, %v2838
        %v2840 = vpop.f32.mrb[0].mxu0
        %2841 = vmatprep.mubr.f32.mxu0 0.0
        %2842 = vmatmul.mubr.f32.gmra.mrb[0].mxu0 %v2411
        %v2843 = vpop.f32.mrb[0].mxu0
        %v2844 = vadd.f32 %v2739, %v2843
        %v2845 = vpop.f32.mrb[0].mxu0
        %2846 = vmatprep.mubr.f32.mxu0 0.0
        %2847 = vmatmul.mubr.f32.gmra.mrb[0].mxu0 %v2414
        %v2848 = vpop.f32.mrb[0].mxu0
        %v2849 = vadd.f32 %v2744, %v2848
        %v2850 = vpop.f32.mrb[0].mxu0
        %2851 = vdwg.mxu0
        %v2852 = vmax.f32 %v2596, 0.0
        %v2853 = vmax.f32 %v2598, 0.0
        %v2854 = vmax.f32 %v2814, 0.0
        %v2855 = vmax.f32 %v2602, 0.0
        %v2856 = vmax.f32 %v2604, 0.0
        %v2857 = vmax.f32 %v2819, 0.0
        %v2858 = vmax.f32 %v2608, 0.0
        %v2859 = vmax.f32 %v2610, 0.0
        %v2860 = vmax.f32 %v2824, 0.0
        %v2861 = vmax.f32 %v2614, 0.0
        %v2862 = vmax.f32 %v2616, 0.0
        %v2863 = vmax.f32 %v2829, 0.0
        %v2864 = vmax.f32 %v2620, 0.0
        %v2865 = vmax.f32 %v2622, 0.0
        %v2866 = vmax.f32 %v2834, 0.0
        %v2867 = vmax.f32 %v2626, 0.0
        %v2868 = vmax.f32 %v2628, 0.0
        %v2869 = vmax.f32 %v2839, 0.0
        %v2870 = vmax.f32 %v2632, 0.0
        %v2871 = vmax.f32 %v2634, 0.0
        %v2872 = vmax.f32 %v2844, 0.0
        %v2873 = vmax.f32 %v2638, 0.0
        %v2874 = vmax.f32 %v2640, 0.0
        %v2875 = vmax.f32 %v2849, 0.0
        %v2876 = vmul.f32 %v1351, %v2852
        %v2877 = vmul.f32 %v1355, %v2853
        %v2878 = vmul.f32 %v1359, %v2854
        %v2879 = vmul.f32 %v1351, %v2855
        %v2880 = vmul.f32 %v1355, %v2856
        %v2881 = vmul.f32 %v1359, %v2857
        %v2882 = vmul.f32 %v1351, %v2858
        %v2883 = vmul.f32 %v1355, %v2859
        %v2884 = vmul.f32 %v1359, %v2860
        %v2885 = vmul.f32 %v1351, %v2861
        %v2886 = vmul.f32 %v1355, %v2862
        %v2887 = vmul.f32 %v1359, %v2863
        %v2888 = vmul.f32 %v1351, %v2864
        %v2889 = vmul.f32 %v1355, %v2865
        %v2890 = vmul.f32 %v1359, %v2866
        %v2891 = vmul.f32 %v1351, %v2867
        %v2892 = vmul.f32 %v1355, %v2868
        %v2893 = vmul.f32 %v1359, %v2869
        %v2894 = vmul.f32 %v1351, %v2870
        %v2895 = vmul.f32 %v1355, %v2871
        %v2896 = vmul.f32 %v1359, %v2872
        %v2897 = vmul.f32 %v1351, %v2873
        %v2898 = vmul.f32 %v1355, %v2874
        %v2899 = vmul.f32 %v1359, %v2875
        %2900 = vst [vmem:[#allocation3 + $0x8] sm:$0xff] %v2876
        %2901 = vst [vmem:[#allocation3 + $0x10] sm:$0xff] %v2877
        %2902 = vst [vmem:[#allocation3 + $0x18] sm:$0xff] %v2878
        %2903 = vst [vmem:[#allocation3 + $0x30] sm:$0xff] %v2879
        %2904 = vst [vmem:[#allocation3 + $0x38] sm:$0xff] %v2880
        %2905 = vst [vmem:[#allocation3 + $0x40] sm:$0xff] %v2881
        %2906 = vst [vmem:[#allocation3 + $0x58] sm:$0xff] %v2882
        %2907 = vst [vmem:[#allocation3 + $0x60] sm:$0xff] %v2883
        %2908 = vst [vmem:[#allocation3 + $0x68] sm:$0xff] %v2884
        %2909 = vst [vmem:[#allocation3 + $0x80] sm:$0xff] %v2885
        %2910 = vst [vmem:[#allocation3 + $0x88] sm:$0xff] %v2886
        %2911 = vst [vmem:[#allocation3 + $0x90] sm:$0xff] %v2887
        %2912 = vst [vmem:[#allocation3 + $0xa8] sm:$0xff] %v2888
        %2913 = vst [vmem:[#allocation3 + $0xb0] sm:$0xff] %v2889
        %2914 = vst [vmem:[#allocation3 + $0xb8] sm:$0xff] %v2890
        %2915 = vst [vmem:[#allocation3 + $0xd0] sm:$0xff] %v2891
        %2916 = vst [vmem:[#allocation3 + $0xd8] sm:$0xff] %v2892
        %2917 = vst [vmem:[#allocation3 + $0xe0] sm:$0xff] %v2893
        %2918 = vst [vmem:[#allocation3 + $0xf8] sm:$0xff] %v2894
        %2919 = vst [vmem:[#allocation3 + $0x100] sm:$0xff] %v2895
        %2920 = vst [vmem:[#allocation3 + $0x108] sm:$0xff] %v2896
        %2921 = vst [vmem:[#allocation3 + $0x120] sm:$0xff] %v2897
        %2922 = vst [vmem:[#allocation3 + $0x128] sm:$0xff] %v2898
        %2923 = vst [vmem:[#allocation3 + $0x130] sm:$0xff] %v2899
        %v2924 = vld [vmem:[#allocation3] sm:$0xff]
        %v2925 = vld [vmem:[#allocation3 + $0x8] sm:$0xff]
        %v2926 = vld [vmem:[#allocation3 + $0x10] sm:$0xff]
        %v2927 = vld [vmem:[#allocation3 + $0x18] sm:$0xff]
        %v2928 = vld [vmem:[#allocation3 + $0x28] sm:$0xff]
        %v2929 = vld [vmem:[#allocation3 + $0x30] sm:$0xff]
        %v2930 = vld [vmem:[#allocation3 + $0x38] sm:$0xff]
        %v2931 = vld [vmem:[#allocation3 + $0x40] sm:$0xff]
        %v2932 = vld [vmem:[#allocation3 + $0x50] sm:$0xff]
        %v2933 = vld [vmem:[#allocation3 + $0x58] sm:$0xff]
        %v2934 = vld [vmem:[#allocation3 + $0x60] sm:$0xff]
        %v2935 = vld [vmem:[#allocation3 + $0x68] sm:$0xff]
        %v2936 = vld [vmem:[#allocation3 + $0x78] sm:$0xff]
        %v2937 = vld [vmem:[#allocation3 + $0x80] sm:$0xff]
        %v2938 = vld [vmem:[#allocation3 + $0x88] sm:$0xff]
        %v2939 = vld [vmem:[#allocation3 + $0x90] sm:$0xff]
        %v2940 = vld [vmem:[#allocation3 + $0xa0] sm:$0xff]
        %v2941 = vld [vmem:[#allocation3 + $0xa8] sm:$0xff]
        %v2942 = vld [vmem:[#allocation3 + $0xb0] sm:$0xff]
        %v2943 = vld [vmem:[#allocation3 + $0xb8] sm:$0xff]
        %v2944 = vld [vmem:[#allocation3 + $0xc8] sm:$0xff]
        %v2945 = vld [vmem:[#allocation3 + $0xd0] sm:$0xff]
        %v2946 = vld [vmem:[#allocation3 + $0xd8] sm:$0xff]
        %v2947 = vld [vmem:[#allocation3 + $0xe0] sm:$0xff]
        %v2948 = vld [vmem:[#allocation3 + $0xf0] sm:$0xff]
        %v2949 = vld [vmem:[#allocation3 + $0xf8] sm:$0xff]
        %v2950 = vld [vmem:[#allocation3 + $0x100] sm:$0xff]
        %v2951 = vld [vmem:[#allocation3 + $0x108] sm:$0xff]
        %v2952 = vld [vmem:[#allocation3 + $0x118] sm:$0xff]
        %v2953 = vld [vmem:[#allocation3 + $0x120] sm:$0xff]
        %v2954 = vld [vmem:[#allocation3 + $0x128] sm:$0xff]
        %v2955 = vld [vmem:[#allocation3 + $0x130] sm:$0xff]
        %2988 = vrot.lane.b32.xlu0 %v2924, 19
        %v2989 = vpop.permute.xlu0 %2988
        %2990 = vrot.lane.b32.xlu0 %v2925, 19
        %v2991 = vpop.permute.xlu0 %2990
        %2992 = vrot.lane.b32.xlu0 %v2926, 19
        %v2993 = vpop.permute.xlu0 %2992
        %2994 = vrot.lane.b32.xlu0 %v2927, 19
        %v2995 = vpop.permute.xlu0 %2994
        %2996 = vrot.lane.b32.xlu0 %v2928, 19
        %v2997 = vpop.permute.xlu0 %2996
        %2998 = vrot.lane.b32.xlu0 %v2929, 19
        %v2999 = vpop.permute.xlu0 %2998
        %3000 = vrot.lane.b32.xlu0 %v2930, 19
        %v3001 = vpop.permute.xlu0 %3000
        %3002 = vrot.lane.b32.xlu0 %v2931, 19
        %v3003 = vpop.permute.xlu0 %3002
        %3004 = vrot.lane.b32.xlu0 %v2932, 19
        %v3005 = vpop.permute.xlu0 %3004
        %3006 = vrot.lane.b32.xlu0 %v2933, 19
        %v3007 = vpop.permute.xlu0 %3006
        %3008 = vrot.lane.b32.xlu0 %v2934, 19
        %v3009 = vpop.permute.xlu0 %3008
        %3010 = vrot.lane.b32.xlu0 %v2935, 19
        %v3011 = vpop.permute.xlu0 %3010
        %3012 = vrot.lane.b32.xlu0 %v2936, 19
        %v3013 = vpop.permute.xlu0 %3012
        %3014 = vrot.lane.b32.xlu0 %v2937, 19
        %v3015 = vpop.permute.xlu0 %3014
        %3016 = vrot.lane.b32.xlu0 %v2938, 19
        %v3017 = vpop.permute.xlu0 %3016
        %3018 = vrot.lane.b32.xlu0 %v2939, 19
        %v3019 = vpop.permute.xlu0 %3018
        %3020 = vrot.lane.b32.xlu0 %v2940, 19
        %v3021 = vpop.permute.xlu0 %3020
        %3022 = vrot.lane.b32.xlu0 %v2941, 19
        %v3023 = vpop.permute.xlu0 %3022
        %3024 = vrot.lane.b32.xlu0 %v2942, 19
        %v3025 = vpop.permute.xlu0 %3024
        %3026 = vrot.lane.b32.xlu0 %v2943, 19
        %v3027 = vpop.permute.xlu0 %3026
        %3028 = vrot.lane.b32.xlu0 %v2944, 19
        %v3029 = vpop.permute.xlu0 %3028
        %3030 = vrot.lane.b32.xlu0 %v2945, 19
        %v3031 = vpop.permute.xlu0 %3030
        %3032 = vrot.lane.b32.xlu0 %v2946, 19
        %v3033 = vpop.permute.xlu0 %3032
        %3034 = vrot.lane.b32.xlu0 %v2947, 19
        %v3035 = vpop.permute.xlu0 %3034
        %3036 = vrot.lane.b32.xlu0 %v2948, 19
        %v3037 = vpop.permute.xlu0 %3036
        %3038 = vrot.lane.b32.xlu0 %v2949, 19
        %v3039 = vpop.permute.xlu0 %3038
        %3040 = vrot.lane.b32.xlu0 %v2950, 19
        %v3041 = vpop.permute.xlu0 %3040
        %3042 = vrot.lane.b32.xlu0 %v2951, 19
        %v3043 = vpop.permute.xlu0 %3042
        %3044 = vrot.lane.b32.xlu0 %v2952, 19
        %v3045 = vpop.permute.xlu0 %3044
        %3046 = vrot.lane.b32.xlu0 %v2953, 19
        %v3047 = vpop.permute.xlu0 %3046
        %3048 = vrot.lane.b32.xlu0 %v2954, 19
        %v3049 = vpop.permute.xlu0 %3048
        %3050 = vrot.lane.b32.xlu0 %v2955, 19
        %v3051 = vpop.permute.xlu0 %3050
        %v3052 = vsel %vm600, %v2989, %v2991
        %v3053 = vsel %vm600, %v2991, %v2993
        %v3054 = vsel %vm600, %v2993, %v2995
        %v3055 = vsel %vm600, %v2997, %v2999
        %v3056 = vsel %vm600, %v2999, %v3001
        %v3057 = vsel %vm600, %v3001, %v3003
        %v3058 = vsel %vm600, %v3005, %v3007
        %v3059 = vsel %vm600, %v3007, %v3009
        %v3060 = vsel %vm600, %v3009, %v3011
        %v3061 = vsel %vm600, %v3013, %v3015
        %v3062 = vsel %vm600, %v3015, %v3017
        %v3063 = vsel %vm600, %v3017, %v3019
        %v3064 = vsel %vm600, %v3021, %v3023
        %v3065 = vsel %vm600, %v3023, %v3025
        %v3066 = vsel %vm600, %v3025, %v3027
        %v3067 = vsel %vm600, %v3029, %v3031
        %v3068 = vsel %vm600, %v3031, %v3033
        %v3069 = vsel %vm600, %v3033, %v3035
        %v3070 = vsel %vm600, %v3037, %v3039
        %v3071 = vsel %vm600, %v3039, %v3041
        %v3072 = vsel %vm600, %v3041, %v3043
        %v3073 = vsel %vm600, %v3045, %v3047
        %v3074 = vsel %vm600, %v3047, %v3049
        %v3075 = vsel %vm600, %v3049, %v3051
        %3100 = vst [vmem:[#allocation5] sm:$0xff] %v3052
        %3101 = vst [vmem:[#allocation5 + $0x8] sm:$0xff] %v3053
        %3102 = vst [vmem:[#allocation5 + $0x10] sm:$0xff] %v3054
        %3103 = vst [vmem:[#allocation5 + $0x18] sm:$0xff] %v3055
        %3104 = vst [vmem:[#allocation5 + $0x20] sm:$0xff] %v3056
        %3105 = vst [vmem:[#allocation5 + $0x28] sm:$0xff] %v3057
        %3106 = vst [vmem:[#allocation5 + $0x30] sm:$0xff] %v3058
        %3107 = vst [vmem:[#allocation5 + $0x38] sm:$0xff] %v3059
        %3108 = vst [vmem:[#allocation5 + $0x40] sm:$0xff] %v3060
        %3109 = vst [vmem:[#allocation5 + $0x48] sm:$0xff] %v3061
        %3110 = vst [vmem:[#allocation5 + $0x50] sm:$0xff] %v3062
        %3111 = vst [vmem:[#allocation5 + $0x58] sm:$0xff] %v3063
        %3112 = vst [vmem:[#allocation5 + $0x60] sm:$0xff] %v3064
        %3113 = vst [vmem:[#allocation5 + $0x68] sm:$0xff] %v3065
        %3114 = vst [vmem:[#allocation5 + $0x70] sm:$0xff] %v3066
        %3115 = vst [vmem:[#allocation5 + $0x78] sm:$0xff] %v3067
        %3116 = vst [vmem:[#allocation5 + $0x80] sm:$0xff] %v3068
        %3117 = vst [vmem:[#allocation5 + $0x88] sm:$0xff] %v3069
        %3118 = vst [vmem:[#allocation5 + $0x90] sm:$0xff] %v3070
        %3119 = vst [vmem:[#allocation5 + $0x98] sm:$0xff] %v3071
        %3120 = vst [vmem:[#allocation5 + $0xa0] sm:$0xff] %v3072
        %3121 = vst [vmem:[#allocation5 + $0xa8] sm:$0xff] %v3073
        %3122 = vst [vmem:[#allocation5 + $0xb0] sm:$0xff] %v3074
        %3123 = vst [vmem:[#allocation5 + $0xb8] sm:$0xff] %v3075
        %v3124 = vld [vmem:[#allocation3] sm:$0xff]
        %v3125 = vld [vmem:[#allocation3 + $0x8] sm:$0xff]
        %v3126 = vld [vmem:[#allocation3 + $0x10] sm:$0xff]
        %v3127 = vld [vmem:[#allocation3 + $0x18] sm:$0xff]
        %v3128 = vld [vmem:[#allocation3 + $0x28] sm:$0xff]
        %v3129 = vld [vmem:[#allocation3 + $0x30] sm:$0xff]
        %v3130 = vld [vmem:[#allocation3 + $0x38] sm:$0xff]
        %v3131 = vld [vmem:[#allocation3 + $0x40] sm:$0xff]
        %v3132 = vld [vmem:[#allocation3 + $0x50] sm:$0xff]
        %v3133 = vld [vmem:[#allocation3 + $0x58] sm:$0xff]
        %v3134 = vld [vmem:[#allocation3 + $0x60] sm:$0xff]
        %v3135 = vld [vmem:[#allocation3 + $0x68] sm:$0xff]
        %v3136 = vld [vmem:[#allocation3 + $0x78] sm:$0xff]
        %v3137 = vld [vmem:[#allocation3 + $0x80] sm:$0xff]
        %v3138 = vld [vmem:[#allocation3 + $0x88] sm:$0xff]
        %v3139 = vld [vmem:[#allocation3 + $0x90] sm:$0xff]
        %v3140 = vld [vmem:[#allocation3 + $0xa0] sm:$0xff]
        %v3141 = vld [vmem:[#allocation3 + $0xa8] sm:$0xff]
        %v3142 = vld [vmem:[#allocation3 + $0xb0] sm:$0xff]
        %v3143 = vld [vmem:[#allocation3 + $0xb8] sm:$0xff]
        %v3144 = vld [vmem:[#allocation3 + $0xc8] sm:$0xff]
        %v3145 = vld [vmem:[#allocation3 + $0xd0] sm:$0xff]
        %v3146 = vld [vmem:[#allocation3 + $0xd8] sm:$0xff]
        %v3147 = vld [vmem:[#allocation3 + $0xe0] sm:$0xff]
        %v3148 = vld [vmem:[#allocation3 + $0xf0] sm:$0xff]
        %v3149 = vld [vmem:[#allocation3 + $0xf8] sm:$0xff]
        %v3150 = vld [vmem:[#allocation3 + $0x100] sm:$0xff]
        %v3151 = vld [vmem:[#allocation3 + $0x108] sm:$0xff]
        %v3152 = vld [vmem:[#allocation3 + $0x118] sm:$0xff]
        %v3153 = vld [vmem:[#allocation3 + $0x120] sm:$0xff]
        %v3154 = vld [vmem:[#allocation3 + $0x128] sm:$0xff]
        %v3155 = vld [vmem:[#allocation3 + $0x130] sm:$0xff]
        %3188 = vrot.lane.b32.xlu0 %v3124, 18
        %v3189 = vpop.permute.xlu0 %3188
        %3190 = vrot.lane.b32.xlu0 %v3125, 18
        %v3191 = vpop.permute.xlu0 %3190
        %3192 = vrot.lane.b32.xlu0 %v3126, 18
        %v3193 = vpop.permute.xlu0 %3192
        %3194 = vrot.lane.b32.xlu0 %v3127, 18
        %v3195 = vpop.permute.xlu0 %3194
        %3196 = vrot.lane.b32.xlu0 %v3128, 18
        %v3197 = vpop.permute.xlu0 %3196
        %3198 = vrot.lane.b32.xlu0 %v3129, 18
        %v3199 = vpop.permute.xlu0 %3198
        %3200 = vrot.lane.b32.xlu0 %v3130, 18
        %v3201 = vpop.permute.xlu0 %3200
        %3202 = vrot.lane.b32.xlu0 %v3131, 18
        %v3203 = vpop.permute.xlu0 %3202
        %3204 = vrot.lane.b32.xlu0 %v3132, 18
        %v3205 = vpop.permute.xlu0 %3204
        %3206 = vrot.lane.b32.xlu0 %v3133, 18
        %v3207 = vpop.permute.xlu0 %3206
        %3208 = vrot.lane.b32.xlu0 %v3134, 18
        %v3209 = vpop.permute.xlu0 %3208
        %3210 = vrot.lane.b32.xlu0 %v3135, 18
        %v3211 = vpop.permute.xlu0 %3210
        %3212 = vrot.lane.b32.xlu0 %v3136, 18
        %v3213 = vpop.permute.xlu0 %3212
        %3214 = vrot.lane.b32.xlu0 %v3137, 18
        %v3215 = vpop.permute.xlu0 %3214
        %3216 = vrot.lane.b32.xlu0 %v3138, 18
        %v3217 = vpop.permute.xlu0 %3216
        %3218 = vrot.lane.b32.xlu0 %v3139, 18
        %v3219 = vpop.permute.xlu0 %3218
        %3220 = vrot.lane.b32.xlu0 %v3140, 18
        %v3221 = vpop.permute.xlu0 %3220
        %3222 = vrot.lane.b32.xlu0 %v3141, 18
        %v3223 = vpop.permute.xlu0 %3222
        %3224 = vrot.lane.b32.xlu0 %v3142, 18
        %v3225 = vpop.permute.xlu0 %3224
        %3226 = vrot.lane.b32.xlu0 %v3143, 18
        %v3227 = vpop.permute.xlu0 %3226
        %3228 = vrot.lane.b32.xlu0 %v3144, 18
        %v3229 = vpop.permute.xlu0 %3228
        %3230 = vrot.lane.b32.xlu0 %v3145, 18
        %v3231 = vpop.permute.xlu0 %3230
        %3232 = vrot.lane.b32.xlu0 %v3146, 18
        %v3233 = vpop.permute.xlu0 %3232
        %3234 = vrot.lane.b32.xlu0 %v3147, 18
        %v3235 = vpop.permute.xlu0 %3234
        %3236 = vrot.lane.b32.xlu0 %v3148, 18
        %v3237 = vpop.permute.xlu0 %3236
        %3238 = vrot.lane.b32.xlu0 %v3149, 18
        %v3239 = vpop.permute.xlu0 %3238
        %3240 = vrot.lane.b32.xlu0 %v3150, 18
        %v3241 = vpop.permute.xlu0 %3240
        %3242 = vrot.lane.b32.xlu0 %v3151, 18
        %v3243 = vpop.permute.xlu0 %3242
        %3244 = vrot.lane.b32.xlu0 %v3152, 18
        %v3245 = vpop.permute.xlu0 %3244
        %3246 = vrot.lane.b32.xlu0 %v3153, 18
        %v3247 = vpop.permute.xlu0 %3246
        %3248 = vrot.lane.b32.xlu0 %v3154, 18
        %v3249 = vpop.permute.xlu0 %3248
        %3250 = vrot.lane.b32.xlu0 %v3155, 18
        %v3251 = vpop.permute.xlu0 %3250
        %v3252 = vsel %vm624, %v3189, %v3191
        %v3253 = vsel %vm624, %v3191, %v3193
        %v3254 = vsel %vm624, %v3193, %v3195
        %v3255 = vsel %vm624, %v3197, %v3199
        %v3256 = vsel %vm624, %v3199, %v3201
        %v3257 = vsel %vm624, %v3201, %v3203
        %v3258 = vsel %vm624, %v3205, %v3207
        %v3259 = vsel %vm624, %v3207, %v3209
        %v3260 = vsel %vm624, %v3209, %v3211
        %v3261 = vsel %vm624, %v3213, %v3215
        %v3262 = vsel %vm624, %v3215, %v3217
        %v3263 = vsel %vm624, %v3217, %v3219
        %v3264 = vsel %vm624, %v3221, %v3223
        %v3265 = vsel %vm624, %v3223, %v3225
        %v3266 = vsel %vm624, %v3225, %v3227
        %v3267 = vsel %vm624, %v3229, %v3231
        %v3268 = vsel %vm624, %v3231, %v3233
        %v3269 = vsel %vm624, %v3233, %v3235
        %v3270 = vsel %vm624, %v3237, %v3239
        %v3271 = vsel %vm624, %v3239, %v3241
        %v3272 = vsel %vm624, %v3241, %v3243
        %v3273 = vsel %vm624, %v3245, %v3247
        %v3274 = vsel %vm624, %v3247, %v3249
        %v3275 = vsel %vm624, %v3249, %v3251
        %3300 = vst [vmem:[#allocation5 + $0xc0] sm:$0xff] %v3252
        %3301 = vst [vmem:[#allocation5 + $0xc8] sm:$0xff] %v3253
        %3302 = vst [vmem:[#allocation5 + $0xd0] sm:$0xff] %v3254
        %3303 = vst [vmem:[#allocation5 + $0xd8] sm:$0xff] %v3255
        %3304 = vst [vmem:[#allocation5 + $0xe0] sm:$0xff] %v3256
        %3305 = vst [vmem:[#allocation5 + $0xe8] sm:$0xff] %v3257
        %3306 = vst [vmem:[#allocation5 + $0xf0] sm:$0xff] %v3258
        %3307 = vst [vmem:[#allocation5 + $0xf8] sm:$0xff] %v3259
        %3308 = vst [vmem:[#allocation5 + $0x100] sm:$0xff] %v3260
        %3309 = vst [vmem:[#allocation5 + $0x108] sm:$0xff] %v3261
        %3310 = vst [vmem:[#allocation5 + $0x110] sm:$0xff] %v3262
        %3311 = vst [vmem:[#allocation5 + $0x118] sm:$0xff] %v3263
        %3312 = vst [vmem:[#allocation5 + $0x120] sm:$0xff] %v3264
        %3313 = vst [vmem:[#allocation5 + $0x128] sm:$0xff] %v3265
        %3314 = vst [vmem:[#allocation5 + $0x130] sm:$0xff] %v3266
        %3315 = vst [vmem:[#allocation5 + $0x138] sm:$0xff] %v3267
        %3316 = vst [vmem:[#allocation5 + $0x140] sm:$0xff] %v3268
        %3317 = vst [vmem:[#allocation5 + $0x148] sm:$0xff] %v3269
        %3318 = vst [vmem:[#allocation5 + $0x150] sm:$0xff] %v3270
        %3319 = vst [vmem:[#allocation5 + $0x158] sm:$0xff] %v3271
        %3320 = vst [vmem:[#allocation5 + $0x160] sm:$0xff] %v3272
        %3321 = vst [vmem:[#allocation5 + $0x168] sm:$0xff] %v3273
        %3322 = vst [vmem:[#allocation5 + $0x170] sm:$0xff] %v3274
        %3323 = vst [vmem:[#allocation5 + $0x178] sm:$0xff] %v3275
        %v3324 = vld [vmem:[#allocation3] sm:$0xff]
        %v3325 = vld [vmem:[#allocation3 + $0x8] sm:$0xff]
        %v3326 = vld [vmem:[#allocation3 + $0x10] sm:$0xff]
        %v3327 = vld [vmem:[#allocation3 + $0x18] sm:$0xff]
        %v3328 = vld [vmem:[#allocation3 + $0x28] sm:$0xff]
        %v3329 = vld [vmem:[#allocation3 + $0x30] sm:$0xff]
        %v3330 = vld [vmem:[#allocation3 + $0x38] sm:$0xff]
        %v3331 = vld [vmem:[#allocation3 + $0x40] sm:$0xff]
        %v3332 = vld [vmem:[#allocation3 + $0x50] sm:$0xff]
        %v3333 = vld [vmem:[#allocation3 + $0x58] sm:$0xff]
        %v3334 = vld [vmem:[#allocation3 + $0x60] sm:$0xff]
        %v3335 = vld [vmem:[#allocation3 + $0x68] sm:$0xff]
        %v3336 = vld [vmem:[#allocation3 + $0x78] sm:$0xff]
        %v3337 = vld [vmem:[#allocation3 + $0x80] sm:$0xff]
        %v3338 = vld [vmem:[#allocation3 + $0x88] sm:$0xff]
        %v3339 = vld [vmem:[#allocation3 + $0x90] sm:$0xff]
        %v3340 = vld [vmem:[#allocation3 + $0xa0] sm:$0xff]
        %v3341 = vld [vmem:[#allocation3 + $0xa8] sm:$0xff]
        %v3342 = vld [vmem:[#allocation3 + $0xb0] sm:$0xff]
        %v3343 = vld [vmem:[#allocation3 + $0xb8] sm:$0xff]
        %v3344 = vld [vmem:[#allocation3 + $0xc8] sm:$0xff]
        %v3345 = vld [vmem:[#allocation3 + $0xd0] sm:$0xff]
        %v3346 = vld [vmem:[#allocation3 + $0xd8] sm:$0xff]
        %v3347 = vld [vmem:[#allocation3 + $0xe0] sm:$0xff]
        %v3348 = vld [vmem:[#allocation3 + $0xf0] sm:$0xff]
        %v3349 = vld [vmem:[#allocation3 + $0xf8] sm:$0xff]
        %v3350 = vld [vmem:[#allocation3 + $0x100] sm:$0xff]
        %v3351 = vld [vmem:[#allocation3 + $0x108] sm:$0xff]
        %v3352 = vld [vmem:[#allocation3 + $0x118] sm:$0xff]
        %v3353 = vld [vmem:[#allocation3 + $0x120] sm:$0xff]
        %v3354 = vld [vmem:[#allocation3 + $0x128] sm:$0xff]
        %v3355 = vld [vmem:[#allocation3 + $0x130] sm:$0xff]
        %3388 = vrot.lane.b32.xlu0 %v3324, 17
        %v3389 = vpop.permute.xlu0 %3388
        %3390 = vrot.lane.b32.xlu0 %v3325, 17
        %v3391 = vpop.permute.xlu0 %3390
        %3392 = vrot.lane.b32.xlu0 %v3326, 17
        %v3393 = vpop.permute.xlu0 %3392
        %3394 = vrot.lane.b32.xlu0 %v3327, 17
        %v3395 = vpop.permute.xlu0 %3394
        %3396 = vrot.lane.b32.xlu0 %v3328, 17
        %v3397 = vpop.permute.xlu0 %3396
        %3398 = vrot.lane.b32.xlu0 %v3329, 17
        %v3399 = vpop.permute.xlu0 %3398
        %3400 = vrot.lane.b32.xlu0 %v3330, 17
        %v3401 = vpop.permute.xlu0 %3400
        %3402 = vrot.lane.b32.xlu0 %v3331, 17
        %v3403 = vpop.permute.xlu0 %3402
        %3404 = vrot.lane.b32.xlu0 %v3332, 17
        %v3405 = vpop.permute.xlu0 %3404
        %3406 = vrot.lane.b32.xlu0 %v3333, 17
        %v3407 = vpop.permute.xlu0 %3406
        %3408 = vrot.lane.b32.xlu0 %v3334, 17
        %v3409 = vpop.permute.xlu0 %3408
        %3410 = vrot.lane.b32.xlu0 %v3335, 17
        %v3411 = vpop.permute.xlu0 %3410
        %3412 = vrot.lane.b32.xlu0 %v3336, 17
        %v3413 = vpop.permute.xlu0 %3412
        %3414 = vrot.lane.b32.xlu0 %v3337, 17
        %v3415 = vpop.permute.xlu0 %3414
        %3416 = vrot.lane.b32.xlu0 %v3338, 17
        %v3417 = vpop.permute.xlu0 %3416
        %3418 = vrot.lane.b32.xlu0 %v3339, 17
        %v3419 = vpop.permute.xlu0 %3418
        %3420 = vrot.lane.b32.xlu0 %v3340, 17
        %v3421 = vpop.permute.xlu0 %3420
        %3422 = vrot.lane.b32.xlu0 %v3341, 17
        %v3423 = vpop.permute.xlu0 %3422
        %3424 = vrot.lane.b32.xlu0 %v3342, 17
        %v3425 = vpop.permute.xlu0 %3424
        %3426 = vrot.lane.b32.xlu0 %v3343, 17
        %v3427 = vpop.permute.xlu0 %3426
        %3428 = vrot.lane.b32.xlu0 %v3344, 17
        %v3429 = vpop.permute.xlu0 %3428
        %3430 = vrot.lane.b32.xlu0 %v3345, 17
        %v3431 = vpop.permute.xlu0 %3430
        %3432 = vrot.lane.b32.xlu0 %v3346, 17
        %v3433 = vpop.permute.xlu0 %3432
        %3434 = vrot.lane.b32.xlu0 %v3347, 17
        %v3435 = vpop.permute.xlu0 %3434
        %3436 = vrot.lane.b32.xlu0 %v3348, 17
        %v3437 = vpop.permute.xlu0 %3436
        %3438 = vrot.lane.b32.xlu0 %v3349, 17
        %v3439 = vpop.permute.xlu0 %3438
        %3440 = vrot.lane.b32.xlu0 %v3350, 17
        %v3441 = vpop.permute.xlu0 %3440
        %3442 = vrot.lane.b32.xlu0 %v3351, 17
        %v3443 = vpop.permute.xlu0 %3442
        %3444 = vrot.lane.b32.xlu0 %v3352, 17
        %v3445 = vpop.permute.xlu0 %3444
        %3446 = vrot.lane.b32.xlu0 %v3353, 17
        %v3447 = vpop.permute.xlu0 %3446
        %3448 = vrot.lane.b32.xlu0 %v3354, 17
        %v3449 = vpop.permute.xlu0 %3448
        %3450 = vrot.lane.b32.xlu0 %v3355, 17
        %v3451 = vpop.permute.xlu0 %3450
        %v3452 = vsel %vm648, %v3389, %v3391
        %v3453 = vsel %vm648, %v3391, %v3393
        %v3454 = vsel %vm648, %v3393, %v3395
        %v3455 = vsel %vm648, %v3397, %v3399
        %v3456 = vsel %vm648, %v3399, %v3401
        %v3457 = vsel %vm648, %v3401, %v3403
        %v3458 = vsel %vm648, %v3405, %v3407
        %v3459 = vsel %vm648, %v3407, %v3409
        %v3460 = vsel %vm648, %v3409, %v3411
        %v3461 = vsel %vm648, %v3413, %v3415
        %v3462 = vsel %vm648, %v3415, %v3417
        %v3463 = vsel %vm648, %v3417, %v3419
        %v3464 = vsel %vm648, %v3421, %v3423
        %v3465 = vsel %vm648, %v3423, %v3425
        %v3466 = vsel %vm648, %v3425, %v3427
        %v3467 = vsel %vm648, %v3429, %v3431
        %v3468 = vsel %vm648, %v3431, %v3433
        %v3469 = vsel %vm648, %v3433, %v3435
        %v3470 = vsel %vm648, %v3437, %v3439
        %v3471 = vsel %vm648, %v3439, %v3441
        %v3472 = vsel %vm648, %v3441, %v3443
        %v3473 = vsel %vm648, %v3445, %v3447
        %v3474 = vsel %vm648, %v3447, %v3449
        %v3475 = vsel %vm648, %v3449, %v3451
        %3500 = vst [vmem:[#allocation5 + $0x180] sm:$0xff] %v3452
        %3501 = vst [vmem:[#allocation5 + $0x188] sm:$0xff] %v3453
        %3502 = vst [vmem:[#allocation5 + $0x190] sm:$0xff] %v3454
        %3503 = vst [vmem:[#allocation5 + $0x198] sm:$0xff] %v3455
        %3504 = vst [vmem:[#allocation5 + $0x1a0] sm:$0xff] %v3456
        %3505 = vst [vmem:[#allocation5 + $0x1a8] sm:$0xff] %v3457
        %3506 = vst [vmem:[#allocation5 + $0x1b0] sm:$0xff] %v3458
        %3507 = vst [vmem:[#allocation5 + $0x1b8] sm:$0xff] %v3459
        %3508 = vst [vmem:[#allocation5 + $0x1c0] sm:$0xff] %v3460
        %3509 = vst [vmem:[#allocation5 + $0x1c8] sm:$0xff] %v3461
        %3510 = vst [vmem:[#allocation5 + $0x1d0] sm:$0xff] %v3462
        %3511 = vst [vmem:[#allocation5 + $0x1d8] sm:$0xff] %v3463
        %3512 = vst [vmem:[#allocation5 + $0x1e0] sm:$0xff] %v3464
        %3513 = vst [vmem:[#allocation5 + $0x1e8] sm:$0xff] %v3465
        %3514 = vst [vmem:[#allocation5 + $0x1f0] sm:$0xff] %v3466
        %3515 = vst [vmem:[#allocation5 + $0x1f8] sm:$0xff] %v3467
        %3516 = vst [vmem:[#allocation5 + $0x200] sm:$0xff] %v3468
        %3517 = vst [vmem:[#allocation5 + $0x208] sm:$0xff] %v3469
        %3518 = vst [vmem:[#allocation5 + $0x210] sm:$0xff] %v3470
        %3519 = vst [vmem:[#allocation5 + $0x218] sm:$0xff] %v3471
        %3520 = vst [vmem:[#allocation5 + $0x220] sm:$0xff] %v3472
        %3521 = vst [vmem:[#allocation5 + $0x228] sm:$0xff] %v3473
        %3522 = vst [vmem:[#allocation5 + $0x230] sm:$0xff] %v3474
        %3523 = vst [vmem:[#allocation5 + $0x238] sm:$0xff] %v3475
        %v3524 = vld [vmem:[#allocation3] sm:$0xff]
        %v3525 = vld [vmem:[#allocation3 + $0x8] sm:$0xff]
        %v3526 = vld [vmem:[#allocation3 + $0x10] sm:$0xff]
        %v3527 = vld [vmem:[#allocation3 + $0x18] sm:$0xff]
        %v3528 = vld [vmem:[#allocation3 + $0x28] sm:$0xff]
        %v3529 = vld [vmem:[#allocation3 + $0x30] sm:$0xff]
        %v3530 = vld [vmem:[#allocation3 + $0x38] sm:$0xff]
        %v3531 = vld [vmem:[#allocation3 + $0x40] sm:$0xff]
        %v3532 = vld [vmem:[#allocation3 + $0x50] sm:$0xff]
        %v3533 = vld [vmem:[#allocation3 + $0x58] sm:$0xff]
        %v3534 = vld [vmem:[#allocation3 + $0x60] sm:$0xff]
        %v3535 = vld [vmem:[#allocation3 + $0x68] sm:$0xff]
        %v3536 = vld [vmem:[#allocation3 + $0x78] sm:$0xff]
        %v3537 = vld [vmem:[#allocation3 + $0x80] sm:$0xff]
        %v3538 = vld [vmem:[#allocation3 + $0x88] sm:$0xff]
        %v3539 = vld [vmem:[#allocation3 + $0x90] sm:$0xff]
        %v3540 = vld [vmem:[#allocation3 + $0xa0] sm:$0xff]
        %v3541 = vld [vmem:[#allocation3 + $0xa8] sm:$0xff]
        %v3542 = vld [vmem:[#allocation3 + $0xb0] sm:$0xff]
        %v3543 = vld [vmem:[#allocation3 + $0xb8] sm:$0xff]
        %v3544 = vld [vmem:[#allocation3 + $0xc8] sm:$0xff]
        %v3545 = vld [vmem:[#allocation3 + $0xd0] sm:$0xff]
        %v3546 = vld [vmem:[#allocation3 + $0xd8] sm:$0xff]
        %v3547 = vld [vmem:[#allocation3 + $0xe0] sm:$0xff]
        %v3548 = vld [vmem:[#allocation3 + $0xf0] sm:$0xff]
        %v3549 = vld [vmem:[#allocation3 + $0xf8] sm:$0xff]
        %v3550 = vld [vmem:[#allocation3 + $0x100] sm:$0xff]
        %v3551 = vld [vmem:[#allocation3 + $0x108] sm:$0xff]
        %v3552 = vld [vmem:[#allocation3 + $0x118] sm:$0xff]
        %v3553 = vld [vmem:[#allocation3 + $0x120] sm:$0xff]
        %v3554 = vld [vmem:[#allocation3 + $0x128] sm:$0xff]
        %v3555 = vld [vmem:[#allocation3 + $0x130] sm:$0xff]
        %3588 = vrot.lane.b32.xlu0 %v3524, 1
        %v3589 = vpop.permute.xlu0 %3588
        %3590 = vrot.lane.b32.xlu0 %v3525, 1
        %v3591 = vpop.permute.xlu0 %3590
        %3592 = vrot.lane.b32.xlu0 %v3526, 1
        %v3593 = vpop.permute.xlu0 %3592
        %3594 = vrot.lane.b32.xlu0 %v3527, 1
        %v3595 = vpop.permute.xlu0 %3594
        %3596 = vrot.lane.b32.xlu0 %v3528, 1
        %v3597 = vpop.permute.xlu0 %3596
        %3598 = vrot.lane.b32.xlu0 %v3529, 1
        %v3599 = vpop.permute.xlu0 %3598
        %3600 = vrot.lane.b32.xlu0 %v3530, 1
        %v3601 = vpop.permute.xlu0 %3600
        %3602 = vrot.lane.b32.xlu0 %v3531, 1
        %v3603 = vpop.permute.xlu0 %3602
        %3604 = vrot.lane.b32.xlu0 %v3532, 1
        %v3605 = vpop.permute.xlu0 %3604
        %3606 = vrot.lane.b32.xlu0 %v3533, 1
        %v3607 = vpop.permute.xlu0 %3606
        %3608 = vrot.lane.b32.xlu0 %v3534, 1
        %v3609 = vpop.permute.xlu0 %3608
        %3610 = vrot.lane.b32.xlu0 %v3535, 1
        %v3611 = vpop.permute.xlu0 %3610
        %3612 = vrot.lane.b32.xlu0 %v3536, 1
        %v3613 = vpop.permute.xlu0 %3612
        %3614 = vrot.lane.b32.xlu0 %v3537, 1
        %v3615 = vpop.permute.xlu0 %3614
        %3616 = vrot.lane.b32.xlu0 %v3538, 1
        %v3617 = vpop.permute.xlu0 %3616
        %3618 = vrot.lane.b32.xlu0 %v3539, 1
        %v3619 = vpop.permute.xlu0 %3618
        %3620 = vrot.lane.b32.xlu0 %v3540, 1
        %v3621 = vpop.permute.xlu0 %3620
        %3622 = vrot.lane.b32.xlu0 %v3541, 1
        %v3623 = vpop.permute.xlu0 %3622
        %3624 = vrot.lane.b32.xlu0 %v3542, 1
        %v3625 = vpop.permute.xlu0 %3624
        %3626 = vrot.lane.b32.xlu0 %v3543, 1
        %v3627 = vpop.permute.xlu0 %3626
        %3628 = vrot.lane.b32.xlu0 %v3544, 1
        %v3629 = vpop.permute.xlu0 %3628
        %3630 = vrot.lane.b32.xlu0 %v3545, 1
        %v3631 = vpop.permute.xlu0 %3630
        %3632 = vrot.lane.b32.xlu0 %v3546, 1
        %v3633 = vpop.permute.xlu0 %3632
        %3634 = vrot.lane.b32.xlu0 %v3547, 1
        %v3635 = vpop.permute.xlu0 %3634
        %3636 = vrot.lane.b32.xlu0 %v3548, 1
        %v3637 = vpop.permute.xlu0 %3636
        %3638 = vrot.lane.b32.xlu0 %v3549, 1
        %v3639 = vpop.permute.xlu0 %3638
        %3640 = vrot.lane.b32.xlu0 %v3550, 1
        %v3641 = vpop.permute.xlu0 %3640
        %3642 = vrot.lane.b32.xlu0 %v3551, 1
        %v3643 = vpop.permute.xlu0 %3642
        %3644 = vrot.lane.b32.xlu0 %v3552, 1
        %v3645 = vpop.permute.xlu0 %3644
        %3646 = vrot.lane.b32.xlu0 %v3553, 1
        %v3647 = vpop.permute.xlu0 %3646
        %3648 = vrot.lane.b32.xlu0 %v3554, 1
        %v3649 = vpop.permute.xlu0 %3648
        %3650 = vrot.lane.b32.xlu0 %v3555, 1
        %v3651 = vpop.permute.xlu0 %3650
        %v3652 = vsel %vm672, %v3589, %v3591
        %v3653 = vsel %vm672, %v3591, %v3593
        %v3654 = vsel %vm672, %v3593, %v3595
        %v3655 = vsel %vm672, %v3597, %v3599
        %v3656 = vsel %vm672, %v3599, %v3601
        %v3657 = vsel %vm672, %v3601, %v3603
        %v3658 = vsel %vm672, %v3605, %v3607
        %v3659 = vsel %vm672, %v3607, %v3609
        %v3660 = vsel %vm672, %v3609, %v3611
        %v3661 = vsel %vm672, %v3613, %v3615
        %v3662 = vsel %vm672, %v3615, %v3617
        %v3663 = vsel %vm672, %v3617, %v3619
        %v3664 = vsel %vm672, %v3621, %v3623
        %v3665 = vsel %vm672, %v3623, %v3625
        %v3666 = vsel %vm672, %v3625, %v3627
        %v3667 = vsel %vm672, %v3629, %v3631
        %v3668 = vsel %vm672, %v3631, %v3633
        %v3669 = vsel %vm672, %v3633, %v3635
        %v3670 = vsel %vm672, %v3637, %v3639
        %v3671 = vsel %vm672, %v3639, %v3641
        %v3672 = vsel %vm672, %v3641, %v3643
        %v3673 = vsel %vm672, %v3645, %v3647
        %v3674 = vsel %vm672, %v3647, %v3649
        %v3675 = vsel %vm672, %v3649, %v3651
        %3700 = vst [vmem:[#allocation5 + $0x240] sm:$0xff] %v3652
        %3701 = vst [vmem:[#allocation5 + $0x248] sm:$0xff] %v3653
        %3702 = vst [vmem:[#allocation5 + $0x250] sm:$0xff] %v3654
        %3703 = vst [vmem:[#allocation5 + $0x258] sm:$0xff] %v3655
        %3704 = vst [vmem:[#allocation5 + $0x260] sm:$0xff] %v3656
        %3705 = vst [vmem:[#allocation5 + $0x268] sm:$0xff] %v3657
        %3706 = vst [vmem:[#allocation5 + $0x270] sm:$0xff] %v3658
        %3707 = vst [vmem:[#allocation5 + $0x278] sm:$0xff] %v3659
        %3708 = vst [vmem:[#allocation5 + $0x280] sm:$0xff] %v3660
        %3709 = vst [vmem:[#allocation5 + $0x288] sm:$0xff] %v3661
        %3710 = vst [vmem:[#allocation5 + $0x290] sm:$0xff] %v3662
        %3711 = vst [vmem:[#allocation5 + $0x298] sm:$0xff] %v3663
        %3712 = vst [vmem:[#allocation5 + $0x2a0] sm:$0xff] %v3664
        %3713 = vst [vmem:[#allocation5 + $0x2a8] sm:$0xff] %v3665
        %3714 = vst [vmem:[#allocation5 + $0x2b0] sm:$0xff] %v3666
        %3715 = vst [vmem:[#allocation5 + $0x2b8] sm:$0xff] %v3667
        %3716 = vst [vmem:[#allocation5 + $0x2c0] sm:$0xff] %v3668
        %3717 = vst [vmem:[#allocation5 + $0x2c8] sm:$0xff] %v3669
        %3718 = vst [vmem:[#allocation5 + $0x2d0] sm:$0xff] %v3670
        %3719 = vst [vmem:[#allocation5 + $0x2d8] sm:$0xff] %v3671
        %3720 = vst [vmem:[#allocation5 + $0x2e0] sm:$0xff] %v3672
        %3721 = vst [vmem:[#allocation5 + $0x2e8] sm:$0xff] %v3673
        %3722 = vst [vmem:[#allocation5 + $0x2f0] sm:$0xff] %v3674
        %3723 = vst [vmem:[#allocation5 + $0x2f8] sm:$0xff] %v3675
        %v3724 = vld [vmem:[#allocation3 + $0x8] sm:$0xff]
        %v3725 = vld [vmem:[#allocation3 + $0x10] sm:$0xff]
        %v3726 = vld [vmem:[#allocation3 + $0x18] sm:$0xff]
        %v3727 = vld [vmem:[#allocation3 + $0x30] sm:$0xff]
        %v3728 = vld [vmem:[#allocation3 + $0x38] sm:$0xff]
        %v3729 = vld [vmem:[#allocation3 + $0x40] sm:$0xff]
        %v3730 = vld [vmem:[#allocation3 + $0x58] sm:$0xff]
        %v3731 = vld [vmem:[#allocation3 + $0x60] sm:$0xff]
        %v3732 = vld [vmem:[#allocation3 + $0x68] sm:$0xff]
        %v3733 = vld [vmem:[#allocation3 + $0x80] sm:$0xff]
        %v3734 = vld [vmem:[#allocation3 + $0x88] sm:$0xff]
        %v3735 = vld [vmem:[#allocation3 + $0x90] sm:$0xff]
        %v3736 = vld [vmem:[#allocation3 + $0xa8] sm:$0xff]
        %v3737 = vld [vmem:[#allocation3 + $0xb0] sm:$0xff]
        %v3738 = vld [vmem:[#allocation3 + $0xb8] sm:$0xff]
        %v3739 = vld [vmem:[#allocation3 + $0xd0] sm:$0xff]
        %v3740 = vld [vmem:[#allocation3 + $0xd8] sm:$0xff]
        %v3741 = vld [vmem:[#allocation3 + $0xe0] sm:$0xff]
        %v3742 = vld [vmem:[#allocation3 + $0xf8] sm:$0xff]
        %v3743 = vld [vmem:[#allocation3 + $0x100] sm:$0xff]
        %v3744 = vld [vmem:[#allocation3 + $0x108] sm:$0xff]
        %v3745 = vld [vmem:[#allocation3 + $0x120] sm:$0xff]
        %v3746 = vld [vmem:[#allocation3 + $0x128] sm:$0xff]
        %v3747 = vld [vmem:[#allocation3 + $0x130] sm:$0xff]
        %3748 = vst [vmem:[#allocation5 + $0x300] sm:$0xff] %v3724
        %3749 = vst [vmem:[#allocation5 + $0x308] sm:$0xff] %v3725
        %3750 = vst [vmem:[#allocation5 + $0x310] sm:$0xff] %v3726
        %3751 = vst [vmem:[#allocation5 + $0x318] sm:$0xff] %v3727
        %3752 = vst [vmem:[#allocation5 + $0x320] sm:$0xff] %v3728
        %3753 = vst [vmem:[#allocation5 + $0x328] sm:$0xff] %v3729
        %3754 = vst [vmem:[#allocation5 + $0x330] sm:$0xff] %v3730
        %3755 = vst [vmem:[#allocation5 + $0x338] sm:$0xff] %v3731
        %3756 = vst [vmem:[#allocation5 + $0x340] sm:$0xff] %v3732
        %3757 = vst [vmem:[#allocation5 + $0x348] sm:$0xff] %v3733
        %3758 = vst [vmem:[#allocation5 + $0x350] sm:$0xff] %v3734
        %3759 = vst [vmem:[#allocation5 + $0x358] sm:$0xff] %v3735
        %3760 = vst [vmem:[#allocation5 + $0x360] sm:$0xff] %v3736
        %3761 = vst [vmem:[#allocation5 + $0x368] sm:$0xff] %v3737
        %3762 = vst [vmem:[#allocation5 + $0x370] sm:$0xff] %v3738
        %3763 = vst [vmem:[#allocation5 + $0x378] sm:$0xff] %v3739
        %3764 = vst [vmem:[#allocation5 + $0x380] sm:$0xff] %v3740
        %3765 = vst [vmem:[#allocation5 + $0x388] sm:$0xff] %v3741
        %3766 = vst [vmem:[#allocation5 + $0x390] sm:$0xff] %v3742
        %3767 = vst [vmem:[#allocation5 + $0x398] sm:$0xff] %v3743
        %3768 = vst [vmem:[#allocation5 + $0x3a0] sm:$0xff] %v3744
        %3769 = vst [vmem:[#allocation5 + $0x3a8] sm:$0xff] %v3745
        %3770 = vst [vmem:[#allocation5 + $0x3b0] sm:$0xff] %v3746
        %3771 = vst [vmem:[#allocation5 + $0x3b8] sm:$0xff] %v3747
        %v3772 = vld [vmem:[#allocation3 + $0x8] sm:$0xff]
        %v3773 = vld [vmem:[#allocation3 + $0x10] sm:$0xff]
        %v3774 = vld [vmem:[#allocation3 + $0x18] sm:$0xff]
        %v3775 = vld [vmem:[#allocation3 + $0x20] sm:$0xff]
        %v3776 = vld [vmem:[#allocation3 + $0x30] sm:$0xff]
        %v3777 = vld [vmem:[#allocation3 + $0x38] sm:$0xff]
        %v3778 = vld [vmem:[#allocation3 + $0x40] sm:$0xff]
        %v3779 = vld [vmem:[#allocation3 + $0x48] sm:$0xff]
        %v3780 = vld [vmem:[#allocation3 + $0x58] sm:$0xff]
        %v3781 = vld [vmem:[#allocation3 + $0x60] sm:$0xff]
        %v3782 = vld [vmem:[#allocation3 + $0x68] sm:$0xff]
        %v3783 = vld [vmem:[#allocation3 + $0x70] sm:$0xff]
        %v3784 = vld [vmem:[#allocation3 + $0x80] sm:$0xff]
        %v3785 = vld [vmem:[#allocation3 + $0x88] sm:$0xff]
        %v3786 = vld [vmem:[#allocation3 + $0x90] sm:$0xff]
        %v3787 = vld [vmem:[#allocation3 + $0x98] sm:$0xff]
        %v3788 = vld [vmem:[#allocation3 + $0xa8] sm:$0xff]
        %v3789 = vld [vmem:[#allocation3 + $0xb0] sm:$0xff]
        %v3790 = vld [vmem:[#allocation3 + $0xb8] sm:$0xff]
        %v3791 = vld [vmem:[#allocation3 + $0xc0] sm:$0xff]
        %v3792 = vld [vmem:[#allocation3 + $0xd0] sm:$0xff]
        %v3793 = vld [vmem:[#allocation3 + $0xd8] sm:$0xff]
        %v3794 = vld [vmem:[#allocation3 + $0xe0] sm:$0xff]
        %v3795 = vld [vmem:[#allocation3 + $0xe8] sm:$0xff]
        %v3796 = vld [vmem:[#allocation3 + $0xf8] sm:$0xff]
        %v3797 = vld [vmem:[#allocation3 + $0x100] sm:$0xff]
        %v3798 = vld [vmem:[#allocation3 + $0x108] sm:$0xff]
        %v3799 = vld [vmem:[#allocation3 + $0x110] sm:$0xff]
        %v3800 = vld [vmem:[#allocation3 + $0x120] sm:$0xff]
        %v3801 = vld [vmem:[#allocation3 + $0x128] sm:$0xff]
        %v3802 = vld [vmem:[#allocation3 + $0x130] sm:$0xff]
        %v3803 = vld [vmem:[#allocation3 + $0x138] sm:$0xff]
        %3836 = vrot.lane.b32.xlu0 %v3772, 127
        %v3837 = vpop.permute.xlu0 %3836
        %3838 = vrot.lane.b32.xlu0 %v3773, 127
        %v3839 = vpop.permute.xlu0 %3838
        %3840 = vrot.lane.b32.xlu0 %v3774, 127
        %v3841 = vpop.permute.xlu0 %3840
        %3842 = vrot.lane.b32.xlu0 %v3775, 127
        %v3843 = vpop.permute.xlu0 %3842
        %3844 = vrot.lane.b32.xlu0 %v3776, 127
        %v3845 = vpop.permute.xlu0 %3844
        %3846 = vrot.lane.b32.xlu0 %v3777, 127
        %v3847 = vpop.permute.xlu0 %3846
        %3848 = vrot.lane.b32.xlu0 %v3778, 127
        %v3849 = vpop.permute.xlu0 %3848
        %3850 = vrot.lane.b32.xlu0 %v3779, 127
        %v3851 = vpop.permute.xlu0 %3850
        %3852 = vrot.lane.b32.xlu0 %v3780, 127
        %v3853 = vpop.permute.xlu0 %3852
        %3854 = vrot.lane.b32.xlu0 %v3781, 127
        %v3855 = vpop.permute.xlu0 %3854
        %3856 = vrot.lane.b32.xlu0 %v3782, 127
        %v3857 = vpop.permute.xlu0 %3856
        %3858 = vrot.lane.b32.xlu0 %v3783, 127
        %v3859 = vpop.permute.xlu0 %3858
        %3860 = vrot.lane.b32.xlu0 %v3784, 127
        %v3861 = vpop.permute.xlu0 %3860
        %3862 = vrot.lane.b32.xlu0 %v3785, 127
        %v3863 = vpop.permute.xlu0 %3862
        %3864 = vrot.lane.b32.xlu0 %v3786, 127
        %v3865 = vpop.permute.xlu0 %3864
        %3866 = vrot.lane.b32.xlu0 %v3787, 127
        %v3867 = vpop.permute.xlu0 %3866
        %3868 = vrot.lane.b32.xlu0 %v3788, 127
        %v3869 = vpop.permute.xlu0 %3868
        %3870 = vrot.lane.b32.xlu0 %v3789, 127
        %v3871 = vpop.permute.xlu0 %3870
        %3872 = vrot.lane.b32.xlu0 %v3790, 127
        %v3873 = vpop.permute.xlu0 %3872
        %3874 = vrot.lane.b32.xlu0 %v3791, 127
        %v3875 = vpop.permute.xlu0 %3874
        %3876 = vrot.lane.b32.xlu0 %v3792, 127
        %v3877 = vpop.permute.xlu0 %3876
        %3878 = vrot.lane.b32.xlu0 %v3793, 127
        %v3879 = vpop.permute.xlu0 %3878
        %3880 = vrot.lane.b32.xlu0 %v3794, 127
        %v3881 = vpop.permute.xlu0 %3880
        %3882 = vrot.lane.b32.xlu0 %v3795, 127
        %v3883 = vpop.permute.xlu0 %3882
        %3884 = vrot.lane.b32.xlu0 %v3796, 127
        %v3885 = vpop.permute.xlu0 %3884
        %3886 = vrot.lane.b32.xlu0 %v3797, 127
        %v3887 = vpop.permute.xlu0 %3886
        %3888 = vrot.lane.b32.xlu0 %v3798, 127
        %v3889 = vpop.permute.xlu0 %3888
        %3890 = vrot.lane.b32.xlu0 %v3799, 127
        %v3891 = vpop.permute.xlu0 %3890
        %3892 = vrot.lane.b32.xlu0 %v3800, 127
        %v3893 = vpop.permute.xlu0 %3892
        %3894 = vrot.lane.b32.xlu0 %v3801, 127
        %v3895 = vpop.permute.xlu0 %3894
        %3896 = vrot.lane.b32.xlu0 %v3802, 127
        %v3897 = vpop.permute.xlu0 %3896
        %3898 = vrot.lane.b32.xlu0 %v3803, 127
        %v3899 = vpop.permute.xlu0 %3898
        %v3900 = vsel %vm704, %v3837, %v3839
        %v3901 = vsel %vm704, %v3839, %v3841
        %v3902 = vsel %vm704, %v3841, %v3843
        %v3903 = vsel %vm704, %v3845, %v3847
        %v3904 = vsel %vm704, %v3847, %v3849
        %v3905 = vsel %vm704, %v3849, %v3851
        %v3906 = vsel %vm704, %v3853, %v3855
        %v3907 = vsel %vm704, %v3855, %v3857
        %v3908 = vsel %vm704, %v3857, %v3859
        %v3909 = vsel %vm704, %v3861, %v3863
        %v3910 = vsel %vm704, %v3863, %v3865
        %v3911 = vsel %vm704, %v3865, %v3867
        %v3912 = vsel %vm704, %v3869, %v3871
        %v3913 = vsel %vm704, %v3871, %v3873
        %v3914 = vsel %vm704, %v3873, %v3875
        %v3915 = vsel %vm704, %v3877, %v3879
        %v3916 = vsel %vm704, %v3879, %v3881
        %v3917 = vsel %vm704, %v3881, %v3883
        %v3918 = vsel %vm704, %v3885, %v3887
        %v3919 = vsel %vm704, %v3887, %v3889
        %v3920 = vsel %vm704, %v3889, %v3891
        %v3921 = vsel %vm704, %v3893, %v3895
        %v3922 = vsel %vm704, %v3895, %v3897
        %v3923 = vsel %vm704, %v3897, %v3899
        %3948 = vst [vmem:[#allocation5 + $0x3c0] sm:$0xff] %v3900
        %3949 = vst [vmem:[#allocation5 + $0x3c8] sm:$0xff] %v3901
        %3950 = vst [vmem:[#allocation5 + $0x3d0] sm:$0xff] %v3902
        %3951 = vst [vmem:[#allocation5 + $0x3d8] sm:$0xff] %v3903
        %3952 = vst [vmem:[#allocation5 + $0x3e0] sm:$0xff] %v3904
        %3953 = vst [vmem:[#allocation5 + $0x3e8] sm:$0xff] %v3905
        %3954 = vst [vmem:[#allocation5 + $0x3f0] sm:$0xff] %v3906
        %3955 = vst [vmem:[#allocation5 + $0x3f8] sm:$0xff] %v3907
        %3956 = vst [vmem:[#allocation5 + $0x400] sm:$0xff] %v3908
        %3957 = vst [vmem:[#allocation5 + $0x408] sm:$0xff] %v3909
        %3958 = vst [vmem:[#allocation5 + $0x410] sm:$0xff] %v3910
        %3959 = vst [vmem:[#allocation5 + $0x418] sm:$0xff] %v3911
        %3960 = vst [vmem:[#allocation5 + $0x420] sm:$0xff] %v3912
        %3961 = vst [vmem:[#allocation5 + $0x428] sm:$0xff] %v3913
        %3962 = vst [vmem:[#allocation5 + $0x430] sm:$0xff] %v3914
        %3963 = vst [vmem:[#allocation5 + $0x438] sm:$0xff] %v3915
        %3964 = vst [vmem:[#allocation5 + $0x440] sm:$0xff] %v3916
        %3965 = vst [vmem:[#allocation5 + $0x448] sm:$0xff] %v3917
        %3966 = vst [vmem:[#allocation5 + $0x450] sm:$0xff] %v3918
        %3967 = vst [vmem:[#allocation5 + $0x458] sm:$0xff] %v3919
        %3968 = vst [vmem:[#allocation5 + $0x460] sm:$0xff] %v3920
        %3969 = vst [vmem:[#allocation5 + $0x468] sm:$0xff] %v3921
        %3970 = vst [vmem:[#allocation5 + $0x470] sm:$0xff] %v3922
        %3971 = vst [vmem:[#allocation5 + $0x478] sm:$0xff] %v3923
        %v3972 = vld [vmem:[#allocation3 + $0x8] sm:$0xff]
        %v3973 = vld [vmem:[#allocation3 + $0x10] sm:$0xff]
        %v3974 = vld [vmem:[#allocation3 + $0x18] sm:$0xff]
        %v3975 = vld [vmem:[#allocation3 + $0x20] sm:$0xff]
        %v3976 = vld [vmem:[#allocation3 + $0x30] sm:$0xff]
        %v3977 = vld [vmem:[#allocation3 + $0x38] sm:$0xff]
        %v3978 = vld [vmem:[#allocation3 + $0x40] sm:$0xff]
        %v3979 = vld [vmem:[#allocation3 + $0x48] sm:$0xff]
        %v3980 = vld [vmem:[#allocation3 + $0x58] sm:$0xff]
        %v3981 = vld [vmem:[#allocation3 + $0x60] sm:$0xff]
        %v3982 = vld [vmem:[#allocation3 + $0x68] sm:$0xff]
        %v3983 = vld [vmem:[#allocation3 + $0x70] sm:$0xff]
        %v3984 = vld [vmem:[#allocation3 + $0x80] sm:$0xff]
        %v3985 = vld [vmem:[#allocation3 + $0x88] sm:$0xff]
        %v3986 = vld [vmem:[#allocation3 + $0x90] sm:$0xff]
        %v3987 = vld [vmem:[#allocation3 + $0x98] sm:$0xff]
        %v3988 = vld [vmem:[#allocation3 + $0xa8] sm:$0xff]
        %v3989 = vld [vmem:[#allocation3 + $0xb0] sm:$0xff]
        %v3990 = vld [vmem:[#allocation3 + $0xb8] sm:$0xff]
        %v3991 = vld [vmem:[#allocation3 + $0xc0] sm:$0xff]
        %v3992 = vld [vmem:[#allocation3 + $0xd0] sm:$0xff]
        %v3993 = vld [vmem:[#allocation3 + $0xd8] sm:$0xff]
        %v3994 = vld [vmem:[#allocation3 + $0xe0] sm:$0xff]
        %v3995 = vld [vmem:[#allocation3 + $0xe8] sm:$0xff]
        %v3996 = vld [vmem:[#allocation3 + $0xf8] sm:$0xff]
        %v3997 = vld [vmem:[#allocation3 + $0x100] sm:$0xff]
        %v3998 = vld [vmem:[#allocation3 + $0x108] sm:$0xff]
        %v3999 = vld [vmem:[#allocation3 + $0x110] sm:$0xff]
        %v4000 = vld [vmem:[#allocation3 + $0x120] sm:$0xff]
        %v4001 = vld [vmem:[#allocation3 + $0x128] sm:$0xff]
        %v4002 = vld [vmem:[#allocation3 + $0x130] sm:$0xff]
        %v4003 = vld [vmem:[#allocation3 + $0x138] sm:$0xff]
        %4036 = vrot.lane.b32.xlu0 %v3972, 111
        %v4037 = vpop.permute.xlu0 %4036
        %4038 = vrot.lane.b32.xlu0 %v3973, 111
        %v4039 = vpop.permute.xlu0 %4038
        %4040 = vrot.lane.b32.xlu0 %v3974, 111
        %v4041 = vpop.permute.xlu0 %4040
        %4042 = vrot.lane.b32.xlu0 %v3975, 111
        %v4043 = vpop.permute.xlu0 %4042
        %4044 = vrot.lane.b32.xlu0 %v3976, 111
        %v4045 = vpop.permute.xlu0 %4044
        %4046 = vrot.lane.b32.xlu0 %v3977, 111
        %v4047 = vpop.permute.xlu0 %4046
        %4048 = vrot.lane.b32.xlu0 %v3978, 111
        %v4049 = vpop.permute.xlu0 %4048
        %4050 = vrot.lane.b32.xlu0 %v3979, 111
        %v4051 = vpop.permute.xlu0 %4050
        %4052 = vrot.lane.b32.xlu0 %v3980, 111
        %v4053 = vpop.permute.xlu0 %4052
        %4054 = vrot.lane.b32.xlu0 %v3981, 111
        %v4055 = vpop.permute.xlu0 %4054
        %4056 = vrot.lane.b32.xlu0 %v3982, 111
        %v4057 = vpop.permute.xlu0 %4056
        %4058 = vrot.lane.b32.xlu0 %v3983, 111
        %v4059 = vpop.permute.xlu0 %4058
        %4060 = vrot.lane.b32.xlu0 %v3984, 111
        %v4061 = vpop.permute.xlu0 %4060
        %4062 = vrot.lane.b32.xlu0 %v3985, 111
        %v4063 = vpop.permute.xlu0 %4062
        %4064 = vrot.lane.b32.xlu0 %v3986, 111
        %v4065 = vpop.permute.xlu0 %4064
        %4066 = vrot.lane.b32.xlu0 %v3987, 111
        %v4067 = vpop.permute.xlu0 %4066
        %4068 = vrot.lane.b32.xlu0 %v3988, 111
        %v4069 = vpop.permute.xlu0 %4068
        %4070 = vrot.lane.b32.xlu0 %v3989, 111
        %v4071 = vpop.permute.xlu0 %4070
        %4072 = vrot.lane.b32.xlu0 %v3990, 111
        %v4073 = vpop.permute.xlu0 %4072
        %4074 = vrot.lane.b32.xlu0 %v3991, 111
        %v4075 = vpop.permute.xlu0 %4074
        %4076 = vrot.lane.b32.xlu0 %v3992, 111
        %v4077 = vpop.permute.xlu0 %4076
        %4078 = vrot.lane.b32.xlu0 %v3993, 111
        %v4079 = vpop.permute.xlu0 %4078
        %4080 = vrot.lane.b32.xlu0 %v3994, 111
        %v4081 = vpop.permute.xlu0 %4080
        %4082 = vrot.lane.b32.xlu0 %v3995, 111
        %v4083 = vpop.permute.xlu0 %4082
        %4084 = vrot.lane.b32.xlu0 %v3996, 111
        %v4085 = vpop.permute.xlu0 %4084
        %4086 = vrot.lane.b32.xlu0 %v3997, 111
        %v4087 = vpop.permute.xlu0 %4086
        %4088 = vrot.lane.b32.xlu0 %v3998, 111
        %v4089 = vpop.permute.xlu0 %4088
        %4090 = vrot.lane.b32.xlu0 %v3999, 111
        %v4091 = vpop.permute.xlu0 %4090
        %4092 = vrot.lane.b32.xlu0 %v4000, 111
        %v4093 = vpop.permute.xlu0 %4092
        %4094 = vrot.lane.b32.xlu0 %v4001, 111
        %v4095 = vpop.permute.xlu0 %4094
        %4096 = vrot.lane.b32.xlu0 %v4002, 111
        %v4097 = vpop.permute.xlu0 %4096
        %4098 = vrot.lane.b32.xlu0 %v4003, 111
        %v4099 = vpop.permute.xlu0 %4098
        %v4100 = vsel %vm728, %v4037, %v4039
        %v4101 = vsel %vm728, %v4039, %v4041
        %v4102 = vsel %vm728, %v4041, %v4043
        %v4103 = vsel %vm728, %v4045, %v4047
        %v4104 = vsel %vm728, %v4047, %v4049
        %v4105 = vsel %vm728, %v4049, %v4051
        %v4106 = vsel %vm728, %v4053, %v4055
        %v4107 = vsel %vm728, %v4055, %v4057
        %v4108 = vsel %vm728, %v4057, %v4059
        %v4109 = vsel %vm728, %v4061, %v4063
        %v4110 = vsel %vm728, %v4063, %v4065
        %v4111 = vsel %vm728, %v4065, %v4067
        %v4112 = vsel %vm728, %v4069, %v4071
        %v4113 = vsel %vm728, %v4071, %v4073
        %v4114 = vsel %vm728, %v4073, %v4075
        %v4115 = vsel %vm728, %v4077, %v4079
        %v4116 = vsel %vm728, %v4079, %v4081
        %v4117 = vsel %vm728, %v4081, %v4083
        %v4118 = vsel %vm728, %v4085, %v4087
        %v4119 = vsel %vm728, %v4087, %v4089
        %v4120 = vsel %vm728, %v4089, %v4091
        %v4121 = vsel %vm728, %v4093, %v4095
        %v4122 = vsel %vm728, %v4095, %v4097
        %v4123 = vsel %vm728, %v4097, %v4099
        %4148 = vst [vmem:[#allocation5 + $0x480] sm:$0xff] %v4100
        %4149 = vst [vmem:[#allocation5 + $0x488] sm:$0xff] %v4101
        %4150 = vst [vmem:[#allocation5 + $0x490] sm:$0xff] %v4102
        %4151 = vst [vmem:[#allocation5 + $0x498] sm:$0xff] %v4103
        %4152 = vst [vmem:[#allocation5 + $0x4a0] sm:$0xff] %v4104
        %4153 = vst [vmem:[#allocation5 + $0x4a8] sm:$0xff] %v4105
        %4154 = vst [vmem:[#allocation5 + $0x4b0] sm:$0xff] %v4106
        %4155 = vst [vmem:[#allocation5 + $0x4b8] sm:$0xff] %v4107
        %4156 = vst [vmem:[#allocation5 + $0x4c0] sm:$0xff] %v4108
        %4157 = vst [vmem:[#allocation5 + $0x4c8] sm:$0xff] %v4109
        %4158 = vst [vmem:[#allocation5 + $0x4d0] sm:$0xff] %v4110
        %4159 = vst [vmem:[#allocation5 + $0x4d8] sm:$0xff] %v4111
        %4160 = vst [vmem:[#allocation5 + $0x4e0] sm:$0xff] %v4112
        %4161 = vst [vmem:[#allocation5 + $0x4e8] sm:$0xff] %v4113
        %4162 = vst [vmem:[#allocation5 + $0x4f0] sm:$0xff] %v4114
        %4163 = vst [vmem:[#allocation5 + $0x4f8] sm:$0xff] %v4115
        %4164 = vst [vmem:[#allocation5 + $0x500] sm:$0xff] %v4116
        %4165 = vst [vmem:[#allocation5 + $0x508] sm:$0xff] %v4117
        %4166 = vst [vmem:[#allocation5 + $0x510] sm:$0xff] %v4118
        %4167 = vst [vmem:[#allocation5 + $0x518] sm:$0xff] %v4119
        %4168 = vst [vmem:[#allocation5 + $0x520] sm:$0xff] %v4120
        %4169 = vst [vmem:[#allocation5 + $0x528] sm:$0xff] %v4121
        %4170 = vst [vmem:[#allocation5 + $0x530] sm:$0xff] %v4122
        %4171 = vst [vmem:[#allocation5 + $0x538] sm:$0xff] %v4123
        %v4172 = vld [vmem:[#allocation3 + $0x8] sm:$0xff]
        %v4173 = vld [vmem:[#allocation3 + $0x10] sm:$0xff]
        %v4174 = vld [vmem:[#allocation3 + $0x18] sm:$0xff]
        %v4175 = vld [vmem:[#allocation3 + $0x20] sm:$0xff]
        %v4176 = vld [vmem:[#allocation3 + $0x30] sm:$0xff]
        %v4177 = vld [vmem:[#allocation3 + $0x38] sm:$0xff]
        %v4178 = vld [vmem:[#allocation3 + $0x40] sm:$0xff]
        %v4179 = vld [vmem:[#allocation3 + $0x48] sm:$0xff]
        %v4180 = vld [vmem:[#allocation3 + $0x58] sm:$0xff]
        %v4181 = vld [vmem:[#allocation3 + $0x60] sm:$0xff]
        %v4182 = vld [vmem:[#allocation3 + $0x68] sm:$0xff]
        %v4183 = vld [vmem:[#allocation3 + $0x70] sm:$0xff]
        %v4184 = vld [vmem:[#allocation3 + $0x80] sm:$0xff]
        %v4185 = vld [vmem:[#allocation3 + $0x88] sm:$0xff]
        %v4186 = vld [vmem:[#allocation3 + $0x90] sm:$0xff]
        %v4187 = vld [vmem:[#allocation3 + $0x98] sm:$0xff]
        %v4188 = vld [vmem:[#allocation3 + $0xa8] sm:$0xff]
        %v4189 = vld [vmem:[#allocation3 + $0xb0] sm:$0xff]
        %v4190 = vld [vmem:[#allocation3 + $0xb8] sm:$0xff]
        %v4191 = vld [vmem:[#allocation3 + $0xc0] sm:$0xff]
        %v4192 = vld [vmem:[#allocation3 + $0xd0] sm:$0xff]
        %v4193 = vld [vmem:[#allocation3 + $0xd8] sm:$0xff]
        %v4194 = vld [vmem:[#allocation3 + $0xe0] sm:$0xff]
        %v4195 = vld [vmem:[#allocation3 + $0xe8] sm:$0xff]
        %v4196 = vld [vmem:[#allocation3 + $0xf8] sm:$0xff]
        %v4197 = vld [vmem:[#allocation3 + $0x100] sm:$0xff]
        %v4198 = vld [vmem:[#allocation3 + $0x108] sm:$0xff]
        %v4199 = vld [vmem:[#allocation3 + $0x110] sm:$0xff]
        %v4200 = vld [vmem:[#allocation3 + $0x120] sm:$0xff]
        %v4201 = vld [vmem:[#allocation3 + $0x128] sm:$0xff]
        %v4202 = vld [vmem:[#allocation3 + $0x130] sm:$0xff]
        %v4203 = vld [vmem:[#allocation3 + $0x138] sm:$0xff]
        %4236 = vrot.lane.b32.xlu0 %v4172, 110
        %v4237 = vpop.permute.xlu0 %4236
        %4238 = vrot.lane.b32.xlu0 %v4173, 110
        %v4239 = vpop.permute.xlu0 %4238
        %4240 = vrot.lane.b32.xlu0 %v4174, 110
        %v4241 = vpop.permute.xlu0 %4240
        %4242 = vrot.lane.b32.xlu0 %v4175, 110
        %v4243 = vpop.permute.xlu0 %4242
        %4244 = vrot.lane.b32.xlu0 %v4176, 110
        %v4245 = vpop.permute.xlu0 %4244
        %4246 = vrot.lane.b32.xlu0 %v4177, 110
        %v4247 = vpop.permute.xlu0 %4246
        %4248 = vrot.lane.b32.xlu0 %v4178, 110
        %v4249 = vpop.permute.xlu0 %4248
        %4250 = vrot.lane.b32.xlu0 %v4179, 110
        %v4251 = vpop.permute.xlu0 %4250
        %4252 = vrot.lane.b32.xlu0 %v4180, 110
        %v4253 = vpop.permute.xlu0 %4252
        %4254 = vrot.lane.b32.xlu0 %v4181, 110
        %v4255 = vpop.permute.xlu0 %4254
        %4256 = vrot.lane.b32.xlu0 %v4182, 110
        %v4257 = vpop.permute.xlu0 %4256
        %4258 = vrot.lane.b32.xlu0 %v4183, 110
        %v4259 = vpop.permute.xlu0 %4258
        %4260 = vrot.lane.b32.xlu0 %v4184, 110
        %v4261 = vpop.permute.xlu0 %4260
        %4262 = vrot.lane.b32.xlu0 %v4185, 110
        %v4263 = vpop.permute.xlu0 %4262
        %4264 = vrot.lane.b32.xlu0 %v4186, 110
        %v4265 = vpop.permute.xlu0 %4264
        %4266 = vrot.lane.b32.xlu0 %v4187, 110
        %v4267 = vpop.permute.xlu0 %4266
        %4268 = vrot.lane.b32.xlu0 %v4188, 110
        %v4269 = vpop.permute.xlu0 %4268
        %4270 = vrot.lane.b32.xlu0 %v4189, 110
        %v4271 = vpop.permute.xlu0 %4270
        %4272 = vrot.lane.b32.xlu0 %v4190, 110
        %v4273 = vpop.permute.xlu0 %4272
        %4274 = vrot.lane.b32.xlu0 %v4191, 110
        %v4275 = vpop.permute.xlu0 %4274
        %4276 = vrot.lane.b32.xlu0 %v4192, 110
        %v4277 = vpop.permute.xlu0 %4276
        %4278 = vrot.lane.b32.xlu0 %v4193, 110
        %v4279 = vpop.permute.xlu0 %4278
        %4280 = vrot.lane.b32.xlu0 %v4194, 110
        %v4281 = vpop.permute.xlu0 %4280
        %4282 = vrot.lane.b32.xlu0 %v4195, 110
        %v4283 = vpop.permute.xlu0 %4282
        %4284 = vrot.lane.b32.xlu0 %v4196, 110
        %v4285 = vpop.permute.xlu0 %4284
        %4286 = vrot.lane.b32.xlu0 %v4197, 110
        %v4287 = vpop.permute.xlu0 %4286
        %4288 = vrot.lane.b32.xlu0 %v4198, 110
        %v4289 = vpop.permute.xlu0 %4288
        %4290 = vrot.lane.b32.xlu0 %v4199, 110
        %v4291 = vpop.permute.xlu0 %4290
        %4292 = vrot.lane.b32.xlu0 %v4200, 110
        %v4293 = vpop.permute.xlu0 %4292
        %4294 = vrot.lane.b32.xlu0 %v4201, 110
        %v4295 = vpop.permute.xlu0 %4294
        %4296 = vrot.lane.b32.xlu0 %v4202, 110
        %v4297 = vpop.permute.xlu0 %4296
        %4298 = vrot.lane.b32.xlu0 %v4203, 110
        %v4299 = vpop.permute.xlu0 %4298
        %v4300 = vsel %vm752, %v4237, %v4239
        %v4301 = vsel %vm752, %v4239, %v4241
        %v4302 = vsel %vm752, %v4241, %v4243
        %v4303 = vsel %vm752, %v4245, %v4247
        %v4304 = vsel %vm752, %v4247, %v4249
        %v4305 = vsel %vm752, %v4249, %v4251
        %v4306 = vsel %vm752, %v4253, %v4255
        %v4307 = vsel %vm752, %v4255, %v4257
        %v4308 = vsel %vm752, %v4257, %v4259
        %v4309 = vsel %vm752, %v4261, %v4263
        %v4310 = vsel %vm752, %v4263, %v4265
        %v4311 = vsel %vm752, %v4265, %v4267
        %v4312 = vsel %vm752, %v4269, %v4271
        %v4313 = vsel %vm752, %v4271, %v4273
        %v4314 = vsel %vm752, %v4273, %v4275
        %v4315 = vsel %vm752, %v4277, %v4279
        %v4316 = vsel %vm752, %v4279, %v4281
        %v4317 = vsel %vm752, %v4281, %v4283
        %v4318 = vsel %vm752, %v4285, %v4287
        %v4319 = vsel %vm752, %v4287, %v4289
        %v4320 = vsel %vm752, %v4289, %v4291
        %v4321 = vsel %vm752, %v4293, %v4295
        %v4322 = vsel %vm752, %v4295, %v4297
        %v4323 = vsel %vm752, %v4297, %v4299
        %4348 = vst [vmem:[#allocation5 + $0x540] sm:$0xff] %v4300
        %4349 = vst [vmem:[#allocation5 + $0x548] sm:$0xff] %v4301
        %4350 = vst [vmem:[#allocation5 + $0x550] sm:$0xff] %v4302
        %4351 = vst [vmem:[#allocation5 + $0x558] sm:$0xff] %v4303
        %4352 = vst [vmem:[#allocation5 + $0x560] sm:$0xff] %v4304
        %4353 = vst [vmem:[#allocation5 + $0x568] sm:$0xff] %v4305
        %4354 = vst [vmem:[#allocation5 + $0x570] sm:$0xff] %v4306
        %4355 = vst [vmem:[#allocation5 + $0x578] sm:$0xff] %v4307
        %4356 = vst [vmem:[#allocation5 + $0x580] sm:$0xff] %v4308
        %4357 = vst [vmem:[#allocation5 + $0x588] sm:$0xff] %v4309
        %4358 = vst [vmem:[#allocation5 + $0x590] sm:$0xff] %v4310
        %4359 = vst [vmem:[#allocation5 + $0x598] sm:$0xff] %v4311
        %4360 = vst [vmem:[#allocation5 + $0x5a0] sm:$0xff] %v4312
        %4361 = vst [vmem:[#allocation5 + $0x5a8] sm:$0xff] %v4313
        %4362 = vst [vmem:[#allocation5 + $0x5b0] sm:$0xff] %v4314
        %4363 = vst [vmem:[#allocation5 + $0x5b8] sm:$0xff] %v4315
        %4364 = vst [vmem:[#allocation5 + $0x5c0] sm:$0xff] %v4316
        %4365 = vst [vmem:[#allocation5 + $0x5c8] sm:$0xff] %v4317
        %4366 = vst [vmem:[#allocation5 + $0x5d0] sm:$0xff] %v4318
        %4367 = vst [vmem:[#allocation5 + $0x5d8] sm:$0xff] %v4319
        %4368 = vst [vmem:[#allocation5 + $0x5e0] sm:$0xff] %v4320
        %4369 = vst [vmem:[#allocation5 + $0x5e8] sm:$0xff] %v4321
        %4370 = vst [vmem:[#allocation5 + $0x5f0] sm:$0xff] %v4322
        %4371 = vst [vmem:[#allocation5 + $0x5f8] sm:$0xff] %v4323
        %v4372 = vld [vmem:[#allocation3 + $0x8] sm:$0xff]
        %v4373 = vld [vmem:[#allocation3 + $0x10] sm:$0xff]
        %v4374 = vld [vmem:[#allocation3 + $0x18] sm:$0xff]
        %v4375 = vld [vmem:[#allocation3 + $0x20] sm:$0xff]
        %v4376 = vld [vmem:[#allocation3 + $0x30] sm:$0xff]
        %v4377 = vld [vmem:[#allocation3 + $0x38] sm:$0xff]
        %v4378 = vld [vmem:[#allocation3 + $0x40] sm:$0xff]
        %v4379 = vld [vmem:[#allocation3 + $0x48] sm:$0xff]
        %v4380 = vld [vmem:[#allocation3 + $0x58] sm:$0xff]
        %v4381 = vld [vmem:[#allocation3 + $0x60] sm:$0xff]
        %v4382 = vld [vmem:[#allocation3 + $0x68] sm:$0xff]
        %v4383 = vld [vmem:[#allocation3 + $0x70] sm:$0xff]
        %v4384 = vld [vmem:[#allocation3 + $0x80] sm:$0xff]
        %v4385 = vld [vmem:[#allocation3 + $0x88] sm:$0xff]
        %v4386 = vld [vmem:[#allocation3 + $0x90] sm:$0xff]
        %v4387 = vld [vmem:[#allocation3 + $0x98] sm:$0xff]
        %v4388 = vld [vmem:[#allocation3 + $0xa8] sm:$0xff]
        %v4389 = vld [vmem:[#allocation3 + $0xb0] sm:$0xff]
        %v4390 = vld [vmem:[#allocation3 + $0xb8] sm:$0xff]
        %v4391 = vld [vmem:[#allocation3 + $0xc0] sm:$0xff]
        %v4392 = vld [vmem:[#allocation3 + $0xd0] sm:$0xff]
        %v4393 = vld [vmem:[#allocation3 + $0xd8] sm:$0xff]
        %v4394 = vld [vmem:[#allocation3 + $0xe0] sm:$0xff]
        %v4395 = vld [vmem:[#allocation3 + $0xe8] sm:$0xff]
        %v4396 = vld [vmem:[#allocation3 + $0xf8] sm:$0xff]
        %v4397 = vld [vmem:[#allocation3 + $0x100] sm:$0xff]
        %v4398 = vld [vmem:[#allocation3 + $0x108] sm:$0xff]
        %v4399 = vld [vmem:[#allocation3 + $0x110] sm:$0xff]
        %v4400 = vld [vmem:[#allocation3 + $0x120] sm:$0xff]
        %v4401 = vld [vmem:[#allocation3 + $0x128] sm:$0xff]
        %v4402 = vld [vmem:[#allocation3 + $0x130] sm:$0xff]
        %v4403 = vld [vmem:[#allocation3 + $0x138] sm:$0xff]
        %4436 = vrot.lane.b32.xlu0 %v4372, 109
        %v4437 = vpop.permute.xlu0 %4436
        %4438 = vrot.lane.b32.xlu0 %v4373, 109
        %v4439 = vpop.permute.xlu0 %4438
        %4440 = vrot.lane.b32.xlu0 %v4374, 109
        %v4441 = vpop.permute.xlu0 %4440
        %4442 = vrot.lane.b32.xlu0 %v4375, 109
        %v4443 = vpop.permute.xlu0 %4442
        %4444 = vrot.lane.b32.xlu0 %v4376, 109
        %v4445 = vpop.permute.xlu0 %4444
        %4446 = vrot.lane.b32.xlu0 %v4377, 109
        %v4447 = vpop.permute.xlu0 %4446
        %4448 = vrot.lane.b32.xlu0 %v4378, 109
        %v4449 = vpop.permute.xlu0 %4448
        %4450 = vrot.lane.b32.xlu0 %v4379, 109
        %v4451 = vpop.permute.xlu0 %4450
        %4452 = vrot.lane.b32.xlu0 %v4380, 109
        %v4453 = vpop.permute.xlu0 %4452
        %4454 = vrot.lane.b32.xlu0 %v4381, 109
        %v4455 = vpop.permute.xlu0 %4454
        %4456 = vrot.lane.b32.xlu0 %v4382, 109
        %v4457 = vpop.permute.xlu0 %4456
        %4458 = vrot.lane.b32.xlu0 %v4383, 109
        %v4459 = vpop.permute.xlu0 %4458
        %4460 = vrot.lane.b32.xlu0 %v4384, 109
        %v4461 = vpop.permute.xlu0 %4460
        %4462 = vrot.lane.b32.xlu0 %v4385, 109
        %v4463 = vpop.permute.xlu0 %4462
        %4464 = vrot.lane.b32.xlu0 %v4386, 109
        %v4465 = vpop.permute.xlu0 %4464
        %4466 = vrot.lane.b32.xlu0 %v4387, 109
        %v4467 = vpop.permute.xlu0 %4466
        %4468 = vrot.lane.b32.xlu0 %v4388, 109
        %v4469 = vpop.permute.xlu0 %4468
        %4470 = vrot.lane.b32.xlu0 %v4389, 109
        %v4471 = vpop.permute.xlu0 %4470
        %4472 = vrot.lane.b32.xlu0 %v4390, 109
        %v4473 = vpop.permute.xlu0 %4472
        %4474 = vrot.lane.b32.xlu0 %v4391, 109
        %v4475 = vpop.permute.xlu0 %4474
        %4476 = vrot.lane.b32.xlu0 %v4392, 109
        %v4477 = vpop.permute.xlu0 %4476
        %4478 = vrot.lane.b32.xlu0 %v4393, 109
        %v4479 = vpop.permute.xlu0 %4478
        %4480 = vrot.lane.b32.xlu0 %v4394, 109
        %v4481 = vpop.permute.xlu0 %4480
        %4482 = vrot.lane.b32.xlu0 %v4395, 109
        %v4483 = vpop.permute.xlu0 %4482
        %4484 = vrot.lane.b32.xlu0 %v4396, 109
        %v4485 = vpop.permute.xlu0 %4484
        %4486 = vrot.lane.b32.xlu0 %v4397, 109
        %v4487 = vpop.permute.xlu0 %4486
        %4488 = vrot.lane.b32.xlu0 %v4398, 109
        %v4489 = vpop.permute.xlu0 %4488
        %4490 = vrot.lane.b32.xlu0 %v4399, 109
        %v4491 = vpop.permute.xlu0 %4490
        %4492 = vrot.lane.b32.xlu0 %v4400, 109
        %v4493 = vpop.permute.xlu0 %4492
        %4494 = vrot.lane.b32.xlu0 %v4401, 109
        %v4495 = vpop.permute.xlu0 %4494
        %4496 = vrot.lane.b32.xlu0 %v4402, 109
        %v4497 = vpop.permute.xlu0 %4496
        %4498 = vrot.lane.b32.xlu0 %v4403, 109
        %v4499 = vpop.permute.xlu0 %4498
        %v4500 = vsel %vm776, %v4437, %v4439
        %v4501 = vsel %vm776, %v4439, %v4441
        %v4502 = vsel %vm776, %v4441, %v4443
        %v4503 = vsel %vm776, %v4445, %v4447
        %v4504 = vsel %vm776, %v4447, %v4449
        %v4505 = vsel %vm776, %v4449, %v4451
        %v4506 = vsel %vm776, %v4453, %v4455
        %v4507 = vsel %vm776, %v4455, %v4457
        %v4508 = vsel %vm776, %v4457, %v4459
        %v4509 = vsel %vm776, %v4461, %v4463
        %v4510 = vsel %vm776, %v4463, %v4465
        %v4511 = vsel %vm776, %v4465, %v4467
        %v4512 = vsel %vm776, %v4469, %v4471
        %v4513 = vsel %vm776, %v4471, %v4473
        %v4514 = vsel %vm776, %v4473, %v4475
        %v4515 = vsel %vm776, %v4477, %v4479
        %v4516 = vsel %vm776, %v4479, %v4481
        %v4517 = vsel %vm776, %v4481, %v4483
        %v4518 = vsel %vm776, %v4485, %v4487
        %v4519 = vsel %vm776, %v4487, %v4489
        %v4520 = vsel %vm776, %v4489, %v4491
        %v4521 = vsel %vm776, %v4493, %v4495
        %v4522 = vsel %vm776, %v4495, %v4497
        %v4523 = vsel %vm776, %v4497, %v4499
        %4548 = vst [vmem:[#allocation5 + $0x600] sm:$0xff] %v4500
        %4549 = vst [vmem:[#allocation5 + $0x608] sm:$0xff] %v4501
        %4550 = vst [vmem:[#allocation5 + $0x610] sm:$0xff] %v4502
        %4551 = vst [vmem:[#allocation5 + $0x618] sm:$0xff] %v4503
        %4552 = vst [vmem:[#allocation5 + $0x620] sm:$0xff] %v4504
        %4553 = vst [vmem:[#allocation5 + $0x628] sm:$0xff] %v4505
        %4554 = vst [vmem:[#allocation5 + $0x630] sm:$0xff] %v4506
        %4555 = vst [vmem:[#allocation5 + $0x638] sm:$0xff] %v4507
        %4556 = vst [vmem:[#allocation5 + $0x640] sm:$0xff] %v4508
        %4557 = vst [vmem:[#allocation5 + $0x648] sm:$0xff] %v4509
        %4558 = vst [vmem:[#allocation5 + $0x650] sm:$0xff] %v4510
        %4559 = vst [vmem:[#allocation5 + $0x658] sm:$0xff] %v4511
        %4560 = vst [vmem:[#allocation5 + $0x660] sm:$0xff] %v4512
        %4561 = vst [vmem:[#allocation5 + $0x668] sm:$0xff] %v4513
        %4562 = vst [vmem:[#allocation5 + $0x670] sm:$0xff] %v4514
        %4563 = vst [vmem:[#allocation5 + $0x678] sm:$0xff] %v4515
        %4564 = vst [vmem:[#allocation5 + $0x680] sm:$0xff] %v4516
        %4565 = vst [vmem:[#allocation5 + $0x688] sm:$0xff] %v4517
        %4566 = vst [vmem:[#allocation5 + $0x690] sm:$0xff] %v4518
        %4567 = vst [vmem:[#allocation5 + $0x698] sm:$0xff] %v4519
        %4568 = vst [vmem:[#allocation5 + $0x6a0] sm:$0xff] %v4520
        %4569 = vst [vmem:[#allocation5 + $0x6a8] sm:$0xff] %v4521
        %4570 = vst [vmem:[#allocation5 + $0x6b0] sm:$0xff] %v4522
        %4571 = vst [vmem:[#allocation5 + $0x6b8] sm:$0xff] %v4523
        %v4572 = vld [vmem:[%s6] sm:$0xff]
        %v4573 = vld [vmem:[%s6 + $0x8] sm:$0xff]
        %v4574 = vld [vmem:[%s6 + $0x10] sm:$0xff]
        %v4575 = vld [vmem:[%s6 + $0x18] sm:$0xff]
        %v4576 = vld [vmem:[%s6 + $0x20] sm:$0xff]
        %v4577 = vld [vmem:[%s6 + $0x28] sm:$0xff]
        %v4578 = vld [vmem:[%s6 + $0x30] sm:$0xff]
        %v4579 = vld [vmem:[%s6 + $0x38] sm:$0xff]
        %v4580 = vld [vmem:[%s6 + $0x40] sm:$0xff]
        %v4581 = vld [vmem:[%s6 + $0x48] sm:$0xff]
        %v4582 = vld [vmem:[%s6 + $0x50] sm:$0xff]
        %v4583 = vld [vmem:[%s6 + $0x58] sm:$0xff]
        %v4584 = vld [vmem:[%s6 + $0x60] sm:$0xff]
        %v4585 = vld [vmem:[%s6 + $0x68] sm:$0xff]
        %v4586 = vld [vmem:[%s6 + $0x70] sm:$0xff]
        %v4587 = vld [vmem:[%s6 + $0x78] sm:$0xff]
        %v4588 = vld [vmem:[%s6 + $0x80] sm:$0xff]
        %v4589 = vld [vmem:[%s6 + $0x88] sm:$0xff]
        %v4590 = vld [vmem:[%s6 + $0x90] sm:$0xff]
        %v4591 = vld [vmem:[%s6 + $0x98] sm:$0xff]
        %v4592 = vld [vmem:[#allocation5] sm:$0xff]
        %v4593 = vld [vmem:[#allocation5 + $0x8] sm:$0xff]
        %v4594 = vld [vmem:[#allocation5 + $0x10] sm:$0xff]
        %v4595 = vld [vmem:[#allocation5 + $0x18] sm:$0xff]
        %v4596 = vld [vmem:[#allocation5 + $0x20] sm:$0xff]
        %v4597 = vld [vmem:[#allocation5 + $0x28] sm:$0xff]
        %v4598 = vld [vmem:[#allocation5 + $0x30] sm:$0xff]
        %v4599 = vld [vmem:[#allocation5 + $0x38] sm:$0xff]
        %v4600 = vld [vmem:[#allocation5 + $0x40] sm:$0xff]
        %v4601 = vld [vmem:[#allocation5 + $0x48] sm:$0xff]
        %v4602 = vld [vmem:[#allocation5 + $0x50] sm:$0xff]
        %v4603 = vld [vmem:[#allocation5 + $0x58] sm:$0xff]
        %v4604 = vld [vmem:[#allocation5 + $0x60] sm:$0xff]
        %v4605 = vld [vmem:[#allocation5 + $0x68] sm:$0xff]
        %v4606 = vld [vmem:[#allocation5 + $0x70] sm:$0xff]
        %v4607 = vld [vmem:[#allocation5 + $0x78] sm:$0xff]
        %v4608 = vld [vmem:[#allocation5 + $0x80] sm:$0xff]
        %v4609 = vld [vmem:[#allocation5 + $0x88] sm:$0xff]
        %v4610 = vld [vmem:[#allocation5 + $0x90] sm:$0xff]
        %v4611 = vld [vmem:[#allocation5 + $0x98] sm:$0xff]
        %v4612 = vld [vmem:[#allocation5 + $0xa0] sm:$0xff]
        %v4613 = vld [vmem:[#allocation5 + $0xa8] sm:$0xff]
        %v4614 = vld [vmem:[#allocation5 + $0xb0] sm:$0xff]
        %v4615 = vld [vmem:[#allocation5 + $0xb8] sm:$0xff]
        %v4616 = vld [vmem:[#allocation5 + $0xc0] sm:$0xff]
        %v4617 = vld [vmem:[#allocation5 + $0xc8] sm:$0xff]
        %v4618 = vld [vmem:[#allocation5 + $0xd0] sm:$0xff]
        %v4619 = vld [vmem:[#allocation5 + $0xd8] sm:$0xff]
        %v4620 = vld [vmem:[#allocation5 + $0xe0] sm:$0xff]
        %v4621 = vld [vmem:[#allocation5 + $0xe8] sm:$0xff]
        %v4622 = vld [vmem:[#allocation5 + $0xf0] sm:$0xff]
        %v4623 = vld [vmem:[#allocation5 + $0xf8] sm:$0xff]
        %v4624 = vld [vmem:[#allocation5 + $0x100] sm:$0xff]
        %v4625 = vld [vmem:[#allocation5 + $0x108] sm:$0xff]
        %v4626 = vld [vmem:[#allocation5 + $0x110] sm:$0xff]
        %v4627 = vld [vmem:[#allocation5 + $0x118] sm:$0xff]
        %v4628 = vld [vmem:[#allocation5 + $0x120] sm:$0xff]
        %v4629 = vld [vmem:[#allocation5 + $0x128] sm:$0xff]
        %v4630 = vld [vmem:[#allocation5 + $0x130] sm:$0xff]
        %v4631 = vld [vmem:[#allocation5 + $0x138] sm:$0xff]
        %v4632 = vld [vmem:[#allocation5 + $0x140] sm:$0xff]
        %v4633 = vld [vmem:[#allocation5 + $0x148] sm:$0xff]
        %v4634 = vld [vmem:[#allocation5 + $0x150] sm:$0xff]
        %v4635 = vld [vmem:[#allocation5 + $0x158] sm:$0xff]
        %v4636 = vld [vmem:[#allocation5 + $0x160] sm:$0xff]
        %v4637 = vld [vmem:[#allocation5 + $0x168] sm:$0xff]
        %v4638 = vld [vmem:[#allocation5 + $0x170] sm:$0xff]
        %v4639 = vld [vmem:[#allocation5 + $0x178] sm:$0xff]
        %v4640 = vld [vmem:[#allocation5 + $0x180] sm:$0xff]
        %v4641 = vld [vmem:[#allocation5 + $0x188] sm:$0xff]
        %v4642 = vld [vmem:[#allocation5 + $0x190] sm:$0xff]
        %v4643 = vld [vmem:[#allocation5 + $0x198] sm:$0xff]
        %v4644 = vld [vmem:[#allocation5 + $0x1a0] sm:$0xff]
        %v4645 = vld [vmem:[#allocation5 + $0x1a8] sm:$0xff]
        %v4646 = vld [vmem:[#allocation5 + $0x1b0] sm:$0xff]
        %v4647 = vld [vmem:[#allocation5 + $0x1b8] sm:$0xff]
        %v4648 = vld [vmem:[#allocation5 + $0x1c0] sm:$0xff]
        %v4649 = vld [vmem:[#allocation5 + $0x1c8] sm:$0xff]
        %v4650 = vld [vmem:[#allocation5 + $0x1d0] sm:$0xff]
        %v4651 = vld [vmem:[#allocation5 + $0x1d8] sm:$0xff]
        %v4652 = vld [vmem:[#allocation5 + $0x1e0] sm:$0xff]
        %v4653 = vld [vmem:[#allocation5 + $0x1e8] sm:$0xff]
        %v4654 = vld [vmem:[#allocation5 + $0x1f0] sm:$0xff]
        %v4655 = vld [vmem:[#allocation5 + $0x1f8] sm:$0xff]
        %v4656 = vld [vmem:[#allocation5 + $0x200] sm:$0xff]
        %v4657 = vld [vmem:[#allocation5 + $0x208] sm:$0xff]
        %v4658 = vld [vmem:[#allocation5 + $0x210] sm:$0xff]
        %v4659 = vld [vmem:[#allocation5 + $0x218] sm:$0xff]
        %v4660 = vld [vmem:[#allocation5 + $0x220] sm:$0xff]
        %v4661 = vld [vmem:[#allocation5 + $0x228] sm:$0xff]
        %v4662 = vld [vmem:[#allocation5 + $0x230] sm:$0xff]
        %v4663 = vld [vmem:[#allocation5 + $0x238] sm:$0xff]
        %v4664 = vld [vmem:[#allocation5 + $0x240] sm:$0xff]
        %v4665 = vld [vmem:[#allocation5 + $0x248] sm:$0xff]
        %v4666 = vld [vmem:[#allocation5 + $0x250] sm:$0xff]
        %v4667 = vld [vmem:[#allocation5 + $0x258] sm:$0xff]
        %v4668 = vld [vmem:[#allocation5 + $0x260] sm:$0xff]
        %v4669 = vld [vmem:[#allocation5 + $0x268] sm:$0xff]
        %v4670 = vld [vmem:[#allocation5 + $0x270] sm:$0xff]
        %v4671 = vld [vmem:[#allocation5 + $0x278] sm:$0xff]
        %v4672 = vld [vmem:[#allocation5 + $0x280] sm:$0xff]
        %v4673 = vld [vmem:[#allocation5 + $0x288] sm:$0xff]
        %v4674 = vld [vmem:[#allocation5 + $0x290] sm:$0xff]
        %v4675 = vld [vmem:[#allocation5 + $0x298] sm:$0xff]
        %v4676 = vld [vmem:[#allocation5 + $0x2a0] sm:$0xff]
        %v4677 = vld [vmem:[#allocation5 + $0x2a8] sm:$0xff]
        %v4678 = vld [vmem:[#allocation5 + $0x2b0] sm:$0xff]
        %v4679 = vld [vmem:[#allocation5 + $0x2b8] sm:$0xff]
        %v4680 = vld [vmem:[#allocation5 + $0x2c0] sm:$0xff]
        %v4681 = vld [vmem:[#allocation5 + $0x2c8] sm:$0xff]
        %v4682 = vld [vmem:[#allocation5 + $0x2d0] sm:$0xff]
        %v4683 = vld [vmem:[#allocation5 + $0x2d8] sm:$0xff]
        %v4684 = vld [vmem:[#allocation5 + $0x2e0] sm:$0xff]
        %v4685 = vld [vmem:[#allocation5 + $0x2e8] sm:$0xff]
        %v4686 = vld [vmem:[#allocation5 + $0x2f0] sm:$0xff]
        %v4687 = vld [vmem:[#allocation5 + $0x2f8] sm:$0xff]
        %v4688 = vld [vmem:[#allocation5 + $0x300] sm:$0xff]
        %v4689 = vld [vmem:[#allocation5 + $0x308] sm:$0xff]
        %v4690 = vld [vmem:[#allocation5 + $0x310] sm:$0xff]
        %v4691 = vld [vmem:[#allocation5 + $0x318] sm:$0xff]
        %v4692 = vld [vmem:[#allocation5 + $0x320] sm:$0xff]
        %v4693 = vld [vmem:[#allocation5 + $0x328] sm:$0xff]
        %v4694 = vld [vmem:[#allocation5 + $0x330] sm:$0xff]
        %v4695 = vld [vmem:[#allocation5 + $0x338] sm:$0xff]
        %v4696 = vld [vmem:[#allocation5 + $0x340] sm:$0xff]
        %v4697 = vld [vmem:[#allocation5 + $0x348] sm:$0xff]
        %v4698 = vld [vmem:[#allocation5 + $0x350] sm:$0xff]
        %v4699 = vld [vmem:[#allocation5 + $0x358] sm:$0xff]
        %v4700 = vld [vmem:[#allocation5 + $0x360] sm:$0xff]
        %v4701 = vld [vmem:[#allocation5 + $0x368] sm:$0xff]
        %v4702 = vld [vmem:[#allocation5 + $0x370] sm:$0xff]
        %v4703 = vld [vmem:[#allocation5 + $0x378] sm:$0xff]
        %v4704 = vld [vmem:[#allocation5 + $0x380] sm:$0xff]
        %v4705 = vld [vmem:[#allocation5 + $0x388] sm:$0xff]
        %v4706 = vld [vmem:[#allocation5 + $0x390] sm:$0xff]
        %v4707 = vld [vmem:[#allocation5 + $0x398] sm:$0xff]
        %v4708 = vld [vmem:[#allocation5 + $0x3a0] sm:$0xff]
        %v4709 = vld [vmem:[#allocation5 + $0x3a8] sm:$0xff]
        %v4710 = vld [vmem:[#allocation5 + $0x3b0] sm:$0xff]
        %v4711 = vld [vmem:[#allocation5 + $0x3b8] sm:$0xff]
        %v4712 = vld [vmem:[#allocation5 + $0x3c0] sm:$0xff]
        %v4713 = vld [vmem:[#allocation5 + $0x3c8] sm:$0xff]
        %v4714 = vld [vmem:[#allocation5 + $0x3d0] sm:$0xff]
        %v4715 = vld [vmem:[#allocation5 + $0x3d8] sm:$0xff]
        %v4716 = vld [vmem:[#allocation5 + $0x3e0] sm:$0xff]
        %v4717 = vld [vmem:[#allocation5 + $0x3e8] sm:$0xff]
        %v4718 = vld [vmem:[#allocation5 + $0x3f0] sm:$0xff]
        %v4719 = vld [vmem:[#allocation5 + $0x3f8] sm:$0xff]
        %v4720 = vld [vmem:[#allocation5 + $0x400] sm:$0xff]
        %v4721 = vld [vmem:[#allocation5 + $0x408] sm:$0xff]
        %v4722 = vld [vmem:[#allocation5 + $0x410] sm:$0xff]
        %v4723 = vld [vmem:[#allocation5 + $0x418] sm:$0xff]
        %v4724 = vld [vmem:[#allocation5 + $0x420] sm:$0xff]
        %v4725 = vld [vmem:[#allocation5 + $0x428] sm:$0xff]
        %v4726 = vld [vmem:[#allocation5 + $0x430] sm:$0xff]
        %v4727 = vld [vmem:[#allocation5 + $0x438] sm:$0xff]
        %v4728 = vld [vmem:[#allocation5 + $0x440] sm:$0xff]
        %v4729 = vld [vmem:[#allocation5 + $0x448] sm:$0xff]
        %v4730 = vld [vmem:[#allocation5 + $0x450] sm:$0xff]
        %v4731 = vld [vmem:[#allocation5 + $0x458] sm:$0xff]
        %v4732 = vld [vmem:[#allocation5 + $0x460] sm:$0xff]
        %v4733 = vld [vmem:[#allocation5 + $0x468] sm:$0xff]
        %v4734 = vld [vmem:[#allocation5 + $0x470] sm:$0xff]
        %v4735 = vld [vmem:[#allocation5 + $0x478] sm:$0xff]
        %v4736 = vld [vmem:[#allocation5 + $0x480] sm:$0xff]
        %v4737 = vld [vmem:[#allocation5 + $0x488] sm:$0xff]
        %v4738 = vld [vmem:[#allocation5 + $0x490] sm:$0xff]
        %v4739 = vld [vmem:[#allocation5 + $0x498] sm:$0xff]
        %v4740 = vld [vmem:[#allocation5 + $0x4a0] sm:$0xff]
        %v4741 = vld [vmem:[#allocation5 + $0x4a8] sm:$0xff]
        %v4742 = vld [vmem:[#allocation5 + $0x4b0] sm:$0xff]
        %v4743 = vld [vmem:[#allocation5 + $0x4b8] sm:$0xff]
        %v4744 = vld [vmem:[#allocation5 + $0x4c0] sm:$0xff]
        %v4745 = vld [vmem:[#allocation5 + $0x4c8] sm:$0xff]
        %v4746 = vld [vmem:[#allocation5 + $0x4d0] sm:$0xff]
        %v4747 = vld [vmem:[#allocation5 + $0x4d8] sm:$0xff]
        %v4748 = vld [vmem:[#allocation5 + $0x4e0] sm:$0xff]
        %v4749 = vld [vmem:[#allocation5 + $0x4e8] sm:$0xff]
        %v4750 = vld [vmem:[#allocation5 + $0x4f0] sm:$0xff]
        %v4751 = vld [vmem:[#allocation5 + $0x4f8] sm:$0xff]
        %v4752 = vld [vmem:[#allocation5 + $0x500] sm:$0xff]
        %v4753 = vld [vmem:[#allocation5 + $0x508] sm:$0xff]
        %v4754 = vld [vmem:[#allocation5 + $0x510] sm:$0xff]
        %v4755 = vld [vmem:[#allocation5 + $0x518] sm:$0xff]
        %v4756 = vld [vmem:[#allocation5 + $0x520] sm:$0xff]
        %v4757 = vld [vmem:[#allocation5 + $0x528] sm:$0xff]
        %v4758 = vld [vmem:[#allocation5 + $0x530] sm:$0xff]
        %v4759 = vld [vmem:[#allocation5 + $0x538] sm:$0xff]
        %v4760 = vld [vmem:[#allocation5 + $0x540] sm:$0xff]
        %v4761 = vld [vmem:[#allocation5 + $0x548] sm:$0xff]
        %v4762 = vld [vmem:[#allocation5 + $0x550] sm:$0xff]
        %v4763 = vld [vmem:[#allocation5 + $0x558] sm:$0xff]
        %v4764 = vld [vmem:[#allocation5 + $0x560] sm:$0xff]
        %v4765 = vld [vmem:[#allocation5 + $0x568] sm:$0xff]
        %v4766 = vld [vmem:[#allocation5 + $0x570] sm:$0xff]
        %v4767 = vld [vmem:[#allocation5 + $0x578] sm:$0xff]
        %v4768 = vld [vmem:[#allocation5 + $0x580] sm:$0xff]
        %v4769 = vld [vmem:[#allocation5 + $0x588] sm:$0xff]
        %v4770 = vld [vmem:[#allocation5 + $0x590] sm:$0xff]
        %v4771 = vld [vmem:[#allocation5 + $0x598] sm:$0xff]
        %v4772 = vld [vmem:[#allocation5 + $0x5a0] sm:$0xff]
        %v4773 = vld [vmem:[#allocation5 + $0x5a8] sm:$0xff]
        %v4774 = vld [vmem:[#allocation5 + $0x5b0] sm:$0xff]
        %v4775 = vld [vmem:[#allocation5 + $0x5b8] sm:$0xff]
        %v4776 = vld [vmem:[#allocation5 + $0x5c0] sm:$0xff]
        %v4777 = vld [vmem:[#allocation5 + $0x5c8] sm:$0xff]
        %v4778 = vld [vmem:[#allocation5 + $0x5d0] sm:$0xff]
        %v4779 = vld [vmem:[#allocation5 + $0x5d8] sm:$0xff]
        %v4780 = vld [vmem:[#allocation5 + $0x5e0] sm:$0xff]
        %v4781 = vld [vmem:[#allocation5 + $0x5e8] sm:$0xff]
        %v4782 = vld [vmem:[#allocation5 + $0x5f0] sm:$0xff]
        %v4783 = vld [vmem:[#allocation5 + $0x5f8] sm:$0xff]
        %v4784 = vld [vmem:[#allocation5 + $0x600] sm:$0xff]
        %v4785 = vld [vmem:[#allocation5 + $0x608] sm:$0xff]
        %v4786 = vld [vmem:[#allocation5 + $0x610] sm:$0xff]
        %v4787 = vld [vmem:[#allocation5 + $0x618] sm:$0xff]
        %v4788 = vld [vmem:[#allocation5 + $0x620] sm:$0xff]
        %v4789 = vld [vmem:[#allocation5 + $0x628] sm:$0xff]
        %v4790 = vld [vmem:[#allocation5 + $0x630] sm:$0xff]
        %v4791 = vld [vmem:[#allocation5 + $0x638] sm:$0xff]
        %v4792 = vld [vmem:[#allocation5 + $0x640] sm:$0xff]
        %v4793 = vld [vmem:[#allocation5 + $0x648] sm:$0xff]
        %v4794 = vld [vmem:[#allocation5 + $0x650] sm:$0xff]
        %v4795 = vld [vmem:[#allocation5 + $0x658] sm:$0xff]
        %v4796 = vld [vmem:[#allocation5 + $0x660] sm:$0xff]
        %v4797 = vld [vmem:[#allocation5 + $0x668] sm:$0xff]
        %v4798 = vld [vmem:[#allocation5 + $0x670] sm:$0xff]
        %v4799 = vld [vmem:[#allocation5 + $0x678] sm:$0xff]
        %v4800 = vld [vmem:[#allocation5 + $0x680] sm:$0xff]
        %v4801 = vld [vmem:[#allocation5 + $0x688] sm:$0xff]
        %v4802 = vld [vmem:[#allocation5 + $0x690] sm:$0xff]
        %v4803 = vld [vmem:[#allocation5 + $0x698] sm:$0xff]
        %v4804 = vld [vmem:[#allocation5 + $0x6a0] sm:$0xff]
        %v4805 = vld [vmem:[#allocation5 + $0x6a8] sm:$0xff]
        %v4806 = vld [vmem:[#allocation5 + $0x6b0] sm:$0xff]
        %v4807 = vld [vmem:[#allocation5 + $0x6b8] sm:$0xff]
        %v4808 = vld [vmem:[%s7] sm:$0xff]
        %v4809 = vld [vmem:[%s7 + $0x8] sm:$0xff]
        %v4810 = vld [vmem:[%s7 + $0x10] sm:$0xff]
        %v4811 = vld [vmem:[%s7 + $0x18] sm:$0xff]
        %4813 = vset.pattern.permute.xlu0 0
        %4814 = vperm.xlu0 %4813, %v4808
        %v4815 = vpop.permute.xlu0 %4814
        %4818 = vset.pattern.permute.xlu0 0
        %4819 = vperm.xlu0 %4818, %v4809
        %v4820 = vpop.permute.xlu0 %4819
        %4823 = vset.pattern.permute.xlu0 0
        %4824 = vperm.xlu0 %4823, %v4810
        %v4825 = vpop.permute.xlu0 %4824
        %4828 = vset.pattern.permute.xlu0 0
        %4829 = vperm.xlu0 %4828, %v4811
        %v4830 = vpop.permute.xlu0 %4829
        %vm4832 = vcmask 523264
        %v4834 = vsel %vm4832, %v4576, 0
        %v4837 = vsel %vm4832, %v4581, 0
        %v4840 = vsel %vm4832, %v4586, 0
        %v4843 = vsel %vm4832, %v4591, 0
        %4845 = vmatprep.subr.mxu0 %v4593
        %4846 = vmatpush1.msra.mxu0 %v4592
        %4847 = vmatprep.subr.mxu0 %v4596
        %4848 = vmatpush1.msra.mxu0 %v4595
        %4849 = vmatprep.subr.mxu0 %v4599
        %4850 = vmatpush1.msra.mxu0 %v4598
        %4851 = vmatprep.subr.mxu0 %v4602
        %4852 = vmatpush1.msra.mxu0 %v4601
        %4853 = vmatprep.subr.mxu0 %v4605
        %4854 = vmatpush1.msra.mxu0 %v4604
        %4855 = vmatprep.subr.mxu0 %v4608
        %4856 = vmatpush1.msra.mxu0 %v4607
        %4857 = vmatprep.subr.mxu0 %v4611
        %4858 = vmatpush1.msra.mxu0 %v4610
        %4859 = vmatprep.subr.mxu0 %v4614
        %4860 = vmatpush1.msra.mxu0 %v4613
        %4861 = vmatprep.subr.mxu0 %v4617
        %4862 = vmatpush1.msra.mxu0 %v4616
        %4863 = vmatprep.subr.mxu0 %v4620
        %4864 = vmatpush1.msra.mxu0 %v4619
        %4865 = vmatprep.subr.mxu0 %v4623
        %4866 = vmatpush1.msra.mxu0 %v4622
        %4867 = vmatprep.subr.mxu0 %v4626
        %4868 = vmatpush1.msra.mxu0 %v4625
        %4869 = vmatprep.subr.mxu0 %v4629
        %4870 = vmatpush1.msra.mxu0 %v4628
        %4871 = vmatprep.subr.mxu0 %v4632
        %4872 = vmatpush1.msra.mxu0 %v4631
        %4873 = vmatprep.subr.mxu0 %v4635
        %4874 = vmatpush1.msra.mxu0 %v4634
        %4875 = vmatprep.subr.mxu0 %v4638
        %4876 = vmatpush1.msra.mxu0 %v4637
        %4877 = vmatprep.subr.mxu0 %v4641
        %4878 = vmatpush1.msra.mxu0 %v4640
        %4879 = vmatprep.subr.mxu0 %v4644
        %4880 = vmatpush1.msra.mxu0 %v4643
        %4881 = vmatprep.subr.mxu0 %v4647
        %4882 = vmatpush1.msra.mxu0 %v4646
        %4883 = vmatprep.subr.mxu0 %v4650
        %4884 = vmatpush1.msra.mxu0 %v4649
        %4885 = vmatprep.subr.mxu0 %v4653
        %4886 = vmatpush1.msra.mxu0 %v4652
        %4887 = vmatprep.subr.mxu0 %v4656
        %4888 = vmatpush1.msra.mxu0 %v4655
        %4889 = vmatprep.subr.mxu0 %v4659
        %4890 = vmatpush1.msra.mxu0 %v4658
        %4891 = vmatprep.subr.mxu0 %v4662
        %4892 = vmatpush1.msra.mxu0 %v4661
        %4893 = vmatprep.subr.mxu0 %v4665
        %4894 = vmatpush1.msra.mxu0 %v4664
        %4895 = vmatprep.subr.mxu0 %v4668
        %4896 = vmatpush1.msra.mxu0 %v4667
        %4897 = vmatprep.subr.mxu0 %v4671
        %4898 = vmatpush1.msra.mxu0 %v4670
        %4899 = vmatprep.subr.mxu0 %v4674
        %4900 = vmatpush1.msra.mxu0 %v4673
        %4901 = vmatprep.subr.mxu0 %v4677
        %4902 = vmatpush1.msra.mxu0 %v4676
        %4903 = vmatprep.subr.mxu0 %v4680
        %4904 = vmatpush1.msra.mxu0 %v4679
        %4905 = vmatprep.subr.mxu0 %v4683
        %4906 = vmatpush1.msra.mxu0 %v4682
        %4907 = vmatprep.subr.mxu0 %v4686
        %4908 = vmatpush1.msra.mxu0 %v4685
        %4909 = vmatprep.mubr.f32.mxu0 %v4573
        %4910 = vmatmul.mubr.f32.gmra.mrb[0].mxu0 %v4572
        %v4911 = vpop.f32.mrb[0].mxu0
        %v4912 = vadd.f32 %v4815, %v4911
        %v4913 = vpop.f32.mrb[0].mxu0
        %v4914 = vadd.f32 %v4815, %v4913
        %4915 = vmatprep.mubr.f32.mxu0 %v4578
        %4916 = vmatmul.mubr.f32.gmra.mrb[0].mxu0 %v4577
        %v4917 = vpop.f32.mrb[0].mxu0
        %v4918 = vadd.f32 %v4820, %v4917
        %v4919 = vpop.f32.mrb[0].mxu0
        %v4920 = vadd.f32 %v4820, %v4919
        %4921 = vmatprep.mubr.f32.mxu0 %v4583
        %4922 = vmatmul.mubr.f32.gmra.mrb[0].mxu0 %v4582
        %v4923 = vpop.f32.mrb[0].mxu0
        %v4924 = vadd.f32 %v4825, %v4923
        %v4925 = vpop.f32.mrb[0].mxu0
        %v4926 = vadd.f32 %v4825, %v4925
        %4927 = vmatprep.mubr.f32.mxu0 %v4588
        %4928 = vmatmul.mubr.f32.gmra.mrb[0].mxu0 %v4587
        %v4929 = vpop.f32.mrb[0].mxu0
        %v4930 = vadd.f32 %v4830, %v4929
        %v4931 = vpop.f32.mrb[0].mxu0
        %v4932 = vadd.f32 %v4830, %v4931
        %4933 = vdwg.mxu0
        %4934 = vmatprep.subr.mxu0 %v4689
        %4935 = vmatpush1.msra.mxu0 %v4688
        %4936 = vmatprep.subr.mxu0 %v4692
        %4937 = vmatpush1.msra.mxu0 %v4691
        %4938 = vmatprep.subr.mxu0 %v4695
        %4939 = vmatpush1.msra.mxu0 %v4694
        %4940 = vmatprep.subr.mxu0 %v4698
        %4941 = vmatpush1.msra.mxu0 %v4697
        %4942 = vmatprep.subr.mxu0 %v4701
        %4943 = vmatpush1.msra.mxu0 %v4700
        %4944 = vmatprep.subr.mxu0 %v4704
        %4945 = vmatpush1.msra.mxu0 %v4703
        %4946 = vmatprep.subr.mxu0 %v4707
        %4947 = vmatpush1.msra.mxu0 %v4706
        %4948 = vmatprep.subr.mxu0 %v4710
        %4949 = vmatpush1.msra.mxu0 %v4709
        %4950 = vmatprep.subr.mxu0 %v4713
        %4951 = vmatpush1.msra.mxu0 %v4712
        %4952 = vmatprep.subr.mxu0 %v4716
        %4953 = vmatpush1.msra.mxu0 %v4715
        %4954 = vmatprep.subr.mxu0 %v4719
        %4955 = vmatpush1.msra.mxu0 %v4718
        %4956 = vmatprep.subr.mxu0 %v4722
        %4957 = vmatpush1.msra.mxu0 %v4721
        %4958 = vmatprep.subr.mxu0 %v4725
        %4959 = vmatpush1.msra.mxu0 %v4724
        %4960 = vmatprep.subr.mxu0 %v4728
        %4961 = vmatpush1.msra.mxu0 %v4727
        %4962 = vmatprep.subr.mxu0 %v4731
        %4963 = vmatpush1.msra.mxu0 %v4730
        %4964 = vmatprep.subr.mxu0 %v4734
        %4965 = vmatpush1.msra.mxu0 %v4733
        %4966 = vmatprep.subr.mxu0 %v4737
        %4967 = vmatpush1.msra.mxu0 %v4736
        %4968 = vmatprep.subr.mxu0 %v4740
        %4969 = vmatpush1.msra.mxu0 %v4739
        %4970 = vmatprep.subr.mxu0 %v4743
        %4971 = vmatpush1.msra.mxu0 %v4742
        %4972 = vmatprep.subr.mxu0 %v4746
        %4973 = vmatpush1.msra.mxu0 %v4745
        %4974 = vmatprep.subr.mxu0 %v4749
        %4975 = vmatpush1.msra.mxu0 %v4748
        %4976 = vmatprep.subr.mxu0 %v4752
        %4977 = vmatpush1.msra.mxu0 %v4751
        %4978 = vmatprep.subr.mxu0 %v4755
        %4979 = vmatpush1.msra.mxu0 %v4754
        %4980 = vmatprep.subr.mxu0 %v4758
        %4981 = vmatpush1.msra.mxu0 %v4757
        %4982 = vmatprep.subr.mxu0 %v4761
        %4983 = vmatpush1.msra.mxu0 %v4760
        %4984 = vmatprep.subr.mxu0 %v4764
        %4985 = vmatpush1.msra.mxu0 %v4763
        %4986 = vmatprep.subr.mxu0 %v4767
        %4987 = vmatpush1.msra.mxu0 %v4766
        %4988 = vmatprep.subr.mxu0 %v4770
        %4989 = vmatpush1.msra.mxu0 %v4769
        %4990 = vmatprep.subr.mxu0 %v4773
        %4991 = vmatpush1.msra.mxu0 %v4772
        %4992 = vmatprep.subr.mxu0 %v4776
        %4993 = vmatpush1.msra.mxu0 %v4775
        %4994 = vmatprep.subr.mxu0 %v4779
        %4995 = vmatpush1.msra.mxu0 %v4778
        %4996 = vmatprep.subr.mxu0 %v4782
        %4997 = vmatpush1.msra.mxu0 %v4781
        %4998 = vmatprep.mubr.f32.mxu0 %v4575
        %4999 = vmatmul.mubr.f32.gmra.mrb[0].mxu0 %v4574
        %v5000 = vpop.f32.mrb[0].mxu0
        %v5001 = vadd.f32 %v4912, %v5000
        %v5002 = vpop.f32.mrb[0].mxu0
        %v5003 = vadd.f32 %v4914, %v5002
        %5004 = vmatprep.mubr.f32.mxu0 %v4580
        %5005 = vmatmul.mubr.f32.gmra.mrb[0].mxu0 %v4579
        %v5006 = vpop.f32.mrb[0].mxu0
        %v5007 = vadd.f32 %v4918, %v5006
        %v5008 = vpop.f32.mrb[0].mxu0
        %v5009 = vadd.f32 %v4920, %v5008
        %5010 = vmatprep.mubr.f32.mxu0 %v4585
        %5011 = vmatmul.mubr.f32.gmra.mrb[0].mxu0 %v4584
        %v5012 = vpop.f32.mrb[0].mxu0
        %v5013 = vadd.f32 %v4924, %v5012
        %v5014 = vpop.f32.mrb[0].mxu0
        %v5015 = vadd.f32 %v4926, %v5014
        %5016 = vmatprep.mubr.f32.mxu0 %v4590
        %5017 = vmatmul.mubr.f32.gmra.mrb[0].mxu0 %v4589
        %v5018 = vpop.f32.mrb[0].mxu0
        %v5019 = vadd.f32 %v4930, %v5018
        %v5020 = vpop.f32.mrb[0].mxu0
        %v5021 = vadd.f32 %v4932, %v5020
        %5022 = vdwg.mxu0
        %5023 = vmatprep.subr.mxu0 %v4785
        %5024 = vmatpush1.msra.mxu0 %v4784
        %5025 = vmatprep.subr.mxu0 %v4788
        %5026 = vmatpush1.msra.mxu0 %v4787
        %5027 = vmatprep.subr.mxu0 %v4791
        %5028 = vmatpush1.msra.mxu0 %v4790
        %5029 = vmatprep.subr.mxu0 %v4794
        %5030 = vmatpush1.msra.mxu0 %v4793
        %5031 = vmatprep.subr.mxu0 %v4797
        %5032 = vmatpush1.msra.mxu0 %v4796
        %5033 = vmatprep.subr.mxu0 %v4800
        %5034 = vmatpush1.msra.mxu0 %v4799
        %5035 = vmatprep.subr.mxu0 %v4803
        %5036 = vmatpush1.msra.mxu0 %v4802
        %5037 = vmatprep.subr.mxu0 %v4806
        %5038 = vmatpush1.msra.mxu0 %v4805
        %5039 = vmatprep.subr.mxu0 0.0
        %5040 = vmatpush1.msra.mxu0 0.0
        %5041 = vmatprep.subr.mxu0 0.0
        %5042 = vmatpush1.msra.mxu0 0.0
        %5043 = vmatprep.subr.mxu0 0.0
        %5044 = vmatpush1.msra.mxu0 0.0
        %5045 = vmatprep.subr.mxu0 0.0
        %5046 = vmatpush1.msra.mxu0 0.0
        %5047 = vmatprep.subr.mxu0 0.0
        %5048 = vmatpush1.msra.mxu0 0.0
        %5049 = vmatprep.subr.mxu0 0.0
        %5050 = vmatpush1.msra.mxu0 0.0
        %5051 = vmatprep.subr.mxu0 0.0
        %5052 = vmatpush1.msra.mxu0 0.0
        %5053 = vmatprep.subr.mxu0 0.0
        %5054 = vmatpush1.msra.mxu0 0.0
        %5055 = vmatprep.subr.mxu0 0.0
        %5056 = vmatpush1.msra.mxu0 0.0
        %5057 = vmatprep.subr.mxu0 0.0
        %5058 = vmatpush1.msra.mxu0 0.0
        %5059 = vmatprep.subr.mxu0 0.0
        %5060 = vmatpush1.msra.mxu0 0.0
        %5061 = vmatprep.subr.mxu0 0.0
        %5062 = vmatpush1.msra.mxu0 0.0
        %5063 = vmatprep.subr.mxu0 0.0
        %5064 = vmatpush1.msra.mxu0 0.0
        %5065 = vmatprep.subr.mxu0 0.0
        %5066 = vmatpush1.msra.mxu0 0.0
        %5067 = vmatprep.subr.mxu0 0.0
        %5068 = vmatpush1.msra.mxu0 0.0
        %5069 = vmatprep.subr.mxu0 0.0
        %5070 = vmatpush1.msra.mxu0 0.0
        %5071 = vmatprep.subr.mxu0 0.0
        %5072 = vmatpush1.msra.mxu0 0.0
        %5073 = vmatprep.subr.mxu0 0.0
        %5074 = vmatpush1.msra.mxu0 0.0
        %5075 = vmatprep.subr.mxu0 0.0
        %5076 = vmatpush1.msra.mxu0 0.0
        %5077 = vmatprep.subr.mxu0 0.0
        %5078 = vmatpush1.msra.mxu0 0.0
        %5079 = vmatprep.subr.mxu0 0.0
        %5080 = vmatpush1.msra.mxu0 0.0
        %5081 = vmatprep.subr.mxu0 0.0
        %5082 = vmatpush1.msra.mxu0 0.0
        %5083 = vmatprep.subr.mxu0 0.0
        %5084 = vmatpush1.msra.mxu0 0.0
        %5085 = vmatprep.subr.mxu0 0.0
        %5086 = vmatpush1.msra.mxu0 0.0
        %5087 = vmatprep.mubr.f32.mxu0 0.0
        %5088 = vmatmul.mubr.f32.gmra.mrb[0].mxu0 %v4834
        %v5089 = vpop.f32.mrb[0].mxu0
        %v5090 = vadd.f32 %v5001, %v5089
        %v5091 = vpop.f32.mrb[0].mxu0
        %v5092 = vadd.f32 %v5003, %v5091
        %5093 = vmatprep.mubr.f32.mxu0 0.0
        %5094 = vmatmul.mubr.f32.gmra.mrb[0].mxu0 %v4837
        %v5095 = vpop.f32.mrb[0].mxu0
        %v5096 = vadd.f32 %v5007, %v5095
        %v5097 = vpop.f32.mrb[0].mxu0
        %v5098 = vadd.f32 %v5009, %v5097
        %5099 = vmatprep.mubr.f32.mxu0 0.0
        %5100 = vmatmul.mubr.f32.gmra.mrb[0].mxu0 %v4840
        %v5101 = vpop.f32.mrb[0].mxu0
        %v5102 = vadd.f32 %v5013, %v5101
        %v5103 = vpop.f32.mrb[0].mxu0
        %v5104 = vadd.f32 %v5015, %v5103
        %5105 = vmatprep.mubr.f32.mxu0 0.0
        %5106 = vmatmul.mubr.f32.gmra.mrb[0].mxu0 %v4843
        %v5107 = vpop.f32.mrb[0].mxu0
        %v5108 = vadd.f32 %v5019, %v5107
        %v5109 = vpop.f32.mrb[0].mxu0
        %v5110 = vadd.f32 %v5021, %v5109
        %5111 = vdwg.mxu0
        %5112 = vmatprep.subr.mxu0 0.0
        %5113 = vmatpush1.msra.mxu0 %v4594
        %5114 = vmatprep.subr.mxu0 0.0
        %5115 = vmatpush1.msra.mxu0 %v4597
        %5116 = vmatprep.subr.mxu0 0.0
        %5117 = vmatpush1.msra.mxu0 %v4600
        %5118 = vmatprep.subr.mxu0 0.0
        %5119 = vmatpush1.msra.mxu0 %v4603
        %5120 = vmatprep.subr.mxu0 0.0
        %5121 = vmatpush1.msra.mxu0 %v4606
        %5122 = vmatprep.subr.mxu0 0.0
        %5123 = vmatpush1.msra.mxu0 %v4609
        %5124 = vmatprep.subr.mxu0 0.0
        %5125 = vmatpush1.msra.mxu0 %v4612
        %5126 = vmatprep.subr.mxu0 0.0
        %5127 = vmatpush1.msra.mxu0 %v4615
        %5128 = vmatprep.subr.mxu0 0.0
        %5129 = vmatpush1.msra.mxu0 %v4618
        %5130 = vmatprep.subr.mxu0 0.0
        %5131 = vmatpush1.msra.mxu0 %v4621
        %5132 = vmatprep.subr.mxu0 0.0
        %5133 = vmatpush1.msra.mxu0 %v4624
        %5134 = vmatprep.subr.mxu0 0.0
        %5135 = vmatpush1.msra.mxu0 %v4627
        %5136 = vmatprep.subr.mxu0 0.0
        %5137 = vmatpush1.msra.mxu0 %v4630
        %5138 = vmatprep.subr.mxu0 0.0
        %5139 = vmatpush1.msra.mxu0 %v4633
        %5140 = vmatprep.subr.mxu0 0.0
        %5141 = vmatpush1.msra.mxu0 %v4636
        %5142 = vmatprep.subr.mxu0 0.0
        %5143 = vmatpush1.msra.mxu0 %v4639
        %5144 = vmatprep.subr.mxu0 0.0
        %5145 = vmatpush1.msra.mxu0 %v4642
        %5146 = vmatprep.subr.mxu0 0.0
        %5147 = vmatpush1.msra.mxu0 %v4645
        %5148 = vmatprep.subr.mxu0 0.0
        %5149 = vmatpush1.msra.mxu0 %v4648
        %5150 = vmatprep.subr.mxu0 0.0
        %5151 = vmatpush1.msra.mxu0 %v4651
        %5152 = vmatprep.subr.mxu0 0.0
        %5153 = vmatpush1.msra.mxu0 %v4654
        %5154 = vmatprep.subr.mxu0 0.0
        %5155 = vmatpush1.msra.mxu0 %v4657
        %5156 = vmatprep.subr.mxu0 0.0
        %5157 = vmatpush1.msra.mxu0 %v4660
        %5158 = vmatprep.subr.mxu0 0.0
        %5159 = vmatpush1.msra.mxu0 %v4663
        %5160 = vmatprep.subr.mxu0 0.0
        %5161 = vmatpush1.msra.mxu0 %v4666
        %5162 = vmatprep.subr.mxu0 0.0
        %5163 = vmatpush1.msra.mxu0 %v4669
        %5164 = vmatprep.subr.mxu0 0.0
        %5165 = vmatpush1.msra.mxu0 %v4672
        %5166 = vmatprep.subr.mxu0 0.0
        %5167 = vmatpush1.msra.mxu0 %v4675
        %5168 = vmatprep.subr.mxu0 0.0
        %5169 = vmatpush1.msra.mxu0 %v4678
        %5170 = vmatprep.subr.mxu0 0.0
        %5171 = vmatpush1.msra.mxu0 %v4681
        %5172 = vmatprep.subr.mxu0 0.0
        %5173 = vmatpush1.msra.mxu0 %v4684
        %5174 = vmatprep.subr.mxu0 0.0
        %5175 = vmatpush1.msra.mxu0 %v4687
        %5176 = vmatprep.mubr.f32.mxu0 %v4573
        %5177 = vmatmul.mubr.f32.gmra.mrb[0].mxu0 %v4572
        %v5178 = vpop.f32.mrb[0].mxu0
        %v5179 = vadd.f32 %v4815, %v5178
        %v5180 = vpop.f32.mrb[0].mxu0
        %5181 = vmatprep.mubr.f32.mxu0 %v4578
        %5182 = vmatmul.mubr.f32.gmra.mrb[0].mxu0 %v4577
        %v5183 = vpop.f32.mrb[0].mxu0
        %v5184 = vadd.f32 %v4820, %v5183
        %v5185 = vpop.f32.mrb[0].mxu0
        %5186 = vmatprep.mubr.f32.mxu0 %v4583
        %5187 = vmatmul.mubr.f32.gmra.mrb[0].mxu0 %v4582
        %v5188 = vpop.f32.mrb[0].mxu0
        %v5189 = vadd.f32 %v4825, %v5188
        %v5190 = vpop.f32.mrb[0].mxu0
        %5191 = vmatprep.mubr.f32.mxu0 %v4588
        %5192 = vmatmul.mubr.f32.gmra.mrb[0].mxu0 %v4587
        %v5193 = vpop.f32.mrb[0].mxu0
        %v5194 = vadd.f32 %v4830, %v5193
        %v5195 = vpop.f32.mrb[0].mxu0
        %5196 = vdwg.mxu0
        %5197 = vmatprep.subr.mxu0 0.0
        %5198 = vmatpush1.msra.mxu0 %v4690
        %5199 = vmatprep.subr.mxu0 0.0
        %5200 = vmatpush1.msra.mxu0 %v4693
        %5201 = vmatprep.subr.mxu0 0.0
        %5202 = vmatpush1.msra.mxu0 %v4696
        %5203 = vmatprep.subr.mxu0 0.0
        %5204 = vmatpush1.msra.mxu0 %v4699
        %5205 = vmatprep.subr.mxu0 0.0
        %5206 = vmatpush1.msra.mxu0 %v4702
        %5207 = vmatprep.subr.mxu0 0.0
        %5208 = vmatpush1.msra.mxu0 %v4705
        %5209 = vmatprep.subr.mxu0 0.0
        %5210 = vmatpush1.msra.mxu0 %v4708
        %5211 = vmatprep.subr.mxu0 0.0
        %5212 = vmatpush1.msra.mxu0 %v4711
        %5213 = vmatprep.subr.mxu0 0.0
        %5214 = vmatpush1.msra.mxu0 %v4714
        %5215 = vmatprep.subr.mxu0 0.0
        %5216 = vmatpush1.msra.mxu0 %v4717
        %5217 = vmatprep.subr.mxu0 0.0
        %5218 = vmatpush1.msra.mxu0 %v4720
        %5219 = vmatprep.subr.mxu0 0.0
        %5220 = vmatpush1.msra.mxu0 %v4723
        %5221 = vmatprep.subr.mxu0 0.0
        %5222 = vmatpush1.msra.mxu0 %v4726
        %5223 = vmatprep.subr.mxu0 0.0
        %5224 = vmatpush1.msra.mxu0 %v4729
        %5225 = vmatprep.subr.mxu0 0.0
        %5226 = vmatpush1.msra.mxu0 %v4732
        %5227 = vmatprep.subr.mxu0 0.0
        %5228 = vmatpush1.msra.mxu0 %v4735
        %5229 = vmatprep.subr.mxu0 0.0
        %5230 = vmatpush1.msra.mxu0 %v4738
        %5231 = vmatprep.subr.mxu0 0.0
        %5232 = vmatpush1.msra.mxu0 %v4741
        %5233 = vmatprep.subr.mxu0 0.0
        %5234 = vmatpush1.msra.mxu0 %v4744
        %5235 = vmatprep.subr.mxu0 0.0
        %5236 = vmatpush1.msra.mxu0 %v4747
        %5237 = vmatprep.subr.mxu0 0.0
        %5238 = vmatpush1.msra.mxu0 %v4750
        %5239 = vmatprep.subr.mxu0 0.0
        %5240 = vmatpush1.msra.mxu0 %v4753
        %5241 = vmatprep.subr.mxu0 0.0
        %5242 = vmatpush1.msra.mxu0 %v4756
        %5243 = vmatprep.subr.mxu0 0.0
        %5244 = vmatpush1.msra.mxu0 %v4759
        %5245 = vmatprep.subr.mxu0 0.0
        %5246 = vmatpush1.msra.mxu0 %v4762
        %5247 = vmatprep.subr.mxu0 0.0
        %5248 = vmatpush1.msra.mxu0 %v4765
        %5249 = vmatprep.subr.mxu0 0.0
        %5250 = vmatpush1.msra.mxu0 %v4768
        %5251 = vmatprep.subr.mxu0 0.0
        %5252 = vmatpush1.msra.mxu0 %v4771
        %5253 = vmatprep.subr.mxu0 0.0
        %5254 = vmatpush1.msra.mxu0 %v4774
        %5255 = vmatprep.subr.mxu0 0.0
        %5256 = vmatpush1.msra.mxu0 %v4777
        %5257 = vmatprep.subr.mxu0 0.0
        %5258 = vmatpush1.msra.mxu0 %v4780
        %5259 = vmatprep.subr.mxu0 0.0
        %5260 = vmatpush1.msra.mxu0 %v4783
        %5261 = vmatprep.mubr.f32.mxu0 %v4575
        %5262 = vmatmul.mubr.f32.gmra.mrb[0].mxu0 %v4574
        %v5263 = vpop.f32.mrb[0].mxu0
        %v5264 = vadd.f32 %v5179, %v5263
        %v5265 = vpop.f32.mrb[0].mxu0
        %5266 = vmatprep.mubr.f32.mxu0 %v4580
        %5267 = vmatmul.mubr.f32.gmra.mrb[0].mxu0 %v4579
        %v5268 = vpop.f32.mrb[0].mxu0
        %v5269 = vadd.f32 %v5184, %v5268
        %v5270 = vpop.f32.mrb[0].mxu0
        %5271 = vmatprep.mubr.f32.mxu0 %v4585
        %5272 = vmatmul.mubr.f32.gmra.mrb[0].mxu0 %v4584
        %v5273 = vpop.f32.mrb[0].mxu0
        %v5274 = vadd.f32 %v5189, %v5273
        %v5275 = vpop.f32.mrb[0].mxu0
        %5276 = vmatprep.mubr.f32.mxu0 %v4590
        %5277 = vmatmul.mubr.f32.gmra.mrb[0].mxu0 %v4589
        %v5278 = vpop.f32.mrb[0].mxu0
        %v5279 = vadd.f32 %v5194, %v5278
        %v5280 = vpop.f32.mrb[0].mxu0
        %5281 = vdwg.mxu0
        %5282 = vmatprep.subr.mxu0 0.0
        %5283 = vmatpush1.msra.mxu0 %v4786
        %5284 = vmatprep.subr.mxu0 0.0
        %5285 = vmatpush1.msra.mxu0 %v4789
        %5286 = vmatprep.subr.mxu0 0.0
        %5287 = vmatpush1.msra.mxu0 %v4792
        %5288 = vmatprep.subr.mxu0 0.0
        %5289 = vmatpush1.msra.mxu0 %v4795
        %5290 = vmatprep.subr.mxu0 0.0
        %5291 = vmatpush1.msra.mxu0 %v4798
        %5292 = vmatprep.subr.mxu0 0.0
        %5293 = vmatpush1.msra.mxu0 %v4801
        %5294 = vmatprep.subr.mxu0 0.0
        %5295 = vmatpush1.msra.mxu0 %v4804
        %5296 = vmatprep.subr.mxu0 0.0
        %5297 = vmatpush1.msra.mxu0 %v4807
        %5298 = vmatprep.subr.mxu0 0.0
        %5299 = vmatpush1.msra.mxu0 0.0
        %5300 = vmatprep.subr.mxu0 0.0
        %5301 = vmatpush1.msra.mxu0 0.0
        %5302 = vmatprep.subr.mxu0 0.0
        %5303 = vmatpush1.msra.mxu0 0.0
        %5304 = vmatprep.subr.mxu0 0.0
        %5305 = vmatpush1.msra.mxu0 0.0
        %5306 = vmatprep.subr.mxu0 0.0
        %5307 = vmatpush1.msra.mxu0 0.0
        %5308 = vmatprep.subr.mxu0 0.0
        %5309 = vmatpush1.msra.mxu0 0.0
        %5310 = vmatprep.subr.mxu0 0.0
        %5311 = vmatpush1.msra.mxu0 0.0
        %5312 = vmatprep.subr.mxu0 0.0
        %5313 = vmatpush1.msra.mxu0 0.0
        %5314 = vmatprep.subr.mxu0 0.0
        %5315 = vmatpush1.msra.mxu0 0.0
        %5316 = vmatprep.subr.mxu0 0.0
        %5317 = vmatpush1.msra.mxu0 0.0
        %5318 = vmatprep.subr.mxu0 0.0
        %5319 = vmatpush1.msra.mxu0 0.0
        %5320 = vmatprep.subr.mxu0 0.0
        %5321 = vmatpush1.msra.mxu0 0.0
        %5322 = vmatprep.subr.mxu0 0.0
        %5323 = vmatpush1.msra.mxu0 0.0
        %5324 = vmatprep.subr.mxu0 0.0
        %5325 = vmatpush1.msra.mxu0 0.0
        %5326 = vmatprep.subr.mxu0 0.0
        %5327 = vmatpush1.msra.mxu0 0.0
        %5328 = vmatprep.subr.mxu0 0.0
        %5329 = vmatpush1.msra.mxu0 0.0
        %5330 = vmatprep.subr.mxu0 0.0
        %5331 = vmatpush1.msra.mxu0 0.0
        %5332 = vmatprep.subr.mxu0 0.0
        %5333 = vmatpush1.msra.mxu0 0.0
        %5334 = vmatprep.subr.mxu0 0.0
        %5335 = vmatpush1.msra.mxu0 0.0
        %5336 = vmatprep.subr.mxu0 0.0
        %5337 = vmatpush1.msra.mxu0 0.0
        %5338 = vmatprep.subr.mxu0 0.0
        %5339 = vmatpush1.msra.mxu0 0.0
        %5340 = vmatprep.subr.mxu0 0.0
        %5341 = vmatpush1.msra.mxu0 0.0
        %5342 = vmatprep.subr.mxu0 0.0
        %5343 = vmatpush1.msra.mxu0 0.0
        %5344 = vmatprep.subr.mxu0 0.0
        %5345 = vmatpush1.msra.mxu0 0.0
        %5346 = vmatprep.mubr.f32.mxu0 0.0
        %5347 = vmatmul.mubr.f32.gmra.mrb[0].mxu0 %v4834
        %v5348 = vpop.f32.mrb[0].mxu0
        %v5349 = vadd.f32 %v5264, %v5348
        %v5350 = vpop.f32.mrb[0].mxu0
        %5351 = vmatprep.mubr.f32.mxu0 0.0
        %5352 = vmatmul.mubr.f32.gmra.mrb[0].mxu0 %v4837
        %v5353 = vpop.f32.mrb[0].mxu0
        %v5354 = vadd.f32 %v5269, %v5353
        %v5355 = vpop.f32.mrb[0].mxu0
        %5356 = vmatprep.mubr.f32.mxu0 0.0
        %5357 = vmatmul.mubr.f32.gmra.mrb[0].mxu0 %v4840
        %v5358 = vpop.f32.mrb[0].mxu0
        %v5359 = vadd.f32 %v5274, %v5358
        %v5360 = vpop.f32.mrb[0].mxu0
        %5361 = vmatprep.mubr.f32.mxu0 0.0
        %5362 = vmatmul.mubr.f32.gmra.mrb[0].mxu0 %v4843
        %v5363 = vpop.f32.mrb[0].mxu0
        %v5364 = vadd.f32 %v5279, %v5363
        %v5365 = vpop.f32.mrb[0].mxu0
        %5366 = vdwg.mxu0
        %v5367 = vmax.f32 %v5090, 0.0
        %v5368 = vmax.f32 %v5092, 0.0
        %v5369 = vmax.f32 %v5349, 0.0
        %v5370 = vmax.f32 %v5096, 0.0
        %v5371 = vmax.f32 %v5098, 0.0
        %v5372 = vmax.f32 %v5354, 0.0
        %v5373 = vmax.f32 %v5102, 0.0
        %v5374 = vmax.f32 %v5104, 0.0
        %v5375 = vmax.f32 %v5359, 0.0
        %v5376 = vmax.f32 %v5108, 0.0
        %v5377 = vmax.f32 %v5110, 0.0
        %v5378 = vmax.f32 %v5364, 0.0
        %v5379 = vmul.f32 %v1351, %v5367
        %v5380 = vmul.f32 %v1355, %v5368
        %v5381 = vmul.f32 %v1359, %v5369
        %v5382 = vmul.f32 %v1351, %v5370
        %v5383 = vmul.f32 %v1355, %v5371
        %v5384 = vmul.f32 %v1359, %v5372
        %v5385 = vmul.f32 %v1351, %v5373
        %v5386 = vmul.f32 %v1355, %v5374
        %v5387 = vmul.f32 %v1359, %v5375
        %v5388 = vmul.f32 %v1351, %v5376
        %v5389 = vmul.f32 %v1355, %v5377
        %v5390 = vmul.f32 %v1359, %v5378
        %5391 = vst [vmem:[#allocation4 + $0x8] sm:$0xff] %v5379
        %5392 = vst [vmem:[#allocation4 + $0x10] sm:$0xff] %v5380
        %5393 = vst [vmem:[#allocation4 + $0x18] sm:$0xff] %v5381
        %5394 = vst [vmem:[#allocation4 + $0x30] sm:$0xff] %v5382
        %5395 = vst [vmem:[#allocation4 + $0x38] sm:$0xff] %v5383
        %5396 = vst [vmem:[#allocation4 + $0x40] sm:$0xff] %v5384
        %5397 = vst [vmem:[#allocation4 + $0x58] sm:$0xff] %v5385
        %5398 = vst [vmem:[#allocation4 + $0x60] sm:$0xff] %v5386
        %5399 = vst [vmem:[#allocation4 + $0x68] sm:$0xff] %v5387
        %5400 = vst [vmem:[#allocation4 + $0x80] sm:$0xff] %v5388
        %5401 = vst [vmem:[#allocation4 + $0x88] sm:$0xff] %v5389
        %5402 = vst [vmem:[#allocation4 + $0x90] sm:$0xff] %v5390
        %v5403 = vld [vmem:[#allocation4] sm:$0xff]
        %v5404 = vld [vmem:[#allocation4 + $0x8] sm:$0xff]
        %v5405 = vld [vmem:[#allocation4 + $0x10] sm:$0xff]
        %v5406 = vld [vmem:[#allocation4 + $0x18] sm:$0xff]
        %v5407 = vld [vmem:[#allocation4 + $0x28] sm:$0xff]
        %v5408 = vld [vmem:[#allocation4 + $0x30] sm:$0xff]
        %v5409 = vld [vmem:[#allocation4 + $0x38] sm:$0xff]
        %v5410 = vld [vmem:[#allocation4 + $0x40] sm:$0xff]
        %v5411 = vld [vmem:[#allocation4 + $0x50] sm:$0xff]
        %v5412 = vld [vmem:[#allocation4 + $0x58] sm:$0xff]
        %v5413 = vld [vmem:[#allocation4 + $0x60] sm:$0xff]
        %v5414 = vld [vmem:[#allocation4 + $0x68] sm:$0xff]
        %v5415 = vld [vmem:[#allocation4 + $0x78] sm:$0xff]
        %v5416 = vld [vmem:[#allocation4 + $0x80] sm:$0xff]
        %v5417 = vld [vmem:[#allocation4 + $0x88] sm:$0xff]
        %v5418 = vld [vmem:[#allocation4 + $0x90] sm:$0xff]
        %5435 = vrot.lane.b32.xlu0 %v5403, 19
        %v5436 = vpop.permute.xlu0 %5435
        %5437 = vrot.lane.b32.xlu0 %v5404, 19
        %v5438 = vpop.permute.xlu0 %5437
        %5439 = vrot.lane.b32.xlu0 %v5405, 19
        %v5440 = vpop.permute.xlu0 %5439
        %5441 = vrot.lane.b32.xlu0 %v5406, 19
        %v5442 = vpop.permute.xlu0 %5441
        %5443 = vrot.lane.b32.xlu0 %v5407, 19
        %v5444 = vpop.permute.xlu0 %5443
        %5445 = vrot.lane.b32.xlu0 %v5408, 19
        %v5446 = vpop.permute.xlu0 %5445
        %5447 = vrot.lane.b32.xlu0 %v5409, 19
        %v5448 = vpop.permute.xlu0 %5447
        %5449 = vrot.lane.b32.xlu0 %v5410, 19
        %v5450 = vpop.permute.xlu0 %5449
        %5451 = vrot.lane.b32.xlu0 %v5411, 19
        %v5452 = vpop.permute.xlu0 %5451
        %5453 = vrot.lane.b32.xlu0 %v5412, 19
        %v5454 = vpop.permute.xlu0 %5453
        %5455 = vrot.lane.b32.xlu0 %v5413, 19
        %v5456 = vpop.permute.xlu0 %5455
        %5457 = vrot.lane.b32.xlu0 %v5414, 19
        %v5458 = vpop.permute.xlu0 %5457
        %5459 = vrot.lane.b32.xlu0 %v5415, 19
        %v5460 = vpop.permute.xlu0 %5459
        %5461 = vrot.lane.b32.xlu0 %v5416, 19
        %v5462 = vpop.permute.xlu0 %5461
        %5463 = vrot.lane.b32.xlu0 %v5417, 19
        %v5464 = vpop.permute.xlu0 %5463
        %5465 = vrot.lane.b32.xlu0 %v5418, 19
        %v5466 = vpop.permute.xlu0 %5465
        %v5467 = vsel %vm600, %v5436, %v5438
        %v5468 = vsel %vm600, %v5438, %v5440
        %v5469 = vsel %vm600, %v5440, %v5442
        %v5470 = vsel %vm600, %v5444, %v5446
        %v5471 = vsel %vm600, %v5446, %v5448
        %v5472 = vsel %vm600, %v5448, %v5450
        %v5473 = vsel %vm600, %v5452, %v5454
        %v5474 = vsel %vm600, %v5454, %v5456
        %v5475 = vsel %vm600, %v5456, %v5458
        %v5476 = vsel %vm600, %v5460, %v5462
        %v5477 = vsel %vm600, %v5462, %v5464
        %v5478 = vsel %vm600, %v5464, %v5466
        %5491 = vst [vmem:[#allocation5] sm:$0xff] %v5467
        %5492 = vst [vmem:[#allocation5 + $0x8] sm:$0xff] %v5468
        %5493 = vst [vmem:[#allocation5 + $0x10] sm:$0xff] %v5469
        %5494 = vst [vmem:[#allocation5 + $0x18] sm:$0xff] %v5470
        %5495 = vst [vmem:[#allocation5 + $0x20] sm:$0xff] %v5471
        %5496 = vst [vmem:[#allocation5 + $0x28] sm:$0xff] %v5472
        %5497 = vst [vmem:[#allocation5 + $0x30] sm:$0xff] %v5473
        %5498 = vst [vmem:[#allocation5 + $0x38] sm:$0xff] %v5474
        %5499 = vst [vmem:[#allocation5 + $0x40] sm:$0xff] %v5475
        %5500 = vst [vmem:[#allocation5 + $0x48] sm:$0xff] %v5476
        %5501 = vst [vmem:[#allocation5 + $0x50] sm:$0xff] %v5477
        %5502 = vst [vmem:[#allocation5 + $0x58] sm:$0xff] %v5478
        %v5503 = vld [vmem:[#allocation4] sm:$0xff]
        %v5504 = vld [vmem:[#allocation4 + $0x8] sm:$0xff]
        %v5505 = vld [vmem:[#allocation4 + $0x10] sm:$0xff]
        %v5506 = vld [vmem:[#allocation4 + $0x18] sm:$0xff]
        %v5507 = vld [vmem:[#allocation4 + $0x28] sm:$0xff]
        %v5508 = vld [vmem:[#allocation4 + $0x30] sm:$0xff]
        %v5509 = vld [vmem:[#allocation4 + $0x38] sm:$0xff]
        %v5510 = vld [vmem:[#allocation4 + $0x40] sm:$0xff]
        %v5511 = vld [vmem:[#allocation4 + $0x50] sm:$0xff]
        %v5512 = vld [vmem:[#allocation4 + $0x58] sm:$0xff]
        %v5513 = vld [vmem:[#allocation4 + $0x60] sm:$0xff]
        %v5514 = vld [vmem:[#allocation4 + $0x68] sm:$0xff]
        %v5515 = vld [vmem:[#allocation4 + $0x78] sm:$0xff]
        %v5516 = vld [vmem:[#allocation4 + $0x80] sm:$0xff]
        %v5517 = vld [vmem:[#allocation4 + $0x88] sm:$0xff]
        %v5518 = vld [vmem:[#allocation4 + $0x90] sm:$0xff]
        %5535 = vrot.lane.b32.xlu0 %v5503, 18
        %v5536 = vpop.permute.xlu0 %5535
        %5537 = vrot.lane.b32.xlu0 %v5504, 18
        %v5538 = vpop.permute.xlu0 %5537
        %5539 = vrot.lane.b32.xlu0 %v5505, 18
        %v5540 = vpop.permute.xlu0 %5539
        %5541 = vrot.lane.b32.xlu0 %v5506, 18
        %v5542 = vpop.permute.xlu0 %5541
        %5543 = vrot.lane.b32.xlu0 %v5507, 18
        %v5544 = vpop.permute.xlu0 %5543
        %5545 = vrot.lane.b32.xlu0 %v5508, 18
        %v5546 = vpop.permute.xlu0 %5545
        %5547 = vrot.lane.b32.xlu0 %v5509, 18
        %v5548 = vpop.permute.xlu0 %5547
        %5549 = vrot.lane.b32.xlu0 %v5510, 18
        %v5550 = vpop.permute.xlu0 %5549
        %5551 = vrot.lane.b32.xlu0 %v5511, 18
        %v5552 = vpop.permute.xlu0 %5551
        %5553 = vrot.lane.b32.xlu0 %v5512, 18
        %v5554 = vpop.permute.xlu0 %5553
        %5555 = vrot.lane.b32.xlu0 %v5513, 18
        %v5556 = vpop.permute.xlu0 %5555
        %5557 = vrot.lane.b32.xlu0 %v5514, 18
        %v5558 = vpop.permute.xlu0 %5557
        %5559 = vrot.lane.b32.xlu0 %v5515, 18
        %v5560 = vpop.permute.xlu0 %5559
        %5561 = vrot.lane.b32.xlu0 %v5516, 18
        %v5562 = vpop.permute.xlu0 %5561
        %5563 = vrot.lane.b32.xlu0 %v5517, 18
        %v5564 = vpop.permute.xlu0 %5563
        %5565 = vrot.lane.b32.xlu0 %v5518, 18
        %v5566 = vpop.permute.xlu0 %5565
        %v5567 = vsel %vm624, %v5536, %v5538
        %v5568 = vsel %vm624, %v5538, %v5540
        %v5569 = vsel %vm624, %v5540, %v5542
        %v5570 = vsel %vm624, %v5544, %v5546
        %v5571 = vsel %vm624, %v5546, %v5548
        %v5572 = vsel %vm624, %v5548, %v5550
        %v5573 = vsel %vm624, %v5552, %v5554
        %v5574 = vsel %vm624, %v5554, %v5556
        %v5575 = vsel %vm624, %v5556, %v5558
        %v5576 = vsel %vm624, %v5560, %v5562
        %v5577 = vsel %vm624, %v5562, %v5564
        %v5578 = vsel %vm624, %v5564, %v5566
        %5591 = vst [vmem:[#allocation5 + $0x60] sm:$0xff] %v5567
        %5592 = vst [vmem:[#allocation5 + $0x68] sm:$0xff] %v5568
        %5593 = vst [vmem:[#allocation5 + $0x70] sm:$0xff] %v5569
        %5594 = vst [vmem:[#allocation5 + $0x78] sm:$0xff] %v5570
        %5595 = vst [vmem:[#allocation5 + $0x80] sm:$0xff] %v5571
        %5596 = vst [vmem:[#allocation5 + $0x88] sm:$0xff] %v5572
        %5597 = vst [vmem:[#allocation5 + $0x90] sm:$0xff] %v5573
        %5598 = vst [vmem:[#allocation5 + $0x98] sm:$0xff] %v5574
        %5599 = vst [vmem:[#allocation5 + $0xa0] sm:$0xff] %v5575
        %5600 = vst [vmem:[#allocation5 + $0xa8] sm:$0xff] %v5576
        %5601 = vst [vmem:[#allocation5 + $0xb0] sm:$0xff] %v5577
        %5602 = vst [vmem:[#allocation5 + $0xb8] sm:$0xff] %v5578
        %v5603 = vld [vmem:[#allocation4] sm:$0xff]
        %v5604 = vld [vmem:[#allocation4 + $0x8] sm:$0xff]
        %v5605 = vld [vmem:[#allocation4 + $0x10] sm:$0xff]
        %v5606 = vld [vmem:[#allocation4 + $0x18] sm:$0xff]
        %v5607 = vld [vmem:[#allocation4 + $0x28] sm:$0xff]
        %v5608 = vld [vmem:[#allocation4 + $0x30] sm:$0xff]
        %v5609 = vld [vmem:[#allocation4 + $0x38] sm:$0xff]
        %v5610 = vld [vmem:[#allocation4 + $0x40] sm:$0xff]
        %v5611 = vld [vmem:[#allocation4 + $0x50] sm:$0xff]
        %v5612 = vld [vmem:[#allocation4 + $0x58] sm:$0xff]
        %v5613 = vld [vmem:[#allocation4 + $0x60] sm:$0xff]
        %v5614 = vld [vmem:[#allocation4 + $0x68] sm:$0xff]
        %v5615 = vld [vmem:[#allocation4 + $0x78] sm:$0xff]
        %v5616 = vld [vmem:[#allocation4 + $0x80] sm:$0xff]
        %v5617 = vld [vmem:[#allocation4 + $0x88] sm:$0xff]
        %v5618 = vld [vmem:[#allocation4 + $0x90] sm:$0xff]
        %5635 = vrot.lane.b32.xlu0 %v5603, 17
        %v5636 = vpop.permute.xlu0 %5635
        %5637 = vrot.lane.b32.xlu0 %v5604, 17
        %v5638 = vpop.permute.xlu0 %5637
        %5639 = vrot.lane.b32.xlu0 %v5605, 17
        %v5640 = vpop.permute.xlu0 %5639
        %5641 = vrot.lane.b32.xlu0 %v5606, 17
        %v5642 = vpop.permute.xlu0 %5641
        %5643 = vrot.lane.b32.xlu0 %v5607, 17
        %v5644 = vpop.permute.xlu0 %5643
        %5645 = vrot.lane.b32.xlu0 %v5608, 17
        %v5646 = vpop.permute.xlu0 %5645
        %5647 = vrot.lane.b32.xlu0 %v5609, 17
        %v5648 = vpop.permute.xlu0 %5647
        %5649 = vrot.lane.b32.xlu0 %v5610, 17
        %v5650 = vpop.permute.xlu0 %5649
        %5651 = vrot.lane.b32.xlu0 %v5611, 17
        %v5652 = vpop.permute.xlu0 %5651
        %5653 = vrot.lane.b32.xlu0 %v5612, 17
        %v5654 = vpop.permute.xlu0 %5653
        %5655 = vrot.lane.b32.xlu0 %v5613, 17
        %v5656 = vpop.permute.xlu0 %5655
        %5657 = vrot.lane.b32.xlu0 %v5614, 17
        %v5658 = vpop.permute.xlu0 %5657
        %5659 = vrot.lane.b32.xlu0 %v5615, 17
        %v5660 = vpop.permute.xlu0 %5659
        %5661 = vrot.lane.b32.xlu0 %v5616, 17
        %v5662 = vpop.permute.xlu0 %5661
        %5663 = vrot.lane.b32.xlu0 %v5617, 17
        %v5664 = vpop.permute.xlu0 %5663
        %5665 = vrot.lane.b32.xlu0 %v5618, 17
        %v5666 = vpop.permute.xlu0 %5665
        %v5667 = vsel %vm648, %v5636, %v5638
        %v5668 = vsel %vm648, %v5638, %v5640
        %v5669 = vsel %vm648, %v5640, %v5642
        %v5670 = vsel %vm648, %v5644, %v5646
        %v5671 = vsel %vm648, %v5646, %v5648
        %v5672 = vsel %vm648, %v5648, %v5650
        %v5673 = vsel %vm648, %v5652, %v5654
        %v5674 = vsel %vm648, %v5654, %v5656
        %v5675 = vsel %vm648, %v5656, %v5658
        %v5676 = vsel %vm648, %v5660, %v5662
        %v5677 = vsel %vm648, %v5662, %v5664
        %v5678 = vsel %vm648, %v5664, %v5666
        %5691 = vst [vmem:[#allocation5 + $0xc0] sm:$0xff] %v5667
        %5692 = vst [vmem:[#allocation5 + $0xc8] sm:$0xff] %v5668
        %5693 = vst [vmem:[#allocation5 + $0xd0] sm:$0xff] %v5669
        %5694 = vst [vmem:[#allocation5 + $0xd8] sm:$0xff] %v5670
        %5695 = vst [vmem:[#allocation5 + $0xe0] sm:$0xff] %v5671
        %5696 = vst [vmem:[#allocation5 + $0xe8] sm:$0xff] %v5672
        %5697 = vst [vmem:[#allocation5 + $0xf0] sm:$0xff] %v5673
        %5698 = vst [vmem:[#allocation5 + $0xf8] sm:$0xff] %v5674
        %5699 = vst [vmem:[#allocation5 + $0x100] sm:$0xff] %v5675
        %5700 = vst [vmem:[#allocation5 + $0x108] sm:$0xff] %v5676
        %5701 = vst [vmem:[#allocation5 + $0x110] sm:$0xff] %v5677
        %5702 = vst [vmem:[#allocation5 + $0x118] sm:$0xff] %v5678
        %v5703 = vld [vmem:[#allocation4] sm:$0xff]
        %v5704 = vld [vmem:[#allocation4 + $0x8] sm:$0xff]
        %v5705 = vld [vmem:[#allocation4 + $0x10] sm:$0xff]
        %v5706 = vld [vmem:[#allocation4 + $0x18] sm:$0xff]
        %v5707 = vld [vmem:[#allocation4 + $0x28] sm:$0xff]
        %v5708 = vld [vmem:[#allocation4 + $0x30] sm:$0xff]
        %v5709 = vld [vmem:[#allocation4 + $0x38] sm:$0xff]
        %v5710 = vld [vmem:[#allocation4 + $0x40] sm:$0xff]
        %v5711 = vld [vmem:[#allocation4 + $0x50] sm:$0xff]
        %v5712 = vld [vmem:[#allocation4 + $0x58] sm:$0xff]
        %v5713 = vld [vmem:[#allocation4 + $0x60] sm:$0xff]
        %v5714 = vld [vmem:[#allocation4 + $0x68] sm:$0xff]
        %v5715 = vld [vmem:[#allocation4 + $0x78] sm:$0xff]
        %v5716 = vld [vmem:[#allocation4 + $0x80] sm:$0xff]
        %v5717 = vld [vmem:[#allocation4 + $0x88] sm:$0xff]
        %v5718 = vld [vmem:[#allocation4 + $0x90] sm:$0xff]
        %5735 = vrot.lane.b32.xlu0 %v5703, 1
        %v5736 = vpop.permute.xlu0 %5735
        %5737 = vrot.lane.b32.xlu0 %v5704, 1
        %v5738 = vpop.permute.xlu0 %5737
        %5739 = vrot.lane.b32.xlu0 %v5705, 1
        %v5740 = vpop.permute.xlu0 %5739
        %5741 = vrot.lane.b32.xlu0 %v5706, 1
        %v5742 = vpop.permute.xlu0 %5741
        %5743 = vrot.lane.b32.xlu0 %v5707, 1
        %v5744 = vpop.permute.xlu0 %5743
        %5745 = vrot.lane.b32.xlu0 %v5708, 1
        %v5746 = vpop.permute.xlu0 %5745
        %5747 = vrot.lane.b32.xlu0 %v5709, 1
        %v5748 = vpop.permute.xlu0 %5747
        %5749 = vrot.lane.b32.xlu0 %v5710, 1
        %v5750 = vpop.permute.xlu0 %5749
        %5751 = vrot.lane.b32.xlu0 %v5711, 1
        %v5752 = vpop.permute.xlu0 %5751
        %5753 = vrot.lane.b32.xlu0 %v5712, 1
        %v5754 = vpop.permute.xlu0 %5753
        %5755 = vrot.lane.b32.xlu0 %v5713, 1
        %v5756 = vpop.permute.xlu0 %5755
        %5757 = vrot.lane.b32.xlu0 %v5714, 1
        %v5758 = vpop.permute.xlu0 %5757
        %5759 = vrot.lane.b32.xlu0 %v5715, 1
        %v5760 = vpop.permute.xlu0 %5759
        %5761 = vrot.lane.b32.xlu0 %v5716, 1
        %v5762 = vpop.permute.xlu0 %5761
        %5763 = vrot.lane.b32.xlu0 %v5717, 1
        %v5764 = vpop.permute.xlu0 %5763
        %5765 = vrot.lane.b32.xlu0 %v5718, 1
        %v5766 = vpop.permute.xlu0 %5765
        %v5767 = vsel %vm672, %v5736, %v5738
        %v5768 = vsel %vm672, %v5738, %v5740
        %v5769 = vsel %vm672, %v5740, %v5742
        %v5770 = vsel %vm672, %v5744, %v5746
        %v5771 = vsel %vm672, %v5746, %v5748
        %v5772 = vsel %vm672, %v5748, %v5750
        %v5773 = vsel %vm672, %v5752, %v5754
        %v5774 = vsel %vm672, %v5754, %v5756
        %v5775 = vsel %vm672, %v5756, %v5758
        %v5776 = vsel %vm672, %v5760, %v5762
        %v5777 = vsel %vm672, %v5762, %v5764
        %v5778 = vsel %vm672, %v5764, %v5766
        %5791 = vst [vmem:[#allocation5 + $0x120] sm:$0xff] %v5767
        %5792 = vst [vmem:[#allocation5 + $0x128] sm:$0xff] %v5768
        %5793 = vst [vmem:[#allocation5 + $0x130] sm:$0xff] %v5769
        %5794 = vst [vmem:[#allocation5 + $0x138] sm:$0xff] %v5770
        %5795 = vst [vmem:[#allocation5 + $0x140] sm:$0xff] %v5771
        %5796 = vst [vmem:[#allocation5 + $0x148] sm:$0xff] %v5772
        %5797 = vst [vmem:[#allocation5 + $0x150] sm:$0xff] %v5773
        %5798 = vst [vmem:[#allocation5 + $0x158] sm:$0xff] %v5774
        %5799 = vst [vmem:[#allocation5 + $0x160] sm:$0xff] %v5775
        %5800 = vst [vmem:[#allocation5 + $0x168] sm:$0xff] %v5776
        %5801 = vst [vmem:[#allocation5 + $0x170] sm:$0xff] %v5777
        %5802 = vst [vmem:[#allocation5 + $0x178] sm:$0xff] %v5778
        %v5803 = vld [vmem:[#allocation4 + $0x8] sm:$0xff]
        %v5804 = vld [vmem:[#allocation4 + $0x10] sm:$0xff]
        %v5805 = vld [vmem:[#allocation4 + $0x18] sm:$0xff]
        %v5806 = vld [vmem:[#allocation4 + $0x30] sm:$0xff]
        %v5807 = vld [vmem:[#allocation4 + $0x38] sm:$0xff]
        %v5808 = vld [vmem:[#allocation4 + $0x40] sm:$0xff]
        %v5809 = vld [vmem:[#allocation4 + $0x58] sm:$0xff]
        %v5810 = vld [vmem:[#allocation4 + $0x60] sm:$0xff]
        %v5811 = vld [vmem:[#allocation4 + $0x68] sm:$0xff]
        %v5812 = vld [vmem:[#allocation4 + $0x80] sm:$0xff]
        %v5813 = vld [vmem:[#allocation4 + $0x88] sm:$0xff]
        %v5814 = vld [vmem:[#allocation4 + $0x90] sm:$0xff]
        %5815 = vst [vmem:[#allocation5 + $0x180] sm:$0xff] %v5803
        %5816 = vst [vmem:[#allocation5 + $0x188] sm:$0xff] %v5804
        %5817 = vst [vmem:[#allocation5 + $0x190] sm:$0xff] %v5805
        %5818 = vst [vmem:[#allocation5 + $0x198] sm:$0xff] %v5806
        %5819 = vst [vmem:[#allocation5 + $0x1a0] sm:$0xff] %v5807
        %5820 = vst [vmem:[#allocation5 + $0x1a8] sm:$0xff] %v5808
        %5821 = vst [vmem:[#allocation5 + $0x1b0] sm:$0xff] %v5809
        %5822 = vst [vmem:[#allocation5 + $0x1b8] sm:$0xff] %v5810
        %5823 = vst [vmem:[#allocation5 + $0x1c0] sm:$0xff] %v5811
        %5824 = vst [vmem:[#allocation5 + $0x1c8] sm:$0xff] %v5812
        %5825 = vst [vmem:[#allocation5 + $0x1d0] sm:$0xff] %v5813
        %5826 = vst [vmem:[#allocation5 + $0x1d8] sm:$0xff] %v5814
        %v5827 = vld [vmem:[#allocation4 + $0x8] sm:$0xff]
        %v5828 = vld [vmem:[#allocation4 + $0x10] sm:$0xff]
        %v5829 = vld [vmem:[#allocation4 + $0x18] sm:$0xff]
        %v5830 = vld [vmem:[#allocation4 + $0x20] sm:$0xff]
        %v5831 = vld [vmem:[#allocation4 + $0x30] sm:$0xff]
        %v5832 = vld [vmem:[#allocation4 + $0x38] sm:$0xff]
        %v5833 = vld [vmem:[#allocation4 + $0x40] sm:$0xff]
        %v5834 = vld [vmem:[#allocation4 + $0x48] sm:$0xff]
        %v5835 = vld [vmem:[#allocation4 + $0x58] sm:$0xff]
        %v5836 = vld [vmem:[#allocation4 + $0x60] sm:$0xff]
        %v5837 = vld [vmem:[#allocation4 + $0x68] sm:$0xff]
        %v5838 = vld [vmem:[#allocation4 + $0x70] sm:$0xff]
        %v5839 = vld [vmem:[#allocation4 + $0x80] sm:$0xff]
        %v5840 = vld [vmem:[#allocation4 + $0x88] sm:$0xff]
        %v5841 = vld [vmem:[#allocation4 + $0x90] sm:$0xff]
        %v5842 = vld [vmem:[#allocation4 + $0x98] sm:$0xff]
        %5859 = vrot.lane.b32.xlu0 %v5827, 127
        %v5860 = vpop.permute.xlu0 %5859
        %5861 = vrot.lane.b32.xlu0 %v5828, 127
        %v5862 = vpop.permute.xlu0 %5861
        %5863 = vrot.lane.b32.xlu0 %v5829, 127
        %v5864 = vpop.permute.xlu0 %5863
        %5865 = vrot.lane.b32.xlu0 %v5830, 127
        %v5866 = vpop.permute.xlu0 %5865
        %5867 = vrot.lane.b32.xlu0 %v5831, 127
        %v5868 = vpop.permute.xlu0 %5867
        %5869 = vrot.lane.b32.xlu0 %v5832, 127
        %v5870 = vpop.permute.xlu0 %5869
        %5871 = vrot.lane.b32.xlu0 %v5833, 127
        %v5872 = vpop.permute.xlu0 %5871
        %5873 = vrot.lane.b32.xlu0 %v5834, 127
        %v5874 = vpop.permute.xlu0 %5873
        %5875 = vrot.lane.b32.xlu0 %v5835, 127
        %v5876 = vpop.permute.xlu0 %5875
        %5877 = vrot.lane.b32.xlu0 %v5836, 127
        %v5878 = vpop.permute.xlu0 %5877
        %5879 = vrot.lane.b32.xlu0 %v5837, 127
        %v5880 = vpop.permute.xlu0 %5879
        %5881 = vrot.lane.b32.xlu0 %v5838, 127
        %v5882 = vpop.permute.xlu0 %5881
        %5883 = vrot.lane.b32.xlu0 %v5839, 127
        %v5884 = vpop.permute.xlu0 %5883
        %5885 = vrot.lane.b32.xlu0 %v5840, 127
        %v5886 = vpop.permute.xlu0 %5885
        %5887 = vrot.lane.b32.xlu0 %v5841, 127
        %v5888 = vpop.permute.xlu0 %5887
        %5889 = vrot.lane.b32.xlu0 %v5842, 127
        %v5890 = vpop.permute.xlu0 %5889
        %v5891 = vsel %vm704, %v5860, %v5862
        %v5892 = vsel %vm704, %v5862, %v5864
        %v5893 = vsel %vm704, %v5864, %v5866
        %v5894 = vsel %vm704, %v5868, %v5870
        %v5895 = vsel %vm704, %v5870, %v5872
        %v5896 = vsel %vm704, %v5872, %v5874
        %v5897 = vsel %vm704, %v5876, %v5878
        %v5898 = vsel %vm704, %v5878, %v5880
        %v5899 = vsel %vm704, %v5880, %v5882
        %v5900 = vsel %vm704, %v5884, %v5886
        %v5901 = vsel %vm704, %v5886, %v5888
        %v5902 = vsel %vm704, %v5888, %v5890
        %5915 = vst [vmem:[#allocation5 + $0x1e0] sm:$0xff] %v5891
        %5916 = vst [vmem:[#allocation5 + $0x1e8] sm:$0xff] %v5892
        %5917 = vst [vmem:[#allocation5 + $0x1f0] sm:$0xff] %v5893
        %5918 = vst [vmem:[#allocation5 + $0x1f8] sm:$0xff] %v5894
        %5919 = vst [vmem:[#allocation5 + $0x200] sm:$0xff] %v5895
        %5920 = vst [vmem:[#allocation5 + $0x208] sm:$0xff] %v5896
        %5921 = vst [vmem:[#allocation5 + $0x210] sm:$0xff] %v5897
        %5922 = vst [vmem:[#allocation5 + $0x218] sm:$0xff] %v5898
        %5923 = vst [vmem:[#allocation5 + $0x220] sm:$0xff] %v5899
        %5924 = vst [vmem:[#allocation5 + $0x228] sm:$0xff] %v5900
        %5925 = vst [vmem:[#allocation5 + $0x230] sm:$0xff] %v5901
        %5926 = vst [vmem:[#allocation5 + $0x238] sm:$0xff] %v5902
        %v5927 = vld [vmem:[#allocation4 + $0x8] sm:$0xff]
        %v5928 = vld [vmem:[#allocation4 + $0x10] sm:$0xff]
        %v5929 = vld [vmem:[#allocation4 + $0x18] sm:$0xff]
        %v5930 = vld [vmem:[#allocation4 + $0x20] sm:$0xff]
        %v5931 = vld [vmem:[#allocation4 + $0x30] sm:$0xff]
        %v5932 = vld [vmem:[#allocation4 + $0x38] sm:$0xff]
        %v5933 = vld [vmem:[#allocation4 + $0x40] sm:$0xff]
        %v5934 = vld [vmem:[#allocation4 + $0x48] sm:$0xff]
        %v5935 = vld [vmem:[#allocation4 + $0x58] sm:$0xff]
        %v5936 = vld [vmem:[#allocation4 + $0x60] sm:$0xff]
        %v5937 = vld [vmem:[#allocation4 + $0x68] sm:$0xff]
        %v5938 = vld [vmem:[#allocation4 + $0x70] sm:$0xff]
        %v5939 = vld [vmem:[#allocation4 + $0x80] sm:$0xff]
        %v5940 = vld [vmem:[#allocation4 + $0x88] sm:$0xff]
        %v5941 = vld [vmem:[#allocation4 + $0x90] sm:$0xff]
        %v5942 = vld [vmem:[#allocation4 + $0x98] sm:$0xff]
        %5959 = vrot.lane.b32.xlu0 %v5927, 111
        %v5960 = vpop.permute.xlu0 %5959
        %5961 = vrot.lane.b32.xlu0 %v5928, 111
        %v5962 = vpop.permute.xlu0 %5961
        %5963 = vrot.lane.b32.xlu0 %v5929, 111
        %v5964 = vpop.permute.xlu0 %5963
        %5965 = vrot.lane.b32.xlu0 %v5930, 111
        %v5966 = vpop.permute.xlu0 %5965
        %5967 = vrot.lane.b32.xlu0 %v5931, 111
        %v5968 = vpop.permute.xlu0 %5967
        %5969 = vrot.lane.b32.xlu0 %v5932, 111
        %v5970 = vpop.permute.xlu0 %5969
        %5971 = vrot.lane.b32.xlu0 %v5933, 111
        %v5972 = vpop.permute.xlu0 %5971
        %5973 = vrot.lane.b32.xlu0 %v5934, 111
        %v5974 = vpop.permute.xlu0 %5973
        %5975 = vrot.lane.b32.xlu0 %v5935, 111
        %v5976 = vpop.permute.xlu0 %5975
        %5977 = vrot.lane.b32.xlu0 %v5936, 111
        %v5978 = vpop.permute.xlu0 %5977
        %5979 = vrot.lane.b32.xlu0 %v5937, 111
        %v5980 = vpop.permute.xlu0 %5979
        %5981 = vrot.lane.b32.xlu0 %v5938, 111
        %v5982 = vpop.permute.xlu0 %5981
        %5983 = vrot.lane.b32.xlu0 %v5939, 111
        %v5984 = vpop.permute.xlu0 %5983
        %5985 = vrot.lane.b32.xlu0 %v5940, 111
        %v5986 = vpop.permute.xlu0 %5985
        %5987 = vrot.lane.b32.xlu0 %v5941, 111
        %v5988 = vpop.permute.xlu0 %5987
        %5989 = vrot.lane.b32.xlu0 %v5942, 111
        %v5990 = vpop.permute.xlu0 %5989
        %v5991 = vsel %vm728, %v5960, %v5962
        %v5992 = vsel %vm728, %v5962, %v5964
        %v5993 = vsel %vm728, %v5964, %v5966
        %v5994 = vsel %vm728, %v5968, %v5970
        %v5995 = vsel %vm728, %v5970, %v5972
        %v5996 = vsel %vm728, %v5972, %v5974
        %v5997 = vsel %vm728, %v5976, %v5978
        %v5998 = vsel %vm728, %v5978, %v5980
        %v5999 = vsel %vm728, %v5980, %v5982
        %v6000 = vsel %vm728, %v5984, %v5986
        %v6001 = vsel %vm728, %v5986, %v5988
        %v6002 = vsel %vm728, %v5988, %v5990
        %6015 = vst [vmem:[#allocation5 + $0x240] sm:$0xff] %v5991
        %6016 = vst [vmem:[#allocation5 + $0x248] sm:$0xff] %v5992
        %6017 = vst [vmem:[#allocation5 + $0x250] sm:$0xff] %v5993
        %6018 = vst [vmem:[#allocation5 + $0x258] sm:$0xff] %v5994
        %6019 = vst [vmem:[#allocation5 + $0x260] sm:$0xff] %v5995
        %6020 = vst [vmem:[#allocation5 + $0x268] sm:$0xff] %v5996
        %6021 = vst [vmem:[#allocation5 + $0x270] sm:$0xff] %v5997
        %6022 = vst [vmem:[#allocation5 + $0x278] sm:$0xff] %v5998
        %6023 = vst [vmem:[#allocation5 + $0x280] sm:$0xff] %v5999
        %6024 = vst [vmem:[#allocation5 + $0x288] sm:$0xff] %v6000
        %6025 = vst [vmem:[#allocation5 + $0x290] sm:$0xff] %v6001
        %6026 = vst [vmem:[#allocation5 + $0x298] sm:$0xff] %v6002
        %v6027 = vld [vmem:[#allocation4 + $0x8] sm:$0xff]
        %v6028 = vld [vmem:[#allocation4 + $0x10] sm:$0xff]
        %v6029 = vld [vmem:[#allocation4 + $0x18] sm:$0xff]
        %v6030 = vld [vmem:[#allocation4 + $0x20] sm:$0xff]
        %v6031 = vld [vmem:[#allocation4 + $0x30] sm:$0xff]
        %v6032 = vld [vmem:[#allocation4 + $0x38] sm:$0xff]
        %v6033 = vld [vmem:[#allocation4 + $0x40] sm:$0xff]
        %v6034 = vld [vmem:[#allocation4 + $0x48] sm:$0xff]
        %v6035 = vld [vmem:[#allocation4 + $0x58] sm:$0xff]
        %v6036 = vld [vmem:[#allocation4 + $0x60] sm:$0xff]
        %v6037 = vld [vmem:[#allocation4 + $0x68] sm:$0xff]
        %v6038 = vld [vmem:[#allocation4 + $0x70] sm:$0xff]
        %v6039 = vld [vmem:[#allocation4 + $0x80] sm:$0xff]
        %v6040 = vld [vmem:[#allocation4 + $0x88] sm:$0xff]
        %v6041 = vld [vmem:[#allocation4 + $0x90] sm:$0xff]
        %v6042 = vld [vmem:[#allocation4 + $0x98] sm:$0xff]
        %6059 = vrot.lane.b32.xlu0 %v6027, 110
        %v6060 = vpop.permute.xlu0 %6059
        %6061 = vrot.lane.b32.xlu0 %v6028, 110
        %v6062 = vpop.permute.xlu0 %6061
        %6063 = vrot.lane.b32.xlu0 %v6029, 110
        %v6064 = vpop.permute.xlu0 %6063
        %6065 = vrot.lane.b32.xlu0 %v6030, 110
        %v6066 = vpop.permute.xlu0 %6065
        %6067 = vrot.lane.b32.xlu0 %v6031, 110
        %v6068 = vpop.permute.xlu0 %6067
        %6069 = vrot.lane.b32.xlu0 %v6032, 110
        %v6070 = vpop.permute.xlu0 %6069
        %6071 = vrot.lane.b32.xlu0 %v6033, 110
        %v6072 = vpop.permute.xlu0 %6071
        %6073 = vrot.lane.b32.xlu0 %v6034, 110
        %v6074 = vpop.permute.xlu0 %6073
        %6075 = vrot.lane.b32.xlu0 %v6035, 110
        %v6076 = vpop.permute.xlu0 %6075
        %6077 = vrot.lane.b32.xlu0 %v6036, 110
        %v6078 = vpop.permute.xlu0 %6077
        %6079 = vrot.lane.b32.xlu0 %v6037, 110
        %v6080 = vpop.permute.xlu0 %6079
        %6081 = vrot.lane.b32.xlu0 %v6038, 110
        %v6082 = vpop.permute.xlu0 %6081
        %6083 = vrot.lane.b32.xlu0 %v6039, 110
        %v6084 = vpop.permute.xlu0 %6083
        %6085 = vrot.lane.b32.xlu0 %v6040, 110
        %v6086 = vpop.permute.xlu0 %6085
        %6087 = vrot.lane.b32.xlu0 %v6041, 110
        %v6088 = vpop.permute.xlu0 %6087
        %6089 = vrot.lane.b32.xlu0 %v6042, 110
        %v6090 = vpop.permute.xlu0 %6089
        %v6091 = vsel %vm752, %v6060, %v6062
        %v6092 = vsel %vm752, %v6062, %v6064
        %v6093 = vsel %vm752, %v6064, %v6066
        %v6094 = vsel %vm752, %v6068, %v6070
        %v6095 = vsel %vm752, %v6070, %v6072
        %v6096 = vsel %vm752, %v6072, %v6074
        %v6097 = vsel %vm752, %v6076, %v6078
        %v6098 = vsel %vm752, %v6078, %v6080
        %v6099 = vsel %vm752, %v6080, %v6082
        %v6100 = vsel %vm752, %v6084, %v6086
        %v6101 = vsel %vm752, %v6086, %v6088
        %v6102 = vsel %vm752, %v6088, %v6090
        %6115 = vst [vmem:[#allocation5 + $0x2a0] sm:$0xff] %v6091
        %6116 = vst [vmem:[#allocation5 + $0x2a8] sm:$0xff] %v6092
        %6117 = vst [vmem:[#allocation5 + $0x2b0] sm:$0xff] %v6093
        %6118 = vst [vmem:[#allocation5 + $0x2b8] sm:$0xff] %v6094
        %6119 = vst [vmem:[#allocation5 + $0x2c0] sm:$0xff] %v6095
        %6120 = vst [vmem:[#allocation5 + $0x2c8] sm:$0xff] %v6096
        %6121 = vst [vmem:[#allocation5 + $0x2d0] sm:$0xff] %v6097
        %6122 = vst [vmem:[#allocation5 + $0x2d8] sm:$0xff] %v6098
        %6123 = vst [vmem:[#allocation5 + $0x2e0] sm:$0xff] %v6099
        %6124 = vst [vmem:[#allocation5 + $0x2e8] sm:$0xff] %v6100
        %6125 = vst [vmem:[#allocation5 + $0x2f0] sm:$0xff] %v6101
        %6126 = vst [vmem:[#allocation5 + $0x2f8] sm:$0xff] %v6102
        %v6127 = vld [vmem:[#allocation4 + $0x8] sm:$0xff]
        %v6128 = vld [vmem:[#allocation4 + $0x10] sm:$0xff]
        %v6129 = vld [vmem:[#allocation4 + $0x18] sm:$0xff]
        %v6130 = vld [vmem:[#allocation4 + $0x20] sm:$0xff]
        %v6131 = vld [vmem:[#allocation4 + $0x30] sm:$0xff]
        %v6132 = vld [vmem:[#allocation4 + $0x38] sm:$0xff]
        %v6133 = vld [vmem:[#allocation4 + $0x40] sm:$0xff]
        %v6134 = vld [vmem:[#allocation4 + $0x48] sm:$0xff]
        %v6135 = vld [vmem:[#allocation4 + $0x58] sm:$0xff]
        %v6136 = vld [vmem:[#allocation4 + $0x60] sm:$0xff]
        %v6137 = vld [vmem:[#allocation4 + $0x68] sm:$0xff]
        %v6138 = vld [vmem:[#allocation4 + $0x70] sm:$0xff]
        %v6139 = vld [vmem:[#allocation4 + $0x80] sm:$0xff]
        %v6140 = vld [vmem:[#allocation4 + $0x88] sm:$0xff]
        %v6141 = vld [vmem:[#allocation4 + $0x90] sm:$0xff]
        %v6142 = vld [vmem:[#allocation4 + $0x98] sm:$0xff]
        %6159 = vrot.lane.b32.xlu0 %v6127, 109
        %v6160 = vpop.permute.xlu0 %6159
        %6161 = vrot.lane.b32.xlu0 %v6128, 109
        %v6162 = vpop.permute.xlu0 %6161
        %6163 = vrot.lane.b32.xlu0 %v6129, 109
        %v6164 = vpop.permute.xlu0 %6163
        %6165 = vrot.lane.b32.xlu0 %v6130, 109
        %v6166 = vpop.permute.xlu0 %6165
        %6167 = vrot.lane.b32.xlu0 %v6131, 109
        %v6168 = vpop.permute.xlu0 %6167
        %6169 = vrot.lane.b32.xlu0 %v6132, 109
        %v6170 = vpop.permute.xlu0 %6169
        %6171 = vrot.lane.b32.xlu0 %v6133, 109
        %v6172 = vpop.permute.xlu0 %6171
        %6173 = vrot.lane.b32.xlu0 %v6134, 109
        %v6174 = vpop.permute.xlu0 %6173
        %6175 = vrot.lane.b32.xlu0 %v6135, 109
        %v6176 = vpop.permute.xlu0 %6175
        %6177 = vrot.lane.b32.xlu0 %v6136, 109
        %v6178 = vpop.permute.xlu0 %6177
        %6179 = vrot.lane.b32.xlu0 %v6137, 109
        %v6180 = vpop.permute.xlu0 %6179
        %6181 = vrot.lane.b32.xlu0 %v6138, 109
        %v6182 = vpop.permute.xlu0 %6181
        %6183 = vrot.lane.b32.xlu0 %v6139, 109
        %v6184 = vpop.permute.xlu0 %6183
        %6185 = vrot.lane.b32.xlu0 %v6140, 109
        %v6186 = vpop.permute.xlu0 %6185
        %6187 = vrot.lane.b32.xlu0 %v6141, 109
        %v6188 = vpop.permute.xlu0 %6187
        %6189 = vrot.lane.b32.xlu0 %v6142, 109
        %v6190 = vpop.permute.xlu0 %6189
        %v6191 = vsel %vm776, %v6160, %v6162
        %v6192 = vsel %vm776, %v6162, %v6164
        %v6193 = vsel %vm776, %v6164, %v6166
        %v6194 = vsel %vm776, %v6168, %v6170
        %v6195 = vsel %vm776, %v6170, %v6172
        %v6196 = vsel %vm776, %v6172, %v6174
        %v6197 = vsel %vm776, %v6176, %v6178
        %v6198 = vsel %vm776, %v6178, %v6180
        %v6199 = vsel %vm776, %v6180, %v6182
        %v6200 = vsel %vm776, %v6184, %v6186
        %v6201 = vsel %vm776, %v6186, %v6188
        %v6202 = vsel %vm776, %v6188, %v6190
        %6215 = vst [vmem:[#allocation5 + $0x300] sm:$0xff] %v6191
        %6216 = vst [vmem:[#allocation5 + $0x308] sm:$0xff] %v6192
        %6217 = vst [vmem:[#allocation5 + $0x310] sm:$0xff] %v6193
        %6218 = vst [vmem:[#allocation5 + $0x318] sm:$0xff] %v6194
        %6219 = vst [vmem:[#allocation5 + $0x320] sm:$0xff] %v6195
        %6220 = vst [vmem:[#allocation5 + $0x328] sm:$0xff] %v6196
        %6221 = vst [vmem:[#allocation5 + $0x330] sm:$0xff] %v6197
        %6222 = vst [vmem:[#allocation5 + $0x338] sm:$0xff] %v6198
        %6223 = vst [vmem:[#allocation5 + $0x340] sm:$0xff] %v6199
        %6224 = vst [vmem:[#allocation5 + $0x348] sm:$0xff] %v6200
        %6225 = vst [vmem:[#allocation5 + $0x350] sm:$0xff] %v6201
        %6226 = vst [vmem:[#allocation5 + $0x358] sm:$0xff] %v6202
        %v6227 = vld [vmem:[%s8] sm:$0x7]
        %v6228 = vld [vmem:[#allocation5] sm:$0xff]
        %v6229 = vld [vmem:[#allocation5 + $0x8] sm:$0xff]
        %v6230 = vld [vmem:[#allocation5 + $0x10] sm:$0xff]
        %v6231 = vld [vmem:[#allocation5 + $0x18] sm:$0xff]
        %v6232 = vld [vmem:[#allocation5 + $0x20] sm:$0xff]
        %v6233 = vld [vmem:[#allocation5 + $0x28] sm:$0xff]
        %v6234 = vld [vmem:[#allocation5 + $0x30] sm:$0xff]
        %v6235 = vld [vmem:[#allocation5 + $0x38] sm:$0xff]
        %v6236 = vld [vmem:[#allocation5 + $0x40] sm:$0xff]
        %v6237 = vld [vmem:[#allocation5 + $0x48] sm:$0xff]
        %v6238 = vld [vmem:[#allocation5 + $0x50] sm:$0xff]
        %v6239 = vld [vmem:[#allocation5 + $0x58] sm:$0xff]
        %v6240 = vld [vmem:[#allocation5 + $0x60] sm:$0xff]
        %v6241 = vld [vmem:[#allocation5 + $0x68] sm:$0xff]
        %v6242 = vld [vmem:[#allocation5 + $0x70] sm:$0xff]
        %v6243 = vld [vmem:[#allocation5 + $0x78] sm:$0xff]
        %v6244 = vld [vmem:[#allocation5 + $0x80] sm:$0xff]
        %v6245 = vld [vmem:[#allocation5 + $0x88] sm:$0xff]
        %v6246 = vld [vmem:[#allocation5 + $0x90] sm:$0xff]
        %v6247 = vld [vmem:[#allocation5 + $0x98] sm:$0xff]
        %v6248 = vld [vmem:[#allocation5 + $0xa0] sm:$0xff]
        %v6249 = vld [vmem:[#allocation5 + $0xa8] sm:$0xff]
        %v6250 = vld [vmem:[#allocation5 + $0xb0] sm:$0xff]
        %v6251 = vld [vmem:[#allocation5 + $0xb8] sm:$0xff]
        %v6252 = vld [vmem:[#allocation5 + $0xc0] sm:$0xff]
        %v6253 = vld [vmem:[#allocation5 + $0xc8] sm:$0xff]
        %v6254 = vld [vmem:[#allocation5 + $0xd0] sm:$0xff]
        %v6255 = vld [vmem:[#allocation5 + $0xd8] sm:$0xff]
        %v6256 = vld [vmem:[#allocation5 + $0xe0] sm:$0xff]
        %v6257 = vld [vmem:[#allocation5 + $0xe8] sm:$0xff]
        %v6258 = vld [vmem:[#allocation5 + $0xf0] sm:$0xff]
        %v6259 = vld [vmem:[#allocation5 + $0xf8] sm:$0xff]
        %v6260 = vld [vmem:[#allocation5 + $0x100] sm:$0xff]
        %v6261 = vld [vmem:[#allocation5 + $0x108] sm:$0xff]
        %v6262 = vld [vmem:[#allocation5 + $0x110] sm:$0xff]
        %v6263 = vld [vmem:[#allocation5 + $0x118] sm:$0xff]
        %v6264 = vld [vmem:[#allocation5 + $0x120] sm:$0xff]
        %v6265 = vld [vmem:[#allocation5 + $0x128] sm:$0xff]
        %v6266 = vld [vmem:[#allocation5 + $0x130] sm:$0xff]
        %v6267 = vld [vmem:[#allocation5 + $0x138] sm:$0xff]
        %v6268 = vld [vmem:[#allocation5 + $0x140] sm:$0xff]
        %v6269 = vld [vmem:[#allocation5 + $0x148] sm:$0xff]
        %v6270 = vld [vmem:[#allocation5 + $0x150] sm:$0xff]
        %v6271 = vld [vmem:[#allocation5 + $0x158] sm:$0xff]
        %v6272 = vld [vmem:[#allocation5 + $0x160] sm:$0xff]
        %v6273 = vld [vmem:[#allocation5 + $0x168] sm:$0xff]
        %v6274 = vld [vmem:[#allocation5 + $0x170] sm:$0xff]
        %v6275 = vld [vmem:[#allocation5 + $0x178] sm:$0xff]
        %v6276 = vld [vmem:[#allocation5 + $0x180] sm:$0xff]
        %v6277 = vld [vmem:[#allocation5 + $0x188] sm:$0xff]
        %v6278 = vld [vmem:[#allocation5 + $0x190] sm:$0xff]
        %v6279 = vld [vmem:[#allocation5 + $0x198] sm:$0xff]
        %v6280 = vld [vmem:[#allocation5 + $0x1a0] sm:$0xff]
        %v6281 = vld [vmem:[#allocation5 + $0x1a8] sm:$0xff]
        %v6282 = vld [vmem:[#allocation5 + $0x1b0] sm:$0xff]
        %v6283 = vld [vmem:[#allocation5 + $0x1b8] sm:$0xff]
        %v6284 = vld [vmem:[#allocation5 + $0x1c0] sm:$0xff]
        %v6285 = vld [vmem:[#allocation5 + $0x1c8] sm:$0xff]
        %v6286 = vld [vmem:[#allocation5 + $0x1d0] sm:$0xff]
        %v6287 = vld [vmem:[#allocation5 + $0x1d8] sm:$0xff]
        %v6288 = vld [vmem:[#allocation5 + $0x1e0] sm:$0xff]
        %v6289 = vld [vmem:[#allocation5 + $0x1e8] sm:$0xff]
        %v6290 = vld [vmem:[#allocation5 + $0x1f0] sm:$0xff]
        %v6291 = vld [vmem:[#allocation5 + $0x1f8] sm:$0xff]
        %v6292 = vld [vmem:[#allocation5 + $0x200] sm:$0xff]
        %v6293 = vld [vmem:[#allocation5 + $0x208] sm:$0xff]
        %v6294 = vld [vmem:[#allocation5 + $0x210] sm:$0xff]
        %v6295 = vld [vmem:[#allocation5 + $0x218] sm:$0xff]
        %v6296 = vld [vmem:[#allocation5 + $0x220] sm:$0xff]
        %v6297 = vld [vmem:[#allocation5 + $0x228] sm:$0xff]
        %v6298 = vld [vmem:[#allocation5 + $0x230] sm:$0xff]
        %v6299 = vld [vmem:[#allocation5 + $0x238] sm:$0xff]
        %v6300 = vld [vmem:[#allocation5 + $0x240] sm:$0xff]
        %v6301 = vld [vmem:[#allocation5 + $0x248] sm:$0xff]
        %v6302 = vld [vmem:[#allocation5 + $0x250] sm:$0xff]
        %v6303 = vld [vmem:[#allocation5 + $0x258] sm:$0xff]
        %v6304 = vld [vmem:[#allocation5 + $0x260] sm:$0xff]
        %v6305 = vld [vmem:[#allocation5 + $0x268] sm:$0xff]
        %v6306 = vld [vmem:[#allocation5 + $0x270] sm:$0xff]
        %v6307 = vld [vmem:[#allocation5 + $0x278] sm:$0xff]
        %v6308 = vld [vmem:[#allocation5 + $0x280] sm:$0xff]
        %v6309 = vld [vmem:[#allocation5 + $0x288] sm:$0xff]
        %v6310 = vld [vmem:[#allocation5 + $0x290] sm:$0xff]
        %v6311 = vld [vmem:[#allocation5 + $0x298] sm:$0xff]
        %v6312 = vld [vmem:[#allocation5 + $0x2a0] sm:$0xff]
        %v6313 = vld [vmem:[#allocation5 + $0x2a8] sm:$0xff]
        %v6314 = vld [vmem:[#allocation5 + $0x2b0] sm:$0xff]
        %v6315 = vld [vmem:[#allocation5 + $0x2b8] sm:$0xff]
        %v6316 = vld [vmem:[#allocation5 + $0x2c0] sm:$0xff]
        %v6317 = vld [vmem:[#allocation5 + $0x2c8] sm:$0xff]
        %v6318 = vld [vmem:[#allocation5 + $0x2d0] sm:$0xff]
        %v6319 = vld [vmem:[#allocation5 + $0x2d8] sm:$0xff]
        %v6320 = vld [vmem:[#allocation5 + $0x2e0] sm:$0xff]
        %v6321 = vld [vmem:[#allocation5 + $0x2e8] sm:$0xff]
        %v6322 = vld [vmem:[#allocation5 + $0x2f0] sm:$0xff]
        %v6323 = vld [vmem:[#allocation5 + $0x2f8] sm:$0xff]
        %v6324 = vld [vmem:[#allocation5 + $0x300] sm:$0xff]
        %v6325 = vld [vmem:[#allocation5 + $0x308] sm:$0xff]
        %v6326 = vld [vmem:[#allocation5 + $0x310] sm:$0xff]
        %v6327 = vld [vmem:[#allocation5 + $0x318] sm:$0xff]
        %v6328 = vld [vmem:[#allocation5 + $0x320] sm:$0xff]
        %v6329 = vld [vmem:[#allocation5 + $0x328] sm:$0xff]
        %v6330 = vld [vmem:[#allocation5 + $0x330] sm:$0xff]
        %v6331 = vld [vmem:[#allocation5 + $0x338] sm:$0xff]
        %v6332 = vld [vmem:[#allocation5 + $0x340] sm:$0xff]
        %v6333 = vld [vmem:[#allocation5 + $0x348] sm:$0xff]
        %v6334 = vld [vmem:[#allocation5 + $0x350] sm:$0xff]
        %v6335 = vld [vmem:[#allocation5 + $0x358] sm:$0xff]
        %v6336 = vld [vmem:[#allocation6] sm:$0x1]
        %6338 = vset.pattern.permute.xlu0 0
        %6339 = vperm.xlu0 %6338, %v6336
        %v6340 = vpop.permute.xlu0 %6339
        %v6342 = vlaneseq
        %v6343 = vshrl.u32 %v6342, 7
        %v6344 = vsub.s32 0, %v6343
        %v6345 = vrot.slane %v6340, %v6344
        %v6347 = vlaneseq
        %v6348 = vshrl.u32 %v6347, 7
        %v6349 = vsub.s32 0, %v6348
        %v6350 = vrot.slane %v6227, %v6349
        %v6351 = vlaneseq
        %v6352 = vshrl.u32 %v6351, 7
        %v6353 = vsub.s32 1, %v6352
        %v6354 = vrot.slane %v6227, %v6353
        %v6355 = vlaneseq
        %v6356 = vshrl.u32 %v6355, 7
        %v6357 = vsub.s32 2, %v6356
        %v6358 = vrot.slane %v6227, %v6357
        %v6361 = vsel %vm2391, %v6358, 0
        %6363 = vmatprep.subr.mxu0 %v6229
        %6364 = vmatpush1.msra.mxu0 %v6228
        %6365 = vmatprep.subr.mxu0 %v6232
        %6366 = vmatpush1.msra.mxu0 %v6231
        %6367 = vmatprep.subr.mxu0 %v6235
        %6368 = vmatpush1.msra.mxu0 %v6234
        %6369 = vmatprep.subr.mxu0 %v6238
        %6370 = vmatpush1.msra.mxu0 %v6237
        %6371 = vmatprep.subr.mxu0 %v6241
        %6372 = vmatpush1.msra.mxu0 %v6240
        %6373 = vmatprep.subr.mxu0 %v6244
        %6374 = vmatpush1.msra.mxu0 %v6243
        %6375 = vmatprep.subr.mxu0 %v6247
        %6376 = vmatpush1.msra.mxu0 %v6246
        %6377 = vmatprep.subr.mxu0 %v6250
        %6378 = vmatpush1.msra.mxu0 %v6249
        %6379 = vmatprep.subr.mxu0 %v6253
        %6380 = vmatpush1.msra.mxu0 %v6252
        %6381 = vmatprep.subr.mxu0 %v6256
        %6382 = vmatpush1.msra.mxu0 %v6255
        %6383 = vmatprep.subr.mxu0 %v6259
        %6384 = vmatpush1.msra.mxu0 %v6258
        %6385 = vmatprep.subr.mxu0 %v6262
        %6386 = vmatpush1.msra.mxu0 %v6261
        %6387 = vmatprep.subr.mxu0 %v6265
        %6388 = vmatpush1.msra.mxu0 %v6264
        %6389 = vmatprep.subr.mxu0 %v6268
        %6390 = vmatpush1.msra.mxu0 %v6267
        %6391 = vmatprep.subr.mxu0 %v6271
        %6392 = vmatpush1.msra.mxu0 %v6270
        %6393 = vmatprep.subr.mxu0 %v6274
        %6394 = vmatpush1.msra.mxu0 %v6273
        %6395 = vmatprep.subr.mxu0 %v6277
        %6396 = vmatpush1.msra.mxu0 %v6276
        %6397 = vmatprep.subr.mxu0 %v6280
        %6398 = vmatpush1.msra.mxu0 %v6279
        %6399 = vmatprep.subr.mxu0 %v6283
        %6400 = vmatpush1.msra.mxu0 %v6282
        %6401 = vmatprep.subr.mxu0 %v6286
        %6402 = vmatpush1.msra.mxu0 %v6285
        %6403 = vmatprep.subr.mxu0 %v6289
        %6404 = vmatpush1.msra.mxu0 %v6288
        %6405 = vmatprep.subr.mxu0 %v6292
        %6406 = vmatpush1.msra.mxu0 %v6291
        %6407 = vmatprep.subr.mxu0 %v6295
        %6408 = vmatpush1.msra.mxu0 %v6294
        %6409 = vmatprep.subr.mxu0 %v6298
        %6410 = vmatpush1.msra.mxu0 %v6297
        %6411 = vmatprep.subr.mxu0 %v6301
        %6412 = vmatpush1.msra.mxu0 %v6300
        %6413 = vmatprep.subr.mxu0 %v6304
        %6414 = vmatpush1.msra.mxu0 %v6303
        %6415 = vmatprep.subr.mxu0 %v6307
        %6416 = vmatpush1.msra.mxu0 %v6306
        %6417 = vmatprep.subr.mxu0 %v6310
        %6418 = vmatpush1.msra.mxu0 %v6309
        %6419 = vmatprep.subr.mxu0 %v6313
        %6420 = vmatpush1.msra.mxu0 %v6312
        %6421 = vmatprep.subr.mxu0 %v6316
        %6422 = vmatpush1.msra.mxu0 %v6315
        %6423 = vmatprep.subr.mxu0 %v6319
        %6424 = vmatpush1.msra.mxu0 %v6318
        %6425 = vmatprep.subr.mxu0 %v6322
        %6426 = vmatpush1.msra.mxu0 %v6321
        %6427 = vmatprep.mubr.f32.mxu0 %v6354
        %6428 = vmatmul.mubr.f32.gmra.mrb[0].mxu0 %v6350
        %v6429 = vpop.f32.mrb[0].mxu0
        %v6430 = vadd.f32 %v6345, %v6429
        %v6431 = vpop.f32.mrb[0].mxu0
        %v6432 = vadd.f32 %v6345, %v6431
        %6433 = vdwg.mxu0
        %6434 = vmatprep.subr.mxu0 %v6325
        %6435 = vmatpush1.msra.mxu0 %v6324
        %6436 = vmatprep.subr.mxu0 %v6328
        %6437 = vmatpush1.msra.mxu0 %v6327
        %6438 = vmatprep.subr.mxu0 %v6331
        %6439 = vmatpush1.msra.mxu0 %v6330
        %6440 = vmatprep.subr.mxu0 %v6334
        %6441 = vmatpush1.msra.mxu0 %v6333
        %6442 = vmatprep.subr.mxu0 0.0
        %6443 = vmatpush1.msra.mxu0 0.0
        %6444 = vmatprep.subr.mxu0 0.0
        %6445 = vmatpush1.msra.mxu0 0.0
        %6446 = vmatprep.subr.mxu0 0.0
        %6447 = vmatpush1.msra.mxu0 0.0
        %6448 = vmatprep.subr.mxu0 0.0
        %6449 = vmatpush1.msra.mxu0 0.0
        %6450 = vmatprep.subr.mxu0 0.0
        %6451 = vmatpush1.msra.mxu0 0.0
        %6452 = vmatprep.subr.mxu0 0.0
        %6453 = vmatpush1.msra.mxu0 0.0
        %6454 = vmatprep.subr.mxu0 0.0
        %6455 = vmatpush1.msra.mxu0 0.0
        %6456 = vmatprep.subr.mxu0 0.0
        %6457 = vmatpush1.msra.mxu0 0.0
        %6458 = vmatprep.subr.mxu0 0.0
        %6459 = vmatpush1.msra.mxu0 0.0
        %6460 = vmatprep.subr.mxu0 0.0
        %6461 = vmatpush1.msra.mxu0 0.0
        %6462 = vmatprep.subr.mxu0 0.0
        %6463 = vmatpush1.msra.mxu0 0.0
        %6464 = vmatprep.subr.mxu0 0.0
        %6465 = vmatpush1.msra.mxu0 0.0
        %6466 = vmatprep.subr.mxu0 0.0
        %6467 = vmatpush1.msra.mxu0 0.0
        %6468 = vmatprep.subr.mxu0 0.0
        %6469 = vmatpush1.msra.mxu0 0.0
        %6470 = vmatprep.subr.mxu0 0.0
        %6471 = vmatpush1.msra.mxu0 0.0
        %6472 = vmatprep.subr.mxu0 0.0
        %6473 = vmatpush1.msra.mxu0 0.0
        %6474 = vmatprep.subr.mxu0 0.0
        %6475 = vmatpush1.msra.mxu0 0.0
        %6476 = vmatprep.subr.mxu0 0.0
        %6477 = vmatpush1.msra.mxu0 0.0
        %6478 = vmatprep.subr.mxu0 0.0
        %6479 = vmatpush1.msra.mxu0 0.0
        %6480 = vmatprep.subr.mxu0 0.0
        %6481 = vmatpush1.msra.mxu0 0.0
        %6482 = vmatprep.subr.mxu0 0.0
        %6483 = vmatpush1.msra.mxu0 0.0
        %6484 = vmatprep.subr.mxu0 0.0
        %6485 = vmatpush1.msra.mxu0 0.0
        %6486 = vmatprep.subr.mxu0 0.0
        %6487 = vmatpush1.msra.mxu0 0.0
        %6488 = vmatprep.subr.mxu0 0.0
        %6489 = vmatpush1.msra.mxu0 0.0
        %6490 = vmatprep.subr.mxu0 0.0
        %6491 = vmatpush1.msra.mxu0 0.0
        %6492 = vmatprep.subr.mxu0 0.0
        %6493 = vmatpush1.msra.mxu0 0.0
        %6494 = vmatprep.subr.mxu0 0.0
        %6495 = vmatpush1.msra.mxu0 0.0
        %6496 = vmatprep.subr.mxu0 0.0
        %6497 = vmatpush1.msra.mxu0 0.0
        %6498 = vmatprep.mubr.f32.mxu0 0.0
        %6499 = vmatmul.mubr.f32.gmra.mrb[0].mxu0 %v6361
        %v6500 = vpop.f32.mrb[0].mxu0
        %v6501 = vadd.f32 %v6430, %v6500
        %v6502 = vpop.f32.mrb[0].mxu0
        %v6503 = vadd.f32 %v6432, %v6502
        %6504 = vdwg.mxu0
        %6505 = vmatprep.subr.mxu0 0.0
        %6506 = vmatpush1.msra.mxu0 %v6230
        %6507 = vmatprep.subr.mxu0 0.0
        %6508 = vmatpush1.msra.mxu0 %v6233
        %6509 = vmatprep.subr.mxu0 0.0
        %6510 = vmatpush1.msra.mxu0 %v6236
        %6511 = vmatprep.subr.mxu0 0.0
        %6512 = vmatpush1.msra.mxu0 %v6239
        %6513 = vmatprep.subr.mxu0 0.0
        %6514 = vmatpush1.msra.mxu0 %v6242
        %6515 = vmatprep.subr.mxu0 0.0
        %6516 = vmatpush1.msra.mxu0 %v6245
        %6517 = vmatprep.subr.mxu0 0.0
        %6518 = vmatpush1.msra.mxu0 %v6248
        %6519 = vmatprep.subr.mxu0 0.0
        %6520 = vmatpush1.msra.mxu0 %v6251
        %6521 = vmatprep.subr.mxu0 0.0
        %6522 = vmatpush1.msra.mxu0 %v6254
        %6523 = vmatprep.subr.mxu0 0.0
        %6524 = vmatpush1.msra.mxu0 %v6257
        %6525 = vmatprep.subr.mxu0 0.0
        %6526 = vmatpush1.msra.mxu0 %v6260
        %6527 = vmatprep.subr.mxu0 0.0
        %6528 = vmatpush1.msra.mxu0 %v6263
        %6529 = vmatprep.subr.mxu0 0.0
        %6530 = vmatpush1.msra.mxu0 %v6266
        %6531 = vmatprep.subr.mxu0 0.0
        %6532 = vmatpush1.msra.mxu0 %v6269
        %6533 = vmatprep.subr.mxu0 0.0
        %6534 = vmatpush1.msra.mxu0 %v6272
        %6535 = vmatprep.subr.mxu0 0.0
        %6536 = vmatpush1.msra.mxu0 %v6275
        %6537 = vmatprep.subr.mxu0 0.0
        %6538 = vmatpush1.msra.mxu0 %v6278
        %6539 = vmatprep.subr.mxu0 0.0
        %6540 = vmatpush1.msra.mxu0 %v6281
        %6541 = vmatprep.subr.mxu0 0.0
        %6542 = vmatpush1.msra.mxu0 %v6284
        %6543 = vmatprep.subr.mxu0 0.0
        %6544 = vmatpush1.msra.mxu0 %v6287
        %6545 = vmatprep.subr.mxu0 0.0
        %6546 = vmatpush1.msra.mxu0 %v6290
        %6547 = vmatprep.subr.mxu0 0.0
        %6548 = vmatpush1.msra.mxu0 %v6293
        %6549 = vmatprep.subr.mxu0 0.0
        %6550 = vmatpush1.msra.mxu0 %v6296
        %6551 = vmatprep.subr.mxu0 0.0
        %6552 = vmatpush1.msra.mxu0 %v6299
        %6553 = vmatprep.subr.mxu0 0.0
        %6554 = vmatpush1.msra.mxu0 %v6302
        %6555 = vmatprep.subr.mxu0 0.0
        %6556 = vmatpush1.msra.mxu0 %v6305
        %6557 = vmatprep.subr.mxu0 0.0
        %6558 = vmatpush1.msra.mxu0 %v6308
        %6559 = vmatprep.subr.mxu0 0.0
        %6560 = vmatpush1.msra.mxu0 %v6311
        %6561 = vmatprep.subr.mxu0 0.0
        %6562 = vmatpush1.msra.mxu0 %v6314
        %6563 = vmatprep.subr.mxu0 0.0
        %6564 = vmatpush1.msra.mxu0 %v6317
        %6565 = vmatprep.subr.mxu0 0.0
        %6566 = vmatpush1.msra.mxu0 %v6320
        %6567 = vmatprep.subr.mxu0 0.0
        %6568 = vmatpush1.msra.mxu0 %v6323
        %6569 = vmatprep.mubr.f32.mxu0 %v6354
        %6570 = vmatmul.mubr.f32.gmra.mrb[0].mxu0 %v6350
        %v6571 = vpop.f32.mrb[0].mxu0
        %v6572 = vadd.f32 %v6345, %v6571
        %v6573 = vpop.f32.mrb[0].mxu0
        %6574 = vdwg.mxu0
        %6575 = vmatprep.subr.mxu0 0.0
        %6576 = vmatpush1.msra.mxu0 %v6326
        %6577 = vmatprep.subr.mxu0 0.0
        %6578 = vmatpush1.msra.mxu0 %v6329
        %6579 = vmatprep.subr.mxu0 0.0
        %6580 = vmatpush1.msra.mxu0 %v6332
        %6581 = vmatprep.subr.mxu0 0.0
        %6582 = vmatpush1.msra.mxu0 %v6335
        %6583 = vmatprep.subr.mxu0 0.0
        %6584 = vmatpush1.msra.mxu0 0.0
        %6585 = vmatprep.subr.mxu0 0.0
        %6586 = vmatpush1.msra.mxu0 0.0
        %6587 = vmatprep.subr.mxu0 0.0
        %6588 = vmatpush1.msra.mxu0 0.0
        %6589 = vmatprep.subr.mxu0 0.0
        %6590 = vmatpush1.msra.mxu0 0.0
        %6591 = vmatprep.subr.mxu0 0.0
        %6592 = vmatpush1.msra.mxu0 0.0
        %6593 = vmatprep.subr.mxu0 0.0
        %6594 = vmatpush1.msra.mxu0 0.0
        %6595 = vmatprep.subr.mxu0 0.0
        %6596 = vmatpush1.msra.mxu0 0.0
        %6597 = vmatprep.subr.mxu0 0.0
        %6598 = vmatpush1.msra.mxu0 0.0
        %6599 = vmatprep.subr.mxu0 0.0
        %6600 = vmatpush1.msra.mxu0 0.0
        %6601 = vmatprep.subr.mxu0 0.0
        %6602 = vmatpush1.msra.mxu0 0.0
        %6603 = vmatprep.subr.mxu0 0.0
        %6604 = vmatpush1.msra.mxu0 0.0
        %6605 = vmatprep.subr.mxu0 0.0
        %6606 = vmatpush1.msra.mxu0 0.0
        %6607 = vmatprep.subr.mxu0 0.0
        %6608 = vmatpush1.msra.mxu0 0.0
        %6609 = vmatprep.subr.mxu0 0.0
        %6610 = vmatpush1.msra.mxu0 0.0
        %6611 = vmatprep.subr.mxu0 0.0
        %6612 = vmatpush1.msra.mxu0 0.0
        %6613 = vmatprep.subr.mxu0 0.0
        %6614 = vmatpush1.msra.mxu0 0.0
        %6615 = vmatprep.subr.mxu0 0.0
        %6616 = vmatpush1.msra.mxu0 0.0
        %6617 = vmatprep.subr.mxu0 0.0
        %6618 = vmatpush1.msra.mxu0 0.0
        %6619 = vmatprep.subr.mxu0 0.0
        %6620 = vmatpush1.msra.mxu0 0.0
        %6621 = vmatprep.subr.mxu0 0.0
        %6622 = vmatpush1.msra.mxu0 0.0
        %6623 = vmatprep.subr.mxu0 0.0
        %6624 = vmatpush1.msra.mxu0 0.0
        %6625 = vmatprep.subr.mxu0 0.0
        %6626 = vmatpush1.msra.mxu0 0.0
        %6627 = vmatprep.subr.mxu0 0.0
        %6628 = vmatpush1.msra.mxu0 0.0
        %6629 = vmatprep.subr.mxu0 0.0
        %6630 = vmatpush1.msra.mxu0 0.0
        %6631 = vmatprep.subr.mxu0 0.0
        %6632 = vmatpush1.msra.mxu0 0.0
        %6633 = vmatprep.subr.mxu0 0.0
        %6634 = vmatpush1.msra.mxu0 0.0
        %6635 = vmatprep.subr.mxu0 0.0
        %6636 = vmatpush1.msra.mxu0 0.0
        %6637 = vmatprep.subr.mxu0 0.0
        %6638 = vmatpush1.msra.mxu0 0.0
        %6639 = vmatprep.mubr.f32.mxu0 0.0
        %6640 = vmatmul.mubr.f32.gmra.mrb[0].mxu0 %v6361
        %v6641 = vpop.f32.mrb[0].mxu0
        %v6642 = vadd.f32 %v6572, %v6641
        %v6643 = vpop.f32.mrb[0].mxu0
        %6644 = vdwg.mxu0
        %v6645 = vxor.u32 %v6501, 2147483648
        %v6646 = vxor.u32 %v6503, 2147483648
        %v6647 = vxor.u32 %v6642, 2147483648
        %v6648 = vmul.f32 %v6645, 1.442695
        %v6649 = vpow.pop %v6648
        %v6650 = vmul.f32 %v6646, 1.442695
        %v6651 = vpow.pop %v6650
        %v6652 = vmul.f32 %v6647, 1.442695
        %v6653 = vpow.pop %v6652
        %v6654 = vadd.f32 %v6649, 1.0
        %v6655 = vadd.f32 %v6651, 1.0
        %v6656 = vadd.f32 %v6653, 1.0
        %v6657 = vrcp.pop %v6654
        %v6658 = vmul.f32 1.0, %v6657
        %v6659 = vrcp.pop %v6655
        %v6660 = vmul.f32 1.0, %v6659
        %v6661 = vrcp.pop %v6656
        %v6662 = vmul.f32 1.0, %v6661
        %v6663 = vsub.f32 %v1110, %v1261
        %v6664 = vsub.f32 %v1112, %v1263
        %v6665 = vsub.f32 %v1181, %v1332
        %v6666 = vlaneseq
        %v6667 = vshrl.u32 %v6666, 7
        %v6668 = vsub.s32 0, %v6667
        %v6669 = vrot.slane %v6658, %v6668
        %v6670 = vlaneseq
        %v6671 = vshrl.u32 %v6670, 7
        %v6672 = vsub.s32 0, %v6671
        %v6673 = vrot.slane %v6660, %v6672
        %v6674 = vlaneseq
        %v6675 = vshrl.u32 %v6674, 7
        %v6676 = vsub.s32 0, %v6675
        %v6677 = vrot.slane %v6662, %v6676
        %v6678 = vmul.f32 %v6669, %v6663
        %v6679 = vmul.f32 %v6673, %v6664
        %v6680 = vmul.f32 %v6677, %v6665
        %v6681 = vadd.f32 %v1261, %v6678
        %v6682 = vadd.f32 %v1263, %v6679
        %v6683 = vadd.f32 %v1332, %v6680
        %6684 = vst [vmem:[%s545] sm:$0xff] %v6681
        %6685 = vst [vmem:[%s545 + $0x8] sm:$0xff] %v6682
        %6686 = vst [vmem:[%s545 + $0x10] sm:$0xff] %v6683
        %v6690 = vcombine.low %v6658, %v6660
        %v6692 = vunpack.c.l.s4 1966171168
        %v6693 = vunpack.c.0.s8 %v6692
        %v6694 = vlaneseq
        %v6695 = vshrl.u32 %v6694, 7
        %v6696 = vsub.s32 %v6693, %v6695
        %v6697 = vrot.slane %v6690, %v6696
        %v6699 = vunpack.c.l.s4 1966171168
        %v6700 = vunpack.c.0.s8 %v6699
        %v6701 = vlaneseq
        %v6702 = vshrl.u32 %v6701, 7
        %v6703 = vsub.s32 %v6700, %v6702
        %v6704 = vrot.slane %v6662, %v6703
        %v6705 = vcombine.low %v6697, %v6704
        %v6707 = vunpack.c.l.s4 1966171168
        %v6708 = vunpack.c.0.s8 %v6707
        %v6709 = vlaneseq
        %v6710 = vshrl.u32 %v6709, 7
        %v6711 = vsub.s32 %v6708, %v6710
        %v6712 = vrot.slane %v6705, %v6711
        %v6714 = vlaneseq
        %vm6715 = vcmp.ge.s32.totalorder %v6714, 0
        %vm6716 = vcmp.lt.s32.totalorder %v6714, 384
        %vm6717 = vmand %vm6715, %vm6716
        %6718 = vst.msk [vmem:[%s552] sm:$0x7] %vm6717, %v6712
        %s6719 = sand.u32 %s346, 1
        %s6720 = scalar_lea.sflag [#allocation9], %s6719
        %s6721 = sand.u32 %s346, 1
        %s6722 = smul.addr %s6721, 24
        %s6723 = scalar_lea.vmem [#allocation13], %s6722
        %s6724 = sand.u32 %s372, 1
        %s6725 = scalar_lea.sflag [#allocation15], %s6724
        %s6726 = sand.u32 %s372, 1
        %s6727 = smul.addr %s6726, 3
        %s6728 = scalar_lea.vmem [#allocation14], %s6727
        // Predicated region
        $region89: #{tpu_custom_call.1} parent=75 // pred_check
          %p6729 = pneg %p356
        $region90: #{tpu_custom_call.1} parent=75 // pred_check_branch
          %6731 = sbr.rel (%p6729) target = $region92
        $region91: #{tpu_custom_call.1} parent=75 // pred_region
          %s6733 = ssub.s32 384, 384
          %6734 = vsyncadd %s6720, %s6733
          %s6735 = smul.addr %s39, 3
          %s6736 = smul.addr %s6735, 128
          %s6737 = scalar_lea.hbm %s14, %s6736
          %s6739 = sshll.u32 %s6723, 4
          %s6740 = int_to_ptr.vmem [resolvable:$true] %s6739
          %6742 = dma.vmem_to_hbm [thread:$0]  %s6740, 384, %s6737, %s6720
        $region92: #{tpu_custom_call.1} parent=75 // pred_fallthru
          _
        // Predicated region
        $region93: #{tpu_custom_call.1} parent=75 // pred_check
          %p6743 = pneg %p382
        $region94: #{tpu_custom_call.1} parent=75 // pred_check_branch
          %6745 = sbr.rel (%p6743) target = $region96
        $region95: #{tpu_custom_call.1} parent=75 // pred_region
          %s6747 = ssub.s32 48, 48
          %6748 = vsyncadd %s6725, %s6747
          %s6749 = smul.addr %s39, 3
          %s6750 = smul.addr %s6749, 16
          %s6751 = scalar_lea.hbm %s15, %s6750
          %s6753 = sshll.u32 %s6728, 4
          %s6754 = int_to_ptr.vmem [resolvable:$true] %s6753
          %6756 = dma.vmem_to_hbm [thread:$0]  %s6754, 48, %s6751, %s6725
        $region96: #{tpu_custom_call.1} parent=75 // pred_fallthru
          _
      $region76: #{tpu_custom_call.1} parent=5 // pred_fallthru
        _
      %p6757 = scmp.le.s32.totalorder 2, %s34
      // Predicated region
      $region97: #{tpu_custom_call.1} parent=5 // pred_check
        %p6758 = pneg %p6757
      $region98: #{tpu_custom_call.1} parent=5 // pred_check_branch
        %6760 = sbr.rel (%p6758) target = $region100
      $region99: #{tpu_custom_call.1} parent=5 // pred_region
        %s6761 = ssub.s32 %s34, 2
        // Predicated region
        $region101: #{tpu_custom_call.1} parent=99 // pred_check
          %p6762 = pneg %p362
        $region102: #{tpu_custom_call.1} parent=99 // pred_check_branch
          %6764 = sbr.rel (%p6762) target = $region104
        $region103: #{tpu_custom_call.1} parent=99 // pred_region
          %s6765 = sand.u32 %s347, 1
          %s6766 = scalar_lea.sflag [#allocation9], %s6765
          %s6767 = sand.u32 %s347, 1
          %s6768 = smul.addr %s6767, 24
          %s6769 = scalar_lea.vmem [#allocation13], %s6768
          %6770 = dma.done %s6766, 384
        $region104: #{tpu_custom_call.1} parent=99 // pred_fallthru
          _
        // Predicated region
        $region105: #{tpu_custom_call.1} parent=99 // pred_check
          %p6771 = pneg %p388
        $region106: #{tpu_custom_call.1} parent=99 // pred_check_branch
          %6773 = sbr.rel (%p6771) target = $region108
        $region107: #{tpu_custom_call.1} parent=99 // pred_region
          %s6774 = sand.u32 %s373, 1
          %s6775 = scalar_lea.sflag [#allocation15], %s6774
          %s6776 = sand.u32 %s373, 1
          %s6777 = smul.addr %s6776, 3
          %s6778 = scalar_lea.vmem [#allocation14], %s6777
          %6779 = dma.done %s6775, 48
        $region108: #{tpu_custom_call.1} parent=99 // pred_fallthru
          _
      $region100: #{tpu_custom_call.1} parent=5 // pred_fallthru
        _
    $region6: #{tpu_custom_call.1} parent=1 // loop_footer
      %s38 = sadd.s32 1, %s34
    $region7: #{tpu_custom_call.1} parent=1 // loop_footer_branch
      %33 = sbr.rel target = $region3
    $region8: #{tpu_custom_call.1} parent=1 // loop_exit
      _
    %6780 = vsyncpa [#allocation8], 1
    %s6781 = scalar_lea.sflag [#allocation8], 1
    %6782 = vsyncpa %s6781, 1
    %6783 = vsyncpa [#allocation11], 1
    %6784 = vsyncpa [#allocation9], 1
    %s6785 = scalar_lea.sflag [#allocation9], 1
    %6786 = vsyncpa %s6785, 1
    %6787 = vsyncpa [#allocation15], 1
    %s6788 = scalar_lea.sflag [#allocation15], 1
    %6789 = vsyncpa %s6788, 1

</llo_original>
